<compile_context>
chip_gen: v6e
topology: v6e:2x2x1
jax: 0.10.0
libtpu: 0.0.40
codegen_flags: <defaults>
</compile_context>

<pallas_src>
import functools

import jax
import jax.numpy as jnp
from jax.experimental import pallas as pl
from jax.experimental.pallas import tpu as pltpu


# ---------------------------------------------------------------------------
# BlockSpec helper (full-array blocks; single-step grid)
# ---------------------------------------------------------------------------
def _full_spec(shape):
    nd = len(shape)
    return pl.BlockSpec(shape, lambda i, _z=(0,) * nd: _z)


# ---------------------------------------------------------------------------
# Fused whole-network kernel (one program covers the whole batch)
# ---------------------------------------------------------------------------
def _informer_kernel(x_ref, glob_ref, wqkv_ref, bqkv_ref, wo_ref, encv_ref,
                     linw_ref, convw_ref, sew1_ref, sew2_ref, o_ref,
                     *, seq_len, batch):
    L = encv_ref.shape[0]                       # encoder layers
    _, H, E, threeD = wqkv_ref.shape            # (L+1, H, E, 3D)
    D = threeD // 3
    S, Bb = seq_len, batch
    BS, BH = Bb * S, Bb * H
    scale = 1.0 / (float(D) ** 0.5)
    f32 = jnp.float32

    def attention(h2, li, bo):
        """Dense MHSA on (BS, E) rows; heads batched as B*H in the dot_generals."""
        wqkv = wqkv_ref[li]                                   # (H, E, 3D) head-major
        bqkv = bqkv_ref[li]                                   # (H, 1, 3D)
        wo = wo_ref[li]                                       # (E, E)
        # Broadcast over leading (cheap) batch/head axes; one batched MXU op
        # produces the head-split QKV directly -> no lane-unaligned head split.
        hb = jnp.broadcast_to(h2.reshape(Bb, 1, S, E), (Bb, H, S, E)).reshape(BH, S, E)
        wb = jnp.broadcast_to(wqkv[None], (Bb, H, E, threeD)).reshape(BH, E, threeD)
        bb = jnp.broadcast_to(bqkv[None], (Bb, H, 1, threeD)).reshape(BH, 1, threeD)
        qkv = jax.lax.dot_general(hb, wb, (((2,), (1,)), ((0,), (0,))),
                                  preferred_element_type=f32) + bb        # (BH, S, 3D)
        q = qkv[:, :, :D]
        k = qkv[:, :, D:2 * D]
        v = qkv[:, :, 2 * D:]
        s = jax.lax.dot_general(q, k, (((2,), (2,)), ((0,), (0,))),
                                preferred_element_type=f32) * scale       # (BH, S, S)
        s = s - jnp.max(s, axis=-1, keepdims=True)
        p = jnp.exp(s)
        p = p * pl.reciprocal(jnp.sum(p, axis=-1, keepdims=True), approx=True)
        # attn @ V computed transposed -> (BH, D, S): heads then merge straight
        # into the lane axis (free leading-dim reshape + one small minor-dims
        # transpose), enabling a single fused (BS,E)@(E,E) output projection.
        avT = jax.lax.dot_general(v, p, (((1,), (2,)), ((0,), (0,))),
                                  preferred_element_type=f32)             # (BH, D, S)
        avt = jnp.transpose(avT.reshape(Bb, H * D, S), (0, 2, 1)).reshape(BS, E)
        return jnp.dot(avt, wo, preferred_element_type=f32) + bo          # (BS, E)

    # Embedding: Linear(1, E) as a broadcast multiply (no degenerate K=1 matmul).
    h2 = x_ref[...] * glob_ref[0:1, :] + glob_ref[1:2, :]                 # (BS, E)

    for li in range(L):
        vec = encv_ref[li]                                                # (7, E)
        # -- ProbSparseMHSA (dense softmax attention) --
        h2 = attention(h2, li, vec[0:1, :])
        # -- LayerNorm(E) + Linear(E, E) --
        mu = jnp.mean(h2, axis=-1, keepdims=True)
        var = jnp.mean((h2 - mu) ** 2, axis=-1, keepdims=True)
        hn = (h2 - mu) * jax.lax.rsqrt(var + 1e-5) * vec[1:2, :] + vec[2:3, :]
        h2 = jnp.dot(hn, linw_ref[li], preferred_element_type=f32) + vec[3:4, :]
        # -- SEResNet: Conv1d(E,E,k=1) == per-token matmul; SE gate from seq mean --
        y = jnp.dot(h2, convw_ref[li], preferred_element_type=f32) + vec[4:5, :]
        m = jnp.mean(y.reshape(Bb, S, E), axis=1)                         # (Bb, E)
        g = jnp.maximum(
            jnp.dot(m, sew1_ref[li], preferred_element_type=f32) + vec[5:6, :E // 2],
            0.0)
        gate = jax.nn.sigmoid(
            jnp.dot(g, sew2_ref[li], preferred_element_type=f32) + vec[6:7, :])
        h2 = (y.reshape(Bb, S, E) * gate[:, None, :]).reshape(BS, E)

    # Decoder: MHSA then Linear(E, 1), emitted as one lane-dense (1, BS) row.
    h2 = attention(h2, L, glob_ref[2:3, :])
    dec_row = jax.lax.dot_general(glob_ref[3:4, :], h2, (((1,), (1,)), ((), ())),
                                  preferred_element_type=f32)             # (1, BS)
    o_ref[...] = dec_row + glob_ref[4:5, 0:1]


# ---------------------------------------------------------------------------
# Host-side parameter packing (layout prep for the fused kernel)
# ---------------------------------------------------------------------------
def _pack_qkv_w(wq, wk, wv, H):
    E = wq.shape[0]
    D = E // H
    w = jnp.concatenate([wq.reshape(E, H, D), wk.reshape(E, H, D),
                         wv.reshape(E, H, D)], axis=-1)                   # (E, H, 3D)
    return jnp.transpose(w, (1, 0, 2))                                    # (H, E, 3D)


def _pack_qkv_b(bq, bk, bv, H):
    D = bq.shape[0] // H
    b = jnp.concatenate([bq.reshape(H, D), bk.reshape(H, D),
                         bv.reshape(H, D)], axis=-1)                      # (H, 3D)
    return b[:, None, :]                                                  # (H, 1, 3D)


def informer_forward(params, x, num_heads):
    B, S, _ = x.shape
    E = params["embed_w"].shape[1]
    H = num_heads
    D = E // H
    L = len(params["layers"])

    def row(v):
        v = v.reshape(-1)
        return jnp.pad(v, (0, E - v.shape[0]))

    # global (non-per-layer) vectors: embed_w, embed_b, dec-attn bo, dec_w, dec_b
    glob = jnp.stack([row(params["embed_w"]), row(params["embed_b"]),
                      row(params["dec_attn"][7]), row(params["dec_w"]),
                      row(params["dec_b"])])                               # (5, E)

    attns = [lp["attn"] for lp in params["layers"]] + [params["dec_attn"]]
    wqkv_all = jnp.stack([_pack_qkv_w(a[0], a[2], a[4], H) for a in attns])  # (L+1,H,E,3D)
    bqkv_all = jnp.stack([_pack_qkv_b(a[1], a[3], a[5], H) for a in attns])  # (L+1,H,1,3D)
    wo_all = jnp.stack([a[6] for a in attns])                                # (L+1,E,E)

    # per-layer vector table: [attn bo, ln_g, ln_b, lin_b, conv_b, se_b1, se_b2]
    encv = jnp.stack([jnp.stack([row(lp["attn"][7]), row(lp["ln_g"]), row(lp["ln_b"]),
                                 row(lp["lin_b"]), row(lp["conv_b"]),
                                 row(lp["se_b1"]), row(lp["se_b2"])])
                      for lp in params["layers"]])                           # (L, 7, E)
    linw = jnp.stack([lp["lin_w"] for lp in params["layers"]])                # (L, E, E)
    convw = jnp.stack([lp["conv_w"] for lp in params["layers"]])              # (L, E, E)
    sew1 = jnp.stack([lp["se_w1"] for lp in params["layers"]])                # (L, E, E/2)
    sew2 = jnp.stack([lp["se_w2"] for lp in params["layers"]])                # (L, E/2, E)

    x2 = x.reshape(B * S, 1)
    operands = (x2, glob, wqkv_all, bqkv_all, wo_all, encv, linw, convw, sew1, sew2)

    kernel = functools.partial(_informer_kernel, seq_len=S, batch=B)

    # Advisory cost estimate so XLA schedules neighbours sensibly around the call.
    att = (2 * B * S * E * 3 * E            # fused QKV projection
           + 4 * B * H * S * S * D          # scores + attn@V
           + 2 * B * S * E * E)             # output projection
    per_layer = att + 4 * B * S * E * E + 2 * B * E * E
    flops = L * per_layer + att + 2 * B * S * E
    transcendentals = (L + 1) * B * H * S * S + L * B * E
    nbytes = 4 * (sum(int(o.size) for o in operands) + B * S)
    cost = pl.CostEstimate(flops=int(flops), transcendentals=int(transcendentals),
                           bytes_accessed=int(nbytes))

    out = pl.pallas_call(
        kernel,
        out_shape=jax.ShapeDtypeStruct((1, B * S), jnp.float32),
        grid=(1,),
        in_specs=[_full_spec(op.shape) for op in operands],
        out_specs=_full_spec((1, B * S)),
        compiler_params=pltpu.CompilerParams(dimension_semantics=("arbitrary",)),
        cost_estimate=cost,
    )(*operands)
    return out.reshape(B, S, 1)


# ---------------------------------------------------------------------------
# Parameter init (deterministic, synthetic; PyTorch-style layouts, (in,out))
# ---------------------------------------------------------------------------
def _init_linear(key, din, dout, scale=0.1):
    kw, kb = jax.random.split(key)
    w = scale * jax.random.normal(kw, (din, dout), jnp.float32)
    b = scale * jax.random.normal(kb, (dout,), jnp.float32)
    return w, b


def _init_mhsa(key, E):
    ks = jax.random.split(key, 4)
    wq, bq = _init_linear(ks[0], E, E)
    wk, bk = _init_linear(ks[1], E, E)
    wv, bv = _init_linear(ks[2], E, E)
    wo, bo = _init_linear(ks[3], E, E)
    return (wq, bq, wk, bk, wv, bv, wo, bo)


def init_params(key, E, num_layers):
    keys = jax.random.split(key, 3 + num_layers)
    params = {}
    params["embed_w"], params["embed_b"] = _init_linear(keys[0], 1, E)
    layers = []
    for li in range(num_layers):
        lk = jax.random.split(keys[1 + li], 4)
        attn = _init_mhsa(lk[0], E)
        ln_g = jnp.ones((E,), jnp.float32)
        ln_b = jnp.zeros((E,), jnp.float32)
        lin_w, lin_b = _init_linear(lk[1], E, E)
        conv_w, conv_b = _init_linear(lk[2], E, E)      # Conv1d k=1 squeezed weight
        sk = jax.random.split(lk[3], 2)
        se_w1, se_b1 = _init_linear(sk[0], E, E // 2)
        se_w2, se_b2 = _init_linear(sk[1], E // 2, E)
        layers.append(dict(attn=attn, ln_g=ln_g, ln_b=ln_b, lin_w=lin_w,
                           lin_b=lin_b, conv_w=conv_w, conv_b=conv_b,
                           se_w1=se_w1, se_b1=se_b1, se_w2=se_w2, se_b2=se_b2))
    params["layers"] = layers
    params["dec_attn"] = _init_mhsa(keys[1 + num_layers], E)
    params["dec_w"], params["dec_b"] = _init_linear(keys[2 + num_layers], E, 1)
    return params


# ---------------------------------------------------------------------------
# Pure-JAX reference
# ---------------------------------------------------------------------------
def _ref_mhsa(x, p, num_heads):
    wq, bq, wk, bk, wv, bv, wo, bo = p
    B, S, E = x.shape
    D = E // num_heads
    q = (x @ wq + bq).reshape(B, S, num_heads, D)
    k = (x @ wk + bk).reshape(B, S, num_heads, D)
    v = (x @ wv + bv).reshape(B, S, num_heads, D)
    att = jnp.einsum("nqhd,nkhd->nhqk", q, k) / (float(D) ** 0.5)
    att = jax.nn.softmax(att, axis=-1)
    o = jnp.einsum("nhql,nlhd->nqhd", att, v).reshape(B, S, E)
    return o @ wo + bo


def informer_reference(params, x, num_heads):
    h = x @ params["embed_w"] + params["embed_b"]
    for lp in params["layers"]:
        h = _ref_mhsa(h, lp["attn"], num_heads)
        mu = jnp.mean(h, axis=-1, keepdims=True)
        var = jnp.mean((h - mu) ** 2, axis=-1, keepdims=True)
        h = (h - mu) / jnp.sqrt(var + 1e-5) * lp["ln_g"] + lp["ln_b"]
        h = h @ lp["lin_w"] + lp["lin_b"]
        y = h @ lp["conv_w"] + lp["conv_b"]
        m = jnp.mean(y, axis=1)
        gate = jax.nn.sigmoid(jnp.maximum(m @ lp["se_w1"] + lp["se_b1"], 0.0)
                              @ lp["se_w2"] + lp["se_b2"])
        h = y * gate[:, None, :]
    h = _ref_mhsa(h, params["dec_attn"], num_heads)
    return h @ params["dec_w"] + params["dec_b"]


# ---------------------------------------------------------------------------
if __name__ == "__main__":
    B, S, E = 2, 8, 32
    HEADS = 4
    NUM_ENC_LAYERS = 2

    key = jax.random.PRNGKey(0)
    kx, kp = jax.random.split(key)
    x = jax.random.normal(kx, (B, S, 1), jnp.float32)  # Informer takes (B, seq, 1)
    params = init_params(kp, E, NUM_ENC_LAYERS)

    fwd = jax.jit(informer_forward, static_argnums=(2,))
    out = jax.block_until_ready(fwd(params, x, HEADS))
    assert out.shape == (B, S, 1), out.shape

    ref = informer_reference(params, x, HEADS)
    # 2e-3 tolerance: only deviation from the exact f32 reference is the EUP
    # approximate reciprocal in the softmax normalization.
    err = float(jnp.max(jnp.abs(out - ref)))
    assert jnp.allclose(out, ref, atol=2e-3, rtol=2e-3), err

    print("KERNEL_OK")
</pallas_src>

<mosaic_0001>
module attributes {stable_mosaic.version = 11 : i64} {
  func.func @_informer_kernel(%arg0: i32, %arg1: memref<16x1xf32, #tpu.memory_space<vmem>>, %arg2: memref<5x32xf32, #tpu.memory_space<vmem>>, %arg3: memref<3x4x32x24xf32, #tpu.memory_space<vmem>>, %arg4: memref<3x4x1x24xf32, #tpu.memory_space<vmem>>, %arg5: memref<3x32x32xf32, #tpu.memory_space<vmem>>, %arg6: memref<2x7x32xf32, #tpu.memory_space<vmem>>, %arg7: memref<2x32x32xf32, #tpu.memory_space<vmem>>, %arg8: memref<2x32x32xf32, #tpu.memory_space<vmem>>, %arg9: memref<2x32x16xf32, #tpu.memory_space<vmem>>, %arg10: memref<2x16x32xf32, #tpu.memory_space<vmem>>, %arg11: memref<1x16xf32, #tpu.memory_space<vmem>>) attributes {dimension_semantics = [#tpu.dimension_semantics<arbitrary>], iteration_bounds = array<i64: 1>, scalar_prefetch = 0 : i64, scratch_operands = 0 : i64, tpu.core_type = #tpu.core_type<tc>, window_params = [{pipeline_mode = #tpu.pipeline_mode<synchronous>, transform_indices = @transform_0, window_bounds = array<i64: 16, 1>}, {pipeline_mode = #tpu.pipeline_mode<synchronous>, transform_indices = @transform_1, window_bounds = array<i64: 5, 32>}, {pipeline_mode = #tpu.pipeline_mode<synchronous>, transform_indices = @transform_2, window_bounds = array<i64: 3, 4, 32, 24>}, {pipeline_mode = #tpu.pipeline_mode<synchronous>, transform_indices = @transform_3, window_bounds = array<i64: 3, 4, 1, 24>}, {pipeline_mode = #tpu.pipeline_mode<synchronous>, transform_indices = @transform_4, window_bounds = array<i64: 3, 32, 32>}, {pipeline_mode = #tpu.pipeline_mode<synchronous>, transform_indices = @transform_5, window_bounds = array<i64: 2, 7, 32>}, {pipeline_mode = #tpu.pipeline_mode<synchronous>, transform_indices = @transform_6, window_bounds = array<i64: 2, 32, 32>}, {pipeline_mode = #tpu.pipeline_mode<synchronous>, transform_indices = @transform_7, window_bounds = array<i64: 2, 32, 32>}, {pipeline_mode = #tpu.pipeline_mode<synchronous>, transform_indices = @transform_8, window_bounds = array<i64: 2, 32, 16>}, {pipeline_mode = #tpu.pipeline_mode<synchronous>, transform_indices = @transform_9, window_bounds = array<i64: 2, 16, 32>}, {pipeline_mode = #tpu.pipeline_mode<synchronous>, transform_indices = @transform_10, window_bounds = array<i64: 1, 16>}]} {
    %c0 = arith.constant 0 : index
    %c0_0 = arith.constant 0 : index
    %0 = vector.load %arg1[%c0, %c0_0] : memref<16x1xf32, #tpu.memory_space<vmem>>, vector<16x1xf32>
    %c0_1 = arith.constant 0 : index
    %c0_2 = arith.constant 0 : index
    %1 = vector.load %arg2[%c0_1, %c0_2] : memref<5x32xf32, #tpu.memory_space<vmem>>, vector<1x32xf32>
    %2 = vector.broadcast %0 : vector<16x1xf32> to vector<16x32xf32>
    %3 = vector.broadcast %1 : vector<1x32xf32> to vector<16x32xf32>
    %4 = arith.mulf %2, %3 : vector<16x32xf32>
    %c1 = arith.constant 1 : index
    %c0_3 = arith.constant 0 : index
    %5 = vector.load %arg2[%c1, %c0_3] : memref<5x32xf32, #tpu.memory_space<vmem>>, vector<1x32xf32>
    %6 = vector.broadcast %5 : vector<1x32xf32> to vector<16x32xf32>
    %7 = arith.addf %4, %6 : vector<16x32xf32>
    %c0_4 = arith.constant 0 : index
    %c0_5 = arith.constant 0 : index
    %c0_6 = arith.constant 0 : index
    %8 = vector.load %arg6[%c0_4, %c0_5, %c0_6] : memref<2x7x32xf32, #tpu.memory_space<vmem>>, vector<1x7x32xf32>
    %9 = vector.shape_cast %8 : vector<1x7x32xf32> to vector<7x32xf32>
    %10 = vector.extract_strided_slice %9 {offsets = [0, 0], sizes = [1, 32], strides = [1, 1]} : vector<7x32xf32> to vector<1x32xf32>
    %c0_7 = arith.constant 0 : index
    %c0_8 = arith.constant 0 : index
    %c0_9 = arith.constant 0 : index
    %c0_10 = arith.constant 0 : index
    %11 = vector.load %arg3[%c0_7, %c0_8, %c0_9, %c0_10] : memref<3x4x32x24xf32, #tpu.memory_space<vmem>>, vector<1x4x32x24xf32>
    %12 = vector.shape_cast %11 : vector<1x4x32x24xf32> to vector<4x32x24xf32>
    %c0_11 = arith.constant 0 : index
    %c0_12 = arith.constant 0 : index
    %c0_13 = arith.constant 0 : index
    %c0_14 = arith.constant 0 : index
    %13 = vector.load %arg4[%c0_11, %c0_12, %c0_13, %c0_14] : memref<3x4x1x24xf32, #tpu.memory_space<vmem>>, vector<1x4x1x24xf32>
    %14 = vector.shape_cast %13 : vector<1x4x1x24xf32> to vector<4x1x24xf32>
    %c0_15 = arith.constant 0 : index
    %c0_16 = arith.constant 0 : index
    %c0_17 = arith.constant 0 : index
    %15 = vector.load %arg5[%c0_15, %c0_16, %c0_17] : memref<3x32x32xf32, #tpu.memory_space<vmem>>, vector<1x32x32xf32>
    %16 = vector.shape_cast %15 : vector<1x32x32xf32> to vector<32x32xf32>
    %17 = vector.shape_cast %7 : vector<16x32xf32> to vector<2x1x8x32xf32>
    %18 = vector.shape_cast %17 : vector<2x1x8x32xf32> to vector<2x1x8x32xf32>
    %19 = vector.broadcast %18 : vector<2x1x8x32xf32> to vector<2x4x8x32xf32>
    %20 = vector.shape_cast %19 : vector<2x4x8x32xf32> to vector<8x8x32xf32>
    %21 = vector.shape_cast %12 : vector<4x32x24xf32> to vector<1x4x32x24xf32>
    %22 = vector.shape_cast %21 : vector<1x4x32x24xf32> to vector<1x4x32x24xf32>
    %23 = vector.broadcast %22 : vector<1x4x32x24xf32> to vector<2x4x32x24xf32>
    %24 = vector.shape_cast %23 : vector<2x4x32x24xf32> to vector<8x32x24xf32>
    %25 = vector.shape_cast %14 : vector<4x1x24xf32> to vector<1x4x1x24xf32>
    %26 = vector.shape_cast %25 : vector<1x4x1x24xf32> to vector<1x4x1x24xf32>
    %27 = vector.broadcast %26 : vector<1x4x1x24xf32> to vector<2x4x1x24xf32>
    %28 = vector.shape_cast %27 : vector<2x4x1x24xf32> to vector<8x1x24xf32>
    %cst = arith.constant dense<0.000000e+00> : vector<8x8x24xf32>
    %29 = tpu.matmul %20, %24, %cst {dimension_numbers = #tpu.dot_dimension_numbers<[2], [1], [1], [2], [0, 0, 0, 1, 1, 2], [0], [0]>} : vector<8x8x32xf32>, vector<8x32x24xf32>, vector<8x8x24xf32> -> vector<8x8x24xf32>
    %30 = vector.broadcast %28 : vector<8x1x24xf32> to vector<8x8x24xf32>
    %31 = arith.addf %29, %30 : vector<8x8x24xf32>
    %32 = vector.extract_strided_slice %31 {offsets = [0, 0, 0], sizes = [8, 8, 8], strides = [1, 1, 1]} : vector<8x8x24xf32> to vector<8x8x8xf32>
    %33 = vector.extract_strided_slice %31 {offsets = [0, 0, 8], sizes = [8, 8, 8], strides = [1, 1, 1]} : vector<8x8x24xf32> to vector<8x8x8xf32>
    %34 = vector.extract_strided_slice %31 {offsets = [0, 0, 16], sizes = [8, 8, 8], strides = [1, 1, 1]} : vector<8x8x24xf32> to vector<8x8x8xf32>
    %cst_18 = arith.constant dense<0.000000e+00> : vector<8x8x8xf32>
    %35 = tpu.matmul %32, %33, %cst_18 {dimension_numbers = #tpu.dot_dimension_numbers<[2], [2], [1], [1], [0, 0, 0, 1, 1, 1], [0], [0]>} : vector<8x8x8xf32>, vector<8x8x8xf32>, vector<8x8x8xf32> -> vector<8x8x8xf32>
    %cst_19 = arith.constant 0.353553385 : f32
    %36 = vector.broadcast %cst_19 : f32 to vector<8x8x8xf32>
    %37 = arith.mulf %35, %36 : vector<8x8x8xf32>
    %cst_20 = arith.constant dense<0xFF800000> : vector<8x8xf32>
    %38 = vector.multi_reduction <maximumf>, %37, %cst_20 [2] : vector<8x8x8xf32> to vector<8x8xf32>
    %39 = vector.shape_cast %38 : vector<8x8xf32> to vector<8x8x1xf32>
    %40 = vector.broadcast %39 : vector<8x8x1xf32> to vector<8x8x8xf32>
    %41 = arith.subf %37, %40 : vector<8x8x8xf32>
    %42 = math.exp %41 : vector<8x8x8xf32>
    %cst_21 = arith.constant dense<0.000000e+00> : vector<8x8xf32>
    %43 = vector.multi_reduction <add>, %42, %cst_21 [2] : vector<8x8x8xf32> to vector<8x8xf32>
    %44 = vector.shape_cast %43 : vector<8x8xf32> to vector<8x8x1xf32>
    %45 = tpu.reciprocal %44 {approx = true} : vector<8x8x1xf32> -> vector<8x8x1xf32>
    %46 = vector.broadcast %45 : vector<8x8x1xf32> to vector<8x8x8xf32>
    %47 = arith.mulf %42, %46 : vector<8x8x8xf32>
    %cst_22 = arith.constant dense<0.000000e+00> : vector<8x8x8xf32>
    %48 = tpu.matmul %34, %47, %cst_22 {dimension_numbers = #tpu.dot_dimension_numbers<[1], [2], [2], [1], [0, 0, 0, 2, 1, 1], [0], [0]>} : vector<8x8x8xf32>, vector<8x8x8xf32>, vector<8x8x8xf32> -> vector<8x8x8xf32>
    %49 = vector.shape_cast %48 : vector<8x8x8xf32> to vector<2x32x8xf32>
    %50 = tpu.transpose %49, [0, 2, 1] : vector<2x32x8xf32> -> vector<2x8x32xf32>
    %51 = vector.shape_cast %50 : vector<2x8x32xf32> to vector<16x32xf32>
    %cst_23 = arith.constant dense<0.000000e+00> : vector<16x32xf32>
    %52 = tpu.matmul %51, %16, %cst_23 {dimension_numbers = #tpu.dot_dimension_numbers<[1], [0], [0], [1], [0, 0, 1, 1], [], []>} : vector<16x32xf32>, vector<32x32xf32>, vector<16x32xf32> -> vector<16x32xf32>
    %53 = vector.broadcast %10 : vector<1x32xf32> to vector<16x32xf32>
    %54 = arith.addf %52, %53 : vector<16x32xf32>
    %cst_24 = arith.constant dense<0.000000e+00> : vector<16xf32>
    %55 = vector.multi_reduction <add>, %54, %cst_24 [1] : vector<16x32xf32> to vector<16xf32>
    %56 = vector.shape_cast %55 : vector<16xf32> to vector<16x1xf32>
    %cst_25 = arith.constant 3.200000e+01 : f32
    %57 = vector.broadcast %cst_25 : f32 to vector<16x1xf32>
    %58 = arith.divf %56, %57 : vector<16x1xf32>
    %59 = vector.broadcast %58 : vector<16x1xf32> to vector<16x32xf32>
    %60 = arith.subf %54, %59 : vector<16x32xf32>
    %61 = arith.mulf %60, %60 : vector<16x32xf32>
    %cst_26 = arith.constant dense<0.000000e+00> : vector<16xf32>
    %62 = vector.multi_reduction <add>, %61, %cst_26 [1] : vector<16x32xf32> to vector<16xf32>
    %63 = vector.shape_cast %62 : vector<16xf32> to vector<16x1xf32>
    %cst_27 = arith.constant 3.200000e+01 : f32
    %64 = vector.broadcast %cst_27 : f32 to vector<16x1xf32>
    %65 = arith.divf %63, %64 : vector<16x1xf32>
    %66 = vector.broadcast %58 : vector<16x1xf32> to vector<16x32xf32>
    %67 = arith.subf %54, %66 : vector<16x32xf32>
    %cst_28 = arith.constant 9.99999974E-6 : f32
    %68 = vector.broadcast %cst_28 : f32 to vector<16x1xf32>
    %69 = arith.addf %65, %68 : vector<16x1xf32>
    %70 = math.rsqrt %69 : vector<16x1xf32>
    %71 = vector.broadcast %70 : vector<16x1xf32> to vector<16x32xf32>
    %72 = arith.mulf %67, %71 : vector<16x32xf32>
    %73 = vector.extract_strided_slice %9 {offsets = [1, 0], sizes = [1, 32], strides = [1, 1]} : vector<7x32xf32> to vector<1x32xf32>
    %74 = vector.broadcast %73 : vector<1x32xf32> to vector<16x32xf32>
    %75 = arith.mulf %72, %74 : vector<16x32xf32>
    %76 = vector.extract_strided_slice %9 {offsets = [2, 0], sizes = [1, 32], strides = [1, 1]} : vector<7x32xf32> to vector<1x32xf32>
    %77 = vector.broadcast %76 : vector<1x32xf32> to vector<16x32xf32>
    %78 = arith.addf %75, %77 : vector<16x32xf32>
    %c0_29 = arith.constant 0 : index
    %c0_30 = arith.constant 0 : index
    %c0_31 = arith.constant 0 : index
    %79 = vector.load %arg7[%c0_29, %c0_30, %c0_31] : memref<2x32x32xf32, #tpu.memory_space<vmem>>, vector<1x32x32xf32>
    %80 = vector.shape_cast %79 : vector<1x32x32xf32> to vector<32x32xf32>
    %cst_32 = arith.constant dense<0.000000e+00> : vector<16x32xf32>
    %81 = tpu.matmul %78, %80, %cst_32 {dimension_numbers = #tpu.dot_dimension_numbers<[1], [0], [0], [1], [0, 0, 1, 1], [], []>} : vector<16x32xf32>, vector<32x32xf32>, vector<16x32xf32> -> vector<16x32xf32>
    %82 = vector.extract_strided_slice %9 {offsets = [3, 0], sizes = [1, 32], strides = [1, 1]} : vector<7x32xf32> to vector<1x32xf32>
    %83 = vector.broadcast %82 : vector<1x32xf32> to vector<16x32xf32>
    %84 = arith.addf %81, %83 : vector<16x32xf32>
    %c0_33 = arith.constant 0 : index
    %c0_34 = arith.constant 0 : index
    %c0_35 = arith.constant 0 : index
    %85 = vector.load %arg8[%c0_33, %c0_34, %c0_35] : memref<2x32x32xf32, #tpu.memory_space<vmem>>, vector<1x32x32xf32>
    %86 = vector.shape_cast %85 : vector<1x32x32xf32> to vector<32x32xf32>
    %cst_36 = arith.constant dense<0.000000e+00> : vector<16x32xf32>
    %87 = tpu.matmul %84, %86, %cst_36 {dimension_numbers = #tpu.dot_dimension_numbers<[1], [0], [0], [1], [0, 0, 1, 1], [], []>} : vector<16x32xf32>, vector<32x32xf32>, vector<16x32xf32> -> vector<16x32xf32>
    %88 = vector.extract_strided_slice %9 {offsets = [4, 0], sizes = [1, 32], strides = [1, 1]} : vector<7x32xf32> to vector<1x32xf32>
    %89 = vector.broadcast %88 : vector<1x32xf32> to vector<16x32xf32>
    %90 = arith.addf %87, %89 : vector<16x32xf32>
    %91 = vector.shape_cast %90 : vector<16x32xf32> to vector<2x8x32xf32>
    %cst_37 = arith.constant dense<0.000000e+00> : vector<2x32xf32>
    %92 = vector.multi_reduction <add>, %91, %cst_37 [1] : vector<2x8x32xf32> to vector<2x32xf32>
    %cst_38 = arith.constant 8.000000e+00 : f32
    %93 = vector.broadcast %cst_38 : f32 to vector<2x32xf32>
    %94 = arith.divf %92, %93 : vector<2x32xf32>
    %c0_39 = arith.constant 0 : index
    %c0_40 = arith.constant 0 : index
    %c0_41 = arith.constant 0 : index
    %95 = vector.load %arg9[%c0_39, %c0_40, %c0_41] : memref<2x32x16xf32, #tpu.memory_space<vmem>>, vector<1x32x16xf32>
    %96 = vector.shape_cast %95 : vector<1x32x16xf32> to vector<32x16xf32>
    %cst_42 = arith.constant dense<0.000000e+00> : vector<2x16xf32>
    %97 = tpu.matmul %94, %96, %cst_42 {dimension_numbers = #tpu.dot_dimension_numbers<[1], [0], [0], [1], [0, 0, 1, 1], [], []>} : vector<2x32xf32>, vector<32x16xf32>, vector<2x16xf32> -> vector<2x16xf32>
    %98 = vector.extract_strided_slice %9 {offsets = [5, 0], sizes = [1, 16], strides = [1, 1]} : vector<7x32xf32> to vector<1x16xf32>
    %99 = vector.broadcast %98 : vector<1x16xf32> to vector<2x16xf32>
    %100 = arith.addf %97, %99 : vector<2x16xf32>
    %cst_43 = arith.constant 0.000000e+00 : f32
    %101 = vector.broadcast %cst_43 : f32 to vector<2x16xf32>
    %102 = arith.maximumf %100, %101 : vector<2x16xf32>
    %c0_44 = arith.constant 0 : index
    %c0_45 = arith.constant 0 : index
    %c0_46 = arith.constant 0 : index
    %103 = vector.load %arg10[%c0_44, %c0_45, %c0_46] : memref<2x16x32xf32, #tpu.memory_space<vmem>>, vector<1x16x32xf32>
    %104 = vector.shape_cast %103 : vector<1x16x32xf32> to vector<16x32xf32>
    %cst_47 = arith.constant dense<0.000000e+00> : vector<2x32xf32>
    %105 = tpu.matmul %102, %104, %cst_47 {dimension_numbers = #tpu.dot_dimension_numbers<[1], [0], [0], [1], [0, 0, 1, 1], [], []>} : vector<2x16xf32>, vector<16x32xf32>, vector<2x32xf32> -> vector<2x32xf32>
    %106 = vector.extract_strided_slice %9 {offsets = [6, 0], sizes = [1, 32], strides = [1, 1]} : vector<7x32xf32> to vector<1x32xf32>
    %107 = vector.broadcast %106 : vector<1x32xf32> to vector<2x32xf32>
    %108 = arith.addf %105, %107 : vector<2x32xf32>
    %109 = arith.negf %108 : vector<2x32xf32>
    %110 = math.exp %109 : vector<2x32xf32>
    %cst_48 = arith.constant 1.000000e+00 : f32
    %111 = vector.broadcast %cst_48 : f32 to vector<2x32xf32>
    %112 = arith.addf %111, %110 : vector<2x32xf32>
    %113 = arith.divf %111, %112 : vector<2x32xf32>
    %114 = vector.shape_cast %90 : vector<16x32xf32> to vector<2x8x32xf32>
    %115 = vector.shape_cast %113 : vector<2x32xf32> to vector<2x1x32xf32>
    %116 = vector.broadcast %115 : vector<2x1x32xf32> to vector<2x8x32xf32>
    %117 = arith.mulf %114, %116 : vector<2x8x32xf32>
    %118 = vector.shape_cast %117 : vector<2x8x32xf32> to vector<16x32xf32>
    %c1_49 = arith.constant 1 : index
    %c0_50 = arith.constant 0 : index
    %c0_51 = arith.constant 0 : index
    %119 = vector.load %arg6[%c1_49, %c0_50, %c0_51] : memref<2x7x32xf32, #tpu.memory_space<vmem>>, vector<1x7x32xf32>
    %120 = vector.shape_cast %119 : vector<1x7x32xf32> to vector<7x32xf32>
    %121 = vector.extract_strided_slice %120 {offsets = [0, 0], sizes = [1, 32], strides = [1, 1]} : vector<7x32xf32> to vector<1x32xf32>
    %c1_52 = arith.constant 1 : index
    %c0_53 = arith.constant 0 : index
    %c0_54 = arith.constant 0 : index
    %c0_55 = arith.constant 0 : index
    %122 = vector.load %arg3[%c1_52, %c0_53, %c0_54, %c0_55] : memref<3x4x32x24xf32, #tpu.memory_space<vmem>>, vector<1x4x32x24xf32>
    %123 = vector.shape_cast %122 : vector<1x4x32x24xf32> to vector<4x32x24xf32>
    %c1_56 = arith.constant 1 : index
    %c0_57 = arith.constant 0 : index
    %c0_58 = arith.constant 0 : index
    %c0_59 = arith.constant 0 : index
    %124 = vector.load %arg4[%c1_56, %c0_57, %c0_58, %c0_59] : memref<3x4x1x24xf32, #tpu.memory_space<vmem>>, vector<1x4x1x24xf32>
    %125 = vector.shape_cast %124 : vector<1x4x1x24xf32> to vector<4x1x24xf32>
    %c1_60 = arith.constant 1 : index
    %c0_61 = arith.constant 0 : index
    %c0_62 = arith.constant 0 : index
    %126 = vector.load %arg5[%c1_60, %c0_61, %c0_62] : memref<3x32x32xf32, #tpu.memory_space<vmem>>, vector<1x32x32xf32>
    %127 = vector.shape_cast %126 : vector<1x32x32xf32> to vector<32x32xf32>
    %128 = vector.shape_cast %118 : vector<16x32xf32> to vector<2x1x8x32xf32>
    %129 = vector.shape_cast %128 : vector<2x1x8x32xf32> to vector<2x1x8x32xf32>
    %130 = vector.broadcast %129 : vector<2x1x8x32xf32> to vector<2x4x8x32xf32>
    %131 = vector.shape_cast %130 : vector<2x4x8x32xf32> to vector<8x8x32xf32>
    %132 = vector.shape_cast %123 : vector<4x32x24xf32> to vector<1x4x32x24xf32>
    %133 = vector.shape_cast %132 : vector<1x4x32x24xf32> to vector<1x4x32x24xf32>
    %134 = vector.broadcast %133 : vector<1x4x32x24xf32> to vector<2x4x32x24xf32>
    %135 = vector.shape_cast %134 : vector<2x4x32x24xf32> to vector<8x32x24xf32>
    %136 = vector.shape_cast %125 : vector<4x1x24xf32> to vector<1x4x1x24xf32>
    %137 = vector.shape_cast %136 : vector<1x4x1x24xf32> to vector<1x4x1x24xf32>
    %138 = vector.broadcast %137 : vector<1x4x1x24xf32> to vector<2x4x1x24xf32>
    %139 = vector.shape_cast %138 : vector<2x4x1x24xf32> to vector<8x1x24xf32>
    %cst_63 = arith.constant dense<0.000000e+00> : vector<8x8x24xf32>
    %140 = tpu.matmul %131, %135, %cst_63 {dimension_numbers = #tpu.dot_dimension_numbers<[2], [1], [1], [2], [0, 0, 0, 1, 1, 2], [0], [0]>} : vector<8x8x32xf32>, vector<8x32x24xf32>, vector<8x8x24xf32> -> vector<8x8x24xf32>
    %141 = vector.broadcast %139 : vector<8x1x24xf32> to vector<8x8x24xf32>
    %142 = arith.addf %140, %141 : vector<8x8x24xf32>
    %143 = vector.extract_strided_slice %142 {offsets = [0, 0, 0], sizes = [8, 8, 8], strides = [1, 1, 1]} : vector<8x8x24xf32> to vector<8x8x8xf32>
    %144 = vector.extract_strided_slice %142 {offsets = [0, 0, 8], sizes = [8, 8, 8], strides = [1, 1, 1]} : vector<8x8x24xf32> to vector<8x8x8xf32>
    %145 = vector.extract_strided_slice %142 {offsets = [0, 0, 16], sizes = [8, 8, 8], strides = [1, 1, 1]} : vector<8x8x24xf32> to vector<8x8x8xf32>
    %cst_64 = arith.constant dense<0.000000e+00> : vector<8x8x8xf32>
    %146 = tpu.matmul %143, %144, %cst_64 {dimension_numbers = #tpu.dot_dimension_numbers<[2], [2], [1], [1], [0, 0, 0, 1, 1, 1], [0], [0]>} : vector<8x8x8xf32>, vector<8x8x8xf32>, vector<8x8x8xf32> -> vector<8x8x8xf32>
    %cst_65 = arith.constant 0.353553385 : f32
    %147 = vector.broadcast %cst_65 : f32 to vector<8x8x8xf32>
    %148 = arith.mulf %146, %147 : vector<8x8x8xf32>
    %cst_66 = arith.constant dense<0xFF800000> : vector<8x8xf32>
    %149 = vector.multi_reduction <maximumf>, %148, %cst_66 [2] : vector<8x8x8xf32> to vector<8x8xf32>
    %150 = vector.shape_cast %149 : vector<8x8xf32> to vector<8x8x1xf32>
    %151 = vector.broadcast %150 : vector<8x8x1xf32> to vector<8x8x8xf32>
    %152 = arith.subf %148, %151 : vector<8x8x8xf32>
    %153 = math.exp %152 : vector<8x8x8xf32>
    %cst_67 = arith.constant dense<0.000000e+00> : vector<8x8xf32>
    %154 = vector.multi_reduction <add>, %153, %cst_67 [2] : vector<8x8x8xf32> to vector<8x8xf32>
    %155 = vector.shape_cast %154 : vector<8x8xf32> to vector<8x8x1xf32>
    %156 = tpu.reciprocal %155 {approx = true} : vector<8x8x1xf32> -> vector<8x8x1xf32>
    %157 = vector.broadcast %156 : vector<8x8x1xf32> to vector<8x8x8xf32>
    %158 = arith.mulf %153, %157 : vector<8x8x8xf32>
    %cst_68 = arith.constant dense<0.000000e+00> : vector<8x8x8xf32>
    %159 = tpu.matmul %145, %158, %cst_68 {dimension_numbers = #tpu.dot_dimension_numbers<[1], [2], [2], [1], [0, 0, 0, 2, 1, 1], [0], [0]>} : vector<8x8x8xf32>, vector<8x8x8xf32>, vector<8x8x8xf32> -> vector<8x8x8xf32>
    %160 = vector.shape_cast %159 : vector<8x8x8xf32> to vector<2x32x8xf32>
    %161 = tpu.transpose %160, [0, 2, 1] : vector<2x32x8xf32> -> vector<2x8x32xf32>
    %162 = vector.shape_cast %161 : vector<2x8x32xf32> to vector<16x32xf32>
    %cst_69 = arith.constant dense<0.000000e+00> : vector<16x32xf32>
    %163 = tpu.matmul %162, %127, %cst_69 {dimension_numbers = #tpu.dot_dimension_numbers<[1], [0], [0], [1], [0, 0, 1, 1], [], []>} : vector<16x32xf32>, vector<32x32xf32>, vector<16x32xf32> -> vector<16x32xf32>
    %164 = vector.broadcast %121 : vector<1x32xf32> to vector<16x32xf32>
    %165 = arith.addf %163, %164 : vector<16x32xf32>
    %cst_70 = arith.constant dense<0.000000e+00> : vector<16xf32>
    %166 = vector.multi_reduction <add>, %165, %cst_70 [1] : vector<16x32xf32> to vector<16xf32>
    %167 = vector.shape_cast %166 : vector<16xf32> to vector<16x1xf32>
    %cst_71 = arith.constant 3.200000e+01 : f32
    %168 = vector.broadcast %cst_71 : f32 to vector<16x1xf32>
    %169 = arith.divf %167, %168 : vector<16x1xf32>
    %170 = vector.broadcast %169 : vector<16x1xf32> to vector<16x32xf32>
    %171 = arith.subf %165, %170 : vector<16x32xf32>
    %172 = arith.mulf %171, %171 : vector<16x32xf32>
    %cst_72 = arith.constant dense<0.000000e+00> : vector<16xf32>
    %173 = vector.multi_reduction <add>, %172, %cst_72 [1] : vector<16x32xf32> to vector<16xf32>
    %174 = vector.shape_cast %173 : vector<16xf32> to vector<16x1xf32>
    %cst_73 = arith.constant 3.200000e+01 : f32
    %175 = vector.broadcast %cst_73 : f32 to vector<16x1xf32>
    %176 = arith.divf %174, %175 : vector<16x1xf32>
    %177 = vector.broadcast %169 : vector<16x1xf32> to vector<16x32xf32>
    %178 = arith.subf %165, %177 : vector<16x32xf32>
    %cst_74 = arith.constant 9.99999974E-6 : f32
    %179 = vector.broadcast %cst_74 : f32 to vector<16x1xf32>
    %180 = arith.addf %176, %179 : vector<16x1xf32>
    %181 = math.rsqrt %180 : vector<16x1xf32>
    %182 = vector.broadcast %181 : vector<16x1xf32> to vector<16x32xf32>
    %183 = arith.mulf %178, %182 : vector<16x32xf32>
    %184 = vector.extract_strided_slice %120 {offsets = [1, 0], sizes = [1, 32], strides = [1, 1]} : vector<7x32xf32> to vector<1x32xf32>
    %185 = vector.broadcast %184 : vector<1x32xf32> to vector<16x32xf32>
    %186 = arith.mulf %183, %185 : vector<16x32xf32>
    %187 = vector.extract_strided_slice %120 {offsets = [2, 0], sizes = [1, 32], strides = [1, 1]} : vector<7x32xf32> to vector<1x32xf32>
    %188 = vector.broadcast %187 : vector<1x32xf32> to vector<16x32xf32>
    %189 = arith.addf %186, %188 : vector<16x32xf32>
    %c1_75 = arith.constant 1 : index
    %c0_76 = arith.constant 0 : index
    %c0_77 = arith.constant 0 : index
    %190 = vector.load %arg7[%c1_75, %c0_76, %c0_77] : memref<2x32x32xf32, #tpu.memory_space<vmem>>, vector<1x32x32xf32>
    %191 = vector.shape_cast %190 : vector<1x32x32xf32> to vector<32x32xf32>
    %cst_78 = arith.constant dense<0.000000e+00> : vector<16x32xf32>
    %192 = tpu.matmul %189, %191, %cst_78 {dimension_numbers = #tpu.dot_dimension_numbers<[1], [0], [0], [1], [0, 0, 1, 1], [], []>} : vector<16x32xf32>, vector<32x32xf32>, vector<16x32xf32> -> vector<16x32xf32>
    %193 = vector.extract_strided_slice %120 {offsets = [3, 0], sizes = [1, 32], strides = [1, 1]} : vector<7x32xf32> to vector<1x32xf32>
    %194 = vector.broadcast %193 : vector<1x32xf32> to vector<16x32xf32>
    %195 = arith.addf %192, %194 : vector<16x32xf32>
    %c1_79 = arith.constant 1 : index
    %c0_80 = arith.constant 0 : index
    %c0_81 = arith.constant 0 : index
    %196 = vector.load %arg8[%c1_79, %c0_80, %c0_81] : memref<2x32x32xf32, #tpu.memory_space<vmem>>, vector<1x32x32xf32>
    %197 = vector.shape_cast %196 : vector<1x32x32xf32> to vector<32x32xf32>
    %cst_82 = arith.constant dense<0.000000e+00> : vector<16x32xf32>
    %198 = tpu.matmul %195, %197, %cst_82 {dimension_numbers = #tpu.dot_dimension_numbers<[1], [0], [0], [1], [0, 0, 1, 1], [], []>} : vector<16x32xf32>, vector<32x32xf32>, vector<16x32xf32> -> vector<16x32xf32>
    %199 = vector.extract_strided_slice %120 {offsets = [4, 0], sizes = [1, 32], strides = [1, 1]} : vector<7x32xf32> to vector<1x32xf32>
    %200 = vector.broadcast %199 : vector<1x32xf32> to vector<16x32xf32>
    %201 = arith.addf %198, %200 : vector<16x32xf32>
    %202 = vector.shape_cast %201 : vector<16x32xf32> to vector<2x8x32xf32>
    %cst_83 = arith.constant dense<0.000000e+00> : vector<2x32xf32>
    %203 = vector.multi_reduction <add>, %202, %cst_83 [1] : vector<2x8x32xf32> to vector<2x32xf32>
    %cst_84 = arith.constant 8.000000e+00 : f32
    %204 = vector.broadcast %cst_84 : f32 to vector<2x32xf32>
    %205 = arith.divf %203, %204 : vector<2x32xf32>
    %c1_85 = arith.constant 1 : index
    %c0_86 = arith.constant 0 : index
    %c0_87 = arith.constant 0 : index
    %206 = vector.load %arg9[%c1_85, %c0_86, %c0_87] : memref<2x32x16xf32, #tpu.memory_space<vmem>>, vector<1x32x16xf32>
    %207 = vector.shape_cast %206 : vector<1x32x16xf32> to vector<32x16xf32>
    %cst_88 = arith.constant dense<0.000000e+00> : vector<2x16xf32>
    %208 = tpu.matmul %205, %207, %cst_88 {dimension_numbers = #tpu.dot_dimension_numbers<[1], [0], [0], [1], [0, 0, 1, 1], [], []>} : vector<2x32xf32>, vector<32x16xf32>, vector<2x16xf32> -> vector<2x16xf32>
    %209 = vector.extract_strided_slice %120 {offsets = [5, 0], sizes = [1, 16], strides = [1, 1]} : vector<7x32xf32> to vector<1x16xf32>
    %210 = vector.broadcast %209 : vector<1x16xf32> to vector<2x16xf32>
    %211 = arith.addf %208, %210 : vector<2x16xf32>
    %cst_89 = arith.constant 0.000000e+00 : f32
    %212 = vector.broadcast %cst_89 : f32 to vector<2x16xf32>
    %213 = arith.maximumf %211, %212 : vector<2x16xf32>
    %c1_90 = arith.constant 1 : index
    %c0_91 = arith.constant 0 : index
    %c0_92 = arith.constant 0 : index
    %214 = vector.load %arg10[%c1_90, %c0_91, %c0_92] : memref<2x16x32xf32, #tpu.memory_space<vmem>>, vector<1x16x32xf32>
    %215 = vector.shape_cast %214 : vector<1x16x32xf32> to vector<16x32xf32>
    %cst_93 = arith.constant dense<0.000000e+00> : vector<2x32xf32>
    %216 = tpu.matmul %213, %215, %cst_93 {dimension_numbers = #tpu.dot_dimension_numbers<[1], [0], [0], [1], [0, 0, 1, 1], [], []>} : vector<2x16xf32>, vector<16x32xf32>, vector<2x32xf32> -> vector<2x32xf32>
    %217 = vector.extract_strided_slice %120 {offsets = [6, 0], sizes = [1, 32], strides = [1, 1]} : vector<7x32xf32> to vector<1x32xf32>
    %218 = vector.broadcast %217 : vector<1x32xf32> to vector<2x32xf32>
    %219 = arith.addf %216, %218 : vector<2x32xf32>
    %220 = arith.negf %219 : vector<2x32xf32>
    %221 = math.exp %220 : vector<2x32xf32>
    %cst_94 = arith.constant 1.000000e+00 : f32
    %222 = vector.broadcast %cst_94 : f32 to vector<2x32xf32>
    %223 = arith.addf %222, %221 : vector<2x32xf32>
    %224 = arith.divf %222, %223 : vector<2x32xf32>
    %225 = vector.shape_cast %201 : vector<16x32xf32> to vector<2x8x32xf32>
    %226 = vector.shape_cast %224 : vector<2x32xf32> to vector<2x1x32xf32>
    %227 = vector.broadcast %226 : vector<2x1x32xf32> to vector<2x8x32xf32>
    %228 = arith.mulf %225, %227 : vector<2x8x32xf32>
    %229 = vector.shape_cast %228 : vector<2x8x32xf32> to vector<16x32xf32>
    %c2 = arith.constant 2 : index
    %c0_95 = arith.constant 0 : index
    %230 = vector.load %arg2[%c2, %c0_95] : memref<5x32xf32, #tpu.memory_space<vmem>>, vector<1x32xf32>
    %c2_96 = arith.constant 2 : index
    %c0_97 = arith.constant 0 : index
    %c0_98 = arith.constant 0 : index
    %c0_99 = arith.constant 0 : index
    %231 = vector.load %arg3[%c2_96, %c0_97, %c0_98, %c0_99] : memref<3x4x32x24xf32, #tpu.memory_space<vmem>>, vector<1x4x32x24xf32>
    %232 = vector.shape_cast %231 : vector<1x4x32x24xf32> to vector<4x32x24xf32>
    %c2_100 = arith.constant 2 : index
    %c0_101 = arith.constant 0 : index
    %c0_102 = arith.constant 0 : index
    %c0_103 = arith.constant 0 : index
    %233 = vector.load %arg4[%c2_100, %c0_101, %c0_102, %c0_103] : memref<3x4x1x24xf32, #tpu.memory_space<vmem>>, vector<1x4x1x24xf32>
    %234 = vector.shape_cast %233 : vector<1x4x1x24xf32> to vector<4x1x24xf32>
    %c2_104 = arith.constant 2 : index
    %c0_105 = arith.constant 0 : index
    %c0_106 = arith.constant 0 : index
    %235 = vector.load %arg5[%c2_104, %c0_105, %c0_106] : memref<3x32x32xf32, #tpu.memory_space<vmem>>, vector<1x32x32xf32>
    %236 = vector.shape_cast %235 : vector<1x32x32xf32> to vector<32x32xf32>
    %237 = vector.shape_cast %229 : vector<16x32xf32> to vector<2x1x8x32xf32>
    %238 = vector.shape_cast %237 : vector<2x1x8x32xf32> to vector<2x1x8x32xf32>
    %239 = vector.broadcast %238 : vector<2x1x8x32xf32> to vector<2x4x8x32xf32>
    %240 = vector.shape_cast %239 : vector<2x4x8x32xf32> to vector<8x8x32xf32>
    %241 = vector.shape_cast %232 : vector<4x32x24xf32> to vector<1x4x32x24xf32>
    %242 = vector.shape_cast %241 : vector<1x4x32x24xf32> to vector<1x4x32x24xf32>
    %243 = vector.broadcast %242 : vector<1x4x32x24xf32> to vector<2x4x32x24xf32>
    %244 = vector.shape_cast %243 : vector<2x4x32x24xf32> to vector<8x32x24xf32>
    %245 = vector.shape_cast %234 : vector<4x1x24xf32> to vector<1x4x1x24xf32>
    %246 = vector.shape_cast %245 : vector<1x4x1x24xf32> to vector<1x4x1x24xf32>
    %247 = vector.broadcast %246 : vector<1x4x1x24xf32> to vector<2x4x1x24xf32>
    %248 = vector.shape_cast %247 : vector<2x4x1x24xf32> to vector<8x1x24xf32>
    %cst_107 = arith.constant dense<0.000000e+00> : vector<8x8x24xf32>
    %249 = tpu.matmul %240, %244, %cst_107 {dimension_numbers = #tpu.dot_dimension_numbers<[2], [1], [1], [2], [0, 0, 0, 1, 1, 2], [0], [0]>} : vector<8x8x32xf32>, vector<8x32x24xf32>, vector<8x8x24xf32> -> vector<8x8x24xf32>
    %250 = vector.broadcast %248 : vector<8x1x24xf32> to vector<8x8x24xf32>
    %251 = arith.addf %249, %250 : vector<8x8x24xf32>
    %252 = vector.extract_strided_slice %251 {offsets = [0, 0, 0], sizes = [8, 8, 8], strides = [1, 1, 1]} : vector<8x8x24xf32> to vector<8x8x8xf32>
    %253 = vector.extract_strided_slice %251 {offsets = [0, 0, 8], sizes = [8, 8, 8], strides = [1, 1, 1]} : vector<8x8x24xf32> to vector<8x8x8xf32>
    %254 = vector.extract_strided_slice %251 {offsets = [0, 0, 16], sizes = [8, 8, 8], strides = [1, 1, 1]} : vector<8x8x24xf32> to vector<8x8x8xf32>
    %cst_108 = arith.constant dense<0.000000e+00> : vector<8x8x8xf32>
    %255 = tpu.matmul %252, %253, %cst_108 {dimension_numbers = #tpu.dot_dimension_numbers<[2], [2], [1], [1], [0, 0, 0, 1, 1, 1], [0], [0]>} : vector<8x8x8xf32>, vector<8x8x8xf32>, vector<8x8x8xf32> -> vector<8x8x8xf32>
    %cst_109 = arith.constant 0.353553385 : f32
    %256 = vector.broadcast %cst_109 : f32 to vector<8x8x8xf32>
    %257 = arith.mulf %255, %256 : vector<8x8x8xf32>
    %cst_110 = arith.constant dense<0xFF800000> : vector<8x8xf32>
    %258 = vector.multi_reduction <maximumf>, %257, %cst_110 [2] : vector<8x8x8xf32> to vector<8x8xf32>
    %259 = vector.shape_cast %258 : vector<8x8xf32> to vector<8x8x1xf32>
    %260 = vector.broadcast %259 : vector<8x8x1xf32> to vector<8x8x8xf32>
    %261 = arith.subf %257, %260 : vector<8x8x8xf32>
    %262 = math.exp %261 : vector<8x8x8xf32>
    %cst_111 = arith.constant dense<0.000000e+00> : vector<8x8xf32>
    %263 = vector.multi_reduction <add>, %262, %cst_111 [2] : vector<8x8x8xf32> to vector<8x8xf32>
    %264 = vector.shape_cast %263 : vector<8x8xf32> to vector<8x8x1xf32>
    %265 = tpu.reciprocal %264 {approx = true} : vector<8x8x1xf32> -> vector<8x8x1xf32>
    %266 = vector.broadcast %265 : vector<8x8x1xf32> to vector<8x8x8xf32>
    %267 = arith.mulf %262, %266 : vector<8x8x8xf32>
    %cst_112 = arith.constant dense<0.000000e+00> : vector<8x8x8xf32>
    %268 = tpu.matmul %254, %267, %cst_112 {dimension_numbers = #tpu.dot_dimension_numbers<[1], [2], [2], [1], [0, 0, 0, 2, 1, 1], [0], [0]>} : vector<8x8x8xf32>, vector<8x8x8xf32>, vector<8x8x8xf32> -> vector<8x8x8xf32>
    %269 = vector.shape_cast %268 : vector<8x8x8xf32> to vector<2x32x8xf32>
    %270 = tpu.transpose %269, [0, 2, 1] : vector<2x32x8xf32> -> vector<2x8x32xf32>
    %271 = vector.shape_cast %270 : vector<2x8x32xf32> to vector<16x32xf32>
    %cst_113 = arith.constant dense<0.000000e+00> : vector<16x32xf32>
    %272 = tpu.matmul %271, %236, %cst_113 {dimension_numbers = #tpu.dot_dimension_numbers<[1], [0], [0], [1], [0, 0, 1, 1], [], []>} : vector<16x32xf32>, vector<32x32xf32>, vector<16x32xf32> -> vector<16x32xf32>
    %273 = vector.broadcast %230 : vector<1x32xf32> to vector<16x32xf32>
    %274 = arith.addf %272, %273 : vector<16x32xf32>
    %c3 = arith.constant 3 : index
    %c0_114 = arith.constant 0 : index
    %275 = vector.load %arg2[%c3, %c0_114] : memref<5x32xf32, #tpu.memory_space<vmem>>, vector<1x32xf32>
    %cst_115 = arith.constant dense<0.000000e+00> : vector<1x16xf32>
    %276 = tpu.matmul %275, %274, %cst_115 {dimension_numbers = #tpu.dot_dimension_numbers<[1], [1], [0], [0], [0, 0, 1, 0], [], []>} : vector<1x32xf32>, vector<16x32xf32>, vector<1x16xf32> -> vector<1x16xf32>
    %c4 = arith.constant 4 : index
    %c0_116 = arith.constant 0 : index
    %277 = vector.load %arg2[%c4, %c0_116] : memref<5x32xf32, #tpu.memory_space<vmem>>, vector<1x1xf32>
    %278 = vector.broadcast %277 : vector<1x1xf32> to vector<1x16xf32>
    %279 = arith.addf %276, %278 : vector<1x16xf32>
    %c0_117 = arith.constant 0 : index
    %c0_118 = arith.constant 0 : index
    %280 = vector.load %arg11[%c0_117, %c0_118] : memref<1x16xf32, #tpu.memory_space<vmem>>, vector<1x16xf32>
    tpu.vector_store %arg11[%c0_117, %c0_118], %279 {strides = array<i32>} : memref<1x16xf32, #tpu.memory_space<vmem>>, vector<1x16xf32>,
    return
  }
  func.func @transform_0(%arg0: i32) -> (i32, i32) {
    %c0_i32 = arith.constant 0 : i32
    %c0_i32_0 = arith.constant 0 : i32
    %c0_i32_1 = arith.constant 0 : i32
    return %c0_i32, %c0_i32_0 : i32, i32
  }
  func.func @transform_1(%arg0: i32) -> (i32, i32) {
    %c0_i32 = arith.constant 0 : i32
    %c0_i32_0 = arith.constant 0 : i32
    %c0_i32_1 = arith.constant 0 : i32
    return %c0_i32, %c0_i32_0 : i32, i32
  }
  func.func @transform_2(%arg0: i32) -> (i32, i32, i32, i32) {
    %c0_i32 = arith.constant 0 : i32
    %c0_i32_0 = arith.constant 0 : i32
    %c0_i32_1 = arith.constant 0 : i32
    %c0_i32_2 = arith.constant 0 : i32
    %c0_i32_3 = arith.constant 0 : i32
    return %c0_i32, %c0_i32_0, %c0_i32_1, %c0_i32_2 : i32, i32, i32, i32
  }
  func.func @transform_3(%arg0: i32) -> (i32, i32, i32, i32) {
    %c0_i32 = arith.constant 0 : i32
    %c0_i32_0 = arith.constant 0 : i32
    %c0_i32_1 = arith.constant 0 : i32
    %c0_i32_2 = arith.constant 0 : i32
    %c0_i32_3 = arith.constant 0 : i32
    return %c0_i32, %c0_i32_0, %c0_i32_1, %c0_i32_2 : i32, i32, i32, i32
  }
  func.func @transform_4(%arg0: i32) -> (i32, i32, i32) {
    %c0_i32 = arith.constant 0 : i32
    %c0_i32_0 = arith.constant 0 : i32
    %c0_i32_1 = arith.constant 0 : i32
    %c0_i32_2 = arith.constant 0 : i32
    return %c0_i32, %c0_i32_0, %c0_i32_1 : i32, i32, i32
  }
  func.func @transform_5(%arg0: i32) -> (i32, i32, i32) {
    %c0_i32 = arith.constant 0 : i32
    %c0_i32_0 = arith.constant 0 : i32
    %c0_i32_1 = arith.constant 0 : i32
    %c0_i32_2 = arith.constant 0 : i32
    return %c0_i32, %c0_i32_0, %c0_i32_1 : i32, i32, i32
  }
  func.func @transform_6(%arg0: i32) -> (i32, i32, i32) {
    %c0_i32 = arith.constant 0 : i32
    %c0_i32_0 = arith.constant 0 : i32
    %c0_i32_1 = arith.constant 0 : i32
    %c0_i32_2 = arith.constant 0 : i32
    return %c0_i32, %c0_i32_0, %c0_i32_1 : i32, i32, i32
  }
  func.func @transform_7(%arg0: i32) -> (i32, i32, i32) {
    %c0_i32 = arith.constant 0 : i32
    %c0_i32_0 = arith.constant 0 : i32
    %c0_i32_1 = arith.constant 0 : i32
    %c0_i32_2 = arith.constant 0 : i32
    return %c0_i32, %c0_i32_0, %c0_i32_1 : i32, i32, i32
  }
  func.func @transform_8(%arg0: i32) -> (i32, i32, i32) {
    %c0_i32 = arith.constant 0 : i32
    %c0_i32_0 = arith.constant 0 : i32
    %c0_i32_1 = arith.constant 0 : i32
    %c0_i32_2 = arith.constant 0 : i32
    return %c0_i32, %c0_i32_0, %c0_i32_1 : i32, i32, i32
  }
  func.func @transform_9(%arg0: i32) -> (i32, i32, i32) {
    %c0_i32 = arith.constant 0 : i32
    %c0_i32_0 = arith.constant 0 : i32
    %c0_i32_1 = arith.constant 0 : i32
    %c0_i32_2 = arith.constant 0 : i32
    return %c0_i32, %c0_i32_0, %c0_i32_1 : i32, i32, i32
  }
  func.func @transform_10(%arg0: i32) -> (i32, i32) {
    %c0_i32 = arith.constant 0 : i32
    %c0_i32_0 = arith.constant 0 : i32
    %c0_i32_1 = arith.constant 0 : i32
    return %c0_i32, %c0_i32_0 : i32, i32
  }
}

</mosaic_0001>

<llo_original>
// kernel: informer_forward.1
$region0: #{informer_forward.1}
  #allocation0 [shape = 'u32[]', space=smem, size = 0x4, offset = 0x4, fixed_abs, tag = 'smem constant byte address 0x4 - core index']
  #allocation1 [shape = 'u32[144,128]{1,0:T(1,128)}', space=vmem, size = 0x12000, scoped, tag = 'internal scratch']
  %s0 = inlined_call_operand.vmem [shape: f32[16,1], index: 0, kind: input, shape index: {}]
  %s1 = inlined_call_operand.vmem [shape: f32[5,32], index: 1, kind: input, shape index: {}]
  %s2 = inlined_call_operand.vmem [shape: f32[3,4,32,24], index: 2, kind: input, shape index: {}]
  %s3 = inlined_call_operand.vmem [shape: f32[3,4,1,24], index: 3, kind: input, shape index: {}]
  %s4 = inlined_call_operand.vmem [shape: f32[3,32,32], index: 4, kind: input, shape index: {}]
  %s5 = inlined_call_operand.vmem [shape: f32[2,7,32], index: 5, kind: input, shape index: {}]
  %s6 = inlined_call_operand.vmem [shape: f32[2,32,32], index: 6, kind: input, shape index: {}]
  %s7 = inlined_call_operand.vmem [shape: f32[2,32,32], index: 7, kind: input, shape index: {}]
  %s8 = inlined_call_operand.vmem [shape: f32[2,32,16], index: 8, kind: input, shape index: {}]
  %s9 = inlined_call_operand.vmem [shape: f32[2,16,32], index: 9, kind: input, shape index: {}]
  %s10 = inlined_call_operand.vmem [shape: f32[1,16], index: 10, kind: output, shape index: {}]
  %s11 = sld [smem:[#allocation0]]
  $region50: #{informer_forward.1} parent=0
    _
  %s13 = ssub.s32 1, %s11
  %s14 = scalar_select 0, %s13, %s11
  // Predicated region
  $region2: #{informer_forward.1} parent=0 // pred_check
    _
  $region3: #{informer_forward.1} parent=0 // pred_check_branch
    %16 = sbr.rel (0) target = $region5
  $region4: #{informer_forward.1} parent=0 // pred_region
    _
  $region5: #{informer_forward.1} parent=0 // pred_fallthru
    _
  // Predicated region
  $region6: #{informer_forward.1} parent=0 // pred_check
    _
  $region7: #{informer_forward.1} parent=0 // pred_check_branch
    %18 = sbr.rel (0) target = $region9
  $region8: #{informer_forward.1} parent=0 // pred_region
    _
  $region9: #{informer_forward.1} parent=0 // pred_fallthru
    _
  // Predicated region
  $region10: #{informer_forward.1} parent=0 // pred_check
    _
  $region11: #{informer_forward.1} parent=0 // pred_check_branch
    %20 = sbr.rel (0) target = $region13
  $region12: #{informer_forward.1} parent=0 // pred_region
    _
  $region13: #{informer_forward.1} parent=0 // pred_fallthru
    _
  // Predicated region
  $region14: #{informer_forward.1} parent=0 // pred_check
    _
  $region15: #{informer_forward.1} parent=0 // pred_check_branch
    %22 = sbr.rel (0) target = $region17
  $region16: #{informer_forward.1} parent=0 // pred_region
    _
  $region17: #{informer_forward.1} parent=0 // pred_fallthru
    _
  // Predicated region
  $region18: #{informer_forward.1} parent=0 // pred_check
    _
  $region19: #{informer_forward.1} parent=0 // pred_check_branch
    %24 = sbr.rel (0) target = $region21
  $region20: #{informer_forward.1} parent=0 // pred_region
    _
  $region21: #{informer_forward.1} parent=0 // pred_fallthru
    _
  // Predicated region
  $region22: #{informer_forward.1} parent=0 // pred_check
    _
  $region23: #{informer_forward.1} parent=0 // pred_check_branch
    %26 = sbr.rel (0) target = $region25
  $region24: #{informer_forward.1} parent=0 // pred_region
    _
  $region25: #{informer_forward.1} parent=0 // pred_fallthru
    _
  // Predicated region
  $region26: #{informer_forward.1} parent=0 // pred_check
    _
  $region27: #{informer_forward.1} parent=0 // pred_check_branch
    %28 = sbr.rel (0) target = $region29
  $region28: #{informer_forward.1} parent=0 // pred_region
    _
  $region29: #{informer_forward.1} parent=0 // pred_fallthru
    _
  // Predicated region
  $region30: #{informer_forward.1} parent=0 // pred_check
    _
  $region31: #{informer_forward.1} parent=0 // pred_check_branch
    %30 = sbr.rel (0) target = $region33
  $region32: #{informer_forward.1} parent=0 // pred_region
    _
  $region33: #{informer_forward.1} parent=0 // pred_fallthru
    _
  // Predicated region
  $region34: #{informer_forward.1} parent=0 // pred_check
    _
  $region35: #{informer_forward.1} parent=0 // pred_check_branch
    %32 = sbr.rel (0) target = $region37
  $region36: #{informer_forward.1} parent=0 // pred_region
    _
  $region37: #{informer_forward.1} parent=0 // pred_fallthru
    _
  // Predicated region
  $region38: #{informer_forward.1} parent=0 // pred_check
    _
  $region39: #{informer_forward.1} parent=0 // pred_check_branch
    %34 = sbr.rel (0) target = $region41
  $region40: #{informer_forward.1} parent=0 // pred_region
    _
  $region41: #{informer_forward.1} parent=0 // pred_fallthru
    _
  %v35 = vld [vmem:[%s0] sm:$0xff]
  %v36 = vld [vmem:[%s0 + $0x8] sm:$0xff]
  %v37 = vld [vmem:[%s1] sm:$0x1]
  %39 = vset.pattern.permute.xlu0 0
  %40 = vperm.xlu0 %39, %v35
  %v41 = vpop.permute.xlu0 %40
  %44 = vset.pattern.permute.xlu0 0
  %45 = vperm.xlu0 %44, %v36
  %v46 = vpop.permute.xlu0 %45
  %v48 = vlaneseq
  %v49 = vshrl.u32 %v48, 7
  %v50 = vsub.s32 0, %v49
  %v51 = vrot.slane %v37, %v50
  %v52 = vmul.f32 %v41, %v51
  %v53 = vmul.f32 %v46, %v51
  %v54 = vld [vmem:[%s1 + $0x1] sm:$0x1]
  %v55 = vlaneseq
  %v56 = vshrl.u32 %v55, 7
  %v57 = vsub.s32 0, %v56
  %v58 = vrot.slane %v54, %v57
  %v59 = vadd.f32 %v52, %v58
  %v60 = vadd.f32 %v53, %v58
  %v61 = vld [vmem:[%s5] sm:$0x7f]
  %v62 = vld [vmem:[%s2] sm:$0xff]
  %v63 = vld [vmem:[%s2 + $0x8] sm:$0xff]
  %v64 = vld [vmem:[%s2 + $0x10] sm:$0xff]
  %v65 = vld [vmem:[%s2 + $0x18] sm:$0xff]
  %v66 = vld [vmem:[%s2 + $0x20] sm:$0xff]
  %v67 = vld [vmem:[%s2 + $0x28] sm:$0xff]
  %v68 = vld [vmem:[%s2 + $0x30] sm:$0xff]
  %v69 = vld [vmem:[%s2 + $0x38] sm:$0xff]
  %v70 = vld [vmem:[%s2 + $0x40] sm:$0xff]
  %v71 = vld [vmem:[%s2 + $0x48] sm:$0xff]
  %v72 = vld [vmem:[%s2 + $0x50] sm:$0xff]
  %v73 = vld [vmem:[%s2 + $0x58] sm:$0xff]
  %v74 = vld [vmem:[%s2 + $0x60] sm:$0xff]
  %v75 = vld [vmem:[%s2 + $0x68] sm:$0xff]
  %v76 = vld [vmem:[%s2 + $0x70] sm:$0xff]
  %v77 = vld [vmem:[%s2 + $0x78] sm:$0xff]
  %v78 = vld [vmem:[%s3] sm:$0x1]
  %v79 = vld [vmem:[%s3 + $0x1] sm:$0x1]
  %v80 = vld [vmem:[%s3 + $0x2] sm:$0x1]
  %v81 = vld [vmem:[%s3 + $0x3] sm:$0x1]
  %v82 = vld [vmem:[%s4] sm:$0xff]
  %v83 = vld [vmem:[%s4 + $0x8] sm:$0xff]
  %v84 = vld [vmem:[%s4 + $0x10] sm:$0xff]
  %v85 = vld [vmem:[%s4 + $0x18] sm:$0xff]
  %v90 = vlaneseq
  %v91 = vshrl.u32 %v90, 7
  %v92 = vsub.s32 0, %v91
  %v93 = vrot.slane %v78, %v92
  %v94 = vlaneseq
  %v95 = vshrl.u32 %v94, 7
  %v96 = vsub.s32 0, %v95
  %v97 = vrot.slane %v79, %v96
  %v98 = vlaneseq
  %v99 = vshrl.u32 %v98, 7
  %v100 = vsub.s32 0, %v99
  %v101 = vrot.slane %v80, %v100
  %v102 = vlaneseq
  %v103 = vshrl.u32 %v102, 7
  %v104 = vsub.s32 0, %v103
  %v105 = vrot.slane %v81, %v104
  %vm110 = vcmask 261120
  %v112 = vsel %vm110, %v59, 0
  %114 = vmatprep.subr.mxu0 0.0
  %115 = vmatpush1.msra.mxu0 0.0
  %116 = vmatprep.subr.mxu0 0.0
  %117 = vmatpush1.msra.mxu0 0.0
  %118 = vmatprep.subr.mxu0 0.0
  %119 = vmatpush1.msra.mxu0 0.0
  %120 = vmatprep.subr.mxu0 0.0
  %121 = vmatpush1.msra.mxu0 0.0
  %122 = vmatprep.subr.mxu0 0.0
  %123 = vmatpush1.msra.mxu0 0.0
  %124 = vmatprep.subr.mxu0 0.0
  %125 = vmatpush1.msra.mxu0 0.0
  %126 = vmatprep.subr.mxu0 0.0
  %127 = vmatpush1.msra.mxu0 0.0
  %128 = vmatprep.subr.mxu0 0.0
  %129 = vmatpush1.msra.mxu0 0.0
  %130 = vmatprep.subr.mxu0 0.0
  %131 = vmatpush1.msra.mxu0 0.0
  %132 = vmatprep.subr.mxu0 0.0
  %133 = vmatpush1.msra.mxu0 0.0
  %134 = vmatprep.subr.mxu0 0.0
  %135 = vmatpush1.msra.mxu0 0.0
  %136 = vmatprep.subr.mxu0 0.0
  %137 = vmatpush1.msra.mxu0 0.0
  %138 = vmatprep.subr.mxu0 0.0
  %139 = vmatpush1.msra.mxu0 %v65
  %140 = vmatprep.subr.mxu0 0.0
  %141 = vmatpush1.msra.mxu0 %v64
  %142 = vmatprep.subr.mxu0 0.0
  %143 = vmatpush1.msra.mxu0 %v63
  %144 = vmatprep.subr.mxu0 0.0
  %145 = vmatpush1.msra.mxu0 %v62
  %146 = vmatprep.subr.mxu0 0.0
  %147 = vmatpush2.msra.mxu0 0.0
  %148 = vmatprep.subr.mxu0 0.0
  %149 = vmatpush2.msra.mxu0 0.0
  %150 = vmatprep.subr.mxu0 0.0
  %151 = vmatpush2.msra.mxu0 0.0
  %152 = vmatprep.subr.mxu0 0.0
  %153 = vmatpush2.msra.mxu0 0.0
  %154 = vmatprep.subr.mxu0 0.0
  %155 = vmatpush2.msra.mxu0 0.0
  %156 = vmatprep.subr.mxu0 0.0
  %157 = vmatpush2.msra.mxu0 0.0
  %158 = vmatprep.subr.mxu0 0.0
  %159 = vmatpush2.msra.mxu0 0.0
  %160 = vmatprep.subr.mxu0 0.0
  %161 = vmatpush2.msra.mxu0 0.0
  %162 = vmatprep.subr.mxu0 0.0
  %163 = vmatpush2.msra.mxu0 0.0
  %164 = vmatprep.subr.mxu0 0.0
  %165 = vmatpush2.msra.mxu0 0.0
  %166 = vmatprep.subr.mxu0 0.0
  %167 = vmatpush2.msra.mxu0 0.0
  %168 = vmatprep.subr.mxu0 0.0
  %169 = vmatpush2.msra.mxu0 0.0
  %170 = vmatprep.subr.mxu0 0.0
  %171 = vmatpush2.msra.mxu0 0.0
  %172 = vmatprep.subr.mxu0 0.0
  %173 = vmatpush2.msra.mxu0 0.0
  %174 = vmatprep.subr.mxu0 0.0
  %175 = vmatpush2.msra.mxu0 0.0
  %176 = vmatprep.subr.mxu0 0.0
  %177 = vmatpush2.msra.mxu0 0.0
  %178 = vmatprep.mubr.f32.mxu0 0.0
  %179 = vmatmul.mubr.f32.gmra.mxu0 %v112
  %v180 = vpop.f32.mrf.mxu0
  %v181 = vadd.f32 %v93, %v180
  %v182 = vpop.f32.mrf.mxu0
  %183 = vdwg.mxu0
  %184 = vmatprep.subr.mxu0 0.0
  %185 = vmatpush1.msra.mxu0 0.0
  %186 = vmatprep.subr.mxu0 0.0
  %187 = vmatpush1.msra.mxu0 0.0
  %188 = vmatprep.subr.mxu0 0.0
  %189 = vmatpush1.msra.mxu0 0.0
  %190 = vmatprep.subr.mxu0 0.0
  %191 = vmatpush1.msra.mxu0 0.0
  %192 = vmatprep.subr.mxu0 0.0
  %193 = vmatpush1.msra.mxu0 0.0
  %194 = vmatprep.subr.mxu0 0.0
  %195 = vmatpush1.msra.mxu0 0.0
  %196 = vmatprep.subr.mxu0 0.0
  %197 = vmatpush1.msra.mxu0 0.0
  %198 = vmatprep.subr.mxu0 0.0
  %199 = vmatpush1.msra.mxu0 0.0
  %200 = vmatprep.subr.mxu0 0.0
  %201 = vmatpush1.msra.mxu0 0.0
  %202 = vmatprep.subr.mxu0 0.0
  %203 = vmatpush1.msra.mxu0 0.0
  %204 = vmatprep.subr.mxu0 0.0
  %205 = vmatpush1.msra.mxu0 0.0
  %206 = vmatprep.subr.mxu0 0.0
  %207 = vmatpush1.msra.mxu0 0.0
  %208 = vmatprep.subr.mxu0 0.0
  %209 = vmatpush1.msra.mxu0 %v69
  %210 = vmatprep.subr.mxu0 0.0
  %211 = vmatpush1.msra.mxu0 %v68
  %212 = vmatprep.subr.mxu0 0.0
  %213 = vmatpush1.msra.mxu0 %v67
  %214 = vmatprep.subr.mxu0 0.0
  %215 = vmatpush1.msra.mxu0 %v66
  %216 = vmatprep.subr.mxu0 0.0
  %217 = vmatpush2.msra.mxu0 0.0
  %218 = vmatprep.subr.mxu0 0.0
  %219 = vmatpush2.msra.mxu0 0.0
  %220 = vmatprep.subr.mxu0 0.0
  %221 = vmatpush2.msra.mxu0 0.0
  %222 = vmatprep.subr.mxu0 0.0
  %223 = vmatpush2.msra.mxu0 0.0
  %224 = vmatprep.subr.mxu0 0.0
  %225 = vmatpush2.msra.mxu0 0.0
  %226 = vmatprep.subr.mxu0 0.0
  %227 = vmatpush2.msra.mxu0 0.0
  %228 = vmatprep.subr.mxu0 0.0
  %229 = vmatpush2.msra.mxu0 0.0
  %230 = vmatprep.subr.mxu0 0.0
  %231 = vmatpush2.msra.mxu0 0.0
  %232 = vmatprep.subr.mxu0 0.0
  %233 = vmatpush2.msra.mxu0 0.0
  %234 = vmatprep.subr.mxu0 0.0
  %235 = vmatpush2.msra.mxu0 0.0
  %236 = vmatprep.subr.mxu0 0.0
  %237 = vmatpush2.msra.mxu0 0.0
  %238 = vmatprep.subr.mxu0 0.0
  %239 = vmatpush2.msra.mxu0 0.0
  %240 = vmatprep.subr.mxu0 0.0
  %241 = vmatpush2.msra.mxu0 0.0
  %242 = vmatprep.subr.mxu0 0.0
  %243 = vmatpush2.msra.mxu0 0.0
  %244 = vmatprep.subr.mxu0 0.0
  %245 = vmatpush2.msra.mxu0 0.0
  %246 = vmatprep.subr.mxu0 0.0
  %247 = vmatpush2.msra.mxu0 0.0
  %248 = vmatprep.mubr.f32.mxu0 0.0
  %249 = vmatmul.mubr.f32.gmra.mxu0 %v112
  %v250 = vpop.f32.mrf.mxu0
  %v251 = vadd.f32 %v97, %v250
  %v252 = vpop.f32.mrf.mxu0
  %253 = vdwg.mxu0
  %254 = vmatprep.subr.mxu0 0.0
  %255 = vmatpush1.msra.mxu0 0.0
  %256 = vmatprep.subr.mxu0 0.0
  %257 = vmatpush1.msra.mxu0 0.0
  %258 = vmatprep.subr.mxu0 0.0
  %259 = vmatpush1.msra.mxu0 0.0
  %260 = vmatprep.subr.mxu0 0.0
  %261 = vmatpush1.msra.mxu0 0.0
  %262 = vmatprep.subr.mxu0 0.0
  %263 = vmatpush1.msra.mxu0 0.0
  %264 = vmatprep.subr.mxu0 0.0
  %265 = vmatpush1.msra.mxu0 0.0
  %266 = vmatprep.subr.mxu0 0.0
  %267 = vmatpush1.msra.mxu0 0.0
  %268 = vmatprep.subr.mxu0 0.0
  %269 = vmatpush1.msra.mxu0 0.0
  %270 = vmatprep.subr.mxu0 0.0
  %271 = vmatpush1.msra.mxu0 0.0
  %272 = vmatprep.subr.mxu0 0.0
  %273 = vmatpush1.msra.mxu0 0.0
  %274 = vmatprep.subr.mxu0 0.0
  %275 = vmatpush1.msra.mxu0 0.0
  %276 = vmatprep.subr.mxu0 0.0
  %277 = vmatpush1.msra.mxu0 0.0
  %278 = vmatprep.subr.mxu0 0.0
  %279 = vmatpush1.msra.mxu0 %v73
  %280 = vmatprep.subr.mxu0 0.0
  %281 = vmatpush1.msra.mxu0 %v72
  %282 = vmatprep.subr.mxu0 0.0
  %283 = vmatpush1.msra.mxu0 %v71
  %284 = vmatprep.subr.mxu0 0.0
  %285 = vmatpush1.msra.mxu0 %v70
  %286 = vmatprep.subr.mxu0 0.0
  %287 = vmatpush2.msra.mxu0 0.0
  %288 = vmatprep.subr.mxu0 0.0
  %289 = vmatpush2.msra.mxu0 0.0
  %290 = vmatprep.subr.mxu0 0.0
  %291 = vmatpush2.msra.mxu0 0.0
  %292 = vmatprep.subr.mxu0 0.0
  %293 = vmatpush2.msra.mxu0 0.0
  %294 = vmatprep.subr.mxu0 0.0
  %295 = vmatpush2.msra.mxu0 0.0
  %296 = vmatprep.subr.mxu0 0.0
  %297 = vmatpush2.msra.mxu0 0.0
  %298 = vmatprep.subr.mxu0 0.0
  %299 = vmatpush2.msra.mxu0 0.0
  %300 = vmatprep.subr.mxu0 0.0
  %301 = vmatpush2.msra.mxu0 0.0
  %302 = vmatprep.subr.mxu0 0.0
  %303 = vmatpush2.msra.mxu0 0.0
  %304 = vmatprep.subr.mxu0 0.0
  %305 = vmatpush2.msra.mxu0 0.0
  %306 = vmatprep.subr.mxu0 0.0
  %307 = vmatpush2.msra.mxu0 0.0
  %308 = vmatprep.subr.mxu0 0.0
  %309 = vmatpush2.msra.mxu0 0.0
  %310 = vmatprep.subr.mxu0 0.0
  %311 = vmatpush2.msra.mxu0 0.0
  %312 = vmatprep.subr.mxu0 0.0
  %313 = vmatpush2.msra.mxu0 0.0
  %314 = vmatprep.subr.mxu0 0.0
  %315 = vmatpush2.msra.mxu0 0.0
  %316 = vmatprep.subr.mxu0 0.0
  %317 = vmatpush2.msra.mxu0 0.0
  %318 = vmatprep.mubr.f32.mxu0 0.0
  %319 = vmatmul.mubr.f32.gmra.mxu0 %v112
  %v320 = vpop.f32.mrf.mxu0
  %v321 = vadd.f32 %v101, %v320
  %v322 = vpop.f32.mrf.mxu0
  %323 = vdwg.mxu0
  %324 = vmatprep.subr.mxu0 0.0
  %325 = vmatpush1.msra.mxu0 0.0
  %326 = vmatprep.subr.mxu0 0.0
  %327 = vmatpush1.msra.mxu0 0.0
  %328 = vmatprep.subr.mxu0 0.0
  %329 = vmatpush1.msra.mxu0 0.0
  %330 = vmatprep.subr.mxu0 0.0
  %331 = vmatpush1.msra.mxu0 0.0
  %332 = vmatprep.subr.mxu0 0.0
  %333 = vmatpush1.msra.mxu0 0.0
  %334 = vmatprep.subr.mxu0 0.0
  %335 = vmatpush1.msra.mxu0 0.0
  %336 = vmatprep.subr.mxu0 0.0
  %337 = vmatpush1.msra.mxu0 0.0
  %338 = vmatprep.subr.mxu0 0.0
  %339 = vmatpush1.msra.mxu0 0.0
  %340 = vmatprep.subr.mxu0 0.0
  %341 = vmatpush1.msra.mxu0 0.0
  %342 = vmatprep.subr.mxu0 0.0
  %343 = vmatpush1.msra.mxu0 0.0
  %344 = vmatprep.subr.mxu0 0.0
  %345 = vmatpush1.msra.mxu0 0.0
  %346 = vmatprep.subr.mxu0 0.0
  %347 = vmatpush1.msra.mxu0 0.0
  %348 = vmatprep.subr.mxu0 0.0
  %349 = vmatpush1.msra.mxu0 %v77
  %350 = vmatprep.subr.mxu0 0.0
  %351 = vmatpush1.msra.mxu0 %v76
  %352 = vmatprep.subr.mxu0 0.0
  %353 = vmatpush1.msra.mxu0 %v75
  %354 = vmatprep.subr.mxu0 0.0
  %355 = vmatpush1.msra.mxu0 %v74
  %356 = vmatprep.subr.mxu0 0.0
  %357 = vmatpush2.msra.mxu0 0.0
  %358 = vmatprep.subr.mxu0 0.0
  %359 = vmatpush2.msra.mxu0 0.0
  %360 = vmatprep.subr.mxu0 0.0
  %361 = vmatpush2.msra.mxu0 0.0
  %362 = vmatprep.subr.mxu0 0.0
  %363 = vmatpush2.msra.mxu0 0.0
  %364 = vmatprep.subr.mxu0 0.0
  %365 = vmatpush2.msra.mxu0 0.0
  %366 = vmatprep.subr.mxu0 0.0
  %367 = vmatpush2.msra.mxu0 0.0
  %368 = vmatprep.subr.mxu0 0.0
  %369 = vmatpush2.msra.mxu0 0.0
  %370 = vmatprep.subr.mxu0 0.0
  %371 = vmatpush2.msra.mxu0 0.0
  %372 = vmatprep.subr.mxu0 0.0
  %373 = vmatpush2.msra.mxu0 0.0
  %374 = vmatprep.subr.mxu0 0.0
  %375 = vmatpush2.msra.mxu0 0.0
  %376 = vmatprep.subr.mxu0 0.0
  %377 = vmatpush2.msra.mxu0 0.0
  %378 = vmatprep.subr.mxu0 0.0
  %379 = vmatpush2.msra.mxu0 0.0
  %380 = vmatprep.subr.mxu0 0.0
  %381 = vmatpush2.msra.mxu0 0.0
  %382 = vmatprep.subr.mxu0 0.0
  %383 = vmatpush2.msra.mxu0 0.0
  %384 = vmatprep.subr.mxu0 0.0
  %385 = vmatpush2.msra.mxu0 0.0
  %386 = vmatprep.subr.mxu0 0.0
  %387 = vmatpush2.msra.mxu0 0.0
  %388 = vmatprep.mubr.f32.mxu0 0.0
  %389 = vmatmul.mubr.f32.gmra.mxu0 %v112
  %v390 = vpop.f32.mrf.mxu0
  %v391 = vadd.f32 %v105, %v390
  %v392 = vpop.f32.mrf.mxu0
  %393 = vdwg.mxu0
  %v395 = vsel %vm110, %v60, 0
  %397 = vmatprep.subr.mxu0 0.0
  %398 = vmatpush1.msra.mxu0 0.0
  %399 = vmatprep.subr.mxu0 0.0
  %400 = vmatpush1.msra.mxu0 0.0
  %401 = vmatprep.subr.mxu0 0.0
  %402 = vmatpush1.msra.mxu0 0.0
  %403 = vmatprep.subr.mxu0 0.0
  %404 = vmatpush1.msra.mxu0 0.0
  %405 = vmatprep.subr.mxu0 0.0
  %406 = vmatpush1.msra.mxu0 0.0
  %407 = vmatprep.subr.mxu0 0.0
  %408 = vmatpush1.msra.mxu0 0.0
  %409 = vmatprep.subr.mxu0 0.0
  %410 = vmatpush1.msra.mxu0 0.0
  %411 = vmatprep.subr.mxu0 0.0
  %412 = vmatpush1.msra.mxu0 0.0
  %413 = vmatprep.subr.mxu0 0.0
  %414 = vmatpush1.msra.mxu0 0.0
  %415 = vmatprep.subr.mxu0 0.0
  %416 = vmatpush1.msra.mxu0 0.0
  %417 = vmatprep.subr.mxu0 0.0
  %418 = vmatpush1.msra.mxu0 0.0
  %419 = vmatprep.subr.mxu0 0.0
  %420 = vmatpush1.msra.mxu0 0.0
  %421 = vmatprep.subr.mxu0 0.0
  %422 = vmatpush1.msra.mxu0 %v65
  %423 = vmatprep.subr.mxu0 0.0
  %424 = vmatpush1.msra.mxu0 %v64
  %425 = vmatprep.subr.mxu0 0.0
  %426 = vmatpush1.msra.mxu0 %v63
  %427 = vmatprep.subr.mxu0 0.0
  %428 = vmatpush1.msra.mxu0 %v62
  %429 = vmatprep.subr.mxu0 0.0
  %430 = vmatpush2.msra.mxu0 0.0
  %431 = vmatprep.subr.mxu0 0.0
  %432 = vmatpush2.msra.mxu0 0.0
  %433 = vmatprep.subr.mxu0 0.0
  %434 = vmatpush2.msra.mxu0 0.0
  %435 = vmatprep.subr.mxu0 0.0
  %436 = vmatpush2.msra.mxu0 0.0
  %437 = vmatprep.subr.mxu0 0.0
  %438 = vmatpush2.msra.mxu0 0.0
  %439 = vmatprep.subr.mxu0 0.0
  %440 = vmatpush2.msra.mxu0 0.0
  %441 = vmatprep.subr.mxu0 0.0
  %442 = vmatpush2.msra.mxu0 0.0
  %443 = vmatprep.subr.mxu0 0.0
  %444 = vmatpush2.msra.mxu0 0.0
  %445 = vmatprep.subr.mxu0 0.0
  %446 = vmatpush2.msra.mxu0 0.0
  %447 = vmatprep.subr.mxu0 0.0
  %448 = vmatpush2.msra.mxu0 0.0
  %449 = vmatprep.subr.mxu0 0.0
  %450 = vmatpush2.msra.mxu0 0.0
  %451 = vmatprep.subr.mxu0 0.0
  %452 = vmatpush2.msra.mxu0 0.0
  %453 = vmatprep.subr.mxu0 0.0
  %454 = vmatpush2.msra.mxu0 0.0
  %455 = vmatprep.subr.mxu0 0.0
  %456 = vmatpush2.msra.mxu0 0.0
  %457 = vmatprep.subr.mxu0 0.0
  %458 = vmatpush2.msra.mxu0 0.0
  %459 = vmatprep.subr.mxu0 0.0
  %460 = vmatpush2.msra.mxu0 0.0
  %461 = vmatprep.mubr.f32.mxu0 0.0
  %462 = vmatmul.mubr.f32.gmra.mxu0 %v395
  %v463 = vpop.f32.mrf.mxu0
  %v464 = vadd.f32 %v93, %v463
  %v465 = vpop.f32.mrf.mxu0
  %466 = vdwg.mxu0
  %467 = vmatprep.subr.mxu0 0.0
  %468 = vmatpush1.msra.mxu0 0.0
  %469 = vmatprep.subr.mxu0 0.0
  %470 = vmatpush1.msra.mxu0 0.0
  %471 = vmatprep.subr.mxu0 0.0
  %472 = vmatpush1.msra.mxu0 0.0
  %473 = vmatprep.subr.mxu0 0.0
  %474 = vmatpush1.msra.mxu0 0.0
  %475 = vmatprep.subr.mxu0 0.0
  %476 = vmatpush1.msra.mxu0 0.0
  %477 = vmatprep.subr.mxu0 0.0
  %478 = vmatpush1.msra.mxu0 0.0
  %479 = vmatprep.subr.mxu0 0.0
  %480 = vmatpush1.msra.mxu0 0.0
  %481 = vmatprep.subr.mxu0 0.0
  %482 = vmatpush1.msra.mxu0 0.0
  %483 = vmatprep.subr.mxu0 0.0
  %484 = vmatpush1.msra.mxu0 0.0
  %485 = vmatprep.subr.mxu0 0.0
  %486 = vmatpush1.msra.mxu0 0.0
  %487 = vmatprep.subr.mxu0 0.0
  %488 = vmatpush1.msra.mxu0 0.0
  %489 = vmatprep.subr.mxu0 0.0
  %490 = vmatpush1.msra.mxu0 0.0
  %491 = vmatprep.subr.mxu0 0.0
  %492 = vmatpush1.msra.mxu0 %v69
  %493 = vmatprep.subr.mxu0 0.0
  %494 = vmatpush1.msra.mxu0 %v68
  %495 = vmatprep.subr.mxu0 0.0
  %496 = vmatpush1.msra.mxu0 %v67
  %497 = vmatprep.subr.mxu0 0.0
  %498 = vmatpush1.msra.mxu0 %v66
  %499 = vmatprep.subr.mxu0 0.0
  %500 = vmatpush2.msra.mxu0 0.0
  %501 = vmatprep.subr.mxu0 0.0
  %502 = vmatpush2.msra.mxu0 0.0
  %503 = vmatprep.subr.mxu0 0.0
  %504 = vmatpush2.msra.mxu0 0.0
  %505 = vmatprep.subr.mxu0 0.0
  %506 = vmatpush2.msra.mxu0 0.0
  %507 = vmatprep.subr.mxu0 0.0
  %508 = vmatpush2.msra.mxu0 0.0
  %509 = vmatprep.subr.mxu0 0.0
  %510 = vmatpush2.msra.mxu0 0.0
  %511 = vmatprep.subr.mxu0 0.0
  %512 = vmatpush2.msra.mxu0 0.0
  %513 = vmatprep.subr.mxu0 0.0
  %514 = vmatpush2.msra.mxu0 0.0
  %515 = vmatprep.subr.mxu0 0.0
  %516 = vmatpush2.msra.mxu0 0.0
  %517 = vmatprep.subr.mxu0 0.0
  %518 = vmatpush2.msra.mxu0 0.0
  %519 = vmatprep.subr.mxu0 0.0
  %520 = vmatpush2.msra.mxu0 0.0
  %521 = vmatprep.subr.mxu0 0.0
  %522 = vmatpush2.msra.mxu0 0.0
  %523 = vmatprep.subr.mxu0 0.0
  %524 = vmatpush2.msra.mxu0 0.0
  %525 = vmatprep.subr.mxu0 0.0
  %526 = vmatpush2.msra.mxu0 0.0
  %527 = vmatprep.subr.mxu0 0.0
  %528 = vmatpush2.msra.mxu0 0.0
  %529 = vmatprep.subr.mxu0 0.0
  %530 = vmatpush2.msra.mxu0 0.0
  %531 = vmatprep.mubr.f32.mxu0 0.0
  %532 = vmatmul.mubr.f32.gmra.mxu0 %v395
  %v533 = vpop.f32.mrf.mxu0
  %v534 = vadd.f32 %v97, %v533
  %v535 = vpop.f32.mrf.mxu0
  %536 = vdwg.mxu0
  %537 = vmatprep.subr.mxu0 0.0
  %538 = vmatpush1.msra.mxu0 0.0
  %539 = vmatprep.subr.mxu0 0.0
  %540 = vmatpush1.msra.mxu0 0.0
  %541 = vmatprep.subr.mxu0 0.0
  %542 = vmatpush1.msra.mxu0 0.0
  %543 = vmatprep.subr.mxu0 0.0
  %544 = vmatpush1.msra.mxu0 0.0
  %545 = vmatprep.subr.mxu0 0.0
  %546 = vmatpush1.msra.mxu0 0.0
  %547 = vmatprep.subr.mxu0 0.0
  %548 = vmatpush1.msra.mxu0 0.0
  %549 = vmatprep.subr.mxu0 0.0
  %550 = vmatpush1.msra.mxu0 0.0
  %551 = vmatprep.subr.mxu0 0.0
  %552 = vmatpush1.msra.mxu0 0.0
  %553 = vmatprep.subr.mxu0 0.0
  %554 = vmatpush1.msra.mxu0 0.0
  %555 = vmatprep.subr.mxu0 0.0
  %556 = vmatpush1.msra.mxu0 0.0
  %557 = vmatprep.subr.mxu0 0.0
  %558 = vmatpush1.msra.mxu0 0.0
  %559 = vmatprep.subr.mxu0 0.0
  %560 = vmatpush1.msra.mxu0 0.0
  %561 = vmatprep.subr.mxu0 0.0
  %562 = vmatpush1.msra.mxu0 %v73
  %563 = vmatprep.subr.mxu0 0.0
  %564 = vmatpush1.msra.mxu0 %v72
  %565 = vmatprep.subr.mxu0 0.0
  %566 = vmatpush1.msra.mxu0 %v71
  %567 = vmatprep.subr.mxu0 0.0
  %568 = vmatpush1.msra.mxu0 %v70
  %569 = vmatprep.subr.mxu0 0.0
  %570 = vmatpush2.msra.mxu0 0.0
  %571 = vmatprep.subr.mxu0 0.0
  %572 = vmatpush2.msra.mxu0 0.0
  %573 = vmatprep.subr.mxu0 0.0
  %574 = vmatpush2.msra.mxu0 0.0
  %575 = vmatprep.subr.mxu0 0.0
  %576 = vmatpush2.msra.mxu0 0.0
  %577 = vmatprep.subr.mxu0 0.0
  %578 = vmatpush2.msra.mxu0 0.0
  %579 = vmatprep.subr.mxu0 0.0
  %580 = vmatpush2.msra.mxu0 0.0
  %581 = vmatprep.subr.mxu0 0.0
  %582 = vmatpush2.msra.mxu0 0.0
  %583 = vmatprep.subr.mxu0 0.0
  %584 = vmatpush2.msra.mxu0 0.0
  %585 = vmatprep.subr.mxu0 0.0
  %586 = vmatpush2.msra.mxu0 0.0
  %587 = vmatprep.subr.mxu0 0.0
  %588 = vmatpush2.msra.mxu0 0.0
  %589 = vmatprep.subr.mxu0 0.0
  %590 = vmatpush2.msra.mxu0 0.0
  %591 = vmatprep.subr.mxu0 0.0
  %592 = vmatpush2.msra.mxu0 0.0
  %593 = vmatprep.subr.mxu0 0.0
  %594 = vmatpush2.msra.mxu0 0.0
  %595 = vmatprep.subr.mxu0 0.0
  %596 = vmatpush2.msra.mxu0 0.0
  %597 = vmatprep.subr.mxu0 0.0
  %598 = vmatpush2.msra.mxu0 0.0
  %599 = vmatprep.subr.mxu0 0.0
  %600 = vmatpush2.msra.mxu0 0.0
  %601 = vmatprep.mubr.f32.mxu0 0.0
  %602 = vmatmul.mubr.f32.gmra.mxu0 %v395
  %v603 = vpop.f32.mrf.mxu0
  %v604 = vadd.f32 %v101, %v603
  %v605 = vpop.f32.mrf.mxu0
  %606 = vdwg.mxu0
  %607 = vmatprep.subr.mxu0 0.0
  %608 = vmatpush1.msra.mxu0 0.0
  %609 = vmatprep.subr.mxu0 0.0
  %610 = vmatpush1.msra.mxu0 0.0
  %611 = vmatprep.subr.mxu0 0.0
  %612 = vmatpush1.msra.mxu0 0.0
  %613 = vmatprep.subr.mxu0 0.0
  %614 = vmatpush1.msra.mxu0 0.0
  %615 = vmatprep.subr.mxu0 0.0
  %616 = vmatpush1.msra.mxu0 0.0
  %617 = vmatprep.subr.mxu0 0.0
  %618 = vmatpush1.msra.mxu0 0.0
  %619 = vmatprep.subr.mxu0 0.0
  %620 = vmatpush1.msra.mxu0 0.0
  %621 = vmatprep.subr.mxu0 0.0
  %622 = vmatpush1.msra.mxu0 0.0
  %623 = vmatprep.subr.mxu0 0.0
  %624 = vmatpush1.msra.mxu0 0.0
  %625 = vmatprep.subr.mxu0 0.0
  %626 = vmatpush1.msra.mxu0 0.0
  %627 = vmatprep.subr.mxu0 0.0
  %628 = vmatpush1.msra.mxu0 0.0
  %629 = vmatprep.subr.mxu0 0.0
  %630 = vmatpush1.msra.mxu0 0.0
  %631 = vmatprep.subr.mxu0 0.0
  %632 = vmatpush1.msra.mxu0 %v77
  %633 = vmatprep.subr.mxu0 0.0
  %634 = vmatpush1.msra.mxu0 %v76
  %635 = vmatprep.subr.mxu0 0.0
  %636 = vmatpush1.msra.mxu0 %v75
  %637 = vmatprep.subr.mxu0 0.0
  %638 = vmatpush1.msra.mxu0 %v74
  %639 = vmatprep.subr.mxu0 0.0
  %640 = vmatpush2.msra.mxu0 0.0
  %641 = vmatprep.subr.mxu0 0.0
  %642 = vmatpush2.msra.mxu0 0.0
  %643 = vmatprep.subr.mxu0 0.0
  %644 = vmatpush2.msra.mxu0 0.0
  %645 = vmatprep.subr.mxu0 0.0
  %646 = vmatpush2.msra.mxu0 0.0
  %647 = vmatprep.subr.mxu0 0.0
  %648 = vmatpush2.msra.mxu0 0.0
  %649 = vmatprep.subr.mxu0 0.0
  %650 = vmatpush2.msra.mxu0 0.0
  %651 = vmatprep.subr.mxu0 0.0
  %652 = vmatpush2.msra.mxu0 0.0
  %653 = vmatprep.subr.mxu0 0.0
  %654 = vmatpush2.msra.mxu0 0.0
  %655 = vmatprep.subr.mxu0 0.0
  %656 = vmatpush2.msra.mxu0 0.0
  %657 = vmatprep.subr.mxu0 0.0
  %658 = vmatpush2.msra.mxu0 0.0
  %659 = vmatprep.subr.mxu0 0.0
  %660 = vmatpush2.msra.mxu0 0.0
  %661 = vmatprep.subr.mxu0 0.0
  %662 = vmatpush2.msra.mxu0 0.0
  %663 = vmatprep.subr.mxu0 0.0
  %664 = vmatpush2.msra.mxu0 0.0
  %665 = vmatprep.subr.mxu0 0.0
  %666 = vmatpush2.msra.mxu0 0.0
  %667 = vmatprep.subr.mxu0 0.0
  %668 = vmatpush2.msra.mxu0 0.0
  %669 = vmatprep.subr.mxu0 0.0
  %670 = vmatpush2.msra.mxu0 0.0
  %671 = vmatprep.mubr.f32.mxu0 0.0
  %672 = vmatmul.mubr.f32.gmra.mxu0 %v395
  %v673 = vpop.f32.mrf.mxu0
  %v674 = vadd.f32 %v105, %v673
  %v675 = vpop.f32.mrf.mxu0
  %676 = vdwg.mxu0
  %678 = vrot.lane.b32.xlu0 %v181, 120
  %v679 = vpop.permute.xlu0 %678
  %vm680 = vcmask 64512
  %v681 = vsel %vm680, %v181, 0
  %v683 = vsel %vm680, %v679, 0
  %685 = vmatprep.subr.mxu0 0.0
  %686 = vmatpush1.xpose.msra.mxu0 0.0
  %687 = vmatprep.subr.mxu0 0.0
  %688 = vmatpush1.xpose.msra.mxu0 0.0
  %689 = vmatprep.subr.mxu0 0.0
  %690 = vmatpush1.xpose.msra.mxu0 0.0
  %691 = vmatprep.subr.mxu0 0.0
  %692 = vmatpush1.xpose.msra.mxu0 0.0
  %693 = vmatprep.subr.mxu0 0.0
  %694 = vmatpush1.xpose.msra.mxu0 0.0
  %695 = vmatprep.subr.mxu0 0.0
  %696 = vmatpush1.xpose.msra.mxu0 0.0
  %697 = vmatprep.subr.mxu0 0.0
  %698 = vmatpush1.xpose.msra.mxu0 0.0
  %699 = vmatprep.subr.mxu0 0.0
  %700 = vmatpush1.xpose.msra.mxu0 0.0
  %701 = vmatprep.subr.mxu0 0.0
  %702 = vmatpush1.xpose.msra.mxu0 0.0
  %703 = vmatprep.subr.mxu0 0.0
  %704 = vmatpush1.xpose.msra.mxu0 0.0
  %705 = vmatprep.subr.mxu0 0.0
  %706 = vmatpush1.xpose.msra.mxu0 0.0
  %707 = vmatprep.subr.mxu0 0.0
  %708 = vmatpush1.xpose.msra.mxu0 0.0
  %709 = vmatprep.subr.mxu0 0.0
  %710 = vmatpush1.xpose.msra.mxu0 0.0
  %711 = vmatprep.subr.mxu0 0.0
  %712 = vmatpush1.xpose.msra.mxu0 0.0
  %713 = vmatprep.subr.mxu0 0.0
  %714 = vmatpush1.xpose.msra.mxu0 0.0
  %715 = vmatprep.subr.mxu0 0.0
  %716 = vmatpush1.xpose.msra.mxu0 %v683
  %717 = vmatprep.subr.mxu0 0.0
  %718 = vmatpush2.xpose.msra.mxu0 0.0
  %719 = vmatprep.subr.mxu0 0.0
  %720 = vmatpush2.xpose.msra.mxu0 0.0
  %721 = vmatprep.subr.mxu0 0.0
  %722 = vmatpush2.xpose.msra.mxu0 0.0
  %723 = vmatprep.subr.mxu0 0.0
  %724 = vmatpush2.xpose.msra.mxu0 0.0
  %725 = vmatprep.subr.mxu0 0.0
  %726 = vmatpush2.xpose.msra.mxu0 0.0
  %727 = vmatprep.subr.mxu0 0.0
  %728 = vmatpush2.xpose.msra.mxu0 0.0
  %729 = vmatprep.subr.mxu0 0.0
  %730 = vmatpush2.xpose.msra.mxu0 0.0
  %731 = vmatprep.subr.mxu0 0.0
  %732 = vmatpush2.xpose.msra.mxu0 0.0
  %733 = vmatprep.subr.mxu0 0.0
  %734 = vmatpush2.xpose.msra.mxu0 0.0
  %735 = vmatprep.subr.mxu0 0.0
  %736 = vmatpush2.xpose.msra.mxu0 0.0
  %737 = vmatprep.subr.mxu0 0.0
  %738 = vmatpush2.xpose.msra.mxu0 0.0
  %739 = vmatprep.subr.mxu0 0.0
  %740 = vmatpush2.xpose.msra.mxu0 0.0
  %741 = vmatprep.subr.mxu0 0.0
  %742 = vmatpush2.xpose.msra.mxu0 0.0
  %743 = vmatprep.subr.mxu0 0.0
  %744 = vmatpush2.xpose.msra.mxu0 0.0
  %745 = vmatprep.subr.mxu0 0.0
  %746 = vmatpush2.xpose.msra.mxu0 0.0
  %747 = vmatprep.subr.mxu0 0.0
  %748 = vmatpush2.xpose.msra.mxu0 0.0
  %749 = vmatprep.mubr.f32.mxu0 0.0
  %750 = vmatmul.mubr.f32.gmra.mxu0 %v681
  %v751 = vpop.f32.mrf.mxu0
  %v752 = vadd.f32 0.0, %v751
  %v753 = vpop.f32.mrf.mxu0
  %754 = vdwg.mxu0
  %756 = vrot.lane.b32.xlu0 %v251, 120
  %v757 = vpop.permute.xlu0 %756
  %v758 = vsel %vm680, %v251, 0
  %v760 = vsel %vm680, %v757, 0
  %762 = vmatprep.subr.mxu0 0.0
  %763 = vmatpush1.xpose.msra.mxu0 0.0
  %764 = vmatprep.subr.mxu0 0.0
  %765 = vmatpush1.xpose.msra.mxu0 0.0
  %766 = vmatprep.subr.mxu0 0.0
  %767 = vmatpush1.xpose.msra.mxu0 0.0
  %768 = vmatprep.subr.mxu0 0.0
  %769 = vmatpush1.xpose.msra.mxu0 0.0
  %770 = vmatprep.subr.mxu0 0.0
  %771 = vmatpush1.xpose.msra.mxu0 0.0
  %772 = vmatprep.subr.mxu0 0.0
  %773 = vmatpush1.xpose.msra.mxu0 0.0
  %774 = vmatprep.subr.mxu0 0.0
  %775 = vmatpush1.xpose.msra.mxu0 0.0
  %776 = vmatprep.subr.mxu0 0.0
  %777 = vmatpush1.xpose.msra.mxu0 0.0
  %778 = vmatprep.subr.mxu0 0.0
  %779 = vmatpush1.xpose.msra.mxu0 0.0
  %780 = vmatprep.subr.mxu0 0.0
  %781 = vmatpush1.xpose.msra.mxu0 0.0
  %782 = vmatprep.subr.mxu0 0.0
  %783 = vmatpush1.xpose.msra.mxu0 0.0
  %784 = vmatprep.subr.mxu0 0.0
  %785 = vmatpush1.xpose.msra.mxu0 0.0
  %786 = vmatprep.subr.mxu0 0.0
  %787 = vmatpush1.xpose.msra.mxu0 0.0
  %788 = vmatprep.subr.mxu0 0.0
  %789 = vmatpush1.xpose.msra.mxu0 0.0
  %790 = vmatprep.subr.mxu0 0.0
  %791 = vmatpush1.xpose.msra.mxu0 0.0
  %792 = vmatprep.subr.mxu0 0.0
  %793 = vmatpush1.xpose.msra.mxu0 %v760
  %794 = vmatprep.subr.mxu0 0.0
  %795 = vmatpush2.xpose.msra.mxu0 0.0
  %796 = vmatprep.subr.mxu0 0.0
  %797 = vmatpush2.xpose.msra.mxu0 0.0
  %798 = vmatprep.subr.mxu0 0.0
  %799 = vmatpush2.xpose.msra.mxu0 0.0
  %800 = vmatprep.subr.mxu0 0.0
  %801 = vmatpush2.xpose.msra.mxu0 0.0
  %802 = vmatprep.subr.mxu0 0.0
  %803 = vmatpush2.xpose.msra.mxu0 0.0
  %804 = vmatprep.subr.mxu0 0.0
  %805 = vmatpush2.xpose.msra.mxu0 0.0
  %806 = vmatprep.subr.mxu0 0.0
  %807 = vmatpush2.xpose.msra.mxu0 0.0
  %808 = vmatprep.subr.mxu0 0.0
  %809 = vmatpush2.xpose.msra.mxu0 0.0
  %810 = vmatprep.subr.mxu0 0.0
  %811 = vmatpush2.xpose.msra.mxu0 0.0
  %812 = vmatprep.subr.mxu0 0.0
  %813 = vmatpush2.xpose.msra.mxu0 0.0
  %814 = vmatprep.subr.mxu0 0.0
  %815 = vmatpush2.xpose.msra.mxu0 0.0
  %816 = vmatprep.subr.mxu0 0.0
  %817 = vmatpush2.xpose.msra.mxu0 0.0
  %818 = vmatprep.subr.mxu0 0.0
  %819 = vmatpush2.xpose.msra.mxu0 0.0
  %820 = vmatprep.subr.mxu0 0.0
  %821 = vmatpush2.xpose.msra.mxu0 0.0
  %822 = vmatprep.subr.mxu0 0.0
  %823 = vmatpush2.xpose.msra.mxu0 0.0
  %824 = vmatprep.subr.mxu0 0.0
  %825 = vmatpush2.xpose.msra.mxu0 0.0
  %826 = vmatprep.mubr.f32.mxu0 0.0
  %827 = vmatmul.mubr.f32.gmra.mxu0 %v758
  %v828 = vpop.f32.mrf.mxu0
  %v829 = vadd.f32 0.0, %v828
  %v830 = vpop.f32.mrf.mxu0
  %831 = vdwg.mxu0
  %833 = vrot.lane.b32.xlu0 %v321, 120
  %v834 = vpop.permute.xlu0 %833
  %v835 = vsel %vm680, %v321, 0
  %v837 = vsel %vm680, %v834, 0
  %839 = vmatprep.subr.mxu0 0.0
  %840 = vmatpush1.xpose.msra.mxu0 0.0
  %841 = vmatprep.subr.mxu0 0.0
  %842 = vmatpush1.xpose.msra.mxu0 0.0
  %843 = vmatprep.subr.mxu0 0.0
  %844 = vmatpush1.xpose.msra.mxu0 0.0
  %845 = vmatprep.subr.mxu0 0.0
  %846 = vmatpush1.xpose.msra.mxu0 0.0
  %847 = vmatprep.subr.mxu0 0.0
  %848 = vmatpush1.xpose.msra.mxu0 0.0
  %849 = vmatprep.subr.mxu0 0.0
  %850 = vmatpush1.xpose.msra.mxu0 0.0
  %851 = vmatprep.subr.mxu0 0.0
  %852 = vmatpush1.xpose.msra.mxu0 0.0
  %853 = vmatprep.subr.mxu0 0.0
  %854 = vmatpush1.xpose.msra.mxu0 0.0
  %855 = vmatprep.subr.mxu0 0.0
  %856 = vmatpush1.xpose.msra.mxu0 0.0
  %857 = vmatprep.subr.mxu0 0.0
  %858 = vmatpush1.xpose.msra.mxu0 0.0
  %859 = vmatprep.subr.mxu0 0.0
  %860 = vmatpush1.xpose.msra.mxu0 0.0
  %861 = vmatprep.subr.mxu0 0.0
  %862 = vmatpush1.xpose.msra.mxu0 0.0
  %863 = vmatprep.subr.mxu0 0.0
  %864 = vmatpush1.xpose.msra.mxu0 0.0
  %865 = vmatprep.subr.mxu0 0.0
  %866 = vmatpush1.xpose.msra.mxu0 0.0
  %867 = vmatprep.subr.mxu0 0.0
  %868 = vmatpush1.xpose.msra.mxu0 0.0
  %869 = vmatprep.subr.mxu0 0.0
  %870 = vmatpush1.xpose.msra.mxu0 %v837
  %871 = vmatprep.subr.mxu0 0.0
  %872 = vmatpush2.xpose.msra.mxu0 0.0
  %873 = vmatprep.subr.mxu0 0.0
  %874 = vmatpush2.xpose.msra.mxu0 0.0
  %875 = vmatprep.subr.mxu0 0.0
  %876 = vmatpush2.xpose.msra.mxu0 0.0
  %877 = vmatprep.subr.mxu0 0.0
  %878 = vmatpush2.xpose.msra.mxu0 0.0
  %879 = vmatprep.subr.mxu0 0.0
  %880 = vmatpush2.xpose.msra.mxu0 0.0
  %881 = vmatprep.subr.mxu0 0.0
  %882 = vmatpush2.xpose.msra.mxu0 0.0
  %883 = vmatprep.subr.mxu0 0.0
  %884 = vmatpush2.xpose.msra.mxu0 0.0
  %885 = vmatprep.subr.mxu0 0.0
  %886 = vmatpush2.xpose.msra.mxu0 0.0
  %887 = vmatprep.subr.mxu0 0.0
  %888 = vmatpush2.xpose.msra.mxu0 0.0
  %889 = vmatprep.subr.mxu0 0.0
  %890 = vmatpush2.xpose.msra.mxu0 0.0
  %891 = vmatprep.subr.mxu0 0.0
  %892 = vmatpush2.xpose.msra.mxu0 0.0
  %893 = vmatprep.subr.mxu0 0.0
  %894 = vmatpush2.xpose.msra.mxu0 0.0
  %895 = vmatprep.subr.mxu0 0.0
  %896 = vmatpush2.xpose.msra.mxu0 0.0
  %897 = vmatprep.subr.mxu0 0.0
  %898 = vmatpush2.xpose.msra.mxu0 0.0
  %899 = vmatprep.subr.mxu0 0.0
  %900 = vmatpush2.xpose.msra.mxu0 0.0
  %901 = vmatprep.subr.mxu0 0.0
  %902 = vmatpush2.xpose.msra.mxu0 0.0
  %903 = vmatprep.mubr.f32.mxu0 0.0
  %904 = vmatmul.mubr.f32.gmra.mxu0 %v835
  %v905 = vpop.f32.mrf.mxu0
  %v906 = vadd.f32 0.0, %v905
  %v907 = vpop.f32.mrf.mxu0
  %908 = vdwg.mxu0
  %910 = vrot.lane.b32.xlu0 %v391, 120
  %v911 = vpop.permute.xlu0 %910
  %v912 = vsel %vm680, %v391, 0
  %v914 = vsel %vm680, %v911, 0
  %916 = vmatprep.subr.mxu0 0.0
  %917 = vmatpush1.xpose.msra.mxu0 0.0
  %918 = vmatprep.subr.mxu0 0.0
  %919 = vmatpush1.xpose.msra.mxu0 0.0
  %920 = vmatprep.subr.mxu0 0.0
  %921 = vmatpush1.xpose.msra.mxu0 0.0
  %922 = vmatprep.subr.mxu0 0.0
  %923 = vmatpush1.xpose.msra.mxu0 0.0
  %924 = vmatprep.subr.mxu0 0.0
  %925 = vmatpush1.xpose.msra.mxu0 0.0
  %926 = vmatprep.subr.mxu0 0.0
  %927 = vmatpush1.xpose.msra.mxu0 0.0
  %928 = vmatprep.subr.mxu0 0.0
  %929 = vmatpush1.xpose.msra.mxu0 0.0
  %930 = vmatprep.subr.mxu0 0.0
  %931 = vmatpush1.xpose.msra.mxu0 0.0
  %932 = vmatprep.subr.mxu0 0.0
  %933 = vmatpush1.xpose.msra.mxu0 0.0
  %934 = vmatprep.subr.mxu0 0.0
  %935 = vmatpush1.xpose.msra.mxu0 0.0
  %936 = vmatprep.subr.mxu0 0.0
  %937 = vmatpush1.xpose.msra.mxu0 0.0
  %938 = vmatprep.subr.mxu0 0.0
  %939 = vmatpush1.xpose.msra.mxu0 0.0
  %940 = vmatprep.subr.mxu0 0.0
  %941 = vmatpush1.xpose.msra.mxu0 0.0
  %942 = vmatprep.subr.mxu0 0.0
  %943 = vmatpush1.xpose.msra.mxu0 0.0
  %944 = vmatprep.subr.mxu0 0.0
  %945 = vmatpush1.xpose.msra.mxu0 0.0
  %946 = vmatprep.subr.mxu0 0.0
  %947 = vmatpush1.xpose.msra.mxu0 %v914
  %948 = vmatprep.subr.mxu0 0.0
  %949 = vmatpush2.xpose.msra.mxu0 0.0
  %950 = vmatprep.subr.mxu0 0.0
  %951 = vmatpush2.xpose.msra.mxu0 0.0
  %952 = vmatprep.subr.mxu0 0.0
  %953 = vmatpush2.xpose.msra.mxu0 0.0
  %954 = vmatprep.subr.mxu0 0.0
  %955 = vmatpush2.xpose.msra.mxu0 0.0
  %956 = vmatprep.subr.mxu0 0.0
  %957 = vmatpush2.xpose.msra.mxu0 0.0
  %958 = vmatprep.subr.mxu0 0.0
  %959 = vmatpush2.xpose.msra.mxu0 0.0
  %960 = vmatprep.subr.mxu0 0.0
  %961 = vmatpush2.xpose.msra.mxu0 0.0
  %962 = vmatprep.subr.mxu0 0.0
  %963 = vmatpush2.xpose.msra.mxu0 0.0
  %964 = vmatprep.subr.mxu0 0.0
  %965 = vmatpush2.xpose.msra.mxu0 0.0
  %966 = vmatprep.subr.mxu0 0.0
  %967 = vmatpush2.xpose.msra.mxu0 0.0
  %968 = vmatprep.subr.mxu0 0.0
  %969 = vmatpush2.xpose.msra.mxu0 0.0
  %970 = vmatprep.subr.mxu0 0.0
  %971 = vmatpush2.xpose.msra.mxu0 0.0
  %972 = vmatprep.subr.mxu0 0.0
  %973 = vmatpush2.xpose.msra.mxu0 0.0
  %974 = vmatprep.subr.mxu0 0.0
  %975 = vmatpush2.xpose.msra.mxu0 0.0
  %976 = vmatprep.subr.mxu0 0.0
  %977 = vmatpush2.xpose.msra.mxu0 0.0
  %978 = vmatprep.subr.mxu0 0.0
  %979 = vmatpush2.xpose.msra.mxu0 0.0
  %980 = vmatprep.mubr.f32.mxu0 0.0
  %981 = vmatmul.mubr.f32.gmra.mxu0 %v912
  %v982 = vpop.f32.mrf.mxu0
  %v983 = vadd.f32 0.0, %v982
  %v984 = vpop.f32.mrf.mxu0
  %985 = vdwg.mxu0
  %987 = vrot.lane.b32.xlu0 %v464, 120
  %v988 = vpop.permute.xlu0 %987
  %v989 = vsel %vm680, %v464, 0
  %v991 = vsel %vm680, %v988, 0
  %993 = vmatprep.subr.mxu0 0.0
  %994 = vmatpush1.xpose.msra.mxu0 0.0
  %995 = vmatprep.subr.mxu0 0.0
  %996 = vmatpush1.xpose.msra.mxu0 0.0
  %997 = vmatprep.subr.mxu0 0.0
  %998 = vmatpush1.xpose.msra.mxu0 0.0
  %999 = vmatprep.subr.mxu0 0.0
  %1000 = vmatpush1.xpose.msra.mxu0 0.0
  %1001 = vmatprep.subr.mxu0 0.0
  %1002 = vmatpush1.xpose.msra.mxu0 0.0
  %1003 = vmatprep.subr.mxu0 0.0
  %1004 = vmatpush1.xpose.msra.mxu0 0.0
  %1005 = vmatprep.subr.mxu0 0.0
  %1006 = vmatpush1.xpose.msra.mxu0 0.0
  %1007 = vmatprep.subr.mxu0 0.0
  %1008 = vmatpush1.xpose.msra.mxu0 0.0
  %1009 = vmatprep.subr.mxu0 0.0
  %1010 = vmatpush1.xpose.msra.mxu0 0.0
  %1011 = vmatprep.subr.mxu0 0.0
  %1012 = vmatpush1.xpose.msra.mxu0 0.0
  %1013 = vmatprep.subr.mxu0 0.0
  %1014 = vmatpush1.xpose.msra.mxu0 0.0
  %1015 = vmatprep.subr.mxu0 0.0
  %1016 = vmatpush1.xpose.msra.mxu0 0.0
  %1017 = vmatprep.subr.mxu0 0.0
  %1018 = vmatpush1.xpose.msra.mxu0 0.0
  %1019 = vmatprep.subr.mxu0 0.0
  %1020 = vmatpush1.xpose.msra.mxu0 0.0
  %1021 = vmatprep.subr.mxu0 0.0
  %1022 = vmatpush1.xpose.msra.mxu0 0.0
  %1023 = vmatprep.subr.mxu0 0.0
  %1024 = vmatpush1.xpose.msra.mxu0 %v991
  %1025 = vmatprep.subr.mxu0 0.0
  %1026 = vmatpush2.xpose.msra.mxu0 0.0
  %1027 = vmatprep.subr.mxu0 0.0
  %1028 = vmatpush2.xpose.msra.mxu0 0.0
  %1029 = vmatprep.subr.mxu0 0.0
  %1030 = vmatpush2.xpose.msra.mxu0 0.0
  %1031 = vmatprep.subr.mxu0 0.0
  %1032 = vmatpush2.xpose.msra.mxu0 0.0
  %1033 = vmatprep.subr.mxu0 0.0
  %1034 = vmatpush2.xpose.msra.mxu0 0.0
  %1035 = vmatprep.subr.mxu0 0.0
  %1036 = vmatpush2.xpose.msra.mxu0 0.0
  %1037 = vmatprep.subr.mxu0 0.0
  %1038 = vmatpush2.xpose.msra.mxu0 0.0
  %1039 = vmatprep.subr.mxu0 0.0
  %1040 = vmatpush2.xpose.msra.mxu0 0.0
  %1041 = vmatprep.subr.mxu0 0.0
  %1042 = vmatpush2.xpose.msra.mxu0 0.0
  %1043 = vmatprep.subr.mxu0 0.0
  %1044 = vmatpush2.xpose.msra.mxu0 0.0
  %1045 = vmatprep.subr.mxu0 0.0
  %1046 = vmatpush2.xpose.msra.mxu0 0.0
  %1047 = vmatprep.subr.mxu0 0.0
  %1048 = vmatpush2.xpose.msra.mxu0 0.0
  %1049 = vmatprep.subr.mxu0 0.0
  %1050 = vmatpush2.xpose.msra.mxu0 0.0
  %1051 = vmatprep.subr.mxu0 0.0
  %1052 = vmatpush2.xpose.msra.mxu0 0.0
  %1053 = vmatprep.subr.mxu0 0.0
  %1054 = vmatpush2.xpose.msra.mxu0 0.0
  %1055 = vmatprep.subr.mxu0 0.0
  %1056 = vmatpush2.xpose.msra.mxu0 0.0
  %1057 = vmatprep.mubr.f32.mxu0 0.0
  %1058 = vmatmul.mubr.f32.gmra.mxu0 %v989
  %v1059 = vpop.f32.mrf.mxu0
  %v1060 = vadd.f32 0.0, %v1059
  %v1061 = vpop.f32.mrf.mxu0
  %1062 = vdwg.mxu0
  %1064 = vrot.lane.b32.xlu0 %v534, 120
  %v1065 = vpop.permute.xlu0 %1064
  %v1066 = vsel %vm680, %v534, 0
  %v1068 = vsel %vm680, %v1065, 0
  %1070 = vmatprep.subr.mxu0 0.0
  %1071 = vmatpush1.xpose.msra.mxu0 0.0
  %1072 = vmatprep.subr.mxu0 0.0
  %1073 = vmatpush1.xpose.msra.mxu0 0.0
  %1074 = vmatprep.subr.mxu0 0.0
  %1075 = vmatpush1.xpose.msra.mxu0 0.0
  %1076 = vmatprep.subr.mxu0 0.0
  %1077 = vmatpush1.xpose.msra.mxu0 0.0
  %1078 = vmatprep.subr.mxu0 0.0
  %1079 = vmatpush1.xpose.msra.mxu0 0.0
  %1080 = vmatprep.subr.mxu0 0.0
  %1081 = vmatpush1.xpose.msra.mxu0 0.0
  %1082 = vmatprep.subr.mxu0 0.0
  %1083 = vmatpush1.xpose.msra.mxu0 0.0
  %1084 = vmatprep.subr.mxu0 0.0
  %1085 = vmatpush1.xpose.msra.mxu0 0.0
  %1086 = vmatprep.subr.mxu0 0.0
  %1087 = vmatpush1.xpose.msra.mxu0 0.0
  %1088 = vmatprep.subr.mxu0 0.0
  %1089 = vmatpush1.xpose.msra.mxu0 0.0
  %1090 = vmatprep.subr.mxu0 0.0
  %1091 = vmatpush1.xpose.msra.mxu0 0.0
  %1092 = vmatprep.subr.mxu0 0.0
  %1093 = vmatpush1.xpose.msra.mxu0 0.0
  %1094 = vmatprep.subr.mxu0 0.0
  %1095 = vmatpush1.xpose.msra.mxu0 0.0
  %1096 = vmatprep.subr.mxu0 0.0
  %1097 = vmatpush1.xpose.msra.mxu0 0.0
  %1098 = vmatprep.subr.mxu0 0.0
  %1099 = vmatpush1.xpose.msra.mxu0 0.0
  %1100 = vmatprep.subr.mxu0 0.0
  %1101 = vmatpush1.xpose.msra.mxu0 %v1068
  %1102 = vmatprep.subr.mxu0 0.0
  %1103 = vmatpush2.xpose.msra.mxu0 0.0
  %1104 = vmatprep.subr.mxu0 0.0
  %1105 = vmatpush2.xpose.msra.mxu0 0.0
  %1106 = vmatprep.subr.mxu0 0.0
  %1107 = vmatpush2.xpose.msra.mxu0 0.0
  %1108 = vmatprep.subr.mxu0 0.0
  %1109 = vmatpush2.xpose.msra.mxu0 0.0
  %1110 = vmatprep.subr.mxu0 0.0
  %1111 = vmatpush2.xpose.msra.mxu0 0.0
  %1112 = vmatprep.subr.mxu0 0.0
  %1113 = vmatpush2.xpose.msra.mxu0 0.0
  %1114 = vmatprep.subr.mxu0 0.0
  %1115 = vmatpush2.xpose.msra.mxu0 0.0
  %1116 = vmatprep.subr.mxu0 0.0
  %1117 = vmatpush2.xpose.msra.mxu0 0.0
  %1118 = vmatprep.subr.mxu0 0.0
  %1119 = vmatpush2.xpose.msra.mxu0 0.0
  %1120 = vmatprep.subr.mxu0 0.0
  %1121 = vmatpush2.xpose.msra.mxu0 0.0
  %1122 = vmatprep.subr.mxu0 0.0
  %1123 = vmatpush2.xpose.msra.mxu0 0.0
  %1124 = vmatprep.subr.mxu0 0.0
  %1125 = vmatpush2.xpose.msra.mxu0 0.0
  %1126 = vmatprep.subr.mxu0 0.0
  %1127 = vmatpush2.xpose.msra.mxu0 0.0
  %1128 = vmatprep.subr.mxu0 0.0
  %1129 = vmatpush2.xpose.msra.mxu0 0.0
  %1130 = vmatprep.subr.mxu0 0.0
  %1131 = vmatpush2.xpose.msra.mxu0 0.0
  %1132 = vmatprep.subr.mxu0 0.0
  %1133 = vmatpush2.xpose.msra.mxu0 0.0
  %1134 = vmatprep.mubr.f32.mxu0 0.0
  %1135 = vmatmul.mubr.f32.gmra.mxu0 %v1066
  %v1136 = vpop.f32.mrf.mxu0
  %v1137 = vadd.f32 0.0, %v1136
  %v1138 = vpop.f32.mrf.mxu0
  %1139 = vdwg.mxu0
  %1141 = vrot.lane.b32.xlu0 %v604, 120
  %v1142 = vpop.permute.xlu0 %1141
  %v1143 = vsel %vm680, %v604, 0
  %v1145 = vsel %vm680, %v1142, 0
  %1147 = vmatprep.subr.mxu0 0.0
  %1148 = vmatpush1.xpose.msra.mxu0 0.0
  %1149 = vmatprep.subr.mxu0 0.0
  %1150 = vmatpush1.xpose.msra.mxu0 0.0
  %1151 = vmatprep.subr.mxu0 0.0
  %1152 = vmatpush1.xpose.msra.mxu0 0.0
  %1153 = vmatprep.subr.mxu0 0.0
  %1154 = vmatpush1.xpose.msra.mxu0 0.0
  %1155 = vmatprep.subr.mxu0 0.0
  %1156 = vmatpush1.xpose.msra.mxu0 0.0
  %1157 = vmatprep.subr.mxu0 0.0
  %1158 = vmatpush1.xpose.msra.mxu0 0.0
  %1159 = vmatprep.subr.mxu0 0.0
  %1160 = vmatpush1.xpose.msra.mxu0 0.0
  %1161 = vmatprep.subr.mxu0 0.0
  %1162 = vmatpush1.xpose.msra.mxu0 0.0
  %1163 = vmatprep.subr.mxu0 0.0
  %1164 = vmatpush1.xpose.msra.mxu0 0.0
  %1165 = vmatprep.subr.mxu0 0.0
  %1166 = vmatpush1.xpose.msra.mxu0 0.0
  %1167 = vmatprep.subr.mxu0 0.0
  %1168 = vmatpush1.xpose.msra.mxu0 0.0
  %1169 = vmatprep.subr.mxu0 0.0
  %1170 = vmatpush1.xpose.msra.mxu0 0.0
  %1171 = vmatprep.subr.mxu0 0.0
  %1172 = vmatpush1.xpose.msra.mxu0 0.0
  %1173 = vmatprep.subr.mxu0 0.0
  %1174 = vmatpush1.xpose.msra.mxu0 0.0
  %1175 = vmatprep.subr.mxu0 0.0
  %1176 = vmatpush1.xpose.msra.mxu0 0.0
  %1177 = vmatprep.subr.mxu0 0.0
  %1178 = vmatpush1.xpose.msra.mxu0 %v1145
  %1179 = vmatprep.subr.mxu0 0.0
  %1180 = vmatpush2.xpose.msra.mxu0 0.0
  %1181 = vmatprep.subr.mxu0 0.0
  %1182 = vmatpush2.xpose.msra.mxu0 0.0
  %1183 = vmatprep.subr.mxu0 0.0
  %1184 = vmatpush2.xpose.msra.mxu0 0.0
  %1185 = vmatprep.subr.mxu0 0.0
  %1186 = vmatpush2.xpose.msra.mxu0 0.0
  %1187 = vmatprep.subr.mxu0 0.0
  %1188 = vmatpush2.xpose.msra.mxu0 0.0
  %1189 = vmatprep.subr.mxu0 0.0
  %1190 = vmatpush2.xpose.msra.mxu0 0.0
  %1191 = vmatprep.subr.mxu0 0.0
  %1192 = vmatpush2.xpose.msra.mxu0 0.0
  %1193 = vmatprep.subr.mxu0 0.0
  %1194 = vmatpush2.xpose.msra.mxu0 0.0
  %1195 = vmatprep.subr.mxu0 0.0
  %1196 = vmatpush2.xpose.msra.mxu0 0.0
  %1197 = vmatprep.subr.mxu0 0.0
  %1198 = vmatpush2.xpose.msra.mxu0 0.0
  %1199 = vmatprep.subr.mxu0 0.0
  %1200 = vmatpush2.xpose.msra.mxu0 0.0
  %1201 = vmatprep.subr.mxu0 0.0
  %1202 = vmatpush2.xpose.msra.mxu0 0.0
  %1203 = vmatprep.subr.mxu0 0.0
  %1204 = vmatpush2.xpose.msra.mxu0 0.0
  %1205 = vmatprep.subr.mxu0 0.0
  %1206 = vmatpush2.xpose.msra.mxu0 0.0
  %1207 = vmatprep.subr.mxu0 0.0
  %1208 = vmatpush2.xpose.msra.mxu0 0.0
  %1209 = vmatprep.subr.mxu0 0.0
  %1210 = vmatpush2.xpose.msra.mxu0 0.0
  %1211 = vmatprep.mubr.f32.mxu0 0.0
  %1212 = vmatmul.mubr.f32.gmra.mxu0 %v1143
  %v1213 = vpop.f32.mrf.mxu0
  %v1214 = vadd.f32 0.0, %v1213
  %v1215 = vpop.f32.mrf.mxu0
  %1216 = vdwg.mxu0
  %1218 = vrot.lane.b32.xlu0 %v674, 120
  %v1219 = vpop.permute.xlu0 %1218
  %v1220 = vsel %vm680, %v674, 0
  %v1222 = vsel %vm680, %v1219, 0
  %1224 = vmatprep.subr.mxu0 0.0
  %1225 = vmatpush1.xpose.msra.mxu0 0.0
  %1226 = vmatprep.subr.mxu0 0.0
  %1227 = vmatpush1.xpose.msra.mxu0 0.0
  %1228 = vmatprep.subr.mxu0 0.0
  %1229 = vmatpush1.xpose.msra.mxu0 0.0
  %1230 = vmatprep.subr.mxu0 0.0
  %1231 = vmatpush1.xpose.msra.mxu0 0.0
  %1232 = vmatprep.subr.mxu0 0.0
  %1233 = vmatpush1.xpose.msra.mxu0 0.0
  %1234 = vmatprep.subr.mxu0 0.0
  %1235 = vmatpush1.xpose.msra.mxu0 0.0
  %1236 = vmatprep.subr.mxu0 0.0
  %1237 = vmatpush1.xpose.msra.mxu0 0.0
  %1238 = vmatprep.subr.mxu0 0.0
  %1239 = vmatpush1.xpose.msra.mxu0 0.0
  %1240 = vmatprep.subr.mxu0 0.0
  %1241 = vmatpush1.xpose.msra.mxu0 0.0
  %1242 = vmatprep.subr.mxu0 0.0
  %1243 = vmatpush1.xpose.msra.mxu0 0.0
  %1244 = vmatprep.subr.mxu0 0.0
  %1245 = vmatpush1.xpose.msra.mxu0 0.0
  %1246 = vmatprep.subr.mxu0 0.0
  %1247 = vmatpush1.xpose.msra.mxu0 0.0
  %1248 = vmatprep.subr.mxu0 0.0
  %1249 = vmatpush1.xpose.msra.mxu0 0.0
  %1250 = vmatprep.subr.mxu0 0.0
  %1251 = vmatpush1.xpose.msra.mxu0 0.0
  %1252 = vmatprep.subr.mxu0 0.0
  %1253 = vmatpush1.xpose.msra.mxu0 0.0
  %1254 = vmatprep.subr.mxu0 0.0
  %1255 = vmatpush1.xpose.msra.mxu0 %v1222
  %1256 = vmatprep.subr.mxu0 0.0
  %1257 = vmatpush2.xpose.msra.mxu0 0.0
  %1258 = vmatprep.subr.mxu0 0.0
  %1259 = vmatpush2.xpose.msra.mxu0 0.0
  %1260 = vmatprep.subr.mxu0 0.0
  %1261 = vmatpush2.xpose.msra.mxu0 0.0
  %1262 = vmatprep.subr.mxu0 0.0
  %1263 = vmatpush2.xpose.msra.mxu0 0.0
  %1264 = vmatprep.subr.mxu0 0.0
  %1265 = vmatpush2.xpose.msra.mxu0 0.0
  %1266 = vmatprep.subr.mxu0 0.0
  %1267 = vmatpush2.xpose.msra.mxu0 0.0
  %1268 = vmatprep.subr.mxu0 0.0
  %1269 = vmatpush2.xpose.msra.mxu0 0.0
  %1270 = vmatprep.subr.mxu0 0.0
  %1271 = vmatpush2.xpose.msra.mxu0 0.0
  %1272 = vmatprep.subr.mxu0 0.0
  %1273 = vmatpush2.xpose.msra.mxu0 0.0
  %1274 = vmatprep.subr.mxu0 0.0
  %1275 = vmatpush2.xpose.msra.mxu0 0.0
  %1276 = vmatprep.subr.mxu0 0.0
  %1277 = vmatpush2.xpose.msra.mxu0 0.0
  %1278 = vmatprep.subr.mxu0 0.0
  %1279 = vmatpush2.xpose.msra.mxu0 0.0
  %1280 = vmatprep.subr.mxu0 0.0
  %1281 = vmatpush2.xpose.msra.mxu0 0.0
  %1282 = vmatprep.subr.mxu0 0.0
  %1283 = vmatpush2.xpose.msra.mxu0 0.0
  %1284 = vmatprep.subr.mxu0 0.0
  %1285 = vmatpush2.xpose.msra.mxu0 0.0
  %1286 = vmatprep.subr.mxu0 0.0
  %1287 = vmatpush2.xpose.msra.mxu0 0.0
  %1288 = vmatprep.mubr.f32.mxu0 0.0
  %1289 = vmatmul.mubr.f32.gmra.mxu0 %v1220
  %v1290 = vpop.f32.mrf.mxu0
  %v1291 = vadd.f32 0.0, %v1290
  %v1292 = vpop.f32.mrf.mxu0
  %1293 = vdwg.mxu0
  %v1294 = vmul.f32 %v752, 0.35355338
  %v1295 = vmul.f32 %v829, 0.35355338
  %v1296 = vmul.f32 %v906, 0.35355338
  %v1297 = vmul.f32 %v983, 0.35355338
  %v1298 = vmul.f32 %v1060, 0.35355338
  %v1299 = vmul.f32 %v1137, 0.35355338
  %v1300 = vmul.f32 %v1214, 0.35355338
  %v1301 = vmul.f32 %v1291, 0.35355338
  %v1302 = vsel %vm680, %v1294, -inf
  %1303 = vmax.xlane.f32.xlu0 %v1302
  %v1304 = vpop.xlane.xlu0 %1303
  %v1305 = vsel %vm680, %v1295, -inf
  %1306 = vmax.xlane.f32.xlu0 %v1305
  %v1307 = vpop.xlane.xlu0 %1306
  %v1308 = vsel %vm680, %v1296, -inf
  %1309 = vmax.xlane.f32.xlu0 %v1308
  %v1310 = vpop.xlane.xlu0 %1309
  %v1311 = vsel %vm680, %v1297, -inf
  %1312 = vmax.xlane.f32.xlu0 %v1311
  %v1313 = vpop.xlane.xlu0 %1312
  %v1314 = vsel %vm680, %v1298, -inf
  %1315 = vmax.xlane.f32.xlu0 %v1314
  %v1316 = vpop.xlane.xlu0 %1315
  %v1317 = vsel %vm680, %v1299, -inf
  %1318 = vmax.xlane.f32.xlu0 %v1317
  %v1319 = vpop.xlane.xlu0 %1318
  %v1320 = vsel %vm680, %v1300, -inf
  %1321 = vmax.xlane.f32.xlu0 %v1320
  %v1322 = vpop.xlane.xlu0 %1321
  %v1323 = vsel %vm680, %v1301, -inf
  %1324 = vmax.xlane.f32.xlu0 %v1323
  %v1325 = vpop.xlane.xlu0 %1324
  %v1326 = vsub.f32 %v1294, %v1304
  %v1327 = vsub.f32 %v1295, %v1307
  %v1328 = vsub.f32 %v1296, %v1310
  %v1329 = vsub.f32 %v1297, %v1313
  %v1330 = vsub.f32 %v1298, %v1316
  %v1331 = vsub.f32 %v1299, %v1319
  %v1332 = vsub.f32 %v1300, %v1322
  %v1333 = vsub.f32 %v1301, %v1325
  %v1334 = vmul.f32 %v1326, 1.442695
  %v1335 = vpow.pop %v1334
  %v1336 = vmul.f32 %v1327, 1.442695
  %v1337 = vpow.pop %v1336
  %v1338 = vmul.f32 %v1328, 1.442695
  %v1339 = vpow.pop %v1338
  %v1340 = vmul.f32 %v1329, 1.442695
  %v1341 = vpow.pop %v1340
  %v1342 = vmul.f32 %v1330, 1.442695
  %v1343 = vpow.pop %v1342
  %v1344 = vmul.f32 %v1331, 1.442695
  %v1345 = vpow.pop %v1344
  %v1346 = vmul.f32 %v1332, 1.442695
  %v1347 = vpow.pop %v1346
  %v1348 = vmul.f32 %v1333, 1.442695
  %v1349 = vpow.pop %v1348
  %v1350 = vsel %vm680, %v1335, 0.0
  %1351 = vadd.xlane.f32.xlu0 %v1350
  %v1352 = vpop.xlane.xlu0 %1351
  %v1353 = vsel %vm680, %v1337, 0.0
  %1354 = vadd.xlane.f32.xlu0 %v1353
  %v1355 = vpop.xlane.xlu0 %1354
  %v1356 = vsel %vm680, %v1339, 0.0
  %1357 = vadd.xlane.f32.xlu0 %v1356
  %v1358 = vpop.xlane.xlu0 %1357
  %v1359 = vsel %vm680, %v1341, 0.0
  %1360 = vadd.xlane.f32.xlu0 %v1359
  %v1361 = vpop.xlane.xlu0 %1360
  %v1362 = vsel %vm680, %v1343, 0.0
  %1363 = vadd.xlane.f32.xlu0 %v1362
  %v1364 = vpop.xlane.xlu0 %1363
  %v1365 = vsel %vm680, %v1345, 0.0
  %1366 = vadd.xlane.f32.xlu0 %v1365
  %v1367 = vpop.xlane.xlu0 %1366
  %v1368 = vsel %vm680, %v1347, 0.0
  %1369 = vadd.xlane.f32.xlu0 %v1368
  %v1370 = vpop.xlane.xlu0 %1369
  %v1371 = vsel %vm680, %v1349, 0.0
  %1372 = vadd.xlane.f32.xlu0 %v1371
  %v1373 = vpop.xlane.xlu0 %1372
  %v1374 = vrcp.pop %v1352
  %v1375 = vrcp.pop %v1355
  %v1376 = vrcp.pop %v1358
  %v1377 = vrcp.pop %v1361
  %v1378 = vrcp.pop %v1364
  %v1379 = vrcp.pop %v1367
  %v1380 = vrcp.pop %v1370
  %v1381 = vrcp.pop %v1373
  %v1382 = vmul.f32 %v1335, %v1374
  %v1383 = vmul.f32 %v1337, %v1375
  %v1384 = vmul.f32 %v1339, %v1376
  %v1385 = vmul.f32 %v1341, %v1377
  %v1386 = vmul.f32 %v1343, %v1378
  %v1387 = vmul.f32 %v1345, %v1379
  %v1388 = vmul.f32 %v1347, %v1380
  %v1389 = vmul.f32 %v1349, %v1381
  %1390 = vrot.lane.b32.xlu0 %v181, 112
  %v1391 = vpop.permute.xlu0 %1390
  %1393 = vxpose.xlu0.b32.start [1/16] %v1391, 128
  %1394 = vxpose.xlu0.b32.cont [2/16] 0.0, 128
  %1395 = vxpose.xlu0.b32.cont [3/16] 0.0, 128
  %1396 = vxpose.xlu0.b32.cont [4/16] 0.0, 128
  %1397 = vxpose.xlu0.b32.cont [5/16] 0.0, 128
  %1398 = vxpose.xlu0.b32.cont [6/16] 0.0, 128
  %1399 = vxpose.xlu0.b32.cont [7/16] 0.0, 128
  %1400 = vxpose.xlu0.b32.cont [8/16] 0.0, 128
  %1401 = vxpose.xlu0.b32.cont [9/16] 0.0, 128
  %1402 = vxpose.xlu0.b32.cont [10/16] 0.0, 128
  %1403 = vxpose.xlu0.b32.cont [11/16] 0.0, 128
  %1404 = vxpose.xlu0.b32.cont [12/16] 0.0, 128
  %1405 = vxpose.xlu0.b32.cont [13/16] 0.0, 128
  %1406 = vxpose.xlu0.b32.cont [14/16] 0.0, 128
  %1407 = vxpose.xlu0.b32.cont [15/16] 0.0, 128
  %1408 = vxpose.xlu0.b32.end [16/16] 0.0, 128
  %v1409 = vpop.trf.xlu0
  %v1410 = vpop.trf.xlu0
  %v1411 = vpop.trf.xlu0
  %v1412 = vpop.trf.xlu0
  %v1413 = vpop.trf.xlu0
  %v1414 = vpop.trf.xlu0
  %v1415 = vpop.trf.xlu0
  %v1416 = vpop.trf.xlu0
  %v1417 = vpop.trf.xlu0
  %v1418 = vpop.trf.xlu0
  %v1419 = vpop.trf.xlu0
  %v1420 = vpop.trf.xlu0
  %v1421 = vpop.trf.xlu0
  %v1422 = vpop.trf.xlu0
  %v1423 = vpop.trf.xlu0
  %v1424 = vpop.trf.xlu0
  %v1426 = vsel %vm680, %v1409, 0
  %v1429 = vsel %vm680, %v1382, 0
  %1431 = vmatprep.subr.mxu0 0.0
  %1432 = vmatpush1.xpose.msra.mxu0 0.0
  %1433 = vmatprep.subr.mxu0 0.0
  %1434 = vmatpush1.xpose.msra.mxu0 0.0
  %1435 = vmatprep.subr.mxu0 0.0
  %1436 = vmatpush1.xpose.msra.mxu0 0.0
  %1437 = vmatprep.subr.mxu0 0.0
  %1438 = vmatpush1.xpose.msra.mxu0 0.0
  %1439 = vmatprep.subr.mxu0 0.0
  %1440 = vmatpush1.xpose.msra.mxu0 0.0
  %1441 = vmatprep.subr.mxu0 0.0
  %1442 = vmatpush1.xpose.msra.mxu0 0.0
  %1443 = vmatprep.subr.mxu0 0.0
  %1444 = vmatpush1.xpose.msra.mxu0 0.0
  %1445 = vmatprep.subr.mxu0 0.0
  %1446 = vmatpush1.xpose.msra.mxu0 0.0
  %1447 = vmatprep.subr.mxu0 0.0
  %1448 = vmatpush1.xpose.msra.mxu0 0.0
  %1449 = vmatprep.subr.mxu0 0.0
  %1450 = vmatpush1.xpose.msra.mxu0 0.0
  %1451 = vmatprep.subr.mxu0 0.0
  %1452 = vmatpush1.xpose.msra.mxu0 0.0
  %1453 = vmatprep.subr.mxu0 0.0
  %1454 = vmatpush1.xpose.msra.mxu0 0.0
  %1455 = vmatprep.subr.mxu0 0.0
  %1456 = vmatpush1.xpose.msra.mxu0 0.0
  %1457 = vmatprep.subr.mxu0 0.0
  %1458 = vmatpush1.xpose.msra.mxu0 0.0
  %1459 = vmatprep.subr.mxu0 0.0
  %1460 = vmatpush1.xpose.msra.mxu0 0.0
  %1461 = vmatprep.subr.mxu0 0.0
  %1462 = vmatpush1.xpose.msra.mxu0 %v1429
  %1463 = vmatprep.subr.mxu0 0.0
  %1464 = vmatpush2.xpose.msra.mxu0 0.0
  %1465 = vmatprep.subr.mxu0 0.0
  %1466 = vmatpush2.xpose.msra.mxu0 0.0
  %1467 = vmatprep.subr.mxu0 0.0
  %1468 = vmatpush2.xpose.msra.mxu0 0.0
  %1469 = vmatprep.subr.mxu0 0.0
  %1470 = vmatpush2.xpose.msra.mxu0 0.0
  %1471 = vmatprep.subr.mxu0 0.0
  %1472 = vmatpush2.xpose.msra.mxu0 0.0
  %1473 = vmatprep.subr.mxu0 0.0
  %1474 = vmatpush2.xpose.msra.mxu0 0.0
  %1475 = vmatprep.subr.mxu0 0.0
  %1476 = vmatpush2.xpose.msra.mxu0 0.0
  %1477 = vmatprep.subr.mxu0 0.0
  %1478 = vmatpush2.xpose.msra.mxu0 0.0
  %1479 = vmatprep.subr.mxu0 0.0
  %1480 = vmatpush2.xpose.msra.mxu0 0.0
  %1481 = vmatprep.subr.mxu0 0.0
  %1482 = vmatpush2.xpose.msra.mxu0 0.0
  %1483 = vmatprep.subr.mxu0 0.0
  %1484 = vmatpush2.xpose.msra.mxu0 0.0
  %1485 = vmatprep.subr.mxu0 0.0
  %1486 = vmatpush2.xpose.msra.mxu0 0.0
  %1487 = vmatprep.subr.mxu0 0.0
  %1488 = vmatpush2.xpose.msra.mxu0 0.0
  %1489 = vmatprep.subr.mxu0 0.0
  %1490 = vmatpush2.xpose.msra.mxu0 0.0
  %1491 = vmatprep.subr.mxu0 0.0
  %1492 = vmatpush2.xpose.msra.mxu0 0.0
  %1493 = vmatprep.subr.mxu0 0.0
  %1494 = vmatpush2.xpose.msra.mxu0 0.0
  %1495 = vmatprep.mubr.f32.mxu0 0.0
  %1496 = vmatmul.mubr.f32.gmra.mxu0 %v1426
  %v1497 = vpop.f32.mrf.mxu0
  %v1498 = vadd.f32 0.0, %v1497
  %v1499 = vpop.f32.mrf.mxu0
  %1500 = vdwg.mxu0
  %1501 = vrot.lane.b32.xlu0 %v251, 112
  %v1502 = vpop.permute.xlu0 %1501
  %1504 = vxpose.xlu0.b32.start [1/16] %v1502, 128
  %1505 = vxpose.xlu0.b32.cont [2/16] 0.0, 128
  %1506 = vxpose.xlu0.b32.cont [3/16] 0.0, 128
  %1507 = vxpose.xlu0.b32.cont [4/16] 0.0, 128
  %1508 = vxpose.xlu0.b32.cont [5/16] 0.0, 128
  %1509 = vxpose.xlu0.b32.cont [6/16] 0.0, 128
  %1510 = vxpose.xlu0.b32.cont [7/16] 0.0, 128
  %1511 = vxpose.xlu0.b32.cont [8/16] 0.0, 128
  %1512 = vxpose.xlu0.b32.cont [9/16] 0.0, 128
  %1513 = vxpose.xlu0.b32.cont [10/16] 0.0, 128
  %1514 = vxpose.xlu0.b32.cont [11/16] 0.0, 128
  %1515 = vxpose.xlu0.b32.cont [12/16] 0.0, 128
  %1516 = vxpose.xlu0.b32.cont [13/16] 0.0, 128
  %1517 = vxpose.xlu0.b32.cont [14/16] 0.0, 128
  %1518 = vxpose.xlu0.b32.cont [15/16] 0.0, 128
  %1519 = vxpose.xlu0.b32.end [16/16] 0.0, 128
  %v1520 = vpop.trf.xlu0
  %v1521 = vpop.trf.xlu0
  %v1522 = vpop.trf.xlu0
  %v1523 = vpop.trf.xlu0
  %v1524 = vpop.trf.xlu0
  %v1525 = vpop.trf.xlu0
  %v1526 = vpop.trf.xlu0
  %v1527 = vpop.trf.xlu0
  %v1528 = vpop.trf.xlu0
  %v1529 = vpop.trf.xlu0
  %v1530 = vpop.trf.xlu0
  %v1531 = vpop.trf.xlu0
  %v1532 = vpop.trf.xlu0
  %v1533 = vpop.trf.xlu0
  %v1534 = vpop.trf.xlu0
  %v1535 = vpop.trf.xlu0
  %v1537 = vsel %vm680, %v1520, 0
  %v1540 = vsel %vm680, %v1383, 0
  %1542 = vmatprep.subr.mxu0 0.0
  %1543 = vmatpush1.xpose.msra.mxu0 0.0
  %1544 = vmatprep.subr.mxu0 0.0
  %1545 = vmatpush1.xpose.msra.mxu0 0.0
  %1546 = vmatprep.subr.mxu0 0.0
  %1547 = vmatpush1.xpose.msra.mxu0 0.0
  %1548 = vmatprep.subr.mxu0 0.0
  %1549 = vmatpush1.xpose.msra.mxu0 0.0
  %1550 = vmatprep.subr.mxu0 0.0
  %1551 = vmatpush1.xpose.msra.mxu0 0.0
  %1552 = vmatprep.subr.mxu0 0.0
  %1553 = vmatpush1.xpose.msra.mxu0 0.0
  %1554 = vmatprep.subr.mxu0 0.0
  %1555 = vmatpush1.xpose.msra.mxu0 0.0
  %1556 = vmatprep.subr.mxu0 0.0
  %1557 = vmatpush1.xpose.msra.mxu0 0.0
  %1558 = vmatprep.subr.mxu0 0.0
  %1559 = vmatpush1.xpose.msra.mxu0 0.0
  %1560 = vmatprep.subr.mxu0 0.0
  %1561 = vmatpush1.xpose.msra.mxu0 0.0
  %1562 = vmatprep.subr.mxu0 0.0
  %1563 = vmatpush1.xpose.msra.mxu0 0.0
  %1564 = vmatprep.subr.mxu0 0.0
  %1565 = vmatpush1.xpose.msra.mxu0 0.0
  %1566 = vmatprep.subr.mxu0 0.0
  %1567 = vmatpush1.xpose.msra.mxu0 0.0
  %1568 = vmatprep.subr.mxu0 0.0
  %1569 = vmatpush1.xpose.msra.mxu0 0.0
  %1570 = vmatprep.subr.mxu0 0.0
  %1571 = vmatpush1.xpose.msra.mxu0 0.0
  %1572 = vmatprep.subr.mxu0 0.0
  %1573 = vmatpush1.xpose.msra.mxu0 %v1540
  %1574 = vmatprep.subr.mxu0 0.0
  %1575 = vmatpush2.xpose.msra.mxu0 0.0
  %1576 = vmatprep.subr.mxu0 0.0
  %1577 = vmatpush2.xpose.msra.mxu0 0.0
  %1578 = vmatprep.subr.mxu0 0.0
  %1579 = vmatpush2.xpose.msra.mxu0 0.0
  %1580 = vmatprep.subr.mxu0 0.0
  %1581 = vmatpush2.xpose.msra.mxu0 0.0
  %1582 = vmatprep.subr.mxu0 0.0
  %1583 = vmatpush2.xpose.msra.mxu0 0.0
  %1584 = vmatprep.subr.mxu0 0.0
  %1585 = vmatpush2.xpose.msra.mxu0 0.0
  %1586 = vmatprep.subr.mxu0 0.0
  %1587 = vmatpush2.xpose.msra.mxu0 0.0
  %1588 = vmatprep.subr.mxu0 0.0
  %1589 = vmatpush2.xpose.msra.mxu0 0.0
  %1590 = vmatprep.subr.mxu0 0.0
  %1591 = vmatpush2.xpose.msra.mxu0 0.0
  %1592 = vmatprep.subr.mxu0 0.0
  %1593 = vmatpush2.xpose.msra.mxu0 0.0
  %1594 = vmatprep.subr.mxu0 0.0
  %1595 = vmatpush2.xpose.msra.mxu0 0.0
  %1596 = vmatprep.subr.mxu0 0.0
  %1597 = vmatpush2.xpose.msra.mxu0 0.0
  %1598 = vmatprep.subr.mxu0 0.0
  %1599 = vmatpush2.xpose.msra.mxu0 0.0
  %1600 = vmatprep.subr.mxu0 0.0
  %1601 = vmatpush2.xpose.msra.mxu0 0.0
  %1602 = vmatprep.subr.mxu0 0.0
  %1603 = vmatpush2.xpose.msra.mxu0 0.0
  %1604 = vmatprep.subr.mxu0 0.0
  %1605 = vmatpush2.xpose.msra.mxu0 0.0
  %1606 = vmatprep.mubr.f32.mxu0 0.0
  %1607 = vmatmul.mubr.f32.gmra.mxu0 %v1537
  %v1608 = vpop.f32.mrf.mxu0
  %v1609 = vadd.f32 0.0, %v1608
  %v1610 = vpop.f32.mrf.mxu0
  %1611 = vdwg.mxu0
  %1612 = vrot.lane.b32.xlu0 %v321, 112
  %v1613 = vpop.permute.xlu0 %1612
  %1615 = vxpose.xlu0.b32.start [1/16] %v1613, 128
  %1616 = vxpose.xlu0.b32.cont [2/16] 0.0, 128
  %1617 = vxpose.xlu0.b32.cont [3/16] 0.0, 128
  %1618 = vxpose.xlu0.b32.cont [4/16] 0.0, 128
  %1619 = vxpose.xlu0.b32.cont [5/16] 0.0, 128
  %1620 = vxpose.xlu0.b32.cont [6/16] 0.0, 128
  %1621 = vxpose.xlu0.b32.cont [7/16] 0.0, 128
  %1622 = vxpose.xlu0.b32.cont [8/16] 0.0, 128
  %1623 = vxpose.xlu0.b32.cont [9/16] 0.0, 128
  %1624 = vxpose.xlu0.b32.cont [10/16] 0.0, 128
  %1625 = vxpose.xlu0.b32.cont [11/16] 0.0, 128
  %1626 = vxpose.xlu0.b32.cont [12/16] 0.0, 128
  %1627 = vxpose.xlu0.b32.cont [13/16] 0.0, 128
  %1628 = vxpose.xlu0.b32.cont [14/16] 0.0, 128
  %1629 = vxpose.xlu0.b32.cont [15/16] 0.0, 128
  %1630 = vxpose.xlu0.b32.end [16/16] 0.0, 128
  %v1631 = vpop.trf.xlu0
  %v1632 = vpop.trf.xlu0
  %v1633 = vpop.trf.xlu0
  %v1634 = vpop.trf.xlu0
  %v1635 = vpop.trf.xlu0
  %v1636 = vpop.trf.xlu0
  %v1637 = vpop.trf.xlu0
  %v1638 = vpop.trf.xlu0
  %v1639 = vpop.trf.xlu0
  %v1640 = vpop.trf.xlu0
  %v1641 = vpop.trf.xlu0
  %v1642 = vpop.trf.xlu0
  %v1643 = vpop.trf.xlu0
  %v1644 = vpop.trf.xlu0
  %v1645 = vpop.trf.xlu0
  %v1646 = vpop.trf.xlu0
  %v1648 = vsel %vm680, %v1631, 0
  %v1651 = vsel %vm680, %v1384, 0
  %1653 = vmatprep.subr.mxu0 0.0
  %1654 = vmatpush1.xpose.msra.mxu0 0.0
  %1655 = vmatprep.subr.mxu0 0.0
  %1656 = vmatpush1.xpose.msra.mxu0 0.0
  %1657 = vmatprep.subr.mxu0 0.0
  %1658 = vmatpush1.xpose.msra.mxu0 0.0
  %1659 = vmatprep.subr.mxu0 0.0
  %1660 = vmatpush1.xpose.msra.mxu0 0.0
  %1661 = vmatprep.subr.mxu0 0.0
  %1662 = vmatpush1.xpose.msra.mxu0 0.0
  %1663 = vmatprep.subr.mxu0 0.0
  %1664 = vmatpush1.xpose.msra.mxu0 0.0
  %1665 = vmatprep.subr.mxu0 0.0
  %1666 = vmatpush1.xpose.msra.mxu0 0.0
  %1667 = vmatprep.subr.mxu0 0.0
  %1668 = vmatpush1.xpose.msra.mxu0 0.0
  %1669 = vmatprep.subr.mxu0 0.0
  %1670 = vmatpush1.xpose.msra.mxu0 0.0
  %1671 = vmatprep.subr.mxu0 0.0
  %1672 = vmatpush1.xpose.msra.mxu0 0.0
  %1673 = vmatprep.subr.mxu0 0.0
  %1674 = vmatpush1.xpose.msra.mxu0 0.0
  %1675 = vmatprep.subr.mxu0 0.0
  %1676 = vmatpush1.xpose.msra.mxu0 0.0
  %1677 = vmatprep.subr.mxu0 0.0
  %1678 = vmatpush1.xpose.msra.mxu0 0.0
  %1679 = vmatprep.subr.mxu0 0.0
  %1680 = vmatpush1.xpose.msra.mxu0 0.0
  %1681 = vmatprep.subr.mxu0 0.0
  %1682 = vmatpush1.xpose.msra.mxu0 0.0
  %1683 = vmatprep.subr.mxu0 0.0
  %1684 = vmatpush1.xpose.msra.mxu0 %v1651
  %1685 = vmatprep.subr.mxu0 0.0
  %1686 = vmatpush2.xpose.msra.mxu0 0.0
  %1687 = vmatprep.subr.mxu0 0.0
  %1688 = vmatpush2.xpose.msra.mxu0 0.0
  %1689 = vmatprep.subr.mxu0 0.0
  %1690 = vmatpush2.xpose.msra.mxu0 0.0
  %1691 = vmatprep.subr.mxu0 0.0
  %1692 = vmatpush2.xpose.msra.mxu0 0.0
  %1693 = vmatprep.subr.mxu0 0.0
  %1694 = vmatpush2.xpose.msra.mxu0 0.0
  %1695 = vmatprep.subr.mxu0 0.0
  %1696 = vmatpush2.xpose.msra.mxu0 0.0
  %1697 = vmatprep.subr.mxu0 0.0
  %1698 = vmatpush2.xpose.msra.mxu0 0.0
  %1699 = vmatprep.subr.mxu0 0.0
  %1700 = vmatpush2.xpose.msra.mxu0 0.0
  %1701 = vmatprep.subr.mxu0 0.0
  %1702 = vmatpush2.xpose.msra.mxu0 0.0
  %1703 = vmatprep.subr.mxu0 0.0
  %1704 = vmatpush2.xpose.msra.mxu0 0.0
  %1705 = vmatprep.subr.mxu0 0.0
  %1706 = vmatpush2.xpose.msra.mxu0 0.0
  %1707 = vmatprep.subr.mxu0 0.0
  %1708 = vmatpush2.xpose.msra.mxu0 0.0
  %1709 = vmatprep.subr.mxu0 0.0
  %1710 = vmatpush2.xpose.msra.mxu0 0.0
  %1711 = vmatprep.subr.mxu0 0.0
  %1712 = vmatpush2.xpose.msra.mxu0 0.0
  %1713 = vmatprep.subr.mxu0 0.0
  %1714 = vmatpush2.xpose.msra.mxu0 0.0
  %1715 = vmatprep.subr.mxu0 0.0
  %1716 = vmatpush2.xpose.msra.mxu0 0.0
  %1717 = vmatprep.mubr.f32.mxu0 0.0
  %1718 = vmatmul.mubr.f32.gmra.mxu0 %v1648
  %v1719 = vpop.f32.mrf.mxu0
  %v1720 = vadd.f32 0.0, %v1719
  %v1721 = vpop.f32.mrf.mxu0
  %1722 = vdwg.mxu0
  %1723 = vrot.lane.b32.xlu0 %v391, 112
  %v1724 = vpop.permute.xlu0 %1723
  %1726 = vxpose.xlu0.b32.start [1/16] %v1724, 128
  %1727 = vxpose.xlu0.b32.cont [2/16] 0.0, 128
  %1728 = vxpose.xlu0.b32.cont [3/16] 0.0, 128
  %1729 = vxpose.xlu0.b32.cont [4/16] 0.0, 128
  %1730 = vxpose.xlu0.b32.cont [5/16] 0.0, 128
  %1731 = vxpose.xlu0.b32.cont [6/16] 0.0, 128
  %1732 = vxpose.xlu0.b32.cont [7/16] 0.0, 128
  %1733 = vxpose.xlu0.b32.cont [8/16] 0.0, 128
  %1734 = vxpose.xlu0.b32.cont [9/16] 0.0, 128
  %1735 = vxpose.xlu0.b32.cont [10/16] 0.0, 128
  %1736 = vxpose.xlu0.b32.cont [11/16] 0.0, 128
  %1737 = vxpose.xlu0.b32.cont [12/16] 0.0, 128
  %1738 = vxpose.xlu0.b32.cont [13/16] 0.0, 128
  %1739 = vxpose.xlu0.b32.cont [14/16] 0.0, 128
  %1740 = vxpose.xlu0.b32.cont [15/16] 0.0, 128
  %1741 = vxpose.xlu0.b32.end [16/16] 0.0, 128
  %v1742 = vpop.trf.xlu0
  %v1743 = vpop.trf.xlu0
  %v1744 = vpop.trf.xlu0
  %v1745 = vpop.trf.xlu0
  %v1746 = vpop.trf.xlu0
  %v1747 = vpop.trf.xlu0
  %v1748 = vpop.trf.xlu0
  %v1749 = vpop.trf.xlu0
  %v1750 = vpop.trf.xlu0
  %v1751 = vpop.trf.xlu0
  %v1752 = vpop.trf.xlu0
  %v1753 = vpop.trf.xlu0
  %v1754 = vpop.trf.xlu0
  %v1755 = vpop.trf.xlu0
  %v1756 = vpop.trf.xlu0
  %v1757 = vpop.trf.xlu0
  %v1759 = vsel %vm680, %v1742, 0
  %v1762 = vsel %vm680, %v1385, 0
  %1764 = vmatprep.subr.mxu0 0.0
  %1765 = vmatpush1.xpose.msra.mxu0 0.0
  %1766 = vmatprep.subr.mxu0 0.0
  %1767 = vmatpush1.xpose.msra.mxu0 0.0
  %1768 = vmatprep.subr.mxu0 0.0
  %1769 = vmatpush1.xpose.msra.mxu0 0.0
  %1770 = vmatprep.subr.mxu0 0.0
  %1771 = vmatpush1.xpose.msra.mxu0 0.0
  %1772 = vmatprep.subr.mxu0 0.0
  %1773 = vmatpush1.xpose.msra.mxu0 0.0
  %1774 = vmatprep.subr.mxu0 0.0
  %1775 = vmatpush1.xpose.msra.mxu0 0.0
  %1776 = vmatprep.subr.mxu0 0.0
  %1777 = vmatpush1.xpose.msra.mxu0 0.0
  %1778 = vmatprep.subr.mxu0 0.0
  %1779 = vmatpush1.xpose.msra.mxu0 0.0
  %1780 = vmatprep.subr.mxu0 0.0
  %1781 = vmatpush1.xpose.msra.mxu0 0.0
  %1782 = vmatprep.subr.mxu0 0.0
  %1783 = vmatpush1.xpose.msra.mxu0 0.0
  %1784 = vmatprep.subr.mxu0 0.0
  %1785 = vmatpush1.xpose.msra.mxu0 0.0
  %1786 = vmatprep.subr.mxu0 0.0
  %1787 = vmatpush1.xpose.msra.mxu0 0.0
  %1788 = vmatprep.subr.mxu0 0.0
  %1789 = vmatpush1.xpose.msra.mxu0 0.0
  %1790 = vmatprep.subr.mxu0 0.0
  %1791 = vmatpush1.xpose.msra.mxu0 0.0
  %1792 = vmatprep.subr.mxu0 0.0
  %1793 = vmatpush1.xpose.msra.mxu0 0.0
  %1794 = vmatprep.subr.mxu0 0.0
  %1795 = vmatpush1.xpose.msra.mxu0 %v1762
  %1796 = vmatprep.subr.mxu0 0.0
  %1797 = vmatpush2.xpose.msra.mxu0 0.0
  %1798 = vmatprep.subr.mxu0 0.0
  %1799 = vmatpush2.xpose.msra.mxu0 0.0
  %1800 = vmatprep.subr.mxu0 0.0
  %1801 = vmatpush2.xpose.msra.mxu0 0.0
  %1802 = vmatprep.subr.mxu0 0.0
  %1803 = vmatpush2.xpose.msra.mxu0 0.0
  %1804 = vmatprep.subr.mxu0 0.0
  %1805 = vmatpush2.xpose.msra.mxu0 0.0
  %1806 = vmatprep.subr.mxu0 0.0
  %1807 = vmatpush2.xpose.msra.mxu0 0.0
  %1808 = vmatprep.subr.mxu0 0.0
  %1809 = vmatpush2.xpose.msra.mxu0 0.0
  %1810 = vmatprep.subr.mxu0 0.0
  %1811 = vmatpush2.xpose.msra.mxu0 0.0
  %1812 = vmatprep.subr.mxu0 0.0
  %1813 = vmatpush2.xpose.msra.mxu0 0.0
  %1814 = vmatprep.subr.mxu0 0.0
  %1815 = vmatpush2.xpose.msra.mxu0 0.0
  %1816 = vmatprep.subr.mxu0 0.0
  %1817 = vmatpush2.xpose.msra.mxu0 0.0
  %1818 = vmatprep.subr.mxu0 0.0
  %1819 = vmatpush2.xpose.msra.mxu0 0.0
  %1820 = vmatprep.subr.mxu0 0.0
  %1821 = vmatpush2.xpose.msra.mxu0 0.0
  %1822 = vmatprep.subr.mxu0 0.0
  %1823 = vmatpush2.xpose.msra.mxu0 0.0
  %1824 = vmatprep.subr.mxu0 0.0
  %1825 = vmatpush2.xpose.msra.mxu0 0.0
  %1826 = vmatprep.subr.mxu0 0.0
  %1827 = vmatpush2.xpose.msra.mxu0 0.0
  %1828 = vmatprep.mubr.f32.mxu0 0.0
  %1829 = vmatmul.mubr.f32.gmra.mxu0 %v1759
  %v1830 = vpop.f32.mrf.mxu0
  %v1831 = vadd.f32 0.0, %v1830
  %v1832 = vpop.f32.mrf.mxu0
  %1833 = vdwg.mxu0
  %1834 = vrot.lane.b32.xlu0 %v464, 112
  %v1835 = vpop.permute.xlu0 %1834
  %1837 = vxpose.xlu0.b32.start [1/16] %v1835, 128
  %1838 = vxpose.xlu0.b32.cont [2/16] 0.0, 128
  %1839 = vxpose.xlu0.b32.cont [3/16] 0.0, 128
  %1840 = vxpose.xlu0.b32.cont [4/16] 0.0, 128
  %1841 = vxpose.xlu0.b32.cont [5/16] 0.0, 128
  %1842 = vxpose.xlu0.b32.cont [6/16] 0.0, 128
  %1843 = vxpose.xlu0.b32.cont [7/16] 0.0, 128
  %1844 = vxpose.xlu0.b32.cont [8/16] 0.0, 128
  %1845 = vxpose.xlu0.b32.cont [9/16] 0.0, 128
  %1846 = vxpose.xlu0.b32.cont [10/16] 0.0, 128
  %1847 = vxpose.xlu0.b32.cont [11/16] 0.0, 128
  %1848 = vxpose.xlu0.b32.cont [12/16] 0.0, 128
  %1849 = vxpose.xlu0.b32.cont [13/16] 0.0, 128
  %1850 = vxpose.xlu0.b32.cont [14/16] 0.0, 128
  %1851 = vxpose.xlu0.b32.cont [15/16] 0.0, 128
  %1852 = vxpose.xlu0.b32.end [16/16] 0.0, 128
  %v1853 = vpop.trf.xlu0
  %v1854 = vpop.trf.xlu0
  %v1855 = vpop.trf.xlu0
  %v1856 = vpop.trf.xlu0
  %v1857 = vpop.trf.xlu0
  %v1858 = vpop.trf.xlu0
  %v1859 = vpop.trf.xlu0
  %v1860 = vpop.trf.xlu0
  %v1861 = vpop.trf.xlu0
  %v1862 = vpop.trf.xlu0
  %v1863 = vpop.trf.xlu0
  %v1864 = vpop.trf.xlu0
  %v1865 = vpop.trf.xlu0
  %v1866 = vpop.trf.xlu0
  %v1867 = vpop.trf.xlu0
  %v1868 = vpop.trf.xlu0
  %v1870 = vsel %vm680, %v1853, 0
  %v1873 = vsel %vm680, %v1386, 0
  %1875 = vmatprep.subr.mxu0 0.0
  %1876 = vmatpush1.xpose.msra.mxu0 0.0
  %1877 = vmatprep.subr.mxu0 0.0
  %1878 = vmatpush1.xpose.msra.mxu0 0.0
  %1879 = vmatprep.subr.mxu0 0.0
  %1880 = vmatpush1.xpose.msra.mxu0 0.0
  %1881 = vmatprep.subr.mxu0 0.0
  %1882 = vmatpush1.xpose.msra.mxu0 0.0
  %1883 = vmatprep.subr.mxu0 0.0
  %1884 = vmatpush1.xpose.msra.mxu0 0.0
  %1885 = vmatprep.subr.mxu0 0.0
  %1886 = vmatpush1.xpose.msra.mxu0 0.0
  %1887 = vmatprep.subr.mxu0 0.0
  %1888 = vmatpush1.xpose.msra.mxu0 0.0
  %1889 = vmatprep.subr.mxu0 0.0
  %1890 = vmatpush1.xpose.msra.mxu0 0.0
  %1891 = vmatprep.subr.mxu0 0.0
  %1892 = vmatpush1.xpose.msra.mxu0 0.0
  %1893 = vmatprep.subr.mxu0 0.0
  %1894 = vmatpush1.xpose.msra.mxu0 0.0
  %1895 = vmatprep.subr.mxu0 0.0
  %1896 = vmatpush1.xpose.msra.mxu0 0.0
  %1897 = vmatprep.subr.mxu0 0.0
  %1898 = vmatpush1.xpose.msra.mxu0 0.0
  %1899 = vmatprep.subr.mxu0 0.0
  %1900 = vmatpush1.xpose.msra.mxu0 0.0
  %1901 = vmatprep.subr.mxu0 0.0
  %1902 = vmatpush1.xpose.msra.mxu0 0.0
  %1903 = vmatprep.subr.mxu0 0.0
  %1904 = vmatpush1.xpose.msra.mxu0 0.0
  %1905 = vmatprep.subr.mxu0 0.0
  %1906 = vmatpush1.xpose.msra.mxu0 %v1873
  %1907 = vmatprep.subr.mxu0 0.0
  %1908 = vmatpush2.xpose.msra.mxu0 0.0
  %1909 = vmatprep.subr.mxu0 0.0
  %1910 = vmatpush2.xpose.msra.mxu0 0.0
  %1911 = vmatprep.subr.mxu0 0.0
  %1912 = vmatpush2.xpose.msra.mxu0 0.0
  %1913 = vmatprep.subr.mxu0 0.0
  %1914 = vmatpush2.xpose.msra.mxu0 0.0
  %1915 = vmatprep.subr.mxu0 0.0
  %1916 = vmatpush2.xpose.msra.mxu0 0.0
  %1917 = vmatprep.subr.mxu0 0.0
  %1918 = vmatpush2.xpose.msra.mxu0 0.0
  %1919 = vmatprep.subr.mxu0 0.0
  %1920 = vmatpush2.xpose.msra.mxu0 0.0
  %1921 = vmatprep.subr.mxu0 0.0
  %1922 = vmatpush2.xpose.msra.mxu0 0.0
  %1923 = vmatprep.subr.mxu0 0.0
  %1924 = vmatpush2.xpose.msra.mxu0 0.0
  %1925 = vmatprep.subr.mxu0 0.0
  %1926 = vmatpush2.xpose.msra.mxu0 0.0
  %1927 = vmatprep.subr.mxu0 0.0
  %1928 = vmatpush2.xpose.msra.mxu0 0.0
  %1929 = vmatprep.subr.mxu0 0.0
  %1930 = vmatpush2.xpose.msra.mxu0 0.0
  %1931 = vmatprep.subr.mxu0 0.0
  %1932 = vmatpush2.xpose.msra.mxu0 0.0
  %1933 = vmatprep.subr.mxu0 0.0
  %1934 = vmatpush2.xpose.msra.mxu0 0.0
  %1935 = vmatprep.subr.mxu0 0.0
  %1936 = vmatpush2.xpose.msra.mxu0 0.0
  %1937 = vmatprep.subr.mxu0 0.0
  %1938 = vmatpush2.xpose.msra.mxu0 0.0
  %1939 = vmatprep.mubr.f32.mxu0 0.0
  %1940 = vmatmul.mubr.f32.gmra.mxu0 %v1870
  %v1941 = vpop.f32.mrf.mxu0
  %v1942 = vadd.f32 0.0, %v1941
  %v1943 = vpop.f32.mrf.mxu0
  %1944 = vdwg.mxu0
  %1945 = vrot.lane.b32.xlu0 %v534, 112
  %v1946 = vpop.permute.xlu0 %1945
  %1948 = vxpose.xlu0.b32.start [1/16] %v1946, 128
  %1949 = vxpose.xlu0.b32.cont [2/16] 0.0, 128
  %1950 = vxpose.xlu0.b32.cont [3/16] 0.0, 128
  %1951 = vxpose.xlu0.b32.cont [4/16] 0.0, 128
  %1952 = vxpose.xlu0.b32.cont [5/16] 0.0, 128
  %1953 = vxpose.xlu0.b32.cont [6/16] 0.0, 128
  %1954 = vxpose.xlu0.b32.cont [7/16] 0.0, 128
  %1955 = vxpose.xlu0.b32.cont [8/16] 0.0, 128
  %1956 = vxpose.xlu0.b32.cont [9/16] 0.0, 128
  %1957 = vxpose.xlu0.b32.cont [10/16] 0.0, 128
  %1958 = vxpose.xlu0.b32.cont [11/16] 0.0, 128
  %1959 = vxpose.xlu0.b32.cont [12/16] 0.0, 128
  %1960 = vxpose.xlu0.b32.cont [13/16] 0.0, 128
  %1961 = vxpose.xlu0.b32.cont [14/16] 0.0, 128
  %1962 = vxpose.xlu0.b32.cont [15/16] 0.0, 128
  %1963 = vxpose.xlu0.b32.end [16/16] 0.0, 128
  %v1964 = vpop.trf.xlu0
  %v1965 = vpop.trf.xlu0
  %v1966 = vpop.trf.xlu0
  %v1967 = vpop.trf.xlu0
  %v1968 = vpop.trf.xlu0
  %v1969 = vpop.trf.xlu0
  %v1970 = vpop.trf.xlu0
  %v1971 = vpop.trf.xlu0
  %v1972 = vpop.trf.xlu0
  %v1973 = vpop.trf.xlu0
  %v1974 = vpop.trf.xlu0
  %v1975 = vpop.trf.xlu0
  %v1976 = vpop.trf.xlu0
  %v1977 = vpop.trf.xlu0
  %v1978 = vpop.trf.xlu0
  %v1979 = vpop.trf.xlu0
  %v1981 = vsel %vm680, %v1964, 0
  %v1984 = vsel %vm680, %v1387, 0
  %1986 = vmatprep.subr.mxu0 0.0
  %1987 = vmatpush1.xpose.msra.mxu0 0.0
  %1988 = vmatprep.subr.mxu0 0.0
  %1989 = vmatpush1.xpose.msra.mxu0 0.0
  %1990 = vmatprep.subr.mxu0 0.0
  %1991 = vmatpush1.xpose.msra.mxu0 0.0
  %1992 = vmatprep.subr.mxu0 0.0
  %1993 = vmatpush1.xpose.msra.mxu0 0.0
  %1994 = vmatprep.subr.mxu0 0.0
  %1995 = vmatpush1.xpose.msra.mxu0 0.0
  %1996 = vmatprep.subr.mxu0 0.0
  %1997 = vmatpush1.xpose.msra.mxu0 0.0
  %1998 = vmatprep.subr.mxu0 0.0
  %1999 = vmatpush1.xpose.msra.mxu0 0.0
  %2000 = vmatprep.subr.mxu0 0.0
  %2001 = vmatpush1.xpose.msra.mxu0 0.0
  %2002 = vmatprep.subr.mxu0 0.0
  %2003 = vmatpush1.xpose.msra.mxu0 0.0
  %2004 = vmatprep.subr.mxu0 0.0
  %2005 = vmatpush1.xpose.msra.mxu0 0.0
  %2006 = vmatprep.subr.mxu0 0.0
  %2007 = vmatpush1.xpose.msra.mxu0 0.0
  %2008 = vmatprep.subr.mxu0 0.0
  %2009 = vmatpush1.xpose.msra.mxu0 0.0
  %2010 = vmatprep.subr.mxu0 0.0
  %2011 = vmatpush1.xpose.msra.mxu0 0.0
  %2012 = vmatprep.subr.mxu0 0.0
  %2013 = vmatpush1.xpose.msra.mxu0 0.0
  %2014 = vmatprep.subr.mxu0 0.0
  %2015 = vmatpush1.xpose.msra.mxu0 0.0
  %2016 = vmatprep.subr.mxu0 0.0
  %2017 = vmatpush1.xpose.msra.mxu0 %v1984
  %2018 = vmatprep.subr.mxu0 0.0
  %2019 = vmatpush2.xpose.msra.mxu0 0.0
  %2020 = vmatprep.subr.mxu0 0.0
  %2021 = vmatpush2.xpose.msra.mxu0 0.0
  %2022 = vmatprep.subr.mxu0 0.0
  %2023 = vmatpush2.xpose.msra.mxu0 0.0
  %2024 = vmatprep.subr.mxu0 0.0
  %2025 = vmatpush2.xpose.msra.mxu0 0.0
  %2026 = vmatprep.subr.mxu0 0.0
  %2027 = vmatpush2.xpose.msra.mxu0 0.0
  %2028 = vmatprep.subr.mxu0 0.0
  %2029 = vmatpush2.xpose.msra.mxu0 0.0
  %2030 = vmatprep.subr.mxu0 0.0
  %2031 = vmatpush2.xpose.msra.mxu0 0.0
  %2032 = vmatprep.subr.mxu0 0.0
  %2033 = vmatpush2.xpose.msra.mxu0 0.0
  %2034 = vmatprep.subr.mxu0 0.0
  %2035 = vmatpush2.xpose.msra.mxu0 0.0
  %2036 = vmatprep.subr.mxu0 0.0
  %2037 = vmatpush2.xpose.msra.mxu0 0.0
  %2038 = vmatprep.subr.mxu0 0.0
  %2039 = vmatpush2.xpose.msra.mxu0 0.0
  %2040 = vmatprep.subr.mxu0 0.0
  %2041 = vmatpush2.xpose.msra.mxu0 0.0
  %2042 = vmatprep.subr.mxu0 0.0
  %2043 = vmatpush2.xpose.msra.mxu0 0.0
  %2044 = vmatprep.subr.mxu0 0.0
  %2045 = vmatpush2.xpose.msra.mxu0 0.0
  %2046 = vmatprep.subr.mxu0 0.0
  %2047 = vmatpush2.xpose.msra.mxu0 0.0
  %2048 = vmatprep.subr.mxu0 0.0
  %2049 = vmatpush2.xpose.msra.mxu0 0.0
  %2050 = vmatprep.mubr.f32.mxu0 0.0
  %2051 = vmatmul.mubr.f32.gmra.mxu0 %v1981
  %v2052 = vpop.f32.mrf.mxu0
  %v2053 = vadd.f32 0.0, %v2052
  %v2054 = vpop.f32.mrf.mxu0
  %2055 = vdwg.mxu0
  %2056 = vrot.lane.b32.xlu0 %v604, 112
  %v2057 = vpop.permute.xlu0 %2056
  %2059 = vxpose.xlu0.b32.start [1/16] %v2057, 128
  %2060 = vxpose.xlu0.b32.cont [2/16] 0.0, 128
  %2061 = vxpose.xlu0.b32.cont [3/16] 0.0, 128
  %2062 = vxpose.xlu0.b32.cont [4/16] 0.0, 128
  %2063 = vxpose.xlu0.b32.cont [5/16] 0.0, 128
  %2064 = vxpose.xlu0.b32.cont [6/16] 0.0, 128
  %2065 = vxpose.xlu0.b32.cont [7/16] 0.0, 128
  %2066 = vxpose.xlu0.b32.cont [8/16] 0.0, 128
  %2067 = vxpose.xlu0.b32.cont [9/16] 0.0, 128
  %2068 = vxpose.xlu0.b32.cont [10/16] 0.0, 128
  %2069 = vxpose.xlu0.b32.cont [11/16] 0.0, 128
  %2070 = vxpose.xlu0.b32.cont [12/16] 0.0, 128
  %2071 = vxpose.xlu0.b32.cont [13/16] 0.0, 128
  %2072 = vxpose.xlu0.b32.cont [14/16] 0.0, 128
  %2073 = vxpose.xlu0.b32.cont [15/16] 0.0, 128
  %2074 = vxpose.xlu0.b32.end [16/16] 0.0, 128
  %v2075 = vpop.trf.xlu0
  %v2076 = vpop.trf.xlu0
  %v2077 = vpop.trf.xlu0
  %v2078 = vpop.trf.xlu0
  %v2079 = vpop.trf.xlu0
  %v2080 = vpop.trf.xlu0
  %v2081 = vpop.trf.xlu0
  %v2082 = vpop.trf.xlu0
  %v2083 = vpop.trf.xlu0
  %v2084 = vpop.trf.xlu0
  %v2085 = vpop.trf.xlu0
  %v2086 = vpop.trf.xlu0
  %v2087 = vpop.trf.xlu0
  %v2088 = vpop.trf.xlu0
  %v2089 = vpop.trf.xlu0
  %v2090 = vpop.trf.xlu0
  %v2092 = vsel %vm680, %v2075, 0
  %v2095 = vsel %vm680, %v1388, 0
  %2097 = vmatprep.subr.mxu0 0.0
  %2098 = vmatpush1.xpose.msra.mxu0 0.0
  %2099 = vmatprep.subr.mxu0 0.0
  %2100 = vmatpush1.xpose.msra.mxu0 0.0
  %2101 = vmatprep.subr.mxu0 0.0
  %2102 = vmatpush1.xpose.msra.mxu0 0.0
  %2103 = vmatprep.subr.mxu0 0.0
  %2104 = vmatpush1.xpose.msra.mxu0 0.0
  %2105 = vmatprep.subr.mxu0 0.0
  %2106 = vmatpush1.xpose.msra.mxu0 0.0
  %2107 = vmatprep.subr.mxu0 0.0
  %2108 = vmatpush1.xpose.msra.mxu0 0.0
  %2109 = vmatprep.subr.mxu0 0.0
  %2110 = vmatpush1.xpose.msra.mxu0 0.0
  %2111 = vmatprep.subr.mxu0 0.0
  %2112 = vmatpush1.xpose.msra.mxu0 0.0
  %2113 = vmatprep.subr.mxu0 0.0
  %2114 = vmatpush1.xpose.msra.mxu0 0.0
  %2115 = vmatprep.subr.mxu0 0.0
  %2116 = vmatpush1.xpose.msra.mxu0 0.0
  %2117 = vmatprep.subr.mxu0 0.0
  %2118 = vmatpush1.xpose.msra.mxu0 0.0
  %2119 = vmatprep.subr.mxu0 0.0
  %2120 = vmatpush1.xpose.msra.mxu0 0.0
  %2121 = vmatprep.subr.mxu0 0.0
  %2122 = vmatpush1.xpose.msra.mxu0 0.0
  %2123 = vmatprep.subr.mxu0 0.0
  %2124 = vmatpush1.xpose.msra.mxu0 0.0
  %2125 = vmatprep.subr.mxu0 0.0
  %2126 = vmatpush1.xpose.msra.mxu0 0.0
  %2127 = vmatprep.subr.mxu0 0.0
  %2128 = vmatpush1.xpose.msra.mxu0 %v2095
  %2129 = vmatprep.subr.mxu0 0.0
  %2130 = vmatpush2.xpose.msra.mxu0 0.0
  %2131 = vmatprep.subr.mxu0 0.0
  %2132 = vmatpush2.xpose.msra.mxu0 0.0
  %2133 = vmatprep.subr.mxu0 0.0
  %2134 = vmatpush2.xpose.msra.mxu0 0.0
  %2135 = vmatprep.subr.mxu0 0.0
  %2136 = vmatpush2.xpose.msra.mxu0 0.0
  %2137 = vmatprep.subr.mxu0 0.0
  %2138 = vmatpush2.xpose.msra.mxu0 0.0
  %2139 = vmatprep.subr.mxu0 0.0
  %2140 = vmatpush2.xpose.msra.mxu0 0.0
  %2141 = vmatprep.subr.mxu0 0.0
  %2142 = vmatpush2.xpose.msra.mxu0 0.0
  %2143 = vmatprep.subr.mxu0 0.0
  %2144 = vmatpush2.xpose.msra.mxu0 0.0
  %2145 = vmatprep.subr.mxu0 0.0
  %2146 = vmatpush2.xpose.msra.mxu0 0.0
  %2147 = vmatprep.subr.mxu0 0.0
  %2148 = vmatpush2.xpose.msra.mxu0 0.0
  %2149 = vmatprep.subr.mxu0 0.0
  %2150 = vmatpush2.xpose.msra.mxu0 0.0
  %2151 = vmatprep.subr.mxu0 0.0
  %2152 = vmatpush2.xpose.msra.mxu0 0.0
  %2153 = vmatprep.subr.mxu0 0.0
  %2154 = vmatpush2.xpose.msra.mxu0 0.0
  %2155 = vmatprep.subr.mxu0 0.0
  %2156 = vmatpush2.xpose.msra.mxu0 0.0
  %2157 = vmatprep.subr.mxu0 0.0
  %2158 = vmatpush2.xpose.msra.mxu0 0.0
  %2159 = vmatprep.subr.mxu0 0.0
  %2160 = vmatpush2.xpose.msra.mxu0 0.0
  %2161 = vmatprep.mubr.f32.mxu0 0.0
  %2162 = vmatmul.mubr.f32.gmra.mxu0 %v2092
  %v2163 = vpop.f32.mrf.mxu0
  %v2164 = vadd.f32 0.0, %v2163
  %v2165 = vpop.f32.mrf.mxu0
  %2166 = vdwg.mxu0
  %2167 = vrot.lane.b32.xlu0 %v674, 112
  %v2168 = vpop.permute.xlu0 %2167
  %2170 = vxpose.xlu0.b32.start [1/16] %v2168, 128
  %2171 = vxpose.xlu0.b32.cont [2/16] 0.0, 128
  %2172 = vxpose.xlu0.b32.cont [3/16] 0.0, 128
  %2173 = vxpose.xlu0.b32.cont [4/16] 0.0, 128
  %2174 = vxpose.xlu0.b32.cont [5/16] 0.0, 128
  %2175 = vxpose.xlu0.b32.cont [6/16] 0.0, 128
  %2176 = vxpose.xlu0.b32.cont [7/16] 0.0, 128
  %2177 = vxpose.xlu0.b32.cont [8/16] 0.0, 128
  %2178 = vxpose.xlu0.b32.cont [9/16] 0.0, 128
  %2179 = vxpose.xlu0.b32.cont [10/16] 0.0, 128
  %2180 = vxpose.xlu0.b32.cont [11/16] 0.0, 128
  %2181 = vxpose.xlu0.b32.cont [12/16] 0.0, 128
  %2182 = vxpose.xlu0.b32.cont [13/16] 0.0, 128
  %2183 = vxpose.xlu0.b32.cont [14/16] 0.0, 128
  %2184 = vxpose.xlu0.b32.cont [15/16] 0.0, 128
  %2185 = vxpose.xlu0.b32.end [16/16] 0.0, 128
  %v2186 = vpop.trf.xlu0
  %v2187 = vpop.trf.xlu0
  %v2188 = vpop.trf.xlu0
  %v2189 = vpop.trf.xlu0
  %v2190 = vpop.trf.xlu0
  %v2191 = vpop.trf.xlu0
  %v2192 = vpop.trf.xlu0
  %v2193 = vpop.trf.xlu0
  %v2194 = vpop.trf.xlu0
  %v2195 = vpop.trf.xlu0
  %v2196 = vpop.trf.xlu0
  %v2197 = vpop.trf.xlu0
  %v2198 = vpop.trf.xlu0
  %v2199 = vpop.trf.xlu0
  %v2200 = vpop.trf.xlu0
  %v2201 = vpop.trf.xlu0
  %v2203 = vsel %vm680, %v2186, 0
  %v2206 = vsel %vm680, %v1389, 0
  %2208 = vmatprep.subr.mxu0 0.0
  %2209 = vmatpush1.xpose.msra.mxu0 0.0
  %2210 = vmatprep.subr.mxu0 0.0
  %2211 = vmatpush1.xpose.msra.mxu0 0.0
  %2212 = vmatprep.subr.mxu0 0.0
  %2213 = vmatpush1.xpose.msra.mxu0 0.0
  %2214 = vmatprep.subr.mxu0 0.0
  %2215 = vmatpush1.xpose.msra.mxu0 0.0
  %2216 = vmatprep.subr.mxu0 0.0
  %2217 = vmatpush1.xpose.msra.mxu0 0.0
  %2218 = vmatprep.subr.mxu0 0.0
  %2219 = vmatpush1.xpose.msra.mxu0 0.0
  %2220 = vmatprep.subr.mxu0 0.0
  %2221 = vmatpush1.xpose.msra.mxu0 0.0
  %2222 = vmatprep.subr.mxu0 0.0
  %2223 = vmatpush1.xpose.msra.mxu0 0.0
  %2224 = vmatprep.subr.mxu0 0.0
  %2225 = vmatpush1.xpose.msra.mxu0 0.0
  %2226 = vmatprep.subr.mxu0 0.0
  %2227 = vmatpush1.xpose.msra.mxu0 0.0
  %2228 = vmatprep.subr.mxu0 0.0
  %2229 = vmatpush1.xpose.msra.mxu0 0.0
  %2230 = vmatprep.subr.mxu0 0.0
  %2231 = vmatpush1.xpose.msra.mxu0 0.0
  %2232 = vmatprep.subr.mxu0 0.0
  %2233 = vmatpush1.xpose.msra.mxu0 0.0
  %2234 = vmatprep.subr.mxu0 0.0
  %2235 = vmatpush1.xpose.msra.mxu0 0.0
  %2236 = vmatprep.subr.mxu0 0.0
  %2237 = vmatpush1.xpose.msra.mxu0 0.0
  %2238 = vmatprep.subr.mxu0 0.0
  %2239 = vmatpush1.xpose.msra.mxu0 %v2206
  %2240 = vmatprep.subr.mxu0 0.0
  %2241 = vmatpush2.xpose.msra.mxu0 0.0
  %2242 = vmatprep.subr.mxu0 0.0
  %2243 = vmatpush2.xpose.msra.mxu0 0.0
  %2244 = vmatprep.subr.mxu0 0.0
  %2245 = vmatpush2.xpose.msra.mxu0 0.0
  %2246 = vmatprep.subr.mxu0 0.0
  %2247 = vmatpush2.xpose.msra.mxu0 0.0
  %2248 = vmatprep.subr.mxu0 0.0
  %2249 = vmatpush2.xpose.msra.mxu0 0.0
  %2250 = vmatprep.subr.mxu0 0.0
  %2251 = vmatpush2.xpose.msra.mxu0 0.0
  %2252 = vmatprep.subr.mxu0 0.0
  %2253 = vmatpush2.xpose.msra.mxu0 0.0
  %2254 = vmatprep.subr.mxu0 0.0
  %2255 = vmatpush2.xpose.msra.mxu0 0.0
  %2256 = vmatprep.subr.mxu0 0.0
  %2257 = vmatpush2.xpose.msra.mxu0 0.0
  %2258 = vmatprep.subr.mxu0 0.0
  %2259 = vmatpush2.xpose.msra.mxu0 0.0
  %2260 = vmatprep.subr.mxu0 0.0
  %2261 = vmatpush2.xpose.msra.mxu0 0.0
  %2262 = vmatprep.subr.mxu0 0.0
  %2263 = vmatpush2.xpose.msra.mxu0 0.0
  %2264 = vmatprep.subr.mxu0 0.0
  %2265 = vmatpush2.xpose.msra.mxu0 0.0
  %2266 = vmatprep.subr.mxu0 0.0
  %2267 = vmatpush2.xpose.msra.mxu0 0.0
  %2268 = vmatprep.subr.mxu0 0.0
  %2269 = vmatpush2.xpose.msra.mxu0 0.0
  %2270 = vmatprep.subr.mxu0 0.0
  %2271 = vmatpush2.xpose.msra.mxu0 0.0
  %2272 = vmatprep.mubr.f32.mxu0 0.0
  %2273 = vmatmul.mubr.f32.gmra.mxu0 %v2203
  %v2274 = vpop.f32.mrf.mxu0
  %v2275 = vadd.f32 0.0, %v2274
  %v2276 = vpop.f32.mrf.mxu0
  %2277 = vdwg.mxu0
  %2278 = vxpose.xlu0.b32.start [1/16] %v1498, 128
  %2279 = vxpose.xlu0.b32.cont [2/16] %v1609, 128
  %2280 = vxpose.xlu0.b32.cont [3/16] %v1720, 128
  %2281 = vxpose.xlu0.b32.cont [4/16] %v1831, 128
  %2282 = vxpose.xlu0.b32.cont [5/16] 0.0, 128
  %2283 = vxpose.xlu0.b32.cont [6/16] 0.0, 128
  %2284 = vxpose.xlu0.b32.cont [7/16] 0.0, 128
  %2285 = vxpose.xlu0.b32.cont [8/16] 0.0, 128
  %2286 = vxpose.xlu0.b32.cont [9/16] 0.0, 128
  %2287 = vxpose.xlu0.b32.cont [10/16] 0.0, 128
  %2288 = vxpose.xlu0.b32.cont [11/16] 0.0, 128
  %2289 = vxpose.xlu0.b32.cont [12/16] 0.0, 128
  %2290 = vxpose.xlu0.b32.cont [13/16] 0.0, 128
  %2291 = vxpose.xlu0.b32.cont [14/16] 0.0, 128
  %2292 = vxpose.xlu0.b32.cont [15/16] 0.0, 128
  %2293 = vxpose.xlu0.b32.end [16/16] 0.0, 128
  %v2294 = vpop.trf.xlu0
  %v2295 = vpop.trf.xlu0
  %v2296 = vpop.trf.xlu0
  %v2297 = vpop.trf.xlu0
  %v2298 = vpop.trf.xlu0
  %v2299 = vpop.trf.xlu0
  %v2300 = vpop.trf.xlu0
  %v2301 = vpop.trf.xlu0
  %v2302 = vpop.trf.xlu0
  %v2303 = vpop.trf.xlu0
  %v2304 = vpop.trf.xlu0
  %v2305 = vpop.trf.xlu0
  %v2306 = vpop.trf.xlu0
  %v2307 = vpop.trf.xlu0
  %v2308 = vpop.trf.xlu0
  %v2309 = vpop.trf.xlu0
  %2310 = vxpose.xlu0.b32.start [1/16] %v1942, 128
  %2311 = vxpose.xlu0.b32.cont [2/16] %v2053, 128
  %2312 = vxpose.xlu0.b32.cont [3/16] %v2164, 128
  %2313 = vxpose.xlu0.b32.cont [4/16] %v2275, 128
  %2314 = vxpose.xlu0.b32.cont [5/16] 0.0, 128
  %2315 = vxpose.xlu0.b32.cont [6/16] 0.0, 128
  %2316 = vxpose.xlu0.b32.cont [7/16] 0.0, 128
  %2317 = vxpose.xlu0.b32.cont [8/16] 0.0, 128
  %2318 = vxpose.xlu0.b32.cont [9/16] 0.0, 128
  %2319 = vxpose.xlu0.b32.cont [10/16] 0.0, 128
  %2320 = vxpose.xlu0.b32.cont [11/16] 0.0, 128
  %2321 = vxpose.xlu0.b32.cont [12/16] 0.0, 128
  %2322 = vxpose.xlu0.b32.cont [13/16] 0.0, 128
  %2323 = vxpose.xlu0.b32.cont [14/16] 0.0, 128
  %2324 = vxpose.xlu0.b32.cont [15/16] 0.0, 128
  %2325 = vxpose.xlu0.b32.end [16/16] 0.0, 128
  %v2326 = vpop.trf.xlu0
  %v2327 = vpop.trf.xlu0
  %v2328 = vpop.trf.xlu0
  %v2329 = vpop.trf.xlu0
  %v2330 = vpop.trf.xlu0
  %v2331 = vpop.trf.xlu0
  %v2332 = vpop.trf.xlu0
  %v2333 = vpop.trf.xlu0
  %v2334 = vpop.trf.xlu0
  %v2335 = vpop.trf.xlu0
  %v2336 = vpop.trf.xlu0
  %v2337 = vpop.trf.xlu0
  %v2338 = vpop.trf.xlu0
  %v2339 = vpop.trf.xlu0
  %v2340 = vpop.trf.xlu0
  %v2341 = vpop.trf.xlu0
  %v2342 = vlaneseq
  %v2343 = vshrl.u32 %v2342, 7
  %v2344 = vsub.s32 0, %v2343
  %v2345 = vrot.slane %v61, %v2344
  %v2347 = vsel %vm110, %v2294, 0
  %v2350 = vsel %vm110, %v2326, 0
  %2352 = vmatprep.subr.mxu0 0.0
  %2353 = vmatpush1.msra.mxu0 0.0
  %2354 = vmatprep.subr.mxu0 0.0
  %2355 = vmatpush1.msra.mxu0 0.0
  %2356 = vmatprep.subr.mxu0 0.0
  %2357 = vmatpush1.msra.mxu0 0.0
  %2358 = vmatprep.subr.mxu0 0.0
  %2359 = vmatpush1.msra.mxu0 0.0
  %2360 = vmatprep.subr.mxu0 0.0
  %2361 = vmatpush1.msra.mxu0 0.0
  %2362 = vmatprep.subr.mxu0 0.0
  %2363 = vmatpush1.msra.mxu0 0.0
  %2364 = vmatprep.subr.mxu0 0.0
  %2365 = vmatpush1.msra.mxu0 0.0
  %2366 = vmatprep.subr.mxu0 0.0
  %2367 = vmatpush1.msra.mxu0 0.0
  %2368 = vmatprep.subr.mxu0 0.0
  %2369 = vmatpush1.msra.mxu0 0.0
  %2370 = vmatprep.subr.mxu0 0.0
  %2371 = vmatpush1.msra.mxu0 0.0
  %2372 = vmatprep.subr.mxu0 0.0
  %2373 = vmatpush1.msra.mxu0 0.0
  %2374 = vmatprep.subr.mxu0 0.0
  %2375 = vmatpush1.msra.mxu0 0.0
  %2376 = vmatprep.subr.mxu0 0.0
  %2377 = vmatpush1.msra.mxu0 %v85
  %2378 = vmatprep.subr.mxu0 0.0
  %2379 = vmatpush1.msra.mxu0 %v84
  %2380 = vmatprep.subr.mxu0 0.0
  %2381 = vmatpush1.msra.mxu0 %v83
  %2382 = vmatprep.subr.mxu0 0.0
  %2383 = vmatpush1.msra.mxu0 %v82
  %2384 = vmatprep.subr.mxu0 0.0
  %2385 = vmatpush2.msra.mxu0 0.0
  %2386 = vmatprep.subr.mxu0 0.0
  %2387 = vmatpush2.msra.mxu0 0.0
  %2388 = vmatprep.subr.mxu0 0.0
  %2389 = vmatpush2.msra.mxu0 0.0
  %2390 = vmatprep.subr.mxu0 0.0
  %2391 = vmatpush2.msra.mxu0 0.0
  %2392 = vmatprep.subr.mxu0 0.0
  %2393 = vmatpush2.msra.mxu0 0.0
  %2394 = vmatprep.subr.mxu0 0.0
  %2395 = vmatpush2.msra.mxu0 0.0
  %2396 = vmatprep.subr.mxu0 0.0
  %2397 = vmatpush2.msra.mxu0 0.0
  %2398 = vmatprep.subr.mxu0 0.0
  %2399 = vmatpush2.msra.mxu0 0.0
  %2400 = vmatprep.subr.mxu0 0.0
  %2401 = vmatpush2.msra.mxu0 0.0
  %2402 = vmatprep.subr.mxu0 0.0
  %2403 = vmatpush2.msra.mxu0 0.0
  %2404 = vmatprep.subr.mxu0 0.0
  %2405 = vmatpush2.msra.mxu0 0.0
  %2406 = vmatprep.subr.mxu0 0.0
  %2407 = vmatpush2.msra.mxu0 0.0
  %2408 = vmatprep.subr.mxu0 0.0
  %2409 = vmatpush2.msra.mxu0 0.0
  %2410 = vmatprep.subr.mxu0 0.0
  %2411 = vmatpush2.msra.mxu0 0.0
  %2412 = vmatprep.subr.mxu0 0.0
  %2413 = vmatpush2.msra.mxu0 0.0
  %2414 = vmatprep.subr.mxu0 0.0
  %2415 = vmatpush2.msra.mxu0 0.0
  %2416 = vmatprep.mubr.f32.mxu0 0.0
  %2417 = vmatmul.mubr.f32.gmra.mxu0 %v2347
  %v2418 = vpop.f32.mrf.mxu0
  %v2419 = vadd.f32 %v2345, %v2418
  %v2420 = vpop.f32.mrf.mxu0
  %2421 = vmatprep.mubr.f32.mxu0 0.0
  %2422 = vmatmul.mubr.f32.gmra.mxu0 %v2350
  %v2423 = vpop.f32.mrf.mxu0
  %v2424 = vadd.f32 %v2345, %v2423
  %v2425 = vpop.f32.mrf.mxu0
  %2426 = vdwg.mxu0
  %v2427 = vsel %vm110, %v2419, 0.0
  %2428 = vadd.xlane.f32.xlu0 %v2427
  %v2429 = vpop.xlane.xlu0 %2428
  %v2430 = vsel %vm110, %v2424, 0.0
  %2431 = vadd.xlane.f32.xlu0 %v2430
  %v2432 = vpop.xlane.xlu0 %2431
  %v2433 = vrcp.pop 32.0
  %v2434 = vmul.f32 %v2429, %v2433
  %v2435 = vmul.f32 %v2432, %v2433
  %v2436 = vsub.f32 %v2419, %v2434
  %v2437 = vsub.f32 %v2424, %v2435
  %v2438 = vmul.f32 %v2436, %v2436
  %v2439 = vmul.f32 %v2437, %v2437
  %v2440 = vsel %vm110, %v2438, 0.0
  %2441 = vadd.xlane.f32.xlu0 %v2440
  %v2442 = vpop.xlane.xlu0 %2441
  %v2443 = vsel %vm110, %v2439, 0.0
  %2444 = vadd.xlane.f32.xlu0 %v2443
  %v2445 = vpop.xlane.xlu0 %2444
  %v2446 = vmul.f32 %v2442, %v2433
  %v2447 = vmul.f32 %v2445, %v2433
  %v2448 = vadd.f32 %v2446, 1e-05
  %v2449 = vadd.f32 %v2447, 1e-05
  %v2450 = vrsqrt.pop %v2448
  %v2451 = vrsqrt.pop %v2449
  %v2452 = vmul.f32 %v2436, %v2450
  %v2453 = vmul.f32 %v2437, %v2451
  %v2454 = vlaneseq
  %v2455 = vshrl.u32 %v2454, 7
  %v2456 = vsub.s32 1, %v2455
  %v2457 = vrot.slane %v61, %v2456
  %v2458 = vmul.f32 %v2452, %v2457
  %v2459 = vmul.f32 %v2453, %v2457
  %v2460 = vlaneseq
  %v2461 = vshrl.u32 %v2460, 7
  %v2462 = vsub.s32 2, %v2461
  %v2463 = vrot.slane %v61, %v2462
  %v2464 = vadd.f32 %v2458, %v2463
  %v2465 = vadd.f32 %v2459, %v2463
  %v2466 = vld [vmem:[%s6] sm:$0xff]
  %v2467 = vld [vmem:[%s6 + $0x8] sm:$0xff]
  %v2468 = vld [vmem:[%s6 + $0x10] sm:$0xff]
  %v2469 = vld [vmem:[%s6 + $0x18] sm:$0xff]
  %v2470 = vlaneseq
  %v2471 = vshrl.u32 %v2470, 7
  %v2472 = vsub.s32 3, %v2471
  %v2473 = vrot.slane %v61, %v2472
  %v2475 = vsel %vm110, %v2464, 0
  %v2478 = vsel %vm110, %v2465, 0
  %2480 = vmatprep.subr.mxu0 0.0
  %2481 = vmatpush1.msra.mxu0 0.0
  %2482 = vmatprep.subr.mxu0 0.0
  %2483 = vmatpush1.msra.mxu0 0.0
  %2484 = vmatprep.subr.mxu0 0.0
  %2485 = vmatpush1.msra.mxu0 0.0
  %2486 = vmatprep.subr.mxu0 0.0
  %2487 = vmatpush1.msra.mxu0 0.0
  %2488 = vmatprep.subr.mxu0 0.0
  %2489 = vmatpush1.msra.mxu0 0.0
  %2490 = vmatprep.subr.mxu0 0.0
  %2491 = vmatpush1.msra.mxu0 0.0
  %2492 = vmatprep.subr.mxu0 0.0
  %2493 = vmatpush1.msra.mxu0 0.0
  %2494 = vmatprep.subr.mxu0 0.0
  %2495 = vmatpush1.msra.mxu0 0.0
  %2496 = vmatprep.subr.mxu0 0.0
  %2497 = vmatpush1.msra.mxu0 0.0
  %2498 = vmatprep.subr.mxu0 0.0
  %2499 = vmatpush1.msra.mxu0 0.0
  %2500 = vmatprep.subr.mxu0 0.0
  %2501 = vmatpush1.msra.mxu0 0.0
  %2502 = vmatprep.subr.mxu0 0.0
  %2503 = vmatpush1.msra.mxu0 0.0
  %2504 = vmatprep.subr.mxu0 0.0
  %2505 = vmatpush1.msra.mxu0 %v2469
  %2506 = vmatprep.subr.mxu0 0.0
  %2507 = vmatpush1.msra.mxu0 %v2468
  %2508 = vmatprep.subr.mxu0 0.0
  %2509 = vmatpush1.msra.mxu0 %v2467
  %2510 = vmatprep.subr.mxu0 0.0
  %2511 = vmatpush1.msra.mxu0 %v2466
  %2512 = vmatprep.subr.mxu0 0.0
  %2513 = vmatpush2.msra.mxu0 0.0
  %2514 = vmatprep.subr.mxu0 0.0
  %2515 = vmatpush2.msra.mxu0 0.0
  %2516 = vmatprep.subr.mxu0 0.0
  %2517 = vmatpush2.msra.mxu0 0.0
  %2518 = vmatprep.subr.mxu0 0.0
  %2519 = vmatpush2.msra.mxu0 0.0
  %2520 = vmatprep.subr.mxu0 0.0
  %2521 = vmatpush2.msra.mxu0 0.0
  %2522 = vmatprep.subr.mxu0 0.0
  %2523 = vmatpush2.msra.mxu0 0.0
  %2524 = vmatprep.subr.mxu0 0.0
  %2525 = vmatpush2.msra.mxu0 0.0
  %2526 = vmatprep.subr.mxu0 0.0
  %2527 = vmatpush2.msra.mxu0 0.0
  %2528 = vmatprep.subr.mxu0 0.0
  %2529 = vmatpush2.msra.mxu0 0.0
  %2530 = vmatprep.subr.mxu0 0.0
  %2531 = vmatpush2.msra.mxu0 0.0
  %2532 = vmatprep.subr.mxu0 0.0
  %2533 = vmatpush2.msra.mxu0 0.0
  %2534 = vmatprep.subr.mxu0 0.0
  %2535 = vmatpush2.msra.mxu0 0.0
  %2536 = vmatprep.subr.mxu0 0.0
  %2537 = vmatpush2.msra.mxu0 0.0
  %2538 = vmatprep.subr.mxu0 0.0
  %2539 = vmatpush2.msra.mxu0 0.0
  %2540 = vmatprep.subr.mxu0 0.0
  %2541 = vmatpush2.msra.mxu0 0.0
  %2542 = vmatprep.subr.mxu0 0.0
  %2543 = vmatpush2.msra.mxu0 0.0
  %2544 = vmatprep.mubr.f32.mxu0 0.0
  %2545 = vmatmul.mubr.f32.gmra.mxu0 %v2475
  %v2546 = vpop.f32.mrf.mxu0
  %v2547 = vadd.f32 %v2473, %v2546
  %v2548 = vpop.f32.mrf.mxu0
  %2549 = vmatprep.mubr.f32.mxu0 0.0
  %2550 = vmatmul.mubr.f32.gmra.mxu0 %v2478
  %v2551 = vpop.f32.mrf.mxu0
  %v2552 = vadd.f32 %v2473, %v2551
  %v2553 = vpop.f32.mrf.mxu0
  %2554 = vdwg.mxu0
  %v2555 = vld [vmem:[%s7] sm:$0xff]
  %v2556 = vld [vmem:[%s7 + $0x8] sm:$0xff]
  %v2557 = vld [vmem:[%s7 + $0x10] sm:$0xff]
  %v2558 = vld [vmem:[%s7 + $0x18] sm:$0xff]
  %v2559 = vlaneseq
  %v2560 = vshrl.u32 %v2559, 7
  %v2561 = vsub.s32 4, %v2560
  %v2562 = vrot.slane %v61, %v2561
  %v2564 = vsel %vm110, %v2547, 0
  %v2567 = vsel %vm110, %v2552, 0
  %2569 = vmatprep.subr.mxu0 0.0
  %2570 = vmatpush1.msra.mxu0 0.0
  %2571 = vmatprep.subr.mxu0 0.0
  %2572 = vmatpush1.msra.mxu0 0.0
  %2573 = vmatprep.subr.mxu0 0.0
  %2574 = vmatpush1.msra.mxu0 0.0
  %2575 = vmatprep.subr.mxu0 0.0
  %2576 = vmatpush1.msra.mxu0 0.0
  %2577 = vmatprep.subr.mxu0 0.0
  %2578 = vmatpush1.msra.mxu0 0.0
  %2579 = vmatprep.subr.mxu0 0.0
  %2580 = vmatpush1.msra.mxu0 0.0
  %2581 = vmatprep.subr.mxu0 0.0
  %2582 = vmatpush1.msra.mxu0 0.0
  %2583 = vmatprep.subr.mxu0 0.0
  %2584 = vmatpush1.msra.mxu0 0.0
  %2585 = vmatprep.subr.mxu0 0.0
  %2586 = vmatpush1.msra.mxu0 0.0
  %2587 = vmatprep.subr.mxu0 0.0
  %2588 = vmatpush1.msra.mxu0 0.0
  %2589 = vmatprep.subr.mxu0 0.0
  %2590 = vmatpush1.msra.mxu0 0.0
  %2591 = vmatprep.subr.mxu0 0.0
  %2592 = vmatpush1.msra.mxu0 0.0
  %2593 = vmatprep.subr.mxu0 0.0
  %2594 = vmatpush1.msra.mxu0 %v2558
  %2595 = vmatprep.subr.mxu0 0.0
  %2596 = vmatpush1.msra.mxu0 %v2557
  %2597 = vmatprep.subr.mxu0 0.0
  %2598 = vmatpush1.msra.mxu0 %v2556
  %2599 = vmatprep.subr.mxu0 0.0
  %2600 = vmatpush1.msra.mxu0 %v2555
  %2601 = vmatprep.subr.mxu0 0.0
  %2602 = vmatpush2.msra.mxu0 0.0
  %2603 = vmatprep.subr.mxu0 0.0
  %2604 = vmatpush2.msra.mxu0 0.0
  %2605 = vmatprep.subr.mxu0 0.0
  %2606 = vmatpush2.msra.mxu0 0.0
  %2607 = vmatprep.subr.mxu0 0.0
  %2608 = vmatpush2.msra.mxu0 0.0
  %2609 = vmatprep.subr.mxu0 0.0
  %2610 = vmatpush2.msra.mxu0 0.0
  %2611 = vmatprep.subr.mxu0 0.0
  %2612 = vmatpush2.msra.mxu0 0.0
  %2613 = vmatprep.subr.mxu0 0.0
  %2614 = vmatpush2.msra.mxu0 0.0
  %2615 = vmatprep.subr.mxu0 0.0
  %2616 = vmatpush2.msra.mxu0 0.0
  %2617 = vmatprep.subr.mxu0 0.0
  %2618 = vmatpush2.msra.mxu0 0.0
  %2619 = vmatprep.subr.mxu0 0.0
  %2620 = vmatpush2.msra.mxu0 0.0
  %2621 = vmatprep.subr.mxu0 0.0
  %2622 = vmatpush2.msra.mxu0 0.0
  %2623 = vmatprep.subr.mxu0 0.0
  %2624 = vmatpush2.msra.mxu0 0.0
  %2625 = vmatprep.subr.mxu0 0.0
  %2626 = vmatpush2.msra.mxu0 0.0
  %2627 = vmatprep.subr.mxu0 0.0
  %2628 = vmatpush2.msra.mxu0 0.0
  %2629 = vmatprep.subr.mxu0 0.0
  %2630 = vmatpush2.msra.mxu0 0.0
  %2631 = vmatprep.subr.mxu0 0.0
  %2632 = vmatpush2.msra.mxu0 0.0
  %2633 = vmatprep.mubr.f32.mxu0 0.0
  %2634 = vmatmul.mubr.f32.gmra.mxu0 %v2564
  %v2635 = vpop.f32.mrf.mxu0
  %v2636 = vadd.f32 %v2562, %v2635
  %v2637 = vpop.f32.mrf.mxu0
  %2638 = vmatprep.mubr.f32.mxu0 0.0
  %2639 = vmatmul.mubr.f32.gmra.mxu0 %v2567
  %v2640 = vpop.f32.mrf.mxu0
  %v2641 = vadd.f32 %v2562, %v2640
  %v2642 = vpop.f32.mrf.mxu0
  %2643 = vdwg.mxu0
  %v2644 = vsel %vm110, %v2636, 0.0
  %v2645 = vrot.slane %v2644, 4
  %v2646 = vadd.f32 %v2644, %v2645
  %v2647 = vrot.slane %v2646, 2
  %v2648 = vadd.f32 %v2646, %v2647
  %v2649 = vrot.slane %v2648, 1
  %v2650 = vadd.f32 %v2648, %v2649
  %v2651 = vsel %vm110, %v2641, 0.0
  %v2652 = vrot.slane %v2651, 4
  %v2653 = vadd.f32 %v2651, %v2652
  %v2654 = vrot.slane %v2653, 2
  %v2655 = vadd.f32 %v2653, %v2654
  %v2656 = vrot.slane %v2655, 1
  %v2657 = vadd.f32 %v2655, %v2656
  %v2658 = vrcp.pop 8.0
  %v2659 = vmul.f32 %v2650, %v2658
  %v2660 = vmul.f32 %v2657, %v2658
  %v2661 = vld [vmem:[%s8] sm:$0xff]
  %v2662 = vld [vmem:[%s8 + $0x8] sm:$0xff]
  %v2663 = vld [vmem:[%s8 + $0x10] sm:$0xff]
  %v2664 = vld [vmem:[%s8 + $0x18] sm:$0xff]
  %v2665 = vlaneseq
  %v2666 = vshrl.u32 %v2665, 7
  %v2667 = vsub.s32 5, %v2666
  %v2668 = vrot.slane %v61, %v2667
  %vm2671 = vcmask 1041409
  %v2672 = vsel %vm2671, %v2660, %v2659
  %v2673 = vsel %vm110, %v2672, 0
  %2675 = vmatprep.subr.mxu0 0.0
  %2676 = vmatpush1.msra.mxu0 0.0
  %2677 = vmatprep.subr.mxu0 0.0
  %2678 = vmatpush1.msra.mxu0 0.0
  %2679 = vmatprep.subr.mxu0 0.0
  %2680 = vmatpush1.msra.mxu0 0.0
  %2681 = vmatprep.subr.mxu0 0.0
  %2682 = vmatpush1.msra.mxu0 0.0
  %2683 = vmatprep.subr.mxu0 0.0
  %2684 = vmatpush1.msra.mxu0 0.0
  %2685 = vmatprep.subr.mxu0 0.0
  %2686 = vmatpush1.msra.mxu0 0.0
  %2687 = vmatprep.subr.mxu0 0.0
  %2688 = vmatpush1.msra.mxu0 0.0
  %2689 = vmatprep.subr.mxu0 0.0
  %2690 = vmatpush1.msra.mxu0 0.0
  %2691 = vmatprep.subr.mxu0 0.0
  %2692 = vmatpush1.msra.mxu0 0.0
  %2693 = vmatprep.subr.mxu0 0.0
  %2694 = vmatpush1.msra.mxu0 0.0
  %2695 = vmatprep.subr.mxu0 0.0
  %2696 = vmatpush1.msra.mxu0 0.0
  %2697 = vmatprep.subr.mxu0 0.0
  %2698 = vmatpush1.msra.mxu0 0.0
  %2699 = vmatprep.subr.mxu0 0.0
  %2700 = vmatpush1.msra.mxu0 %v2664
  %2701 = vmatprep.subr.mxu0 0.0
  %2702 = vmatpush1.msra.mxu0 %v2663
  %2703 = vmatprep.subr.mxu0 0.0
  %2704 = vmatpush1.msra.mxu0 %v2662
  %2705 = vmatprep.subr.mxu0 0.0
  %2706 = vmatpush1.msra.mxu0 %v2661
  %2707 = vmatprep.subr.mxu0 0.0
  %2708 = vmatpush2.msra.mxu0 0.0
  %2709 = vmatprep.subr.mxu0 0.0
  %2710 = vmatpush2.msra.mxu0 0.0
  %2711 = vmatprep.subr.mxu0 0.0
  %2712 = vmatpush2.msra.mxu0 0.0
  %2713 = vmatprep.subr.mxu0 0.0
  %2714 = vmatpush2.msra.mxu0 0.0
  %2715 = vmatprep.subr.mxu0 0.0
  %2716 = vmatpush2.msra.mxu0 0.0
  %2717 = vmatprep.subr.mxu0 0.0
  %2718 = vmatpush2.msra.mxu0 0.0
  %2719 = vmatprep.subr.mxu0 0.0
  %2720 = vmatpush2.msra.mxu0 0.0
  %2721 = vmatprep.subr.mxu0 0.0
  %2722 = vmatpush2.msra.mxu0 0.0
  %2723 = vmatprep.subr.mxu0 0.0
  %2724 = vmatpush2.msra.mxu0 0.0
  %2725 = vmatprep.subr.mxu0 0.0
  %2726 = vmatpush2.msra.mxu0 0.0
  %2727 = vmatprep.subr.mxu0 0.0
  %2728 = vmatpush2.msra.mxu0 0.0
  %2729 = vmatprep.subr.mxu0 0.0
  %2730 = vmatpush2.msra.mxu0 0.0
  %2731 = vmatprep.subr.mxu0 0.0
  %2732 = vmatpush2.msra.mxu0 0.0
  %2733 = vmatprep.subr.mxu0 0.0
  %2734 = vmatpush2.msra.mxu0 0.0
  %2735 = vmatprep.subr.mxu0 0.0
  %2736 = vmatpush2.msra.mxu0 0.0
  %2737 = vmatprep.subr.mxu0 0.0
  %2738 = vmatpush2.msra.mxu0 0.0
  %2739 = vmatprep.mubr.f32.mxu0 0.0
  %2740 = vmatmul.mubr.f32.gmra.mxu0 %v2673
  %v2741 = vpop.f32.mrf.mxu0
  %v2742 = vadd.f32 %v2668, %v2741
  %v2743 = vpop.f32.mrf.mxu0
  %2744 = vdwg.mxu0
  %v2745 = vmax.f32 %v2742, 0.0
  %v2746 = vld [vmem:[%s9] sm:$0xff]
  %v2747 = vld [vmem:[%s9 + $0x8] sm:$0xff]
  %v2748 = vlaneseq
  %v2749 = vshrl.u32 %v2748, 7
  %v2750 = vsub.s32 6, %v2749
  %v2751 = vrot.slane %v61, %v2750
  %vm2752 = vcmask 130048
  %v2754 = vsel %vm2752, %v2745, 0
  %2756 = vmatprep.subr.mxu0 0.0
  %2757 = vmatpush1.msra.mxu0 0.0
  %2758 = vmatprep.subr.mxu0 0.0
  %2759 = vmatpush1.msra.mxu0 0.0
  %2760 = vmatprep.subr.mxu0 0.0
  %2761 = vmatpush1.msra.mxu0 0.0
  %2762 = vmatprep.subr.mxu0 0.0
  %2763 = vmatpush1.msra.mxu0 0.0
  %2764 = vmatprep.subr.mxu0 0.0
  %2765 = vmatpush1.msra.mxu0 0.0
  %2766 = vmatprep.subr.mxu0 0.0
  %2767 = vmatpush1.msra.mxu0 0.0
  %2768 = vmatprep.subr.mxu0 0.0
  %2769 = vmatpush1.msra.mxu0 0.0
  %2770 = vmatprep.subr.mxu0 0.0
  %2771 = vmatpush1.msra.mxu0 0.0
  %2772 = vmatprep.subr.mxu0 0.0
  %2773 = vmatpush1.msra.mxu0 0.0
  %2774 = vmatprep.subr.mxu0 0.0
  %2775 = vmatpush1.msra.mxu0 0.0
  %2776 = vmatprep.subr.mxu0 0.0
  %2777 = vmatpush1.msra.mxu0 0.0
  %2778 = vmatprep.subr.mxu0 0.0
  %2779 = vmatpush1.msra.mxu0 0.0
  %2780 = vmatprep.subr.mxu0 0.0
  %2781 = vmatpush1.msra.mxu0 0.0
  %2782 = vmatprep.subr.mxu0 0.0
  %2783 = vmatpush1.msra.mxu0 0.0
  %2784 = vmatprep.subr.mxu0 0.0
  %2785 = vmatpush1.msra.mxu0 %v2747
  %2786 = vmatprep.subr.mxu0 0.0
  %2787 = vmatpush1.msra.mxu0 %v2746
  %2788 = vmatprep.subr.mxu0 0.0
  %2789 = vmatpush2.msra.mxu0 0.0
  %2790 = vmatprep.subr.mxu0 0.0
  %2791 = vmatpush2.msra.mxu0 0.0
  %2792 = vmatprep.subr.mxu0 0.0
  %2793 = vmatpush2.msra.mxu0 0.0
  %2794 = vmatprep.subr.mxu0 0.0
  %2795 = vmatpush2.msra.mxu0 0.0
  %2796 = vmatprep.subr.mxu0 0.0
  %2797 = vmatpush2.msra.mxu0 0.0
  %2798 = vmatprep.subr.mxu0 0.0
  %2799 = vmatpush2.msra.mxu0 0.0
  %2800 = vmatprep.subr.mxu0 0.0
  %2801 = vmatpush2.msra.mxu0 0.0
  %2802 = vmatprep.subr.mxu0 0.0
  %2803 = vmatpush2.msra.mxu0 0.0
  %2804 = vmatprep.subr.mxu0 0.0
  %2805 = vmatpush2.msra.mxu0 0.0
  %2806 = vmatprep.subr.mxu0 0.0
  %2807 = vmatpush2.msra.mxu0 0.0
  %2808 = vmatprep.subr.mxu0 0.0
  %2809 = vmatpush2.msra.mxu0 0.0
  %2810 = vmatprep.subr.mxu0 0.0
  %2811 = vmatpush2.msra.mxu0 0.0
  %2812 = vmatprep.subr.mxu0 0.0
  %2813 = vmatpush2.msra.mxu0 0.0
  %2814 = vmatprep.subr.mxu0 0.0
  %2815 = vmatpush2.msra.mxu0 0.0
  %2816 = vmatprep.subr.mxu0 0.0
  %2817 = vmatpush2.msra.mxu0 0.0
  %2818 = vmatprep.subr.mxu0 0.0
  %2819 = vmatpush2.msra.mxu0 0.0
  %2820 = vmatprep.mubr.f32.mxu0 0.0
  %2821 = vmatmul.mubr.f32.gmra.mxu0 %v2754
  %v2822 = vpop.f32.mrf.mxu0
  %v2823 = vadd.f32 %v2751, %v2822
  %v2824 = vpop.f32.mrf.mxu0
  %2825 = vdwg.mxu0
  %v2826 = vxor.u32 %v2823, 2147483648
  %v2827 = vmul.f32 %v2826, 1.442695
  %v2828 = vpow.pop %v2827
  %v2829 = vadd.f32 %v2828, 1.0
  %v2830 = vrcp.pop %v2829
  %v2831 = vmul.f32 1.0, %v2830
  %v2834 = vunpack.c.l.s4 1966171168
  %v2835 = vunpack.c.0.s8 %v2834
  %v2836 = vlaneseq
  %v2837 = vshrl.u32 %v2836, 7
  %v2838 = vsub.s32 %v2835, %v2837
  %v2839 = vrot.slane %v2831, %v2838
  %v2840 = vcombine.high %v2839, %v2839
  %v2842 = vunpack.c.l.s4 1966171168
  %v2843 = vunpack.c.0.s8 %v2842
  %v2844 = vlaneseq
  %v2845 = vshrl.u32 %v2844, 7
  %v2846 = vsub.s32 %v2843, %v2845
  %v2847 = vrot.slane %v2839, %v2846
  %v2849 = vunpack.c.l.s4 1966171168
  %v2850 = vunpack.c.0.s8 %v2849
  %v2851 = vlaneseq
  %v2852 = vshrl.u32 %v2851, 7
  %v2853 = vsub.s32 %v2850, %v2852
  %v2854 = vrot.slane %v2840, %v2853
  %v2855 = vlaneseq
  %v2856 = vshrl.u32 %v2855, 7
  %v2857 = vsub.s32 0, %v2856
  %v2858 = vrot.slane %v2847, %v2857
  %v2859 = vlaneseq
  %v2860 = vshrl.u32 %v2859, 7
  %v2861 = vsub.s32 0, %v2860
  %v2862 = vrot.slane %v2854, %v2861
  %v2865 = vmul.f32 %v2636, %v2858
  %v2866 = vmul.f32 %v2641, %v2862
  %s2867 = scalar_lea.vmem %s5, 8
  %v2868 = vld [vmem:[%s2867] sm:$0x7f]
  %s2869 = scalar_lea.vmem %s2, 128
  %v2870 = vld [vmem:[%s2869] sm:$0xff]
  %v2871 = vld [vmem:[%s2869 + $0x8] sm:$0xff]
  %v2872 = vld [vmem:[%s2869 + $0x10] sm:$0xff]
  %v2873 = vld [vmem:[%s2869 + $0x18] sm:$0xff]
  %v2874 = vld [vmem:[%s2869 + $0x20] sm:$0xff]
  %v2875 = vld [vmem:[%s2869 + $0x28] sm:$0xff]
  %v2876 = vld [vmem:[%s2869 + $0x30] sm:$0xff]
  %v2877 = vld [vmem:[%s2869 + $0x38] sm:$0xff]
  %v2878 = vld [vmem:[%s2869 + $0x40] sm:$0xff]
  %v2879 = vld [vmem:[%s2869 + $0x48] sm:$0xff]
  %v2880 = vld [vmem:[%s2869 + $0x50] sm:$0xff]
  %v2881 = vld [vmem:[%s2869 + $0x58] sm:$0xff]
  %v2882 = vld [vmem:[%s2869 + $0x60] sm:$0xff]
  %v2883 = vld [vmem:[%s2869 + $0x68] sm:$0xff]
  %v2884 = vld [vmem:[%s2869 + $0x70] sm:$0xff]
  %v2885 = vld [vmem:[%s2869 + $0x78] sm:$0xff]
  %s2886 = scalar_lea.vmem %s3, 4
  %v2887 = vld [vmem:[%s2886] sm:$0x1]
  %v2888 = vld [vmem:[%s2886 + $0x1] sm:$0x1]
  %v2889 = vld [vmem:[%s2886 + $0x2] sm:$0x1]
  %v2890 = vld [vmem:[%s2886 + $0x3] sm:$0x1]
  %s2891 = scalar_lea.vmem %s4, 32
  %v2892 = vld [vmem:[%s2891] sm:$0xff]
  %v2893 = vld [vmem:[%s2891 + $0x8] sm:$0xff]
  %v2894 = vld [vmem:[%s2891 + $0x10] sm:$0xff]
  %v2895 = vld [vmem:[%s2891 + $0x18] sm:$0xff]
  %v2900 = vlaneseq
  %v2901 = vshrl.u32 %v2900, 7
  %v2902 = vsub.s32 0, %v2901
  %v2903 = vrot.slane %v2887, %v2902
  %v2904 = vlaneseq
  %v2905 = vshrl.u32 %v2904, 7
  %v2906 = vsub.s32 0, %v2905
  %v2907 = vrot.slane %v2888, %v2906
  %v2908 = vlaneseq
  %v2909 = vshrl.u32 %v2908, 7
  %v2910 = vsub.s32 0, %v2909
  %v2911 = vrot.slane %v2889, %v2910
  %v2912 = vlaneseq
  %v2913 = vshrl.u32 %v2912, 7
  %v2914 = vsub.s32 0, %v2913
  %v2915 = vrot.slane %v2890, %v2914
  %v2921 = vsel %vm110, %v2865, 0
  %2923 = vmatprep.subr.mxu0 0.0
  %2924 = vmatpush1.msra.mxu0 0.0
  %2925 = vmatprep.subr.mxu0 0.0
  %2926 = vmatpush1.msra.mxu0 0.0
  %2927 = vmatprep.subr.mxu0 0.0
  %2928 = vmatpush1.msra.mxu0 0.0
  %2929 = vmatprep.subr.mxu0 0.0
  %2930 = vmatpush1.msra.mxu0 0.0
  %2931 = vmatprep.subr.mxu0 0.0
  %2932 = vmatpush1.msra.mxu0 0.0
  %2933 = vmatprep.subr.mxu0 0.0
  %2934 = vmatpush1.msra.mxu0 0.0
  %2935 = vmatprep.subr.mxu0 0.0
  %2936 = vmatpush1.msra.mxu0 0.0
  %2937 = vmatprep.subr.mxu0 0.0
  %2938 = vmatpush1.msra.mxu0 0.0
  %2939 = vmatprep.subr.mxu0 0.0
  %2940 = vmatpush1.msra.mxu0 0.0
  %2941 = vmatprep.subr.mxu0 0.0
  %2942 = vmatpush1.msra.mxu0 0.0
  %2943 = vmatprep.subr.mxu0 0.0
  %2944 = vmatpush1.msra.mxu0 0.0
  %2945 = vmatprep.subr.mxu0 0.0
  %2946 = vmatpush1.msra.mxu0 0.0
  %2947 = vmatprep.subr.mxu0 0.0
  %2948 = vmatpush1.msra.mxu0 %v2873
  %2949 = vmatprep.subr.mxu0 0.0
  %2950 = vmatpush1.msra.mxu0 %v2872
  %2951 = vmatprep.subr.mxu0 0.0
  %2952 = vmatpush1.msra.mxu0 %v2871
  %2953 = vmatprep.subr.mxu0 0.0
  %2954 = vmatpush1.msra.mxu0 %v2870
  %2955 = vmatprep.subr.mxu0 0.0
  %2956 = vmatpush2.msra.mxu0 0.0
  %2957 = vmatprep.subr.mxu0 0.0
  %2958 = vmatpush2.msra.mxu0 0.0
  %2959 = vmatprep.subr.mxu0 0.0
  %2960 = vmatpush2.msra.mxu0 0.0
  %2961 = vmatprep.subr.mxu0 0.0
  %2962 = vmatpush2.msra.mxu0 0.0
  %2963 = vmatprep.subr.mxu0 0.0
  %2964 = vmatpush2.msra.mxu0 0.0
  %2965 = vmatprep.subr.mxu0 0.0
  %2966 = vmatpush2.msra.mxu0 0.0
  %2967 = vmatprep.subr.mxu0 0.0
  %2968 = vmatpush2.msra.mxu0 0.0
  %2969 = vmatprep.subr.mxu0 0.0
  %2970 = vmatpush2.msra.mxu0 0.0
  %2971 = vmatprep.subr.mxu0 0.0
  %2972 = vmatpush2.msra.mxu0 0.0
  %2973 = vmatprep.subr.mxu0 0.0
  %2974 = vmatpush2.msra.mxu0 0.0
  %2975 = vmatprep.subr.mxu0 0.0
  %2976 = vmatpush2.msra.mxu0 0.0
  %2977 = vmatprep.subr.mxu0 0.0
  %2978 = vmatpush2.msra.mxu0 0.0
  %2979 = vmatprep.subr.mxu0 0.0
  %2980 = vmatpush2.msra.mxu0 0.0
  %2981 = vmatprep.subr.mxu0 0.0
  %2982 = vmatpush2.msra.mxu0 0.0
  %2983 = vmatprep.subr.mxu0 0.0
  %2984 = vmatpush2.msra.mxu0 0.0
  %2985 = vmatprep.subr.mxu0 0.0
  %2986 = vmatpush2.msra.mxu0 0.0
  %2987 = vmatprep.mubr.f32.mxu0 0.0
  %2988 = vmatmul.mubr.f32.gmra.mxu0 %v2921
  %v2989 = vpop.f32.mrf.mxu0
  %v2990 = vadd.f32 %v2903, %v2989
  %v2991 = vpop.f32.mrf.mxu0
  %2992 = vdwg.mxu0
  %2993 = vmatprep.subr.mxu0 0.0
  %2994 = vmatpush1.msra.mxu0 0.0
  %2995 = vmatprep.subr.mxu0 0.0
  %2996 = vmatpush1.msra.mxu0 0.0
  %2997 = vmatprep.subr.mxu0 0.0
  %2998 = vmatpush1.msra.mxu0 0.0
  %2999 = vmatprep.subr.mxu0 0.0
  %3000 = vmatpush1.msra.mxu0 0.0
  %3001 = vmatprep.subr.mxu0 0.0
  %3002 = vmatpush1.msra.mxu0 0.0
  %3003 = vmatprep.subr.mxu0 0.0
  %3004 = vmatpush1.msra.mxu0 0.0
  %3005 = vmatprep.subr.mxu0 0.0
  %3006 = vmatpush1.msra.mxu0 0.0
  %3007 = vmatprep.subr.mxu0 0.0
  %3008 = vmatpush1.msra.mxu0 0.0
  %3009 = vmatprep.subr.mxu0 0.0
  %3010 = vmatpush1.msra.mxu0 0.0
  %3011 = vmatprep.subr.mxu0 0.0
  %3012 = vmatpush1.msra.mxu0 0.0
  %3013 = vmatprep.subr.mxu0 0.0
  %3014 = vmatpush1.msra.mxu0 0.0
  %3015 = vmatprep.subr.mxu0 0.0
  %3016 = vmatpush1.msra.mxu0 0.0
  %3017 = vmatprep.subr.mxu0 0.0
  %3018 = vmatpush1.msra.mxu0 %v2877
  %3019 = vmatprep.subr.mxu0 0.0
  %3020 = vmatpush1.msra.mxu0 %v2876
  %3021 = vmatprep.subr.mxu0 0.0
  %3022 = vmatpush1.msra.mxu0 %v2875
  %3023 = vmatprep.subr.mxu0 0.0
  %3024 = vmatpush1.msra.mxu0 %v2874
  %3025 = vmatprep.subr.mxu0 0.0
  %3026 = vmatpush2.msra.mxu0 0.0
  %3027 = vmatprep.subr.mxu0 0.0
  %3028 = vmatpush2.msra.mxu0 0.0
  %3029 = vmatprep.subr.mxu0 0.0
  %3030 = vmatpush2.msra.mxu0 0.0
  %3031 = vmatprep.subr.mxu0 0.0
  %3032 = vmatpush2.msra.mxu0 0.0
  %3033 = vmatprep.subr.mxu0 0.0
  %3034 = vmatpush2.msra.mxu0 0.0
  %3035 = vmatprep.subr.mxu0 0.0
  %3036 = vmatpush2.msra.mxu0 0.0
  %3037 = vmatprep.subr.mxu0 0.0
  %3038 = vmatpush2.msra.mxu0 0.0
  %3039 = vmatprep.subr.mxu0 0.0
  %3040 = vmatpush2.msra.mxu0 0.0
  %3041 = vmatprep.subr.mxu0 0.0
  %3042 = vmatpush2.msra.mxu0 0.0
  %3043 = vmatprep.subr.mxu0 0.0
  %3044 = vmatpush2.msra.mxu0 0.0
  %3045 = vmatprep.subr.mxu0 0.0
  %3046 = vmatpush2.msra.mxu0 0.0
  %3047 = vmatprep.subr.mxu0 0.0
  %3048 = vmatpush2.msra.mxu0 0.0
  %3049 = vmatprep.subr.mxu0 0.0
  %3050 = vmatpush2.msra.mxu0 0.0
  %3051 = vmatprep.subr.mxu0 0.0
  %3052 = vmatpush2.msra.mxu0 0.0
  %3053 = vmatprep.subr.mxu0 0.0
  %3054 = vmatpush2.msra.mxu0 0.0
  %3055 = vmatprep.subr.mxu0 0.0
  %3056 = vmatpush2.msra.mxu0 0.0
  %3057 = vmatprep.mubr.f32.mxu0 0.0
  %3058 = vmatmul.mubr.f32.gmra.mxu0 %v2921
  %v3059 = vpop.f32.mrf.mxu0
  %v3060 = vadd.f32 %v2907, %v3059
  %v3061 = vpop.f32.mrf.mxu0
  %3062 = vdwg.mxu0
  %3063 = vmatprep.subr.mxu0 0.0
  %3064 = vmatpush1.msra.mxu0 0.0
  %3065 = vmatprep.subr.mxu0 0.0
  %3066 = vmatpush1.msra.mxu0 0.0
  %3067 = vmatprep.subr.mxu0 0.0
  %3068 = vmatpush1.msra.mxu0 0.0
  %3069 = vmatprep.subr.mxu0 0.0
  %3070 = vmatpush1.msra.mxu0 0.0
  %3071 = vmatprep.subr.mxu0 0.0
  %3072 = vmatpush1.msra.mxu0 0.0
  %3073 = vmatprep.subr.mxu0 0.0
  %3074 = vmatpush1.msra.mxu0 0.0
  %3075 = vmatprep.subr.mxu0 0.0
  %3076 = vmatpush1.msra.mxu0 0.0
  %3077 = vmatprep.subr.mxu0 0.0
  %3078 = vmatpush1.msra.mxu0 0.0
  %3079 = vmatprep.subr.mxu0 0.0
  %3080 = vmatpush1.msra.mxu0 0.0
  %3081 = vmatprep.subr.mxu0 0.0
  %3082 = vmatpush1.msra.mxu0 0.0
  %3083 = vmatprep.subr.mxu0 0.0
  %3084 = vmatpush1.msra.mxu0 0.0
  %3085 = vmatprep.subr.mxu0 0.0
  %3086 = vmatpush1.msra.mxu0 0.0
  %3087 = vmatprep.subr.mxu0 0.0
  %3088 = vmatpush1.msra.mxu0 %v2881
  %3089 = vmatprep.subr.mxu0 0.0
  %3090 = vmatpush1.msra.mxu0 %v2880
  %3091 = vmatprep.subr.mxu0 0.0
  %3092 = vmatpush1.msra.mxu0 %v2879
  %3093 = vmatprep.subr.mxu0 0.0
  %3094 = vmatpush1.msra.mxu0 %v2878
  %3095 = vmatprep.subr.mxu0 0.0
  %3096 = vmatpush2.msra.mxu0 0.0
  %3097 = vmatprep.subr.mxu0 0.0
  %3098 = vmatpush2.msra.mxu0 0.0
  %3099 = vmatprep.subr.mxu0 0.0
  %3100 = vmatpush2.msra.mxu0 0.0
  %3101 = vmatprep.subr.mxu0 0.0
  %3102 = vmatpush2.msra.mxu0 0.0
  %3103 = vmatprep.subr.mxu0 0.0
  %3104 = vmatpush2.msra.mxu0 0.0
  %3105 = vmatprep.subr.mxu0 0.0
  %3106 = vmatpush2.msra.mxu0 0.0
  %3107 = vmatprep.subr.mxu0 0.0
  %3108 = vmatpush2.msra.mxu0 0.0
  %3109 = vmatprep.subr.mxu0 0.0
  %3110 = vmatpush2.msra.mxu0 0.0
  %3111 = vmatprep.subr.mxu0 0.0
  %3112 = vmatpush2.msra.mxu0 0.0
  %3113 = vmatprep.subr.mxu0 0.0
  %3114 = vmatpush2.msra.mxu0 0.0
  %3115 = vmatprep.subr.mxu0 0.0
  %3116 = vmatpush2.msra.mxu0 0.0
  %3117 = vmatprep.subr.mxu0 0.0
  %3118 = vmatpush2.msra.mxu0 0.0
  %3119 = vmatprep.subr.mxu0 0.0
  %3120 = vmatpush2.msra.mxu0 0.0
  %3121 = vmatprep.subr.mxu0 0.0
  %3122 = vmatpush2.msra.mxu0 0.0
  %3123 = vmatprep.subr.mxu0 0.0
  %3124 = vmatpush2.msra.mxu0 0.0
  %3125 = vmatprep.subr.mxu0 0.0
  %3126 = vmatpush2.msra.mxu0 0.0
  %3127 = vmatprep.mubr.f32.mxu0 0.0
  %3128 = vmatmul.mubr.f32.gmra.mxu0 %v2921
  %v3129 = vpop.f32.mrf.mxu0
  %v3130 = vadd.f32 %v2911, %v3129
  %v3131 = vpop.f32.mrf.mxu0
  %3132 = vdwg.mxu0
  %3133 = vmatprep.subr.mxu0 0.0
  %3134 = vmatpush1.msra.mxu0 0.0
  %3135 = vmatprep.subr.mxu0 0.0
  %3136 = vmatpush1.msra.mxu0 0.0
  %3137 = vmatprep.subr.mxu0 0.0
  %3138 = vmatpush1.msra.mxu0 0.0
  %3139 = vmatprep.subr.mxu0 0.0
  %3140 = vmatpush1.msra.mxu0 0.0
  %3141 = vmatprep.subr.mxu0 0.0
  %3142 = vmatpush1.msra.mxu0 0.0
  %3143 = vmatprep.subr.mxu0 0.0
  %3144 = vmatpush1.msra.mxu0 0.0
  %3145 = vmatprep.subr.mxu0 0.0
  %3146 = vmatpush1.msra.mxu0 0.0
  %3147 = vmatprep.subr.mxu0 0.0
  %3148 = vmatpush1.msra.mxu0 0.0
  %3149 = vmatprep.subr.mxu0 0.0
  %3150 = vmatpush1.msra.mxu0 0.0
  %3151 = vmatprep.subr.mxu0 0.0
  %3152 = vmatpush1.msra.mxu0 0.0
  %3153 = vmatprep.subr.mxu0 0.0
  %3154 = vmatpush1.msra.mxu0 0.0
  %3155 = vmatprep.subr.mxu0 0.0
  %3156 = vmatpush1.msra.mxu0 0.0
  %3157 = vmatprep.subr.mxu0 0.0
  %3158 = vmatpush1.msra.mxu0 %v2885
  %3159 = vmatprep.subr.mxu0 0.0
  %3160 = vmatpush1.msra.mxu0 %v2884
  %3161 = vmatprep.subr.mxu0 0.0
  %3162 = vmatpush1.msra.mxu0 %v2883
  %3163 = vmatprep.subr.mxu0 0.0
  %3164 = vmatpush1.msra.mxu0 %v2882
  %3165 = vmatprep.subr.mxu0 0.0
  %3166 = vmatpush2.msra.mxu0 0.0
  %3167 = vmatprep.subr.mxu0 0.0
  %3168 = vmatpush2.msra.mxu0 0.0
  %3169 = vmatprep.subr.mxu0 0.0
  %3170 = vmatpush2.msra.mxu0 0.0
  %3171 = vmatprep.subr.mxu0 0.0
  %3172 = vmatpush2.msra.mxu0 0.0
  %3173 = vmatprep.subr.mxu0 0.0
  %3174 = vmatpush2.msra.mxu0 0.0
  %3175 = vmatprep.subr.mxu0 0.0
  %3176 = vmatpush2.msra.mxu0 0.0
  %3177 = vmatprep.subr.mxu0 0.0
  %3178 = vmatpush2.msra.mxu0 0.0
  %3179 = vmatprep.subr.mxu0 0.0
  %3180 = vmatpush2.msra.mxu0 0.0
  %3181 = vmatprep.subr.mxu0 0.0
  %3182 = vmatpush2.msra.mxu0 0.0
  %3183 = vmatprep.subr.mxu0 0.0
  %3184 = vmatpush2.msra.mxu0 0.0
  %3185 = vmatprep.subr.mxu0 0.0
  %3186 = vmatpush2.msra.mxu0 0.0
  %3187 = vmatprep.subr.mxu0 0.0
  %3188 = vmatpush2.msra.mxu0 0.0
  %3189 = vmatprep.subr.mxu0 0.0
  %3190 = vmatpush2.msra.mxu0 0.0
  %3191 = vmatprep.subr.mxu0 0.0
  %3192 = vmatpush2.msra.mxu0 0.0
  %3193 = vmatprep.subr.mxu0 0.0
  %3194 = vmatpush2.msra.mxu0 0.0
  %3195 = vmatprep.subr.mxu0 0.0
  %3196 = vmatpush2.msra.mxu0 0.0
  %3197 = vmatprep.mubr.f32.mxu0 0.0
  %3198 = vmatmul.mubr.f32.gmra.mxu0 %v2921
  %v3199 = vpop.f32.mrf.mxu0
  %v3200 = vadd.f32 %v2915, %v3199
  %v3201 = vpop.f32.mrf.mxu0
  %3202 = vdwg.mxu0
  %v3204 = vsel %vm110, %v2866, 0
  %3206 = vmatprep.subr.mxu0 0.0
  %3207 = vmatpush1.msra.mxu0 0.0
  %3208 = vmatprep.subr.mxu0 0.0
  %3209 = vmatpush1.msra.mxu0 0.0
  %3210 = vmatprep.subr.mxu0 0.0
  %3211 = vmatpush1.msra.mxu0 0.0
  %3212 = vmatprep.subr.mxu0 0.0
  %3213 = vmatpush1.msra.mxu0 0.0
  %3214 = vmatprep.subr.mxu0 0.0
  %3215 = vmatpush1.msra.mxu0 0.0
  %3216 = vmatprep.subr.mxu0 0.0
  %3217 = vmatpush1.msra.mxu0 0.0
  %3218 = vmatprep.subr.mxu0 0.0
  %3219 = vmatpush1.msra.mxu0 0.0
  %3220 = vmatprep.subr.mxu0 0.0
  %3221 = vmatpush1.msra.mxu0 0.0
  %3222 = vmatprep.subr.mxu0 0.0
  %3223 = vmatpush1.msra.mxu0 0.0
  %3224 = vmatprep.subr.mxu0 0.0
  %3225 = vmatpush1.msra.mxu0 0.0
  %3226 = vmatprep.subr.mxu0 0.0
  %3227 = vmatpush1.msra.mxu0 0.0
  %3228 = vmatprep.subr.mxu0 0.0
  %3229 = vmatpush1.msra.mxu0 0.0
  %3230 = vmatprep.subr.mxu0 0.0
  %3231 = vmatpush1.msra.mxu0 %v2873
  %3232 = vmatprep.subr.mxu0 0.0
  %3233 = vmatpush1.msra.mxu0 %v2872
  %3234 = vmatprep.subr.mxu0 0.0
  %3235 = vmatpush1.msra.mxu0 %v2871
  %3236 = vmatprep.subr.mxu0 0.0
  %3237 = vmatpush1.msra.mxu0 %v2870
  %3238 = vmatprep.subr.mxu0 0.0
  %3239 = vmatpush2.msra.mxu0 0.0
  %3240 = vmatprep.subr.mxu0 0.0
  %3241 = vmatpush2.msra.mxu0 0.0
  %3242 = vmatprep.subr.mxu0 0.0
  %3243 = vmatpush2.msra.mxu0 0.0
  %3244 = vmatprep.subr.mxu0 0.0
  %3245 = vmatpush2.msra.mxu0 0.0
  %3246 = vmatprep.subr.mxu0 0.0
  %3247 = vmatpush2.msra.mxu0 0.0
  %3248 = vmatprep.subr.mxu0 0.0
  %3249 = vmatpush2.msra.mxu0 0.0
  %3250 = vmatprep.subr.mxu0 0.0
  %3251 = vmatpush2.msra.mxu0 0.0
  %3252 = vmatprep.subr.mxu0 0.0
  %3253 = vmatpush2.msra.mxu0 0.0
  %3254 = vmatprep.subr.mxu0 0.0
  %3255 = vmatpush2.msra.mxu0 0.0
  %3256 = vmatprep.subr.mxu0 0.0
  %3257 = vmatpush2.msra.mxu0 0.0
  %3258 = vmatprep.subr.mxu0 0.0
  %3259 = vmatpush2.msra.mxu0 0.0
  %3260 = vmatprep.subr.mxu0 0.0
  %3261 = vmatpush2.msra.mxu0 0.0
  %3262 = vmatprep.subr.mxu0 0.0
  %3263 = vmatpush2.msra.mxu0 0.0
  %3264 = vmatprep.subr.mxu0 0.0
  %3265 = vmatpush2.msra.mxu0 0.0
  %3266 = vmatprep.subr.mxu0 0.0
  %3267 = vmatpush2.msra.mxu0 0.0
  %3268 = vmatprep.subr.mxu0 0.0
  %3269 = vmatpush2.msra.mxu0 0.0
  %3270 = vmatprep.mubr.f32.mxu0 0.0
  %3271 = vmatmul.mubr.f32.gmra.mxu0 %v3204
  %v3272 = vpop.f32.mrf.mxu0
  %v3273 = vadd.f32 %v2903, %v3272
  %v3274 = vpop.f32.mrf.mxu0
  %3275 = vdwg.mxu0
  %3276 = vmatprep.subr.mxu0 0.0
  %3277 = vmatpush1.msra.mxu0 0.0
  %3278 = vmatprep.subr.mxu0 0.0
  %3279 = vmatpush1.msra.mxu0 0.0
  %3280 = vmatprep.subr.mxu0 0.0
  %3281 = vmatpush1.msra.mxu0 0.0
  %3282 = vmatprep.subr.mxu0 0.0
  %3283 = vmatpush1.msra.mxu0 0.0
  %3284 = vmatprep.subr.mxu0 0.0
  %3285 = vmatpush1.msra.mxu0 0.0
  %3286 = vmatprep.subr.mxu0 0.0
  %3287 = vmatpush1.msra.mxu0 0.0
  %3288 = vmatprep.subr.mxu0 0.0
  %3289 = vmatpush1.msra.mxu0 0.0
  %3290 = vmatprep.subr.mxu0 0.0
  %3291 = vmatpush1.msra.mxu0 0.0
  %3292 = vmatprep.subr.mxu0 0.0
  %3293 = vmatpush1.msra.mxu0 0.0
  %3294 = vmatprep.subr.mxu0 0.0
  %3295 = vmatpush1.msra.mxu0 0.0
  %3296 = vmatprep.subr.mxu0 0.0
  %3297 = vmatpush1.msra.mxu0 0.0
  %3298 = vmatprep.subr.mxu0 0.0
  %3299 = vmatpush1.msra.mxu0 0.0
  %3300 = vmatprep.subr.mxu0 0.0
  %3301 = vmatpush1.msra.mxu0 %v2877
  %3302 = vmatprep.subr.mxu0 0.0
  %3303 = vmatpush1.msra.mxu0 %v2876
  %3304 = vmatprep.subr.mxu0 0.0
  %3305 = vmatpush1.msra.mxu0 %v2875
  %3306 = vmatprep.subr.mxu0 0.0
  %3307 = vmatpush1.msra.mxu0 %v2874
  %3308 = vmatprep.subr.mxu0 0.0
  %3309 = vmatpush2.msra.mxu0 0.0
  %3310 = vmatprep.subr.mxu0 0.0
  %3311 = vmatpush2.msra.mxu0 0.0
  %3312 = vmatprep.subr.mxu0 0.0
  %3313 = vmatpush2.msra.mxu0 0.0
  %3314 = vmatprep.subr.mxu0 0.0
  %3315 = vmatpush2.msra.mxu0 0.0
  %3316 = vmatprep.subr.mxu0 0.0
  %3317 = vmatpush2.msra.mxu0 0.0
  %3318 = vmatprep.subr.mxu0 0.0
  %3319 = vmatpush2.msra.mxu0 0.0
  %3320 = vmatprep.subr.mxu0 0.0
  %3321 = vmatpush2.msra.mxu0 0.0
  %3322 = vmatprep.subr.mxu0 0.0
  %3323 = vmatpush2.msra.mxu0 0.0
  %3324 = vmatprep.subr.mxu0 0.0
  %3325 = vmatpush2.msra.mxu0 0.0
  %3326 = vmatprep.subr.mxu0 0.0
  %3327 = vmatpush2.msra.mxu0 0.0
  %3328 = vmatprep.subr.mxu0 0.0
  %3329 = vmatpush2.msra.mxu0 0.0
  %3330 = vmatprep.subr.mxu0 0.0
  %3331 = vmatpush2.msra.mxu0 0.0
  %3332 = vmatprep.subr.mxu0 0.0
  %3333 = vmatpush2.msra.mxu0 0.0
  %3334 = vmatprep.subr.mxu0 0.0
  %3335 = vmatpush2.msra.mxu0 0.0
  %3336 = vmatprep.subr.mxu0 0.0
  %3337 = vmatpush2.msra.mxu0 0.0
  %3338 = vmatprep.subr.mxu0 0.0
  %3339 = vmatpush2.msra.mxu0 0.0
  %3340 = vmatprep.mubr.f32.mxu0 0.0
  %3341 = vmatmul.mubr.f32.gmra.mxu0 %v3204
  %v3342 = vpop.f32.mrf.mxu0
  %v3343 = vadd.f32 %v2907, %v3342
  %v3344 = vpop.f32.mrf.mxu0
  %3345 = vdwg.mxu0
  %3346 = vmatprep.subr.mxu0 0.0
  %3347 = vmatpush1.msra.mxu0 0.0
  %3348 = vmatprep.subr.mxu0 0.0
  %3349 = vmatpush1.msra.mxu0 0.0
  %3350 = vmatprep.subr.mxu0 0.0
  %3351 = vmatpush1.msra.mxu0 0.0
  %3352 = vmatprep.subr.mxu0 0.0
  %3353 = vmatpush1.msra.mxu0 0.0
  %3354 = vmatprep.subr.mxu0 0.0
  %3355 = vmatpush1.msra.mxu0 0.0
  %3356 = vmatprep.subr.mxu0 0.0
  %3357 = vmatpush1.msra.mxu0 0.0
  %3358 = vmatprep.subr.mxu0 0.0
  %3359 = vmatpush1.msra.mxu0 0.0
  %3360 = vmatprep.subr.mxu0 0.0
  %3361 = vmatpush1.msra.mxu0 0.0
  %3362 = vmatprep.subr.mxu0 0.0
  %3363 = vmatpush1.msra.mxu0 0.0
  %3364 = vmatprep.subr.mxu0 0.0
  %3365 = vmatpush1.msra.mxu0 0.0
  %3366 = vmatprep.subr.mxu0 0.0
  %3367 = vmatpush1.msra.mxu0 0.0
  %3368 = vmatprep.subr.mxu0 0.0
  %3369 = vmatpush1.msra.mxu0 0.0
  %3370 = vmatprep.subr.mxu0 0.0
  %3371 = vmatpush1.msra.mxu0 %v2881
  %3372 = vmatprep.subr.mxu0 0.0
  %3373 = vmatpush1.msra.mxu0 %v2880
  %3374 = vmatprep.subr.mxu0 0.0
  %3375 = vmatpush1.msra.mxu0 %v2879
  %3376 = vmatprep.subr.mxu0 0.0
  %3377 = vmatpush1.msra.mxu0 %v2878
  %3378 = vmatprep.subr.mxu0 0.0
  %3379 = vmatpush2.msra.mxu0 0.0
  %3380 = vmatprep.subr.mxu0 0.0
  %3381 = vmatpush2.msra.mxu0 0.0
  %3382 = vmatprep.subr.mxu0 0.0
  %3383 = vmatpush2.msra.mxu0 0.0
  %3384 = vmatprep.subr.mxu0 0.0
  %3385 = vmatpush2.msra.mxu0 0.0
  %3386 = vmatprep.subr.mxu0 0.0
  %3387 = vmatpush2.msra.mxu0 0.0
  %3388 = vmatprep.subr.mxu0 0.0
  %3389 = vmatpush2.msra.mxu0 0.0
  %3390 = vmatprep.subr.mxu0 0.0
  %3391 = vmatpush2.msra.mxu0 0.0
  %3392 = vmatprep.subr.mxu0 0.0
  %3393 = vmatpush2.msra.mxu0 0.0
  %3394 = vmatprep.subr.mxu0 0.0
  %3395 = vmatpush2.msra.mxu0 0.0
  %3396 = vmatprep.subr.mxu0 0.0
  %3397 = vmatpush2.msra.mxu0 0.0
  %3398 = vmatprep.subr.mxu0 0.0
  %3399 = vmatpush2.msra.mxu0 0.0
  %3400 = vmatprep.subr.mxu0 0.0
  %3401 = vmatpush2.msra.mxu0 0.0
  %3402 = vmatprep.subr.mxu0 0.0
  %3403 = vmatpush2.msra.mxu0 0.0
  %3404 = vmatprep.subr.mxu0 0.0
  %3405 = vmatpush2.msra.mxu0 0.0
  %3406 = vmatprep.subr.mxu0 0.0
  %3407 = vmatpush2.msra.mxu0 0.0
  %3408 = vmatprep.subr.mxu0 0.0
  %3409 = vmatpush2.msra.mxu0 0.0
  %3410 = vmatprep.mubr.f32.mxu0 0.0
  %3411 = vmatmul.mubr.f32.gmra.mxu0 %v3204
  %v3412 = vpop.f32.mrf.mxu0
  %v3413 = vadd.f32 %v2911, %v3412
  %v3414 = vpop.f32.mrf.mxu0
  %3415 = vdwg.mxu0
  %3416 = vmatprep.subr.mxu0 0.0
  %3417 = vmatpush1.msra.mxu0 0.0
  %3418 = vmatprep.subr.mxu0 0.0
  %3419 = vmatpush1.msra.mxu0 0.0
  %3420 = vmatprep.subr.mxu0 0.0
  %3421 = vmatpush1.msra.mxu0 0.0
  %3422 = vmatprep.subr.mxu0 0.0
  %3423 = vmatpush1.msra.mxu0 0.0
  %3424 = vmatprep.subr.mxu0 0.0
  %3425 = vmatpush1.msra.mxu0 0.0
  %3426 = vmatprep.subr.mxu0 0.0
  %3427 = vmatpush1.msra.mxu0 0.0
  %3428 = vmatprep.subr.mxu0 0.0
  %3429 = vmatpush1.msra.mxu0 0.0
  %3430 = vmatprep.subr.mxu0 0.0
  %3431 = vmatpush1.msra.mxu0 0.0
  %3432 = vmatprep.subr.mxu0 0.0
  %3433 = vmatpush1.msra.mxu0 0.0
  %3434 = vmatprep.subr.mxu0 0.0
  %3435 = vmatpush1.msra.mxu0 0.0
  %3436 = vmatprep.subr.mxu0 0.0
  %3437 = vmatpush1.msra.mxu0 0.0
  %3438 = vmatprep.subr.mxu0 0.0
  %3439 = vmatpush1.msra.mxu0 0.0
  %3440 = vmatprep.subr.mxu0 0.0
  %3441 = vmatpush1.msra.mxu0 %v2885
  %3442 = vmatprep.subr.mxu0 0.0
  %3443 = vmatpush1.msra.mxu0 %v2884
  %3444 = vmatprep.subr.mxu0 0.0
  %3445 = vmatpush1.msra.mxu0 %v2883
  %3446 = vmatprep.subr.mxu0 0.0
  %3447 = vmatpush1.msra.mxu0 %v2882
  %3448 = vmatprep.subr.mxu0 0.0
  %3449 = vmatpush2.msra.mxu0 0.0
  %3450 = vmatprep.subr.mxu0 0.0
  %3451 = vmatpush2.msra.mxu0 0.0
  %3452 = vmatprep.subr.mxu0 0.0
  %3453 = vmatpush2.msra.mxu0 0.0
  %3454 = vmatprep.subr.mxu0 0.0
  %3455 = vmatpush2.msra.mxu0 0.0
  %3456 = vmatprep.subr.mxu0 0.0
  %3457 = vmatpush2.msra.mxu0 0.0
  %3458 = vmatprep.subr.mxu0 0.0
  %3459 = vmatpush2.msra.mxu0 0.0
  %3460 = vmatprep.subr.mxu0 0.0
  %3461 = vmatpush2.msra.mxu0 0.0
  %3462 = vmatprep.subr.mxu0 0.0
  %3463 = vmatpush2.msra.mxu0 0.0
  %3464 = vmatprep.subr.mxu0 0.0
  %3465 = vmatpush2.msra.mxu0 0.0
  %3466 = vmatprep.subr.mxu0 0.0
  %3467 = vmatpush2.msra.mxu0 0.0
  %3468 = vmatprep.subr.mxu0 0.0
  %3469 = vmatpush2.msra.mxu0 0.0
  %3470 = vmatprep.subr.mxu0 0.0
  %3471 = vmatpush2.msra.mxu0 0.0
  %3472 = vmatprep.subr.mxu0 0.0
  %3473 = vmatpush2.msra.mxu0 0.0
  %3474 = vmatprep.subr.mxu0 0.0
  %3475 = vmatpush2.msra.mxu0 0.0
  %3476 = vmatprep.subr.mxu0 0.0
  %3477 = vmatpush2.msra.mxu0 0.0
  %3478 = vmatprep.subr.mxu0 0.0
  %3479 = vmatpush2.msra.mxu0 0.0
  %3480 = vmatprep.mubr.f32.mxu0 0.0
  %3481 = vmatmul.mubr.f32.gmra.mxu0 %v3204
  %v3482 = vpop.f32.mrf.mxu0
  %v3483 = vadd.f32 %v2915, %v3482
  %v3484 = vpop.f32.mrf.mxu0
  %3485 = vdwg.mxu0
  %3487 = vrot.lane.b32.xlu0 %v2990, 120
  %v3488 = vpop.permute.xlu0 %3487
  %v3489 = vsel %vm680, %v2990, 0
  %v3491 = vsel %vm680, %v3488, 0
  %3493 = vmatprep.subr.mxu0 0.0
  %3494 = vmatpush1.xpose.msra.mxu0 0.0
  %3495 = vmatprep.subr.mxu0 0.0
  %3496 = vmatpush1.xpose.msra.mxu0 0.0
  %3497 = vmatprep.subr.mxu0 0.0
  %3498 = vmatpush1.xpose.msra.mxu0 0.0
  %3499 = vmatprep.subr.mxu0 0.0
  %3500 = vmatpush1.xpose.msra.mxu0 0.0
  %3501 = vmatprep.subr.mxu0 0.0
  %3502 = vmatpush1.xpose.msra.mxu0 0.0
  %3503 = vmatprep.subr.mxu0 0.0
  %3504 = vmatpush1.xpose.msra.mxu0 0.0
  %3505 = vmatprep.subr.mxu0 0.0
  %3506 = vmatpush1.xpose.msra.mxu0 0.0
  %3507 = vmatprep.subr.mxu0 0.0
  %3508 = vmatpush1.xpose.msra.mxu0 0.0
  %3509 = vmatprep.subr.mxu0 0.0
  %3510 = vmatpush1.xpose.msra.mxu0 0.0
  %3511 = vmatprep.subr.mxu0 0.0
  %3512 = vmatpush1.xpose.msra.mxu0 0.0
  %3513 = vmatprep.subr.mxu0 0.0
  %3514 = vmatpush1.xpose.msra.mxu0 0.0
  %3515 = vmatprep.subr.mxu0 0.0
  %3516 = vmatpush1.xpose.msra.mxu0 0.0
  %3517 = vmatprep.subr.mxu0 0.0
  %3518 = vmatpush1.xpose.msra.mxu0 0.0
  %3519 = vmatprep.subr.mxu0 0.0
  %3520 = vmatpush1.xpose.msra.mxu0 0.0
  %3521 = vmatprep.subr.mxu0 0.0
  %3522 = vmatpush1.xpose.msra.mxu0 0.0
  %3523 = vmatprep.subr.mxu0 0.0
  %3524 = vmatpush1.xpose.msra.mxu0 %v3491
  %3525 = vmatprep.subr.mxu0 0.0
  %3526 = vmatpush2.xpose.msra.mxu0 0.0
  %3527 = vmatprep.subr.mxu0 0.0
  %3528 = vmatpush2.xpose.msra.mxu0 0.0
  %3529 = vmatprep.subr.mxu0 0.0
  %3530 = vmatpush2.xpose.msra.mxu0 0.0
  %3531 = vmatprep.subr.mxu0 0.0
  %3532 = vmatpush2.xpose.msra.mxu0 0.0
  %3533 = vmatprep.subr.mxu0 0.0
  %3534 = vmatpush2.xpose.msra.mxu0 0.0
  %3535 = vmatprep.subr.mxu0 0.0
  %3536 = vmatpush2.xpose.msra.mxu0 0.0
  %3537 = vmatprep.subr.mxu0 0.0
  %3538 = vmatpush2.xpose.msra.mxu0 0.0
  %3539 = vmatprep.subr.mxu0 0.0
  %3540 = vmatpush2.xpose.msra.mxu0 0.0
  %3541 = vmatprep.subr.mxu0 0.0
  %3542 = vmatpush2.xpose.msra.mxu0 0.0
  %3543 = vmatprep.subr.mxu0 0.0
  %3544 = vmatpush2.xpose.msra.mxu0 0.0
  %3545 = vmatprep.subr.mxu0 0.0
  %3546 = vmatpush2.xpose.msra.mxu0 0.0
  %3547 = vmatprep.subr.mxu0 0.0
  %3548 = vmatpush2.xpose.msra.mxu0 0.0
  %3549 = vmatprep.subr.mxu0 0.0
  %3550 = vmatpush2.xpose.msra.mxu0 0.0
  %3551 = vmatprep.subr.mxu0 0.0
  %3552 = vmatpush2.xpose.msra.mxu0 0.0
  %3553 = vmatprep.subr.mxu0 0.0
  %3554 = vmatpush2.xpose.msra.mxu0 0.0
  %3555 = vmatprep.subr.mxu0 0.0
  %3556 = vmatpush2.xpose.msra.mxu0 0.0
  %3557 = vmatprep.mubr.f32.mxu0 0.0
  %3558 = vmatmul.mubr.f32.gmra.mxu0 %v3489
  %v3559 = vpop.f32.mrf.mxu0
  %v3560 = vadd.f32 0.0, %v3559
  %v3561 = vpop.f32.mrf.mxu0
  %3562 = vdwg.mxu0
  %3564 = vrot.lane.b32.xlu0 %v3060, 120
  %v3565 = vpop.permute.xlu0 %3564
  %v3566 = vsel %vm680, %v3060, 0
  %v3568 = vsel %vm680, %v3565, 0
  %3570 = vmatprep.subr.mxu0 0.0
  %3571 = vmatpush1.xpose.msra.mxu0 0.0
  %3572 = vmatprep.subr.mxu0 0.0
  %3573 = vmatpush1.xpose.msra.mxu0 0.0
  %3574 = vmatprep.subr.mxu0 0.0
  %3575 = vmatpush1.xpose.msra.mxu0 0.0
  %3576 = vmatprep.subr.mxu0 0.0
  %3577 = vmatpush1.xpose.msra.mxu0 0.0
  %3578 = vmatprep.subr.mxu0 0.0
  %3579 = vmatpush1.xpose.msra.mxu0 0.0
  %3580 = vmatprep.subr.mxu0 0.0
  %3581 = vmatpush1.xpose.msra.mxu0 0.0
  %3582 = vmatprep.subr.mxu0 0.0
  %3583 = vmatpush1.xpose.msra.mxu0 0.0
  %3584 = vmatprep.subr.mxu0 0.0
  %3585 = vmatpush1.xpose.msra.mxu0 0.0
  %3586 = vmatprep.subr.mxu0 0.0
  %3587 = vmatpush1.xpose.msra.mxu0 0.0
  %3588 = vmatprep.subr.mxu0 0.0
  %3589 = vmatpush1.xpose.msra.mxu0 0.0
  %3590 = vmatprep.subr.mxu0 0.0
  %3591 = vmatpush1.xpose.msra.mxu0 0.0
  %3592 = vmatprep.subr.mxu0 0.0
  %3593 = vmatpush1.xpose.msra.mxu0 0.0
  %3594 = vmatprep.subr.mxu0 0.0
  %3595 = vmatpush1.xpose.msra.mxu0 0.0
  %3596 = vmatprep.subr.mxu0 0.0
  %3597 = vmatpush1.xpose.msra.mxu0 0.0
  %3598 = vmatprep.subr.mxu0 0.0
  %3599 = vmatpush1.xpose.msra.mxu0 0.0
  %3600 = vmatprep.subr.mxu0 0.0
  %3601 = vmatpush1.xpose.msra.mxu0 %v3568
  %3602 = vmatprep.subr.mxu0 0.0
  %3603 = vmatpush2.xpose.msra.mxu0 0.0
  %3604 = vmatprep.subr.mxu0 0.0
  %3605 = vmatpush2.xpose.msra.mxu0 0.0
  %3606 = vmatprep.subr.mxu0 0.0
  %3607 = vmatpush2.xpose.msra.mxu0 0.0
  %3608 = vmatprep.subr.mxu0 0.0
  %3609 = vmatpush2.xpose.msra.mxu0 0.0
  %3610 = vmatprep.subr.mxu0 0.0
  %3611 = vmatpush2.xpose.msra.mxu0 0.0
  %3612 = vmatprep.subr.mxu0 0.0
  %3613 = vmatpush2.xpose.msra.mxu0 0.0
  %3614 = vmatprep.subr.mxu0 0.0
  %3615 = vmatpush2.xpose.msra.mxu0 0.0
  %3616 = vmatprep.subr.mxu0 0.0
  %3617 = vmatpush2.xpose.msra.mxu0 0.0
  %3618 = vmatprep.subr.mxu0 0.0
  %3619 = vmatpush2.xpose.msra.mxu0 0.0
  %3620 = vmatprep.subr.mxu0 0.0
  %3621 = vmatpush2.xpose.msra.mxu0 0.0
  %3622 = vmatprep.subr.mxu0 0.0
  %3623 = vmatpush2.xpose.msra.mxu0 0.0
  %3624 = vmatprep.subr.mxu0 0.0
  %3625 = vmatpush2.xpose.msra.mxu0 0.0
  %3626 = vmatprep.subr.mxu0 0.0
  %3627 = vmatpush2.xpose.msra.mxu0 0.0
  %3628 = vmatprep.subr.mxu0 0.0
  %3629 = vmatpush2.xpose.msra.mxu0 0.0
  %3630 = vmatprep.subr.mxu0 0.0
  %3631 = vmatpush2.xpose.msra.mxu0 0.0
  %3632 = vmatprep.subr.mxu0 0.0
  %3633 = vmatpush2.xpose.msra.mxu0 0.0
  %3634 = vmatprep.mubr.f32.mxu0 0.0
  %3635 = vmatmul.mubr.f32.gmra.mxu0 %v3566
  %v3636 = vpop.f32.mrf.mxu0
  %v3637 = vadd.f32 0.0, %v3636
  %v3638 = vpop.f32.mrf.mxu0
  %3639 = vdwg.mxu0
  %3641 = vrot.lane.b32.xlu0 %v3130, 120
  %v3642 = vpop.permute.xlu0 %3641
  %v3643 = vsel %vm680, %v3130, 0
  %v3645 = vsel %vm680, %v3642, 0
  %3647 = vmatprep.subr.mxu0 0.0
  %3648 = vmatpush1.xpose.msra.mxu0 0.0
  %3649 = vmatprep.subr.mxu0 0.0
  %3650 = vmatpush1.xpose.msra.mxu0 0.0
  %3651 = vmatprep.subr.mxu0 0.0
  %3652 = vmatpush1.xpose.msra.mxu0 0.0
  %3653 = vmatprep.subr.mxu0 0.0
  %3654 = vmatpush1.xpose.msra.mxu0 0.0
  %3655 = vmatprep.subr.mxu0 0.0
  %3656 = vmatpush1.xpose.msra.mxu0 0.0
  %3657 = vmatprep.subr.mxu0 0.0
  %3658 = vmatpush1.xpose.msra.mxu0 0.0
  %3659 = vmatprep.subr.mxu0 0.0
  %3660 = vmatpush1.xpose.msra.mxu0 0.0
  %3661 = vmatprep.subr.mxu0 0.0
  %3662 = vmatpush1.xpose.msra.mxu0 0.0
  %3663 = vmatprep.subr.mxu0 0.0
  %3664 = vmatpush1.xpose.msra.mxu0 0.0
  %3665 = vmatprep.subr.mxu0 0.0
  %3666 = vmatpush1.xpose.msra.mxu0 0.0
  %3667 = vmatprep.subr.mxu0 0.0
  %3668 = vmatpush1.xpose.msra.mxu0 0.0
  %3669 = vmatprep.subr.mxu0 0.0
  %3670 = vmatpush1.xpose.msra.mxu0 0.0
  %3671 = vmatprep.subr.mxu0 0.0
  %3672 = vmatpush1.xpose.msra.mxu0 0.0
  %3673 = vmatprep.subr.mxu0 0.0
  %3674 = vmatpush1.xpose.msra.mxu0 0.0
  %3675 = vmatprep.subr.mxu0 0.0
  %3676 = vmatpush1.xpose.msra.mxu0 0.0
  %3677 = vmatprep.subr.mxu0 0.0
  %3678 = vmatpush1.xpose.msra.mxu0 %v3645
  %3679 = vmatprep.subr.mxu0 0.0
  %3680 = vmatpush2.xpose.msra.mxu0 0.0
  %3681 = vmatprep.subr.mxu0 0.0
  %3682 = vmatpush2.xpose.msra.mxu0 0.0
  %3683 = vmatprep.subr.mxu0 0.0
  %3684 = vmatpush2.xpose.msra.mxu0 0.0
  %3685 = vmatprep.subr.mxu0 0.0
  %3686 = vmatpush2.xpose.msra.mxu0 0.0
  %3687 = vmatprep.subr.mxu0 0.0
  %3688 = vmatpush2.xpose.msra.mxu0 0.0
  %3689 = vmatprep.subr.mxu0 0.0
  %3690 = vmatpush2.xpose.msra.mxu0 0.0
  %3691 = vmatprep.subr.mxu0 0.0
  %3692 = vmatpush2.xpose.msra.mxu0 0.0
  %3693 = vmatprep.subr.mxu0 0.0
  %3694 = vmatpush2.xpose.msra.mxu0 0.0
  %3695 = vmatprep.subr.mxu0 0.0
  %3696 = vmatpush2.xpose.msra.mxu0 0.0
  %3697 = vmatprep.subr.mxu0 0.0
  %3698 = vmatpush2.xpose.msra.mxu0 0.0
  %3699 = vmatprep.subr.mxu0 0.0
  %3700 = vmatpush2.xpose.msra.mxu0 0.0
  %3701 = vmatprep.subr.mxu0 0.0
  %3702 = vmatpush2.xpose.msra.mxu0 0.0
  %3703 = vmatprep.subr.mxu0 0.0
  %3704 = vmatpush2.xpose.msra.mxu0 0.0
  %3705 = vmatprep.subr.mxu0 0.0
  %3706 = vmatpush2.xpose.msra.mxu0 0.0
  %3707 = vmatprep.subr.mxu0 0.0
  %3708 = vmatpush2.xpose.msra.mxu0 0.0
  %3709 = vmatprep.subr.mxu0 0.0
  %3710 = vmatpush2.xpose.msra.mxu0 0.0
  %3711 = vmatprep.mubr.f32.mxu0 0.0
  %3712 = vmatmul.mubr.f32.gmra.mxu0 %v3643
  %v3713 = vpop.f32.mrf.mxu0
  %v3714 = vadd.f32 0.0, %v3713
  %v3715 = vpop.f32.mrf.mxu0
  %3716 = vdwg.mxu0
  %3718 = vrot.lane.b32.xlu0 %v3200, 120
  %v3719 = vpop.permute.xlu0 %3718
  %v3720 = vsel %vm680, %v3200, 0
  %v3722 = vsel %vm680, %v3719, 0
  %3724 = vmatprep.subr.mxu0 0.0
  %3725 = vmatpush1.xpose.msra.mxu0 0.0
  %3726 = vmatprep.subr.mxu0 0.0
  %3727 = vmatpush1.xpose.msra.mxu0 0.0
  %3728 = vmatprep.subr.mxu0 0.0
  %3729 = vmatpush1.xpose.msra.mxu0 0.0
  %3730 = vmatprep.subr.mxu0 0.0
  %3731 = vmatpush1.xpose.msra.mxu0 0.0
  %3732 = vmatprep.subr.mxu0 0.0
  %3733 = vmatpush1.xpose.msra.mxu0 0.0
  %3734 = vmatprep.subr.mxu0 0.0
  %3735 = vmatpush1.xpose.msra.mxu0 0.0
  %3736 = vmatprep.subr.mxu0 0.0
  %3737 = vmatpush1.xpose.msra.mxu0 0.0
  %3738 = vmatprep.subr.mxu0 0.0
  %3739 = vmatpush1.xpose.msra.mxu0 0.0
  %3740 = vmatprep.subr.mxu0 0.0
  %3741 = vmatpush1.xpose.msra.mxu0 0.0
  %3742 = vmatprep.subr.mxu0 0.0
  %3743 = vmatpush1.xpose.msra.mxu0 0.0
  %3744 = vmatprep.subr.mxu0 0.0
  %3745 = vmatpush1.xpose.msra.mxu0 0.0
  %3746 = vmatprep.subr.mxu0 0.0
  %3747 = vmatpush1.xpose.msra.mxu0 0.0
  %3748 = vmatprep.subr.mxu0 0.0
  %3749 = vmatpush1.xpose.msra.mxu0 0.0
  %3750 = vmatprep.subr.mxu0 0.0
  %3751 = vmatpush1.xpose.msra.mxu0 0.0
  %3752 = vmatprep.subr.mxu0 0.0
  %3753 = vmatpush1.xpose.msra.mxu0 0.0
  %3754 = vmatprep.subr.mxu0 0.0
  %3755 = vmatpush1.xpose.msra.mxu0 %v3722
  %3756 = vmatprep.subr.mxu0 0.0
  %3757 = vmatpush2.xpose.msra.mxu0 0.0
  %3758 = vmatprep.subr.mxu0 0.0
  %3759 = vmatpush2.xpose.msra.mxu0 0.0
  %3760 = vmatprep.subr.mxu0 0.0
  %3761 = vmatpush2.xpose.msra.mxu0 0.0
  %3762 = vmatprep.subr.mxu0 0.0
  %3763 = vmatpush2.xpose.msra.mxu0 0.0
  %3764 = vmatprep.subr.mxu0 0.0
  %3765 = vmatpush2.xpose.msra.mxu0 0.0
  %3766 = vmatprep.subr.mxu0 0.0
  %3767 = vmatpush2.xpose.msra.mxu0 0.0
  %3768 = vmatprep.subr.mxu0 0.0
  %3769 = vmatpush2.xpose.msra.mxu0 0.0
  %3770 = vmatprep.subr.mxu0 0.0
  %3771 = vmatpush2.xpose.msra.mxu0 0.0
  %3772 = vmatprep.subr.mxu0 0.0
  %3773 = vmatpush2.xpose.msra.mxu0 0.0
  %3774 = vmatprep.subr.mxu0 0.0
  %3775 = vmatpush2.xpose.msra.mxu0 0.0
  %3776 = vmatprep.subr.mxu0 0.0
  %3777 = vmatpush2.xpose.msra.mxu0 0.0
  %3778 = vmatprep.subr.mxu0 0.0
  %3779 = vmatpush2.xpose.msra.mxu0 0.0
  %3780 = vmatprep.subr.mxu0 0.0
  %3781 = vmatpush2.xpose.msra.mxu0 0.0
  %3782 = vmatprep.subr.mxu0 0.0
  %3783 = vmatpush2.xpose.msra.mxu0 0.0
  %3784 = vmatprep.subr.mxu0 0.0
  %3785 = vmatpush2.xpose.msra.mxu0 0.0
  %3786 = vmatprep.subr.mxu0 0.0
  %3787 = vmatpush2.xpose.msra.mxu0 0.0
  %3788 = vmatprep.mubr.f32.mxu0 0.0
  %3789 = vmatmul.mubr.f32.gmra.mxu0 %v3720
  %v3790 = vpop.f32.mrf.mxu0
  %v3791 = vadd.f32 0.0, %v3790
  %v3792 = vpop.f32.mrf.mxu0
  %3793 = vdwg.mxu0
  %3795 = vrot.lane.b32.xlu0 %v3273, 120
  %v3796 = vpop.permute.xlu0 %3795
  %v3797 = vsel %vm680, %v3273, 0
  %v3799 = vsel %vm680, %v3796, 0
  %3801 = vmatprep.subr.mxu0 0.0
  %3802 = vmatpush1.xpose.msra.mxu0 0.0
  %3803 = vmatprep.subr.mxu0 0.0
  %3804 = vmatpush1.xpose.msra.mxu0 0.0
  %3805 = vmatprep.subr.mxu0 0.0
  %3806 = vmatpush1.xpose.msra.mxu0 0.0
  %3807 = vmatprep.subr.mxu0 0.0
  %3808 = vmatpush1.xpose.msra.mxu0 0.0
  %3809 = vmatprep.subr.mxu0 0.0
  %3810 = vmatpush1.xpose.msra.mxu0 0.0
  %3811 = vmatprep.subr.mxu0 0.0
  %3812 = vmatpush1.xpose.msra.mxu0 0.0
  %3813 = vmatprep.subr.mxu0 0.0
  %3814 = vmatpush1.xpose.msra.mxu0 0.0
  %3815 = vmatprep.subr.mxu0 0.0
  %3816 = vmatpush1.xpose.msra.mxu0 0.0
  %3817 = vmatprep.subr.mxu0 0.0
  %3818 = vmatpush1.xpose.msra.mxu0 0.0
  %3819 = vmatprep.subr.mxu0 0.0
  %3820 = vmatpush1.xpose.msra.mxu0 0.0
  %3821 = vmatprep.subr.mxu0 0.0
  %3822 = vmatpush1.xpose.msra.mxu0 0.0
  %3823 = vmatprep.subr.mxu0 0.0
  %3824 = vmatpush1.xpose.msra.mxu0 0.0
  %3825 = vmatprep.subr.mxu0 0.0
  %3826 = vmatpush1.xpose.msra.mxu0 0.0
  %3827 = vmatprep.subr.mxu0 0.0
  %3828 = vmatpush1.xpose.msra.mxu0 0.0
  %3829 = vmatprep.subr.mxu0 0.0
  %3830 = vmatpush1.xpose.msra.mxu0 0.0
  %3831 = vmatprep.subr.mxu0 0.0
  %3832 = vmatpush1.xpose.msra.mxu0 %v3799
  %3833 = vmatprep.subr.mxu0 0.0
  %3834 = vmatpush2.xpose.msra.mxu0 0.0
  %3835 = vmatprep.subr.mxu0 0.0
  %3836 = vmatpush2.xpose.msra.mxu0 0.0
  %3837 = vmatprep.subr.mxu0 0.0
  %3838 = vmatpush2.xpose.msra.mxu0 0.0
  %3839 = vmatprep.subr.mxu0 0.0
  %3840 = vmatpush2.xpose.msra.mxu0 0.0
  %3841 = vmatprep.subr.mxu0 0.0
  %3842 = vmatpush2.xpose.msra.mxu0 0.0
  %3843 = vmatprep.subr.mxu0 0.0
  %3844 = vmatpush2.xpose.msra.mxu0 0.0
  %3845 = vmatprep.subr.mxu0 0.0
  %3846 = vmatpush2.xpose.msra.mxu0 0.0
  %3847 = vmatprep.subr.mxu0 0.0
  %3848 = vmatpush2.xpose.msra.mxu0 0.0
  %3849 = vmatprep.subr.mxu0 0.0
  %3850 = vmatpush2.xpose.msra.mxu0 0.0
  %3851 = vmatprep.subr.mxu0 0.0
  %3852 = vmatpush2.xpose.msra.mxu0 0.0
  %3853 = vmatprep.subr.mxu0 0.0
  %3854 = vmatpush2.xpose.msra.mxu0 0.0
  %3855 = vmatprep.subr.mxu0 0.0
  %3856 = vmatpush2.xpose.msra.mxu0 0.0
  %3857 = vmatprep.subr.mxu0 0.0
  %3858 = vmatpush2.xpose.msra.mxu0 0.0
  %3859 = vmatprep.subr.mxu0 0.0
  %3860 = vmatpush2.xpose.msra.mxu0 0.0
  %3861 = vmatprep.subr.mxu0 0.0
  %3862 = vmatpush2.xpose.msra.mxu0 0.0
  %3863 = vmatprep.subr.mxu0 0.0
  %3864 = vmatpush2.xpose.msra.mxu0 0.0
  %3865 = vmatprep.mubr.f32.mxu0 0.0
  %3866 = vmatmul.mubr.f32.gmra.mxu0 %v3797
  %v3867 = vpop.f32.mrf.mxu0
  %v3868 = vadd.f32 0.0, %v3867
  %v3869 = vpop.f32.mrf.mxu0
  %3870 = vdwg.mxu0
  %3872 = vrot.lane.b32.xlu0 %v3343, 120
  %v3873 = vpop.permute.xlu0 %3872
  %v3874 = vsel %vm680, %v3343, 0
  %v3876 = vsel %vm680, %v3873, 0
  %3878 = vmatprep.subr.mxu0 0.0
  %3879 = vmatpush1.xpose.msra.mxu0 0.0
  %3880 = vmatprep.subr.mxu0 0.0
  %3881 = vmatpush1.xpose.msra.mxu0 0.0
  %3882 = vmatprep.subr.mxu0 0.0
  %3883 = vmatpush1.xpose.msra.mxu0 0.0
  %3884 = vmatprep.subr.mxu0 0.0
  %3885 = vmatpush1.xpose.msra.mxu0 0.0
  %3886 = vmatprep.subr.mxu0 0.0
  %3887 = vmatpush1.xpose.msra.mxu0 0.0
  %3888 = vmatprep.subr.mxu0 0.0
  %3889 = vmatpush1.xpose.msra.mxu0 0.0
  %3890 = vmatprep.subr.mxu0 0.0
  %3891 = vmatpush1.xpose.msra.mxu0 0.0
  %3892 = vmatprep.subr.mxu0 0.0
  %3893 = vmatpush1.xpose.msra.mxu0 0.0
  %3894 = vmatprep.subr.mxu0 0.0
  %3895 = vmatpush1.xpose.msra.mxu0 0.0
  %3896 = vmatprep.subr.mxu0 0.0
  %3897 = vmatpush1.xpose.msra.mxu0 0.0
  %3898 = vmatprep.subr.mxu0 0.0
  %3899 = vmatpush1.xpose.msra.mxu0 0.0
  %3900 = vmatprep.subr.mxu0 0.0
  %3901 = vmatpush1.xpose.msra.mxu0 0.0
  %3902 = vmatprep.subr.mxu0 0.0
  %3903 = vmatpush1.xpose.msra.mxu0 0.0
  %3904 = vmatprep.subr.mxu0 0.0
  %3905 = vmatpush1.xpose.msra.mxu0 0.0
  %3906 = vmatprep.subr.mxu0 0.0
  %3907 = vmatpush1.xpose.msra.mxu0 0.0
  %3908 = vmatprep.subr.mxu0 0.0
  %3909 = vmatpush1.xpose.msra.mxu0 %v3876
  %3910 = vmatprep.subr.mxu0 0.0
  %3911 = vmatpush2.xpose.msra.mxu0 0.0
  %3912 = vmatprep.subr.mxu0 0.0
  %3913 = vmatpush2.xpose.msra.mxu0 0.0
  %3914 = vmatprep.subr.mxu0 0.0
  %3915 = vmatpush2.xpose.msra.mxu0 0.0
  %3916 = vmatprep.subr.mxu0 0.0
  %3917 = vmatpush2.xpose.msra.mxu0 0.0
  %3918 = vmatprep.subr.mxu0 0.0
  %3919 = vmatpush2.xpose.msra.mxu0 0.0
  %3920 = vmatprep.subr.mxu0 0.0
  %3921 = vmatpush2.xpose.msra.mxu0 0.0
  %3922 = vmatprep.subr.mxu0 0.0
  %3923 = vmatpush2.xpose.msra.mxu0 0.0
  %3924 = vmatprep.subr.mxu0 0.0
  %3925 = vmatpush2.xpose.msra.mxu0 0.0
  %3926 = vmatprep.subr.mxu0 0.0
  %3927 = vmatpush2.xpose.msra.mxu0 0.0
  %3928 = vmatprep.subr.mxu0 0.0
  %3929 = vmatpush2.xpose.msra.mxu0 0.0
  %3930 = vmatprep.subr.mxu0 0.0
  %3931 = vmatpush2.xpose.msra.mxu0 0.0
  %3932 = vmatprep.subr.mxu0 0.0
  %3933 = vmatpush2.xpose.msra.mxu0 0.0
  %3934 = vmatprep.subr.mxu0 0.0
  %3935 = vmatpush2.xpose.msra.mxu0 0.0
  %3936 = vmatprep.subr.mxu0 0.0
  %3937 = vmatpush2.xpose.msra.mxu0 0.0
  %3938 = vmatprep.subr.mxu0 0.0
  %3939 = vmatpush2.xpose.msra.mxu0 0.0
  %3940 = vmatprep.subr.mxu0 0.0
  %3941 = vmatpush2.xpose.msra.mxu0 0.0
  %3942 = vmatprep.mubr.f32.mxu0 0.0
  %3943 = vmatmul.mubr.f32.gmra.mxu0 %v3874
  %v3944 = vpop.f32.mrf.mxu0
  %v3945 = vadd.f32 0.0, %v3944
  %v3946 = vpop.f32.mrf.mxu0
  %3947 = vdwg.mxu0
  %3949 = vrot.lane.b32.xlu0 %v3413, 120
  %v3950 = vpop.permute.xlu0 %3949
  %v3951 = vsel %vm680, %v3413, 0
  %v3953 = vsel %vm680, %v3950, 0
  %3955 = vmatprep.subr.mxu0 0.0
  %3956 = vmatpush1.xpose.msra.mxu0 0.0
  %3957 = vmatprep.subr.mxu0 0.0
  %3958 = vmatpush1.xpose.msra.mxu0 0.0
  %3959 = vmatprep.subr.mxu0 0.0
  %3960 = vmatpush1.xpose.msra.mxu0 0.0
  %3961 = vmatprep.subr.mxu0 0.0
  %3962 = vmatpush1.xpose.msra.mxu0 0.0
  %3963 = vmatprep.subr.mxu0 0.0
  %3964 = vmatpush1.xpose.msra.mxu0 0.0
  %3965 = vmatprep.subr.mxu0 0.0
  %3966 = vmatpush1.xpose.msra.mxu0 0.0
  %3967 = vmatprep.subr.mxu0 0.0
  %3968 = vmatpush1.xpose.msra.mxu0 0.0
  %3969 = vmatprep.subr.mxu0 0.0
  %3970 = vmatpush1.xpose.msra.mxu0 0.0
  %3971 = vmatprep.subr.mxu0 0.0
  %3972 = vmatpush1.xpose.msra.mxu0 0.0
  %3973 = vmatprep.subr.mxu0 0.0
  %3974 = vmatpush1.xpose.msra.mxu0 0.0
  %3975 = vmatprep.subr.mxu0 0.0
  %3976 = vmatpush1.xpose.msra.mxu0 0.0
  %3977 = vmatprep.subr.mxu0 0.0
  %3978 = vmatpush1.xpose.msra.mxu0 0.0
  %3979 = vmatprep.subr.mxu0 0.0
  %3980 = vmatpush1.xpose.msra.mxu0 0.0
  %3981 = vmatprep.subr.mxu0 0.0
  %3982 = vmatpush1.xpose.msra.mxu0 0.0
  %3983 = vmatprep.subr.mxu0 0.0
  %3984 = vmatpush1.xpose.msra.mxu0 0.0
  %3985 = vmatprep.subr.mxu0 0.0
  %3986 = vmatpush1.xpose.msra.mxu0 %v3953
  %3987 = vmatprep.subr.mxu0 0.0
  %3988 = vmatpush2.xpose.msra.mxu0 0.0
  %3989 = vmatprep.subr.mxu0 0.0
  %3990 = vmatpush2.xpose.msra.mxu0 0.0
  %3991 = vmatprep.subr.mxu0 0.0
  %3992 = vmatpush2.xpose.msra.mxu0 0.0
  %3993 = vmatprep.subr.mxu0 0.0
  %3994 = vmatpush2.xpose.msra.mxu0 0.0
  %3995 = vmatprep.subr.mxu0 0.0
  %3996 = vmatpush2.xpose.msra.mxu0 0.0
  %3997 = vmatprep.subr.mxu0 0.0
  %3998 = vmatpush2.xpose.msra.mxu0 0.0
  %3999 = vmatprep.subr.mxu0 0.0
  %4000 = vmatpush2.xpose.msra.mxu0 0.0
  %4001 = vmatprep.subr.mxu0 0.0
  %4002 = vmatpush2.xpose.msra.mxu0 0.0
  %4003 = vmatprep.subr.mxu0 0.0
  %4004 = vmatpush2.xpose.msra.mxu0 0.0
  %4005 = vmatprep.subr.mxu0 0.0
  %4006 = vmatpush2.xpose.msra.mxu0 0.0
  %4007 = vmatprep.subr.mxu0 0.0
  %4008 = vmatpush2.xpose.msra.mxu0 0.0
  %4009 = vmatprep.subr.mxu0 0.0
  %4010 = vmatpush2.xpose.msra.mxu0 0.0
  %4011 = vmatprep.subr.mxu0 0.0
  %4012 = vmatpush2.xpose.msra.mxu0 0.0
  %4013 = vmatprep.subr.mxu0 0.0
  %4014 = vmatpush2.xpose.msra.mxu0 0.0
  %4015 = vmatprep.subr.mxu0 0.0
  %4016 = vmatpush2.xpose.msra.mxu0 0.0
  %4017 = vmatprep.subr.mxu0 0.0
  %4018 = vmatpush2.xpose.msra.mxu0 0.0
  %4019 = vmatprep.mubr.f32.mxu0 0.0
  %4020 = vmatmul.mubr.f32.gmra.mxu0 %v3951
  %v4021 = vpop.f32.mrf.mxu0
  %v4022 = vadd.f32 0.0, %v4021
  %v4023 = vpop.f32.mrf.mxu0
  %4024 = vdwg.mxu0
  %4026 = vrot.lane.b32.xlu0 %v3483, 120
  %v4027 = vpop.permute.xlu0 %4026
  %v4028 = vsel %vm680, %v3483, 0
  %v4030 = vsel %vm680, %v4027, 0
  %4032 = vmatprep.subr.mxu0 0.0
  %4033 = vmatpush1.xpose.msra.mxu0 0.0
  %4034 = vmatprep.subr.mxu0 0.0
  %4035 = vmatpush1.xpose.msra.mxu0 0.0
  %4036 = vmatprep.subr.mxu0 0.0
  %4037 = vmatpush1.xpose.msra.mxu0 0.0
  %4038 = vmatprep.subr.mxu0 0.0
  %4039 = vmatpush1.xpose.msra.mxu0 0.0
  %4040 = vmatprep.subr.mxu0 0.0
  %4041 = vmatpush1.xpose.msra.mxu0 0.0
  %4042 = vmatprep.subr.mxu0 0.0
  %4043 = vmatpush1.xpose.msra.mxu0 0.0
  %4044 = vmatprep.subr.mxu0 0.0
  %4045 = vmatpush1.xpose.msra.mxu0 0.0
  %4046 = vmatprep.subr.mxu0 0.0
  %4047 = vmatpush1.xpose.msra.mxu0 0.0
  %4048 = vmatprep.subr.mxu0 0.0
  %4049 = vmatpush1.xpose.msra.mxu0 0.0
  %4050 = vmatprep.subr.mxu0 0.0
  %4051 = vmatpush1.xpose.msra.mxu0 0.0
  %4052 = vmatprep.subr.mxu0 0.0
  %4053 = vmatpush1.xpose.msra.mxu0 0.0
  %4054 = vmatprep.subr.mxu0 0.0
  %4055 = vmatpush1.xpose.msra.mxu0 0.0
  %4056 = vmatprep.subr.mxu0 0.0
  %4057 = vmatpush1.xpose.msra.mxu0 0.0
  %4058 = vmatprep.subr.mxu0 0.0
  %4059 = vmatpush1.xpose.msra.mxu0 0.0
  %4060 = vmatprep.subr.mxu0 0.0
  %4061 = vmatpush1.xpose.msra.mxu0 0.0
  %4062 = vmatprep.subr.mxu0 0.0
  %4063 = vmatpush1.xpose.msra.mxu0 %v4030
  %4064 = vmatprep.subr.mxu0 0.0
  %4065 = vmatpush2.xpose.msra.mxu0 0.0
  %4066 = vmatprep.subr.mxu0 0.0
  %4067 = vmatpush2.xpose.msra.mxu0 0.0
  %4068 = vmatprep.subr.mxu0 0.0
  %4069 = vmatpush2.xpose.msra.mxu0 0.0
  %4070 = vmatprep.subr.mxu0 0.0
  %4071 = vmatpush2.xpose.msra.mxu0 0.0
  %4072 = vmatprep.subr.mxu0 0.0
  %4073 = vmatpush2.xpose.msra.mxu0 0.0
  %4074 = vmatprep.subr.mxu0 0.0
  %4075 = vmatpush2.xpose.msra.mxu0 0.0
  %4076 = vmatprep.subr.mxu0 0.0
  %4077 = vmatpush2.xpose.msra.mxu0 0.0
  %4078 = vmatprep.subr.mxu0 0.0
  %4079 = vmatpush2.xpose.msra.mxu0 0.0
  %4080 = vmatprep.subr.mxu0 0.0
  %4081 = vmatpush2.xpose.msra.mxu0 0.0
  %4082 = vmatprep.subr.mxu0 0.0
  %4083 = vmatpush2.xpose.msra.mxu0 0.0
  %4084 = vmatprep.subr.mxu0 0.0
  %4085 = vmatpush2.xpose.msra.mxu0 0.0
  %4086 = vmatprep.subr.mxu0 0.0
  %4087 = vmatpush2.xpose.msra.mxu0 0.0
  %4088 = vmatprep.subr.mxu0 0.0
  %4089 = vmatpush2.xpose.msra.mxu0 0.0
  %4090 = vmatprep.subr.mxu0 0.0
  %4091 = vmatpush2.xpose.msra.mxu0 0.0
  %4092 = vmatprep.subr.mxu0 0.0
  %4093 = vmatpush2.xpose.msra.mxu0 0.0
  %4094 = vmatprep.subr.mxu0 0.0
  %4095 = vmatpush2.xpose.msra.mxu0 0.0
  %4096 = vmatprep.mubr.f32.mxu0 0.0
  %4097 = vmatmul.mubr.f32.gmra.mxu0 %v4028
  %v4098 = vpop.f32.mrf.mxu0
  %v4099 = vadd.f32 0.0, %v4098
  %v4100 = vpop.f32.mrf.mxu0
  %4101 = vdwg.mxu0
  %v4102 = vmul.f32 %v3560, 0.35355338
  %v4103 = vmul.f32 %v3637, 0.35355338
  %v4104 = vmul.f32 %v3714, 0.35355338
  %v4105 = vmul.f32 %v3791, 0.35355338
  %v4106 = vmul.f32 %v3868, 0.35355338
  %v4107 = vmul.f32 %v3945, 0.35355338
  %v4108 = vmul.f32 %v4022, 0.35355338
  %v4109 = vmul.f32 %v4099, 0.35355338
  %v4110 = vsel %vm680, %v4102, -inf
  %4111 = vmax.xlane.f32.xlu0 %v4110
  %v4112 = vpop.xlane.xlu0 %4111
  %v4113 = vsel %vm680, %v4103, -inf
  %4114 = vmax.xlane.f32.xlu0 %v4113
  %v4115 = vpop.xlane.xlu0 %4114
  %v4116 = vsel %vm680, %v4104, -inf
  %4117 = vmax.xlane.f32.xlu0 %v4116
  %v4118 = vpop.xlane.xlu0 %4117
  %v4119 = vsel %vm680, %v4105, -inf
  %4120 = vmax.xlane.f32.xlu0 %v4119
  %v4121 = vpop.xlane.xlu0 %4120
  %v4122 = vsel %vm680, %v4106, -inf
  %4123 = vmax.xlane.f32.xlu0 %v4122
  %v4124 = vpop.xlane.xlu0 %4123
  %v4125 = vsel %vm680, %v4107, -inf
  %4126 = vmax.xlane.f32.xlu0 %v4125
  %v4127 = vpop.xlane.xlu0 %4126
  %v4128 = vsel %vm680, %v4108, -inf
  %4129 = vmax.xlane.f32.xlu0 %v4128
  %v4130 = vpop.xlane.xlu0 %4129
  %v4131 = vsel %vm680, %v4109, -inf
  %4132 = vmax.xlane.f32.xlu0 %v4131
  %v4133 = vpop.xlane.xlu0 %4132
  %v4134 = vsub.f32 %v4102, %v4112
  %v4135 = vsub.f32 %v4103, %v4115
  %v4136 = vsub.f32 %v4104, %v4118
  %v4137 = vsub.f32 %v4105, %v4121
  %v4138 = vsub.f32 %v4106, %v4124
  %v4139 = vsub.f32 %v4107, %v4127
  %v4140 = vsub.f32 %v4108, %v4130
  %v4141 = vsub.f32 %v4109, %v4133
  %v4142 = vmul.f32 %v4134, 1.442695
  %v4143 = vpow.pop %v4142
  %v4144 = vmul.f32 %v4135, 1.442695
  %v4145 = vpow.pop %v4144
  %v4146 = vmul.f32 %v4136, 1.442695
  %v4147 = vpow.pop %v4146
  %v4148 = vmul.f32 %v4137, 1.442695
  %v4149 = vpow.pop %v4148
  %v4150 = vmul.f32 %v4138, 1.442695
  %v4151 = vpow.pop %v4150
  %v4152 = vmul.f32 %v4139, 1.442695
  %v4153 = vpow.pop %v4152
  %v4154 = vmul.f32 %v4140, 1.442695
  %v4155 = vpow.pop %v4154
  %v4156 = vmul.f32 %v4141, 1.442695
  %v4157 = vpow.pop %v4156
  %v4158 = vsel %vm680, %v4143, 0.0
  %4159 = vadd.xlane.f32.xlu0 %v4158
  %v4160 = vpop.xlane.xlu0 %4159
  %v4161 = vsel %vm680, %v4145, 0.0
  %4162 = vadd.xlane.f32.xlu0 %v4161
  %v4163 = vpop.xlane.xlu0 %4162
  %v4164 = vsel %vm680, %v4147, 0.0
  %4165 = vadd.xlane.f32.xlu0 %v4164
  %v4166 = vpop.xlane.xlu0 %4165
  %v4167 = vsel %vm680, %v4149, 0.0
  %4168 = vadd.xlane.f32.xlu0 %v4167
  %v4169 = vpop.xlane.xlu0 %4168
  %v4170 = vsel %vm680, %v4151, 0.0
  %4171 = vadd.xlane.f32.xlu0 %v4170
  %v4172 = vpop.xlane.xlu0 %4171
  %v4173 = vsel %vm680, %v4153, 0.0
  %4174 = vadd.xlane.f32.xlu0 %v4173
  %v4175 = vpop.xlane.xlu0 %4174
  %v4176 = vsel %vm680, %v4155, 0.0
  %4177 = vadd.xlane.f32.xlu0 %v4176
  %v4178 = vpop.xlane.xlu0 %4177
  %v4179 = vsel %vm680, %v4157, 0.0
  %4180 = vadd.xlane.f32.xlu0 %v4179
  %v4181 = vpop.xlane.xlu0 %4180
  %v4182 = vrcp.pop %v4160
  %v4183 = vrcp.pop %v4163
  %v4184 = vrcp.pop %v4166
  %v4185 = vrcp.pop %v4169
  %v4186 = vrcp.pop %v4172
  %v4187 = vrcp.pop %v4175
  %v4188 = vrcp.pop %v4178
  %v4189 = vrcp.pop %v4181
  %v4190 = vmul.f32 %v4143, %v4182
  %v4191 = vmul.f32 %v4145, %v4183
  %v4192 = vmul.f32 %v4147, %v4184
  %v4193 = vmul.f32 %v4149, %v4185
  %v4194 = vmul.f32 %v4151, %v4186
  %v4195 = vmul.f32 %v4153, %v4187
  %v4196 = vmul.f32 %v4155, %v4188
  %v4197 = vmul.f32 %v4157, %v4189
  %4198 = vrot.lane.b32.xlu0 %v2990, 112
  %v4199 = vpop.permute.xlu0 %4198
  %4201 = vxpose.xlu0.b32.start [1/16] %v4199, 128
  %4202 = vxpose.xlu0.b32.cont [2/16] 0.0, 128
  %4203 = vxpose.xlu0.b32.cont [3/16] 0.0, 128
  %4204 = vxpose.xlu0.b32.cont [4/16] 0.0, 128
  %4205 = vxpose.xlu0.b32.cont [5/16] 0.0, 128
  %4206 = vxpose.xlu0.b32.cont [6/16] 0.0, 128
  %4207 = vxpose.xlu0.b32.cont [7/16] 0.0, 128
  %4208 = vxpose.xlu0.b32.cont [8/16] 0.0, 128
  %4209 = vxpose.xlu0.b32.cont [9/16] 0.0, 128
  %4210 = vxpose.xlu0.b32.cont [10/16] 0.0, 128
  %4211 = vxpose.xlu0.b32.cont [11/16] 0.0, 128
  %4212 = vxpose.xlu0.b32.cont [12/16] 0.0, 128
  %4213 = vxpose.xlu0.b32.cont [13/16] 0.0, 128
  %4214 = vxpose.xlu0.b32.cont [14/16] 0.0, 128
  %4215 = vxpose.xlu0.b32.cont [15/16] 0.0, 128
  %4216 = vxpose.xlu0.b32.end [16/16] 0.0, 128
  %v4217 = vpop.trf.xlu0
  %v4218 = vpop.trf.xlu0
  %v4219 = vpop.trf.xlu0
  %v4220 = vpop.trf.xlu0
  %v4221 = vpop.trf.xlu0
  %v4222 = vpop.trf.xlu0
  %v4223 = vpop.trf.xlu0
  %v4224 = vpop.trf.xlu0
  %v4225 = vpop.trf.xlu0
  %v4226 = vpop.trf.xlu0
  %v4227 = vpop.trf.xlu0
  %v4228 = vpop.trf.xlu0
  %v4229 = vpop.trf.xlu0
  %v4230 = vpop.trf.xlu0
  %v4231 = vpop.trf.xlu0
  %v4232 = vpop.trf.xlu0
  %v4234 = vsel %vm680, %v4217, 0
  %v4237 = vsel %vm680, %v4190, 0
  %4239 = vmatprep.subr.mxu0 0.0
  %4240 = vmatpush1.xpose.msra.mxu0 0.0
  %4241 = vmatprep.subr.mxu0 0.0
  %4242 = vmatpush1.xpose.msra.mxu0 0.0
  %4243 = vmatprep.subr.mxu0 0.0
  %4244 = vmatpush1.xpose.msra.mxu0 0.0
  %4245 = vmatprep.subr.mxu0 0.0
  %4246 = vmatpush1.xpose.msra.mxu0 0.0
  %4247 = vmatprep.subr.mxu0 0.0
  %4248 = vmatpush1.xpose.msra.mxu0 0.0
  %4249 = vmatprep.subr.mxu0 0.0
  %4250 = vmatpush1.xpose.msra.mxu0 0.0
  %4251 = vmatprep.subr.mxu0 0.0
  %4252 = vmatpush1.xpose.msra.mxu0 0.0
  %4253 = vmatprep.subr.mxu0 0.0
  %4254 = vmatpush1.xpose.msra.mxu0 0.0
  %4255 = vmatprep.subr.mxu0 0.0
  %4256 = vmatpush1.xpose.msra.mxu0 0.0
  %4257 = vmatprep.subr.mxu0 0.0
  %4258 = vmatpush1.xpose.msra.mxu0 0.0
  %4259 = vmatprep.subr.mxu0 0.0
  %4260 = vmatpush1.xpose.msra.mxu0 0.0
  %4261 = vmatprep.subr.mxu0 0.0
  %4262 = vmatpush1.xpose.msra.mxu0 0.0
  %4263 = vmatprep.subr.mxu0 0.0
  %4264 = vmatpush1.xpose.msra.mxu0 0.0
  %4265 = vmatprep.subr.mxu0 0.0
  %4266 = vmatpush1.xpose.msra.mxu0 0.0
  %4267 = vmatprep.subr.mxu0 0.0
  %4268 = vmatpush1.xpose.msra.mxu0 0.0
  %4269 = vmatprep.subr.mxu0 0.0
  %4270 = vmatpush1.xpose.msra.mxu0 %v4237
  %4271 = vmatprep.subr.mxu0 0.0
  %4272 = vmatpush2.xpose.msra.mxu0 0.0
  %4273 = vmatprep.subr.mxu0 0.0
  %4274 = vmatpush2.xpose.msra.mxu0 0.0
  %4275 = vmatprep.subr.mxu0 0.0
  %4276 = vmatpush2.xpose.msra.mxu0 0.0
  %4277 = vmatprep.subr.mxu0 0.0
  %4278 = vmatpush2.xpose.msra.mxu0 0.0
  %4279 = vmatprep.subr.mxu0 0.0
  %4280 = vmatpush2.xpose.msra.mxu0 0.0
  %4281 = vmatprep.subr.mxu0 0.0
  %4282 = vmatpush2.xpose.msra.mxu0 0.0
  %4283 = vmatprep.subr.mxu0 0.0
  %4284 = vmatpush2.xpose.msra.mxu0 0.0
  %4285 = vmatprep.subr.mxu0 0.0
  %4286 = vmatpush2.xpose.msra.mxu0 0.0
  %4287 = vmatprep.subr.mxu0 0.0
  %4288 = vmatpush2.xpose.msra.mxu0 0.0
  %4289 = vmatprep.subr.mxu0 0.0
  %4290 = vmatpush2.xpose.msra.mxu0 0.0
  %4291 = vmatprep.subr.mxu0 0.0
  %4292 = vmatpush2.xpose.msra.mxu0 0.0
  %4293 = vmatprep.subr.mxu0 0.0
  %4294 = vmatpush2.xpose.msra.mxu0 0.0
  %4295 = vmatprep.subr.mxu0 0.0
  %4296 = vmatpush2.xpose.msra.mxu0 0.0
  %4297 = vmatprep.subr.mxu0 0.0
  %4298 = vmatpush2.xpose.msra.mxu0 0.0
  %4299 = vmatprep.subr.mxu0 0.0
  %4300 = vmatpush2.xpose.msra.mxu0 0.0
  %4301 = vmatprep.subr.mxu0 0.0
  %4302 = vmatpush2.xpose.msra.mxu0 0.0
  %4303 = vmatprep.mubr.f32.mxu0 0.0
  %4304 = vmatmul.mubr.f32.gmra.mxu0 %v4234
  %v4305 = vpop.f32.mrf.mxu0
  %v4306 = vadd.f32 0.0, %v4305
  %v4307 = vpop.f32.mrf.mxu0
  %4308 = vdwg.mxu0
  %4309 = vrot.lane.b32.xlu0 %v3060, 112
  %v4310 = vpop.permute.xlu0 %4309
  %4312 = vxpose.xlu0.b32.start [1/16] %v4310, 128
  %4313 = vxpose.xlu0.b32.cont [2/16] 0.0, 128
  %4314 = vxpose.xlu0.b32.cont [3/16] 0.0, 128
  %4315 = vxpose.xlu0.b32.cont [4/16] 0.0, 128
  %4316 = vxpose.xlu0.b32.cont [5/16] 0.0, 128
  %4317 = vxpose.xlu0.b32.cont [6/16] 0.0, 128
  %4318 = vxpose.xlu0.b32.cont [7/16] 0.0, 128
  %4319 = vxpose.xlu0.b32.cont [8/16] 0.0, 128
  %4320 = vxpose.xlu0.b32.cont [9/16] 0.0, 128
  %4321 = vxpose.xlu0.b32.cont [10/16] 0.0, 128
  %4322 = vxpose.xlu0.b32.cont [11/16] 0.0, 128
  %4323 = vxpose.xlu0.b32.cont [12/16] 0.0, 128
  %4324 = vxpose.xlu0.b32.cont [13/16] 0.0, 128
  %4325 = vxpose.xlu0.b32.cont [14/16] 0.0, 128
  %4326 = vxpose.xlu0.b32.cont [15/16] 0.0, 128
  %4327 = vxpose.xlu0.b32.end [16/16] 0.0, 128
  %v4328 = vpop.trf.xlu0
  %v4329 = vpop.trf.xlu0
  %v4330 = vpop.trf.xlu0
  %v4331 = vpop.trf.xlu0
  %v4332 = vpop.trf.xlu0
  %v4333 = vpop.trf.xlu0
  %v4334 = vpop.trf.xlu0
  %v4335 = vpop.trf.xlu0
  %v4336 = vpop.trf.xlu0
  %v4337 = vpop.trf.xlu0
  %v4338 = vpop.trf.xlu0
  %v4339 = vpop.trf.xlu0
  %v4340 = vpop.trf.xlu0
  %v4341 = vpop.trf.xlu0
  %v4342 = vpop.trf.xlu0
  %v4343 = vpop.trf.xlu0
  %v4345 = vsel %vm680, %v4328, 0
  %v4348 = vsel %vm680, %v4191, 0
  %4350 = vmatprep.subr.mxu0 0.0
  %4351 = vmatpush1.xpose.msra.mxu0 0.0
  %4352 = vmatprep.subr.mxu0 0.0
  %4353 = vmatpush1.xpose.msra.mxu0 0.0
  %4354 = vmatprep.subr.mxu0 0.0
  %4355 = vmatpush1.xpose.msra.mxu0 0.0
  %4356 = vmatprep.subr.mxu0 0.0
  %4357 = vmatpush1.xpose.msra.mxu0 0.0
  %4358 = vmatprep.subr.mxu0 0.0
  %4359 = vmatpush1.xpose.msra.mxu0 0.0
  %4360 = vmatprep.subr.mxu0 0.0
  %4361 = vmatpush1.xpose.msra.mxu0 0.0
  %4362 = vmatprep.subr.mxu0 0.0
  %4363 = vmatpush1.xpose.msra.mxu0 0.0
  %4364 = vmatprep.subr.mxu0 0.0
  %4365 = vmatpush1.xpose.msra.mxu0 0.0
  %4366 = vmatprep.subr.mxu0 0.0
  %4367 = vmatpush1.xpose.msra.mxu0 0.0
  %4368 = vmatprep.subr.mxu0 0.0
  %4369 = vmatpush1.xpose.msra.mxu0 0.0
  %4370 = vmatprep.subr.mxu0 0.0
  %4371 = vmatpush1.xpose.msra.mxu0 0.0
  %4372 = vmatprep.subr.mxu0 0.0
  %4373 = vmatpush1.xpose.msra.mxu0 0.0
  %4374 = vmatprep.subr.mxu0 0.0
  %4375 = vmatpush1.xpose.msra.mxu0 0.0
  %4376 = vmatprep.subr.mxu0 0.0
  %4377 = vmatpush1.xpose.msra.mxu0 0.0
  %4378 = vmatprep.subr.mxu0 0.0
  %4379 = vmatpush1.xpose.msra.mxu0 0.0
  %4380 = vmatprep.subr.mxu0 0.0
  %4381 = vmatpush1.xpose.msra.mxu0 %v4348
  %4382 = vmatprep.subr.mxu0 0.0
  %4383 = vmatpush2.xpose.msra.mxu0 0.0
  %4384 = vmatprep.subr.mxu0 0.0
  %4385 = vmatpush2.xpose.msra.mxu0 0.0
  %4386 = vmatprep.subr.mxu0 0.0
  %4387 = vmatpush2.xpose.msra.mxu0 0.0
  %4388 = vmatprep.subr.mxu0 0.0
  %4389 = vmatpush2.xpose.msra.mxu0 0.0
  %4390 = vmatprep.subr.mxu0 0.0
  %4391 = vmatpush2.xpose.msra.mxu0 0.0
  %4392 = vmatprep.subr.mxu0 0.0
  %4393 = vmatpush2.xpose.msra.mxu0 0.0
  %4394 = vmatprep.subr.mxu0 0.0
  %4395 = vmatpush2.xpose.msra.mxu0 0.0
  %4396 = vmatprep.subr.mxu0 0.0
  %4397 = vmatpush2.xpose.msra.mxu0 0.0
  %4398 = vmatprep.subr.mxu0 0.0
  %4399 = vmatpush2.xpose.msra.mxu0 0.0
  %4400 = vmatprep.subr.mxu0 0.0
  %4401 = vmatpush2.xpose.msra.mxu0 0.0
  %4402 = vmatprep.subr.mxu0 0.0
  %4403 = vmatpush2.xpose.msra.mxu0 0.0
  %4404 = vmatprep.subr.mxu0 0.0
  %4405 = vmatpush2.xpose.msra.mxu0 0.0
  %4406 = vmatprep.subr.mxu0 0.0
  %4407 = vmatpush2.xpose.msra.mxu0 0.0
  %4408 = vmatprep.subr.mxu0 0.0
  %4409 = vmatpush2.xpose.msra.mxu0 0.0
  %4410 = vmatprep.subr.mxu0 0.0
  %4411 = vmatpush2.xpose.msra.mxu0 0.0
  %4412 = vmatprep.subr.mxu0 0.0
  %4413 = vmatpush2.xpose.msra.mxu0 0.0
  %4414 = vmatprep.mubr.f32.mxu0 0.0
  %4415 = vmatmul.mubr.f32.gmra.mxu0 %v4345
  %v4416 = vpop.f32.mrf.mxu0
  %v4417 = vadd.f32 0.0, %v4416
  %v4418 = vpop.f32.mrf.mxu0
  %4419 = vdwg.mxu0
  %4420 = vrot.lane.b32.xlu0 %v3130, 112
  %v4421 = vpop.permute.xlu0 %4420
  %4423 = vxpose.xlu0.b32.start [1/16] %v4421, 128
  %4424 = vxpose.xlu0.b32.cont [2/16] 0.0, 128
  %4425 = vxpose.xlu0.b32.cont [3/16] 0.0, 128
  %4426 = vxpose.xlu0.b32.cont [4/16] 0.0, 128
  %4427 = vxpose.xlu0.b32.cont [5/16] 0.0, 128
  %4428 = vxpose.xlu0.b32.cont [6/16] 0.0, 128
  %4429 = vxpose.xlu0.b32.cont [7/16] 0.0, 128
  %4430 = vxpose.xlu0.b32.cont [8/16] 0.0, 128
  %4431 = vxpose.xlu0.b32.cont [9/16] 0.0, 128
  %4432 = vxpose.xlu0.b32.cont [10/16] 0.0, 128
  %4433 = vxpose.xlu0.b32.cont [11/16] 0.0, 128
  %4434 = vxpose.xlu0.b32.cont [12/16] 0.0, 128
  %4435 = vxpose.xlu0.b32.cont [13/16] 0.0, 128
  %4436 = vxpose.xlu0.b32.cont [14/16] 0.0, 128
  %4437 = vxpose.xlu0.b32.cont [15/16] 0.0, 128
  %4438 = vxpose.xlu0.b32.end [16/16] 0.0, 128
  %v4439 = vpop.trf.xlu0
  %v4440 = vpop.trf.xlu0
  %v4441 = vpop.trf.xlu0
  %v4442 = vpop.trf.xlu0
  %v4443 = vpop.trf.xlu0
  %v4444 = vpop.trf.xlu0
  %v4445 = vpop.trf.xlu0
  %v4446 = vpop.trf.xlu0
  %v4447 = vpop.trf.xlu0
  %v4448 = vpop.trf.xlu0
  %v4449 = vpop.trf.xlu0
  %v4450 = vpop.trf.xlu0
  %v4451 = vpop.trf.xlu0
  %v4452 = vpop.trf.xlu0
  %v4453 = vpop.trf.xlu0
  %v4454 = vpop.trf.xlu0
  %v4456 = vsel %vm680, %v4439, 0
  %v4459 = vsel %vm680, %v4192, 0
  %4461 = vmatprep.subr.mxu0 0.0
  %4462 = vmatpush1.xpose.msra.mxu0 0.0
  %4463 = vmatprep.subr.mxu0 0.0
  %4464 = vmatpush1.xpose.msra.mxu0 0.0
  %4465 = vmatprep.subr.mxu0 0.0
  %4466 = vmatpush1.xpose.msra.mxu0 0.0
  %4467 = vmatprep.subr.mxu0 0.0
  %4468 = vmatpush1.xpose.msra.mxu0 0.0
  %4469 = vmatprep.subr.mxu0 0.0
  %4470 = vmatpush1.xpose.msra.mxu0 0.0
  %4471 = vmatprep.subr.mxu0 0.0
  %4472 = vmatpush1.xpose.msra.mxu0 0.0
  %4473 = vmatprep.subr.mxu0 0.0
  %4474 = vmatpush1.xpose.msra.mxu0 0.0
  %4475 = vmatprep.subr.mxu0 0.0
  %4476 = vmatpush1.xpose.msra.mxu0 0.0
  %4477 = vmatprep.subr.mxu0 0.0
  %4478 = vmatpush1.xpose.msra.mxu0 0.0
  %4479 = vmatprep.subr.mxu0 0.0
  %4480 = vmatpush1.xpose.msra.mxu0 0.0
  %4481 = vmatprep.subr.mxu0 0.0
  %4482 = vmatpush1.xpose.msra.mxu0 0.0
  %4483 = vmatprep.subr.mxu0 0.0
  %4484 = vmatpush1.xpose.msra.mxu0 0.0
  %4485 = vmatprep.subr.mxu0 0.0
  %4486 = vmatpush1.xpose.msra.mxu0 0.0
  %4487 = vmatprep.subr.mxu0 0.0
  %4488 = vmatpush1.xpose.msra.mxu0 0.0
  %4489 = vmatprep.subr.mxu0 0.0
  %4490 = vmatpush1.xpose.msra.mxu0 0.0
  %4491 = vmatprep.subr.mxu0 0.0
  %4492 = vmatpush1.xpose.msra.mxu0 %v4459
  %4493 = vmatprep.subr.mxu0 0.0
  %4494 = vmatpush2.xpose.msra.mxu0 0.0
  %4495 = vmatprep.subr.mxu0 0.0
  %4496 = vmatpush2.xpose.msra.mxu0 0.0
  %4497 = vmatprep.subr.mxu0 0.0
  %4498 = vmatpush2.xpose.msra.mxu0 0.0
  %4499 = vmatprep.subr.mxu0 0.0
  %4500 = vmatpush2.xpose.msra.mxu0 0.0
  %4501 = vmatprep.subr.mxu0 0.0
  %4502 = vmatpush2.xpose.msra.mxu0 0.0
  %4503 = vmatprep.subr.mxu0 0.0
  %4504 = vmatpush2.xpose.msra.mxu0 0.0
  %4505 = vmatprep.subr.mxu0 0.0
  %4506 = vmatpush2.xpose.msra.mxu0 0.0
  %4507 = vmatprep.subr.mxu0 0.0
  %4508 = vmatpush2.xpose.msra.mxu0 0.0
  %4509 = vmatprep.subr.mxu0 0.0
  %4510 = vmatpush2.xpose.msra.mxu0 0.0
  %4511 = vmatprep.subr.mxu0 0.0
  %4512 = vmatpush2.xpose.msra.mxu0 0.0
  %4513 = vmatprep.subr.mxu0 0.0
  %4514 = vmatpush2.xpose.msra.mxu0 0.0
  %4515 = vmatprep.subr.mxu0 0.0
  %4516 = vmatpush2.xpose.msra.mxu0 0.0
  %4517 = vmatprep.subr.mxu0 0.0
  %4518 = vmatpush2.xpose.msra.mxu0 0.0
  %4519 = vmatprep.subr.mxu0 0.0
  %4520 = vmatpush2.xpose.msra.mxu0 0.0
  %4521 = vmatprep.subr.mxu0 0.0
  %4522 = vmatpush2.xpose.msra.mxu0 0.0
  %4523 = vmatprep.subr.mxu0 0.0
  %4524 = vmatpush2.xpose.msra.mxu0 0.0
  %4525 = vmatprep.mubr.f32.mxu0 0.0
  %4526 = vmatmul.mubr.f32.gmra.mxu0 %v4456
  %v4527 = vpop.f32.mrf.mxu0
  %v4528 = vadd.f32 0.0, %v4527
  %v4529 = vpop.f32.mrf.mxu0
  %4530 = vdwg.mxu0
  %4531 = vrot.lane.b32.xlu0 %v3200, 112
  %v4532 = vpop.permute.xlu0 %4531
  %4534 = vxpose.xlu0.b32.start [1/16] %v4532, 128
  %4535 = vxpose.xlu0.b32.cont [2/16] 0.0, 128
  %4536 = vxpose.xlu0.b32.cont [3/16] 0.0, 128
  %4537 = vxpose.xlu0.b32.cont [4/16] 0.0, 128
  %4538 = vxpose.xlu0.b32.cont [5/16] 0.0, 128
  %4539 = vxpose.xlu0.b32.cont [6/16] 0.0, 128
  %4540 = vxpose.xlu0.b32.cont [7/16] 0.0, 128
  %4541 = vxpose.xlu0.b32.cont [8/16] 0.0, 128
  %4542 = vxpose.xlu0.b32.cont [9/16] 0.0, 128
  %4543 = vxpose.xlu0.b32.cont [10/16] 0.0, 128
  %4544 = vxpose.xlu0.b32.cont [11/16] 0.0, 128
  %4545 = vxpose.xlu0.b32.cont [12/16] 0.0, 128
  %4546 = vxpose.xlu0.b32.cont [13/16] 0.0, 128
  %4547 = vxpose.xlu0.b32.cont [14/16] 0.0, 128
  %4548 = vxpose.xlu0.b32.cont [15/16] 0.0, 128
  %4549 = vxpose.xlu0.b32.end [16/16] 0.0, 128
  %v4550 = vpop.trf.xlu0
  %v4551 = vpop.trf.xlu0
  %v4552 = vpop.trf.xlu0
  %v4553 = vpop.trf.xlu0
  %v4554 = vpop.trf.xlu0
  %v4555 = vpop.trf.xlu0
  %v4556 = vpop.trf.xlu0
  %v4557 = vpop.trf.xlu0
  %v4558 = vpop.trf.xlu0
  %v4559 = vpop.trf.xlu0
  %v4560 = vpop.trf.xlu0
  %v4561 = vpop.trf.xlu0
  %v4562 = vpop.trf.xlu0
  %v4563 = vpop.trf.xlu0
  %v4564 = vpop.trf.xlu0
  %v4565 = vpop.trf.xlu0
  %v4567 = vsel %vm680, %v4550, 0
  %v4570 = vsel %vm680, %v4193, 0
  %4572 = vmatprep.subr.mxu0 0.0
  %4573 = vmatpush1.xpose.msra.mxu0 0.0
  %4574 = vmatprep.subr.mxu0 0.0
  %4575 = vmatpush1.xpose.msra.mxu0 0.0
  %4576 = vmatprep.subr.mxu0 0.0
  %4577 = vmatpush1.xpose.msra.mxu0 0.0
  %4578 = vmatprep.subr.mxu0 0.0
  %4579 = vmatpush1.xpose.msra.mxu0 0.0
  %4580 = vmatprep.subr.mxu0 0.0
  %4581 = vmatpush1.xpose.msra.mxu0 0.0
  %4582 = vmatprep.subr.mxu0 0.0
  %4583 = vmatpush1.xpose.msra.mxu0 0.0
  %4584 = vmatprep.subr.mxu0 0.0
  %4585 = vmatpush1.xpose.msra.mxu0 0.0
  %4586 = vmatprep.subr.mxu0 0.0
  %4587 = vmatpush1.xpose.msra.mxu0 0.0
  %4588 = vmatprep.subr.mxu0 0.0
  %4589 = vmatpush1.xpose.msra.mxu0 0.0
  %4590 = vmatprep.subr.mxu0 0.0
  %4591 = vmatpush1.xpose.msra.mxu0 0.0
  %4592 = vmatprep.subr.mxu0 0.0
  %4593 = vmatpush1.xpose.msra.mxu0 0.0
  %4594 = vmatprep.subr.mxu0 0.0
  %4595 = vmatpush1.xpose.msra.mxu0 0.0
  %4596 = vmatprep.subr.mxu0 0.0
  %4597 = vmatpush1.xpose.msra.mxu0 0.0
  %4598 = vmatprep.subr.mxu0 0.0
  %4599 = vmatpush1.xpose.msra.mxu0 0.0
  %4600 = vmatprep.subr.mxu0 0.0
  %4601 = vmatpush1.xpose.msra.mxu0 0.0
  %4602 = vmatprep.subr.mxu0 0.0
  %4603 = vmatpush1.xpose.msra.mxu0 %v4570
  %4604 = vmatprep.subr.mxu0 0.0
  %4605 = vmatpush2.xpose.msra.mxu0 0.0
  %4606 = vmatprep.subr.mxu0 0.0
  %4607 = vmatpush2.xpose.msra.mxu0 0.0
  %4608 = vmatprep.subr.mxu0 0.0
  %4609 = vmatpush2.xpose.msra.mxu0 0.0
  %4610 = vmatprep.subr.mxu0 0.0
  %4611 = vmatpush2.xpose.msra.mxu0 0.0
  %4612 = vmatprep.subr.mxu0 0.0
  %4613 = vmatpush2.xpose.msra.mxu0 0.0
  %4614 = vmatprep.subr.mxu0 0.0
  %4615 = vmatpush2.xpose.msra.mxu0 0.0
  %4616 = vmatprep.subr.mxu0 0.0
  %4617 = vmatpush2.xpose.msra.mxu0 0.0
  %4618 = vmatprep.subr.mxu0 0.0
  %4619 = vmatpush2.xpose.msra.mxu0 0.0
  %4620 = vmatprep.subr.mxu0 0.0
  %4621 = vmatpush2.xpose.msra.mxu0 0.0
  %4622 = vmatprep.subr.mxu0 0.0
  %4623 = vmatpush2.xpose.msra.mxu0 0.0
  %4624 = vmatprep.subr.mxu0 0.0
  %4625 = vmatpush2.xpose.msra.mxu0 0.0
  %4626 = vmatprep.subr.mxu0 0.0
  %4627 = vmatpush2.xpose.msra.mxu0 0.0
  %4628 = vmatprep.subr.mxu0 0.0
  %4629 = vmatpush2.xpose.msra.mxu0 0.0
  %4630 = vmatprep.subr.mxu0 0.0
  %4631 = vmatpush2.xpose.msra.mxu0 0.0
  %4632 = vmatprep.subr.mxu0 0.0
  %4633 = vmatpush2.xpose.msra.mxu0 0.0
  %4634 = vmatprep.subr.mxu0 0.0
  %4635 = vmatpush2.xpose.msra.mxu0 0.0
  %4636 = vmatprep.mubr.f32.mxu0 0.0
  %4637 = vmatmul.mubr.f32.gmra.mxu0 %v4567
  %v4638 = vpop.f32.mrf.mxu0
  %v4639 = vadd.f32 0.0, %v4638
  %v4640 = vpop.f32.mrf.mxu0
  %4641 = vdwg.mxu0
  %4642 = vrot.lane.b32.xlu0 %v3273, 112
  %v4643 = vpop.permute.xlu0 %4642
  %4645 = vxpose.xlu0.b32.start [1/16] %v4643, 128
  %4646 = vxpose.xlu0.b32.cont [2/16] 0.0, 128
  %4647 = vxpose.xlu0.b32.cont [3/16] 0.0, 128
  %4648 = vxpose.xlu0.b32.cont [4/16] 0.0, 128
  %4649 = vxpose.xlu0.b32.cont [5/16] 0.0, 128
  %4650 = vxpose.xlu0.b32.cont [6/16] 0.0, 128
  %4651 = vxpose.xlu0.b32.cont [7/16] 0.0, 128
  %4652 = vxpose.xlu0.b32.cont [8/16] 0.0, 128
  %4653 = vxpose.xlu0.b32.cont [9/16] 0.0, 128
  %4654 = vxpose.xlu0.b32.cont [10/16] 0.0, 128
  %4655 = vxpose.xlu0.b32.cont [11/16] 0.0, 128
  %4656 = vxpose.xlu0.b32.cont [12/16] 0.0, 128
  %4657 = vxpose.xlu0.b32.cont [13/16] 0.0, 128
  %4658 = vxpose.xlu0.b32.cont [14/16] 0.0, 128
  %4659 = vxpose.xlu0.b32.cont [15/16] 0.0, 128
  %4660 = vxpose.xlu0.b32.end [16/16] 0.0, 128
  %v4661 = vpop.trf.xlu0
  %v4662 = vpop.trf.xlu0
  %v4663 = vpop.trf.xlu0
  %v4664 = vpop.trf.xlu0
  %v4665 = vpop.trf.xlu0
  %v4666 = vpop.trf.xlu0
  %v4667 = vpop.trf.xlu0
  %v4668 = vpop.trf.xlu0
  %v4669 = vpop.trf.xlu0
  %v4670 = vpop.trf.xlu0
  %v4671 = vpop.trf.xlu0
  %v4672 = vpop.trf.xlu0
  %v4673 = vpop.trf.xlu0
  %v4674 = vpop.trf.xlu0
  %v4675 = vpop.trf.xlu0
  %v4676 = vpop.trf.xlu0
  %v4678 = vsel %vm680, %v4661, 0
  %v4681 = vsel %vm680, %v4194, 0
  %4683 = vmatprep.subr.mxu0 0.0
  %4684 = vmatpush1.xpose.msra.mxu0 0.0
  %4685 = vmatprep.subr.mxu0 0.0
  %4686 = vmatpush1.xpose.msra.mxu0 0.0
  %4687 = vmatprep.subr.mxu0 0.0
  %4688 = vmatpush1.xpose.msra.mxu0 0.0
  %4689 = vmatprep.subr.mxu0 0.0
  %4690 = vmatpush1.xpose.msra.mxu0 0.0
  %4691 = vmatprep.subr.mxu0 0.0
  %4692 = vmatpush1.xpose.msra.mxu0 0.0
  %4693 = vmatprep.subr.mxu0 0.0
  %4694 = vmatpush1.xpose.msra.mxu0 0.0
  %4695 = vmatprep.subr.mxu0 0.0
  %4696 = vmatpush1.xpose.msra.mxu0 0.0
  %4697 = vmatprep.subr.mxu0 0.0
  %4698 = vmatpush1.xpose.msra.mxu0 0.0
  %4699 = vmatprep.subr.mxu0 0.0
  %4700 = vmatpush1.xpose.msra.mxu0 0.0
  %4701 = vmatprep.subr.mxu0 0.0
  %4702 = vmatpush1.xpose.msra.mxu0 0.0
  %4703 = vmatprep.subr.mxu0 0.0
  %4704 = vmatpush1.xpose.msra.mxu0 0.0
  %4705 = vmatprep.subr.mxu0 0.0
  %4706 = vmatpush1.xpose.msra.mxu0 0.0
  %4707 = vmatprep.subr.mxu0 0.0
  %4708 = vmatpush1.xpose.msra.mxu0 0.0
  %4709 = vmatprep.subr.mxu0 0.0
  %4710 = vmatpush1.xpose.msra.mxu0 0.0
  %4711 = vmatprep.subr.mxu0 0.0
  %4712 = vmatpush1.xpose.msra.mxu0 0.0
  %4713 = vmatprep.subr.mxu0 0.0
  %4714 = vmatpush1.xpose.msra.mxu0 %v4681
  %4715 = vmatprep.subr.mxu0 0.0
  %4716 = vmatpush2.xpose.msra.mxu0 0.0
  %4717 = vmatprep.subr.mxu0 0.0
  %4718 = vmatpush2.xpose.msra.mxu0 0.0
  %4719 = vmatprep.subr.mxu0 0.0
  %4720 = vmatpush2.xpose.msra.mxu0 0.0
  %4721 = vmatprep.subr.mxu0 0.0
  %4722 = vmatpush2.xpose.msra.mxu0 0.0
  %4723 = vmatprep.subr.mxu0 0.0
  %4724 = vmatpush2.xpose.msra.mxu0 0.0
  %4725 = vmatprep.subr.mxu0 0.0
  %4726 = vmatpush2.xpose.msra.mxu0 0.0
  %4727 = vmatprep.subr.mxu0 0.0
  %4728 = vmatpush2.xpose.msra.mxu0 0.0
  %4729 = vmatprep.subr.mxu0 0.0
  %4730 = vmatpush2.xpose.msra.mxu0 0.0
  %4731 = vmatprep.subr.mxu0 0.0
  %4732 = vmatpush2.xpose.msra.mxu0 0.0
  %4733 = vmatprep.subr.mxu0 0.0
  %4734 = vmatpush2.xpose.msra.mxu0 0.0
  %4735 = vmatprep.subr.mxu0 0.0
  %4736 = vmatpush2.xpose.msra.mxu0 0.0
  %4737 = vmatprep.subr.mxu0 0.0
  %4738 = vmatpush2.xpose.msra.mxu0 0.0
  %4739 = vmatprep.subr.mxu0 0.0
  %4740 = vmatpush2.xpose.msra.mxu0 0.0
  %4741 = vmatprep.subr.mxu0 0.0
  %4742 = vmatpush2.xpose.msra.mxu0 0.0
  %4743 = vmatprep.subr.mxu0 0.0
  %4744 = vmatpush2.xpose.msra.mxu0 0.0
  %4745 = vmatprep.subr.mxu0 0.0
  %4746 = vmatpush2.xpose.msra.mxu0 0.0
  %4747 = vmatprep.mubr.f32.mxu0 0.0
  %4748 = vmatmul.mubr.f32.gmra.mxu0 %v4678
  %v4749 = vpop.f32.mrf.mxu0
  %v4750 = vadd.f32 0.0, %v4749
  %v4751 = vpop.f32.mrf.mxu0
  %4752 = vdwg.mxu0
  %4753 = vrot.lane.b32.xlu0 %v3343, 112
  %v4754 = vpop.permute.xlu0 %4753
  %4756 = vxpose.xlu0.b32.start [1/16] %v4754, 128
  %4757 = vxpose.xlu0.b32.cont [2/16] 0.0, 128
  %4758 = vxpose.xlu0.b32.cont [3/16] 0.0, 128
  %4759 = vxpose.xlu0.b32.cont [4/16] 0.0, 128
  %4760 = vxpose.xlu0.b32.cont [5/16] 0.0, 128
  %4761 = vxpose.xlu0.b32.cont [6/16] 0.0, 128
  %4762 = vxpose.xlu0.b32.cont [7/16] 0.0, 128
  %4763 = vxpose.xlu0.b32.cont [8/16] 0.0, 128
  %4764 = vxpose.xlu0.b32.cont [9/16] 0.0, 128
  %4765 = vxpose.xlu0.b32.cont [10/16] 0.0, 128
  %4766 = vxpose.xlu0.b32.cont [11/16] 0.0, 128
  %4767 = vxpose.xlu0.b32.cont [12/16] 0.0, 128
  %4768 = vxpose.xlu0.b32.cont [13/16] 0.0, 128
  %4769 = vxpose.xlu0.b32.cont [14/16] 0.0, 128
  %4770 = vxpose.xlu0.b32.cont [15/16] 0.0, 128
  %4771 = vxpose.xlu0.b32.end [16/16] 0.0, 128
  %v4772 = vpop.trf.xlu0
  %v4773 = vpop.trf.xlu0
  %v4774 = vpop.trf.xlu0
  %v4775 = vpop.trf.xlu0
  %v4776 = vpop.trf.xlu0
  %v4777 = vpop.trf.xlu0
  %v4778 = vpop.trf.xlu0
  %v4779 = vpop.trf.xlu0
  %v4780 = vpop.trf.xlu0
  %v4781 = vpop.trf.xlu0
  %v4782 = vpop.trf.xlu0
  %v4783 = vpop.trf.xlu0
  %v4784 = vpop.trf.xlu0
  %v4785 = vpop.trf.xlu0
  %v4786 = vpop.trf.xlu0
  %v4787 = vpop.trf.xlu0
  %v4789 = vsel %vm680, %v4772, 0
  %v4792 = vsel %vm680, %v4195, 0
  %4794 = vmatprep.subr.mxu0 0.0
  %4795 = vmatpush1.xpose.msra.mxu0 0.0
  %4796 = vmatprep.subr.mxu0 0.0
  %4797 = vmatpush1.xpose.msra.mxu0 0.0
  %4798 = vmatprep.subr.mxu0 0.0
  %4799 = vmatpush1.xpose.msra.mxu0 0.0
  %4800 = vmatprep.subr.mxu0 0.0
  %4801 = vmatpush1.xpose.msra.mxu0 0.0
  %4802 = vmatprep.subr.mxu0 0.0
  %4803 = vmatpush1.xpose.msra.mxu0 0.0
  %4804 = vmatprep.subr.mxu0 0.0
  %4805 = vmatpush1.xpose.msra.mxu0 0.0
  %4806 = vmatprep.subr.mxu0 0.0
  %4807 = vmatpush1.xpose.msra.mxu0 0.0
  %4808 = vmatprep.subr.mxu0 0.0
  %4809 = vmatpush1.xpose.msra.mxu0 0.0
  %4810 = vmatprep.subr.mxu0 0.0
  %4811 = vmatpush1.xpose.msra.mxu0 0.0
  %4812 = vmatprep.subr.mxu0 0.0
  %4813 = vmatpush1.xpose.msra.mxu0 0.0
  %4814 = vmatprep.subr.mxu0 0.0
  %4815 = vmatpush1.xpose.msra.mxu0 0.0
  %4816 = vmatprep.subr.mxu0 0.0
  %4817 = vmatpush1.xpose.msra.mxu0 0.0
  %4818 = vmatprep.subr.mxu0 0.0
  %4819 = vmatpush1.xpose.msra.mxu0 0.0
  %4820 = vmatprep.subr.mxu0 0.0
  %4821 = vmatpush1.xpose.msra.mxu0 0.0
  %4822 = vmatprep.subr.mxu0 0.0
  %4823 = vmatpush1.xpose.msra.mxu0 0.0
  %4824 = vmatprep.subr.mxu0 0.0
  %4825 = vmatpush1.xpose.msra.mxu0 %v4792
  %4826 = vmatprep.subr.mxu0 0.0
  %4827 = vmatpush2.xpose.msra.mxu0 0.0
  %4828 = vmatprep.subr.mxu0 0.0
  %4829 = vmatpush2.xpose.msra.mxu0 0.0
  %4830 = vmatprep.subr.mxu0 0.0
  %4831 = vmatpush2.xpose.msra.mxu0 0.0
  %4832 = vmatprep.subr.mxu0 0.0
  %4833 = vmatpush2.xpose.msra.mxu0 0.0
  %4834 = vmatprep.subr.mxu0 0.0
  %4835 = vmatpush2.xpose.msra.mxu0 0.0
  %4836 = vmatprep.subr.mxu0 0.0
  %4837 = vmatpush2.xpose.msra.mxu0 0.0
  %4838 = vmatprep.subr.mxu0 0.0
  %4839 = vmatpush2.xpose.msra.mxu0 0.0
  %4840 = vmatprep.subr.mxu0 0.0
  %4841 = vmatpush2.xpose.msra.mxu0 0.0
  %4842 = vmatprep.subr.mxu0 0.0
  %4843 = vmatpush2.xpose.msra.mxu0 0.0
  %4844 = vmatprep.subr.mxu0 0.0
  %4845 = vmatpush2.xpose.msra.mxu0 0.0
  %4846 = vmatprep.subr.mxu0 0.0
  %4847 = vmatpush2.xpose.msra.mxu0 0.0
  %4848 = vmatprep.subr.mxu0 0.0
  %4849 = vmatpush2.xpose.msra.mxu0 0.0
  %4850 = vmatprep.subr.mxu0 0.0
  %4851 = vmatpush2.xpose.msra.mxu0 0.0
  %4852 = vmatprep.subr.mxu0 0.0
  %4853 = vmatpush2.xpose.msra.mxu0 0.0
  %4854 = vmatprep.subr.mxu0 0.0
  %4855 = vmatpush2.xpose.msra.mxu0 0.0
  %4856 = vmatprep.subr.mxu0 0.0
  %4857 = vmatpush2.xpose.msra.mxu0 0.0
  %4858 = vmatprep.mubr.f32.mxu0 0.0
  %4859 = vmatmul.mubr.f32.gmra.mxu0 %v4789
  %v4860 = vpop.f32.mrf.mxu0
  %v4861 = vadd.f32 0.0, %v4860
  %v4862 = vpop.f32.mrf.mxu0
  %4863 = vdwg.mxu0
  %4864 = vrot.lane.b32.xlu0 %v3413, 112
  %v4865 = vpop.permute.xlu0 %4864
  %4867 = vxpose.xlu0.b32.start [1/16] %v4865, 128
  %4868 = vxpose.xlu0.b32.cont [2/16] 0.0, 128
  %4869 = vxpose.xlu0.b32.cont [3/16] 0.0, 128
  %4870 = vxpose.xlu0.b32.cont [4/16] 0.0, 128
  %4871 = vxpose.xlu0.b32.cont [5/16] 0.0, 128
  %4872 = vxpose.xlu0.b32.cont [6/16] 0.0, 128
  %4873 = vxpose.xlu0.b32.cont [7/16] 0.0, 128
  %4874 = vxpose.xlu0.b32.cont [8/16] 0.0, 128
  %4875 = vxpose.xlu0.b32.cont [9/16] 0.0, 128
  %4876 = vxpose.xlu0.b32.cont [10/16] 0.0, 128
  %4877 = vxpose.xlu0.b32.cont [11/16] 0.0, 128
  %4878 = vxpose.xlu0.b32.cont [12/16] 0.0, 128
  %4879 = vxpose.xlu0.b32.cont [13/16] 0.0, 128
  %4880 = vxpose.xlu0.b32.cont [14/16] 0.0, 128
  %4881 = vxpose.xlu0.b32.cont [15/16] 0.0, 128
  %4882 = vxpose.xlu0.b32.end [16/16] 0.0, 128
  %v4883 = vpop.trf.xlu0
  %v4884 = vpop.trf.xlu0
  %v4885 = vpop.trf.xlu0
  %v4886 = vpop.trf.xlu0
  %v4887 = vpop.trf.xlu0
  %v4888 = vpop.trf.xlu0
  %v4889 = vpop.trf.xlu0
  %v4890 = vpop.trf.xlu0
  %v4891 = vpop.trf.xlu0
  %v4892 = vpop.trf.xlu0
  %v4893 = vpop.trf.xlu0
  %v4894 = vpop.trf.xlu0
  %v4895 = vpop.trf.xlu0
  %v4896 = vpop.trf.xlu0
  %v4897 = vpop.trf.xlu0
  %v4898 = vpop.trf.xlu0
  %v4900 = vsel %vm680, %v4883, 0
  %v4903 = vsel %vm680, %v4196, 0
  %4905 = vmatprep.subr.mxu0 0.0
  %4906 = vmatpush1.xpose.msra.mxu0 0.0
  %4907 = vmatprep.subr.mxu0 0.0
  %4908 = vmatpush1.xpose.msra.mxu0 0.0
  %4909 = vmatprep.subr.mxu0 0.0
  %4910 = vmatpush1.xpose.msra.mxu0 0.0
  %4911 = vmatprep.subr.mxu0 0.0
  %4912 = vmatpush1.xpose.msra.mxu0 0.0
  %4913 = vmatprep.subr.mxu0 0.0
  %4914 = vmatpush1.xpose.msra.mxu0 0.0
  %4915 = vmatprep.subr.mxu0 0.0
  %4916 = vmatpush1.xpose.msra.mxu0 0.0
  %4917 = vmatprep.subr.mxu0 0.0
  %4918 = vmatpush1.xpose.msra.mxu0 0.0
  %4919 = vmatprep.subr.mxu0 0.0
  %4920 = vmatpush1.xpose.msra.mxu0 0.0
  %4921 = vmatprep.subr.mxu0 0.0
  %4922 = vmatpush1.xpose.msra.mxu0 0.0
  %4923 = vmatprep.subr.mxu0 0.0
  %4924 = vmatpush1.xpose.msra.mxu0 0.0
  %4925 = vmatprep.subr.mxu0 0.0
  %4926 = vmatpush1.xpose.msra.mxu0 0.0
  %4927 = vmatprep.subr.mxu0 0.0
  %4928 = vmatpush1.xpose.msra.mxu0 0.0
  %4929 = vmatprep.subr.mxu0 0.0
  %4930 = vmatpush1.xpose.msra.mxu0 0.0
  %4931 = vmatprep.subr.mxu0 0.0
  %4932 = vmatpush1.xpose.msra.mxu0 0.0
  %4933 = vmatprep.subr.mxu0 0.0
  %4934 = vmatpush1.xpose.msra.mxu0 0.0
  %4935 = vmatprep.subr.mxu0 0.0
  %4936 = vmatpush1.xpose.msra.mxu0 %v4903
  %4937 = vmatprep.subr.mxu0 0.0
  %4938 = vmatpush2.xpose.msra.mxu0 0.0
  %4939 = vmatprep.subr.mxu0 0.0
  %4940 = vmatpush2.xpose.msra.mxu0 0.0
  %4941 = vmatprep.subr.mxu0 0.0
  %4942 = vmatpush2.xpose.msra.mxu0 0.0
  %4943 = vmatprep.subr.mxu0 0.0
  %4944 = vmatpush2.xpose.msra.mxu0 0.0
  %4945 = vmatprep.subr.mxu0 0.0
  %4946 = vmatpush2.xpose.msra.mxu0 0.0
  %4947 = vmatprep.subr.mxu0 0.0
  %4948 = vmatpush2.xpose.msra.mxu0 0.0
  %4949 = vmatprep.subr.mxu0 0.0
  %4950 = vmatpush2.xpose.msra.mxu0 0.0
  %4951 = vmatprep.subr.mxu0 0.0
  %4952 = vmatpush2.xpose.msra.mxu0 0.0
  %4953 = vmatprep.subr.mxu0 0.0
  %4954 = vmatpush2.xpose.msra.mxu0 0.0
  %4955 = vmatprep.subr.mxu0 0.0
  %4956 = vmatpush2.xpose.msra.mxu0 0.0
  %4957 = vmatprep.subr.mxu0 0.0
  %4958 = vmatpush2.xpose.msra.mxu0 0.0
  %4959 = vmatprep.subr.mxu0 0.0
  %4960 = vmatpush2.xpose.msra.mxu0 0.0
  %4961 = vmatprep.subr.mxu0 0.0
  %4962 = vmatpush2.xpose.msra.mxu0 0.0
  %4963 = vmatprep.subr.mxu0 0.0
  %4964 = vmatpush2.xpose.msra.mxu0 0.0
  %4965 = vmatprep.subr.mxu0 0.0
  %4966 = vmatpush2.xpose.msra.mxu0 0.0
  %4967 = vmatprep.subr.mxu0 0.0
  %4968 = vmatpush2.xpose.msra.mxu0 0.0
  %4969 = vmatprep.mubr.f32.mxu0 0.0
  %4970 = vmatmul.mubr.f32.gmra.mxu0 %v4900
  %v4971 = vpop.f32.mrf.mxu0
  %v4972 = vadd.f32 0.0, %v4971
  %v4973 = vpop.f32.mrf.mxu0
  %4974 = vdwg.mxu0
  %4975 = vrot.lane.b32.xlu0 %v3483, 112
  %v4976 = vpop.permute.xlu0 %4975
  %4978 = vxpose.xlu0.b32.start [1/16] %v4976, 128
  %4979 = vxpose.xlu0.b32.cont [2/16] 0.0, 128
  %4980 = vxpose.xlu0.b32.cont [3/16] 0.0, 128
  %4981 = vxpose.xlu0.b32.cont [4/16] 0.0, 128
  %4982 = vxpose.xlu0.b32.cont [5/16] 0.0, 128
  %4983 = vxpose.xlu0.b32.cont [6/16] 0.0, 128
  %4984 = vxpose.xlu0.b32.cont [7/16] 0.0, 128
  %4985 = vxpose.xlu0.b32.cont [8/16] 0.0, 128
  %4986 = vxpose.xlu0.b32.cont [9/16] 0.0, 128
  %4987 = vxpose.xlu0.b32.cont [10/16] 0.0, 128
  %4988 = vxpose.xlu0.b32.cont [11/16] 0.0, 128
  %4989 = vxpose.xlu0.b32.cont [12/16] 0.0, 128
  %4990 = vxpose.xlu0.b32.cont [13/16] 0.0, 128
  %4991 = vxpose.xlu0.b32.cont [14/16] 0.0, 128
  %4992 = vxpose.xlu0.b32.cont [15/16] 0.0, 128
  %4993 = vxpose.xlu0.b32.end [16/16] 0.0, 128
  %v4994 = vpop.trf.xlu0
  %v4995 = vpop.trf.xlu0
  %v4996 = vpop.trf.xlu0
  %v4997 = vpop.trf.xlu0
  %v4998 = vpop.trf.xlu0
  %v4999 = vpop.trf.xlu0
  %v5000 = vpop.trf.xlu0
  %v5001 = vpop.trf.xlu0
  %v5002 = vpop.trf.xlu0
  %v5003 = vpop.trf.xlu0
  %v5004 = vpop.trf.xlu0
  %v5005 = vpop.trf.xlu0
  %v5006 = vpop.trf.xlu0
  %v5007 = vpop.trf.xlu0
  %v5008 = vpop.trf.xlu0
  %v5009 = vpop.trf.xlu0
  %v5011 = vsel %vm680, %v4994, 0
  %v5014 = vsel %vm680, %v4197, 0
  %5016 = vmatprep.subr.mxu0 0.0
  %5017 = vmatpush1.xpose.msra.mxu0 0.0
  %5018 = vmatprep.subr.mxu0 0.0
  %5019 = vmatpush1.xpose.msra.mxu0 0.0
  %5020 = vmatprep.subr.mxu0 0.0
  %5021 = vmatpush1.xpose.msra.mxu0 0.0
  %5022 = vmatprep.subr.mxu0 0.0
  %5023 = vmatpush1.xpose.msra.mxu0 0.0
  %5024 = vmatprep.subr.mxu0 0.0
  %5025 = vmatpush1.xpose.msra.mxu0 0.0
  %5026 = vmatprep.subr.mxu0 0.0
  %5027 = vmatpush1.xpose.msra.mxu0 0.0
  %5028 = vmatprep.subr.mxu0 0.0
  %5029 = vmatpush1.xpose.msra.mxu0 0.0
  %5030 = vmatprep.subr.mxu0 0.0
  %5031 = vmatpush1.xpose.msra.mxu0 0.0
  %5032 = vmatprep.subr.mxu0 0.0
  %5033 = vmatpush1.xpose.msra.mxu0 0.0
  %5034 = vmatprep.subr.mxu0 0.0
  %5035 = vmatpush1.xpose.msra.mxu0 0.0
  %5036 = vmatprep.subr.mxu0 0.0
  %5037 = vmatpush1.xpose.msra.mxu0 0.0
  %5038 = vmatprep.subr.mxu0 0.0
  %5039 = vmatpush1.xpose.msra.mxu0 0.0
  %5040 = vmatprep.subr.mxu0 0.0
  %5041 = vmatpush1.xpose.msra.mxu0 0.0
  %5042 = vmatprep.subr.mxu0 0.0
  %5043 = vmatpush1.xpose.msra.mxu0 0.0
  %5044 = vmatprep.subr.mxu0 0.0
  %5045 = vmatpush1.xpose.msra.mxu0 0.0
  %5046 = vmatprep.subr.mxu0 0.0
  %5047 = vmatpush1.xpose.msra.mxu0 %v5014
  %5048 = vmatprep.subr.mxu0 0.0
  %5049 = vmatpush2.xpose.msra.mxu0 0.0
  %5050 = vmatprep.subr.mxu0 0.0
  %5051 = vmatpush2.xpose.msra.mxu0 0.0
  %5052 = vmatprep.subr.mxu0 0.0
  %5053 = vmatpush2.xpose.msra.mxu0 0.0
  %5054 = vmatprep.subr.mxu0 0.0
  %5055 = vmatpush2.xpose.msra.mxu0 0.0
  %5056 = vmatprep.subr.mxu0 0.0
  %5057 = vmatpush2.xpose.msra.mxu0 0.0
  %5058 = vmatprep.subr.mxu0 0.0
  %5059 = vmatpush2.xpose.msra.mxu0 0.0
  %5060 = vmatprep.subr.mxu0 0.0
  %5061 = vmatpush2.xpose.msra.mxu0 0.0
  %5062 = vmatprep.subr.mxu0 0.0
  %5063 = vmatpush2.xpose.msra.mxu0 0.0
  %5064 = vmatprep.subr.mxu0 0.0
  %5065 = vmatpush2.xpose.msra.mxu0 0.0
  %5066 = vmatprep.subr.mxu0 0.0
  %5067 = vmatpush2.xpose.msra.mxu0 0.0
  %5068 = vmatprep.subr.mxu0 0.0
  %5069 = vmatpush2.xpose.msra.mxu0 0.0
  %5070 = vmatprep.subr.mxu0 0.0
  %5071 = vmatpush2.xpose.msra.mxu0 0.0
  %5072 = vmatprep.subr.mxu0 0.0
  %5073 = vmatpush2.xpose.msra.mxu0 0.0
  %5074 = vmatprep.subr.mxu0 0.0
  %5075 = vmatpush2.xpose.msra.mxu0 0.0
  %5076 = vmatprep.subr.mxu0 0.0
  %5077 = vmatpush2.xpose.msra.mxu0 0.0
  %5078 = vmatprep.subr.mxu0 0.0
  %5079 = vmatpush2.xpose.msra.mxu0 0.0
  %5080 = vmatprep.mubr.f32.mxu0 0.0
  %5081 = vmatmul.mubr.f32.gmra.mxu0 %v5011
  %v5082 = vpop.f32.mrf.mxu0
  %v5083 = vadd.f32 0.0, %v5082
  %v5084 = vpop.f32.mrf.mxu0
  %5085 = vdwg.mxu0
  %5086 = vxpose.xlu0.b32.start [1/16] %v4306, 128
  %5087 = vxpose.xlu0.b32.cont [2/16] %v4417, 128
  %5088 = vxpose.xlu0.b32.cont [3/16] %v4528, 128
  %5089 = vxpose.xlu0.b32.cont [4/16] %v4639, 128
  %5090 = vxpose.xlu0.b32.cont [5/16] 0.0, 128
  %5091 = vxpose.xlu0.b32.cont [6/16] 0.0, 128
  %5092 = vxpose.xlu0.b32.cont [7/16] 0.0, 128
  %5093 = vxpose.xlu0.b32.cont [8/16] 0.0, 128
  %5094 = vxpose.xlu0.b32.cont [9/16] 0.0, 128
  %5095 = vxpose.xlu0.b32.cont [10/16] 0.0, 128
  %5096 = vxpose.xlu0.b32.cont [11/16] 0.0, 128
  %5097 = vxpose.xlu0.b32.cont [12/16] 0.0, 128
  %5098 = vxpose.xlu0.b32.cont [13/16] 0.0, 128
  %5099 = vxpose.xlu0.b32.cont [14/16] 0.0, 128
  %5100 = vxpose.xlu0.b32.cont [15/16] 0.0, 128
  %5101 = vxpose.xlu0.b32.end [16/16] 0.0, 128
  %v5102 = vpop.trf.xlu0
  %v5103 = vpop.trf.xlu0
  %v5104 = vpop.trf.xlu0
  %v5105 = vpop.trf.xlu0
  %v5106 = vpop.trf.xlu0
  %v5107 = vpop.trf.xlu0
  %v5108 = vpop.trf.xlu0
  %v5109 = vpop.trf.xlu0
  %v5110 = vpop.trf.xlu0
  %v5111 = vpop.trf.xlu0
  %v5112 = vpop.trf.xlu0
  %v5113 = vpop.trf.xlu0
  %v5114 = vpop.trf.xlu0
  %v5115 = vpop.trf.xlu0
  %v5116 = vpop.trf.xlu0
  %v5117 = vpop.trf.xlu0
  %5118 = vxpose.xlu0.b32.start [1/16] %v4750, 128
  %5119 = vxpose.xlu0.b32.cont [2/16] %v4861, 128
  %5120 = vxpose.xlu0.b32.cont [3/16] %v4972, 128
  %5121 = vxpose.xlu0.b32.cont [4/16] %v5083, 128
  %5122 = vxpose.xlu0.b32.cont [5/16] 0.0, 128
  %5123 = vxpose.xlu0.b32.cont [6/16] 0.0, 128
  %5124 = vxpose.xlu0.b32.cont [7/16] 0.0, 128
  %5125 = vxpose.xlu0.b32.cont [8/16] 0.0, 128
  %5126 = vxpose.xlu0.b32.cont [9/16] 0.0, 128
  %5127 = vxpose.xlu0.b32.cont [10/16] 0.0, 128
  %5128 = vxpose.xlu0.b32.cont [11/16] 0.0, 128
  %5129 = vxpose.xlu0.b32.cont [12/16] 0.0, 128
  %5130 = vxpose.xlu0.b32.cont [13/16] 0.0, 128
  %5131 = vxpose.xlu0.b32.cont [14/16] 0.0, 128
  %5132 = vxpose.xlu0.b32.cont [15/16] 0.0, 128
  %5133 = vxpose.xlu0.b32.end [16/16] 0.0, 128
  %v5134 = vpop.trf.xlu0
  %v5135 = vpop.trf.xlu0
  %v5136 = vpop.trf.xlu0
  %v5137 = vpop.trf.xlu0
  %v5138 = vpop.trf.xlu0
  %v5139 = vpop.trf.xlu0
  %v5140 = vpop.trf.xlu0
  %v5141 = vpop.trf.xlu0
  %v5142 = vpop.trf.xlu0
  %v5143 = vpop.trf.xlu0
  %v5144 = vpop.trf.xlu0
  %v5145 = vpop.trf.xlu0
  %v5146 = vpop.trf.xlu0
  %v5147 = vpop.trf.xlu0
  %v5148 = vpop.trf.xlu0
  %v5149 = vpop.trf.xlu0
  %v5150 = vlaneseq
  %v5151 = vshrl.u32 %v5150, 7
  %v5152 = vsub.s32 0, %v5151
  %v5153 = vrot.slane %v2868, %v5152
  %v5155 = vsel %vm110, %v5102, 0
  %v5158 = vsel %vm110, %v5134, 0
  %5160 = vmatprep.subr.mxu0 0.0
  %5161 = vmatpush1.msra.mxu0 0.0
  %5162 = vmatprep.subr.mxu0 0.0
  %5163 = vmatpush1.msra.mxu0 0.0
  %5164 = vmatprep.subr.mxu0 0.0
  %5165 = vmatpush1.msra.mxu0 0.0
  %5166 = vmatprep.subr.mxu0 0.0
  %5167 = vmatpush1.msra.mxu0 0.0
  %5168 = vmatprep.subr.mxu0 0.0
  %5169 = vmatpush1.msra.mxu0 0.0
  %5170 = vmatprep.subr.mxu0 0.0
  %5171 = vmatpush1.msra.mxu0 0.0
  %5172 = vmatprep.subr.mxu0 0.0
  %5173 = vmatpush1.msra.mxu0 0.0
  %5174 = vmatprep.subr.mxu0 0.0
  %5175 = vmatpush1.msra.mxu0 0.0
  %5176 = vmatprep.subr.mxu0 0.0
  %5177 = vmatpush1.msra.mxu0 0.0
  %5178 = vmatprep.subr.mxu0 0.0
  %5179 = vmatpush1.msra.mxu0 0.0
  %5180 = vmatprep.subr.mxu0 0.0
  %5181 = vmatpush1.msra.mxu0 0.0
  %5182 = vmatprep.subr.mxu0 0.0
  %5183 = vmatpush1.msra.mxu0 0.0
  %5184 = vmatprep.subr.mxu0 0.0
  %5185 = vmatpush1.msra.mxu0 %v2895
  %5186 = vmatprep.subr.mxu0 0.0
  %5187 = vmatpush1.msra.mxu0 %v2894
  %5188 = vmatprep.subr.mxu0 0.0
  %5189 = vmatpush1.msra.mxu0 %v2893
  %5190 = vmatprep.subr.mxu0 0.0
  %5191 = vmatpush1.msra.mxu0 %v2892
  %5192 = vmatprep.subr.mxu0 0.0
  %5193 = vmatpush2.msra.mxu0 0.0
  %5194 = vmatprep.subr.mxu0 0.0
  %5195 = vmatpush2.msra.mxu0 0.0
  %5196 = vmatprep.subr.mxu0 0.0
  %5197 = vmatpush2.msra.mxu0 0.0
  %5198 = vmatprep.subr.mxu0 0.0
  %5199 = vmatpush2.msra.mxu0 0.0
  %5200 = vmatprep.subr.mxu0 0.0
  %5201 = vmatpush2.msra.mxu0 0.0
  %5202 = vmatprep.subr.mxu0 0.0
  %5203 = vmatpush2.msra.mxu0 0.0
  %5204 = vmatprep.subr.mxu0 0.0
  %5205 = vmatpush2.msra.mxu0 0.0
  %5206 = vmatprep.subr.mxu0 0.0
  %5207 = vmatpush2.msra.mxu0 0.0
  %5208 = vmatprep.subr.mxu0 0.0
  %5209 = vmatpush2.msra.mxu0 0.0
  %5210 = vmatprep.subr.mxu0 0.0
  %5211 = vmatpush2.msra.mxu0 0.0
  %5212 = vmatprep.subr.mxu0 0.0
  %5213 = vmatpush2.msra.mxu0 0.0
  %5214 = vmatprep.subr.mxu0 0.0
  %5215 = vmatpush2.msra.mxu0 0.0
  %5216 = vmatprep.subr.mxu0 0.0
  %5217 = vmatpush2.msra.mxu0 0.0
  %5218 = vmatprep.subr.mxu0 0.0
  %5219 = vmatpush2.msra.mxu0 0.0
  %5220 = vmatprep.subr.mxu0 0.0
  %5221 = vmatpush2.msra.mxu0 0.0
  %5222 = vmatprep.subr.mxu0 0.0
  %5223 = vmatpush2.msra.mxu0 0.0
  %5224 = vmatprep.mubr.f32.mxu0 0.0
  %5225 = vmatmul.mubr.f32.gmra.mxu0 %v5155
  %v5226 = vpop.f32.mrf.mxu0
  %v5227 = vadd.f32 %v5153, %v5226
  %v5228 = vpop.f32.mrf.mxu0
  %5229 = vmatprep.mubr.f32.mxu0 0.0
  %5230 = vmatmul.mubr.f32.gmra.mxu0 %v5158
  %v5231 = vpop.f32.mrf.mxu0
  %v5232 = vadd.f32 %v5153, %v5231
  %v5233 = vpop.f32.mrf.mxu0
  %5234 = vdwg.mxu0
  %v5235 = vsel %vm110, %v5227, 0.0
  %5236 = vadd.xlane.f32.xlu0 %v5235
  %v5237 = vpop.xlane.xlu0 %5236
  %v5238 = vsel %vm110, %v5232, 0.0
  %5239 = vadd.xlane.f32.xlu0 %v5238
  %v5240 = vpop.xlane.xlu0 %5239
  %v5241 = vmul.f32 %v5237, %v2433
  %v5242 = vmul.f32 %v5240, %v2433
  %v5243 = vsub.f32 %v5227, %v5241
  %v5244 = vsub.f32 %v5232, %v5242
  %v5245 = vmul.f32 %v5243, %v5243
  %v5246 = vmul.f32 %v5244, %v5244
  %v5247 = vsel %vm110, %v5245, 0.0
  %5248 = vadd.xlane.f32.xlu0 %v5247
  %v5249 = vpop.xlane.xlu0 %5248
  %v5250 = vsel %vm110, %v5246, 0.0
  %5251 = vadd.xlane.f32.xlu0 %v5250
  %v5252 = vpop.xlane.xlu0 %5251
  %v5253 = vmul.f32 %v5249, %v2433
  %v5254 = vmul.f32 %v5252, %v2433
  %v5255 = vadd.f32 %v5253, 1e-05
  %v5256 = vadd.f32 %v5254, 1e-05
  %v5257 = vrsqrt.pop %v5255
  %v5258 = vrsqrt.pop %v5256
  %v5259 = vmul.f32 %v5243, %v5257
  %v5260 = vmul.f32 %v5244, %v5258
  %v5261 = vlaneseq
  %v5262 = vshrl.u32 %v5261, 7
  %v5263 = vsub.s32 1, %v5262
  %v5264 = vrot.slane %v2868, %v5263
  %v5265 = vmul.f32 %v5259, %v5264
  %v5266 = vmul.f32 %v5260, %v5264
  %v5267 = vlaneseq
  %v5268 = vshrl.u32 %v5267, 7
  %v5269 = vsub.s32 2, %v5268
  %v5270 = vrot.slane %v2868, %v5269
  %v5271 = vadd.f32 %v5265, %v5270
  %v5272 = vadd.f32 %v5266, %v5270
  %s5273 = scalar_lea.vmem %s6, 32
  %v5274 = vld [vmem:[%s5273] sm:$0xff]
  %v5275 = vld [vmem:[%s5273 + $0x8] sm:$0xff]
  %v5276 = vld [vmem:[%s5273 + $0x10] sm:$0xff]
  %v5277 = vld [vmem:[%s5273 + $0x18] sm:$0xff]
  %v5278 = vlaneseq
  %v5279 = vshrl.u32 %v5278, 7
  %v5280 = vsub.s32 3, %v5279
  %v5281 = vrot.slane %v2868, %v5280
  %v5283 = vsel %vm110, %v5271, 0
  %v5286 = vsel %vm110, %v5272, 0
  %5288 = vmatprep.subr.mxu0 0.0
  %5289 = vmatpush1.msra.mxu0 0.0
  %5290 = vmatprep.subr.mxu0 0.0
  %5291 = vmatpush1.msra.mxu0 0.0
  %5292 = vmatprep.subr.mxu0 0.0
  %5293 = vmatpush1.msra.mxu0 0.0
  %5294 = vmatprep.subr.mxu0 0.0
  %5295 = vmatpush1.msra.mxu0 0.0
  %5296 = vmatprep.subr.mxu0 0.0
  %5297 = vmatpush1.msra.mxu0 0.0
  %5298 = vmatprep.subr.mxu0 0.0
  %5299 = vmatpush1.msra.mxu0 0.0
  %5300 = vmatprep.subr.mxu0 0.0
  %5301 = vmatpush1.msra.mxu0 0.0
  %5302 = vmatprep.subr.mxu0 0.0
  %5303 = vmatpush1.msra.mxu0 0.0
  %5304 = vmatprep.subr.mxu0 0.0
  %5305 = vmatpush1.msra.mxu0 0.0
  %5306 = vmatprep.subr.mxu0 0.0
  %5307 = vmatpush1.msra.mxu0 0.0
  %5308 = vmatprep.subr.mxu0 0.0
  %5309 = vmatpush1.msra.mxu0 0.0
  %5310 = vmatprep.subr.mxu0 0.0
  %5311 = vmatpush1.msra.mxu0 0.0
  %5312 = vmatprep.subr.mxu0 0.0
  %5313 = vmatpush1.msra.mxu0 %v5277
  %5314 = vmatprep.subr.mxu0 0.0
  %5315 = vmatpush1.msra.mxu0 %v5276
  %5316 = vmatprep.subr.mxu0 0.0
  %5317 = vmatpush1.msra.mxu0 %v5275
  %5318 = vmatprep.subr.mxu0 0.0
  %5319 = vmatpush1.msra.mxu0 %v5274
  %5320 = vmatprep.subr.mxu0 0.0
  %5321 = vmatpush2.msra.mxu0 0.0
  %5322 = vmatprep.subr.mxu0 0.0
  %5323 = vmatpush2.msra.mxu0 0.0
  %5324 = vmatprep.subr.mxu0 0.0
  %5325 = vmatpush2.msra.mxu0 0.0
  %5326 = vmatprep.subr.mxu0 0.0
  %5327 = vmatpush2.msra.mxu0 0.0
  %5328 = vmatprep.subr.mxu0 0.0
  %5329 = vmatpush2.msra.mxu0 0.0
  %5330 = vmatprep.subr.mxu0 0.0
  %5331 = vmatpush2.msra.mxu0 0.0
  %5332 = vmatprep.subr.mxu0 0.0
  %5333 = vmatpush2.msra.mxu0 0.0
  %5334 = vmatprep.subr.mxu0 0.0
  %5335 = vmatpush2.msra.mxu0 0.0
  %5336 = vmatprep.subr.mxu0 0.0
  %5337 = vmatpush2.msra.mxu0 0.0
  %5338 = vmatprep.subr.mxu0 0.0
  %5339 = vmatpush2.msra.mxu0 0.0
  %5340 = vmatprep.subr.mxu0 0.0
  %5341 = vmatpush2.msra.mxu0 0.0
  %5342 = vmatprep.subr.mxu0 0.0
  %5343 = vmatpush2.msra.mxu0 0.0
  %5344 = vmatprep.subr.mxu0 0.0
  %5345 = vmatpush2.msra.mxu0 0.0
  %5346 = vmatprep.subr.mxu0 0.0
  %5347 = vmatpush2.msra.mxu0 0.0
  %5348 = vmatprep.subr.mxu0 0.0
  %5349 = vmatpush2.msra.mxu0 0.0
  %5350 = vmatprep.subr.mxu0 0.0
  %5351 = vmatpush2.msra.mxu0 0.0
  %5352 = vmatprep.mubr.f32.mxu0 0.0
  %5353 = vmatmul.mubr.f32.gmra.mxu0 %v5283
  %v5354 = vpop.f32.mrf.mxu0
  %v5355 = vadd.f32 %v5281, %v5354
  %v5356 = vpop.f32.mrf.mxu0
  %5357 = vmatprep.mubr.f32.mxu0 0.0
  %5358 = vmatmul.mubr.f32.gmra.mxu0 %v5286
  %v5359 = vpop.f32.mrf.mxu0
  %v5360 = vadd.f32 %v5281, %v5359
  %v5361 = vpop.f32.mrf.mxu0
  %5362 = vdwg.mxu0
  %s5363 = scalar_lea.vmem %s7, 32
  %v5364 = vld [vmem:[%s5363] sm:$0xff]
  %v5365 = vld [vmem:[%s5363 + $0x8] sm:$0xff]
  %v5366 = vld [vmem:[%s5363 + $0x10] sm:$0xff]
  %v5367 = vld [vmem:[%s5363 + $0x18] sm:$0xff]
  %v5368 = vlaneseq
  %v5369 = vshrl.u32 %v5368, 7
  %v5370 = vsub.s32 4, %v5369
  %v5371 = vrot.slane %v2868, %v5370
  %v5373 = vsel %vm110, %v5355, 0
  %v5376 = vsel %vm110, %v5360, 0
  %5378 = vmatprep.subr.mxu0 0.0
  %5379 = vmatpush1.msra.mxu0 0.0
  %5380 = vmatprep.subr.mxu0 0.0
  %5381 = vmatpush1.msra.mxu0 0.0
  %5382 = vmatprep.subr.mxu0 0.0
  %5383 = vmatpush1.msra.mxu0 0.0
  %5384 = vmatprep.subr.mxu0 0.0
  %5385 = vmatpush1.msra.mxu0 0.0
  %5386 = vmatprep.subr.mxu0 0.0
  %5387 = vmatpush1.msra.mxu0 0.0
  %5388 = vmatprep.subr.mxu0 0.0
  %5389 = vmatpush1.msra.mxu0 0.0
  %5390 = vmatprep.subr.mxu0 0.0
  %5391 = vmatpush1.msra.mxu0 0.0
  %5392 = vmatprep.subr.mxu0 0.0
  %5393 = vmatpush1.msra.mxu0 0.0
  %5394 = vmatprep.subr.mxu0 0.0
  %5395 = vmatpush1.msra.mxu0 0.0
  %5396 = vmatprep.subr.mxu0 0.0
  %5397 = vmatpush1.msra.mxu0 0.0
  %5398 = vmatprep.subr.mxu0 0.0
  %5399 = vmatpush1.msra.mxu0 0.0
  %5400 = vmatprep.subr.mxu0 0.0
  %5401 = vmatpush1.msra.mxu0 0.0
  %5402 = vmatprep.subr.mxu0 0.0
  %5403 = vmatpush1.msra.mxu0 %v5367
  %5404 = vmatprep.subr.mxu0 0.0
  %5405 = vmatpush1.msra.mxu0 %v5366
  %5406 = vmatprep.subr.mxu0 0.0
  %5407 = vmatpush1.msra.mxu0 %v5365
  %5408 = vmatprep.subr.mxu0 0.0
  %5409 = vmatpush1.msra.mxu0 %v5364
  %5410 = vmatprep.subr.mxu0 0.0
  %5411 = vmatpush2.msra.mxu0 0.0
  %5412 = vmatprep.subr.mxu0 0.0
  %5413 = vmatpush2.msra.mxu0 0.0
  %5414 = vmatprep.subr.mxu0 0.0
  %5415 = vmatpush2.msra.mxu0 0.0
  %5416 = vmatprep.subr.mxu0 0.0
  %5417 = vmatpush2.msra.mxu0 0.0
  %5418 = vmatprep.subr.mxu0 0.0
  %5419 = vmatpush2.msra.mxu0 0.0
  %5420 = vmatprep.subr.mxu0 0.0
  %5421 = vmatpush2.msra.mxu0 0.0
  %5422 = vmatprep.subr.mxu0 0.0
  %5423 = vmatpush2.msra.mxu0 0.0
  %5424 = vmatprep.subr.mxu0 0.0
  %5425 = vmatpush2.msra.mxu0 0.0
  %5426 = vmatprep.subr.mxu0 0.0
  %5427 = vmatpush2.msra.mxu0 0.0
  %5428 = vmatprep.subr.mxu0 0.0
  %5429 = vmatpush2.msra.mxu0 0.0
  %5430 = vmatprep.subr.mxu0 0.0
  %5431 = vmatpush2.msra.mxu0 0.0
  %5432 = vmatprep.subr.mxu0 0.0
  %5433 = vmatpush2.msra.mxu0 0.0
  %5434 = vmatprep.subr.mxu0 0.0
  %5435 = vmatpush2.msra.mxu0 0.0
  %5436 = vmatprep.subr.mxu0 0.0
  %5437 = vmatpush2.msra.mxu0 0.0
  %5438 = vmatprep.subr.mxu0 0.0
  %5439 = vmatpush2.msra.mxu0 0.0
  %5440 = vmatprep.subr.mxu0 0.0
  %5441 = vmatpush2.msra.mxu0 0.0
  %5442 = vmatprep.mubr.f32.mxu0 0.0
  %5443 = vmatmul.mubr.f32.gmra.mxu0 %v5373
  %v5444 = vpop.f32.mrf.mxu0
  %v5445 = vadd.f32 %v5371, %v5444
  %v5446 = vpop.f32.mrf.mxu0
  %5447 = vmatprep.mubr.f32.mxu0 0.0
  %5448 = vmatmul.mubr.f32.gmra.mxu0 %v5376
  %v5449 = vpop.f32.mrf.mxu0
  %v5450 = vadd.f32 %v5371, %v5449
  %v5451 = vpop.f32.mrf.mxu0
  %5452 = vdwg.mxu0
  %v5453 = vsel %vm110, %v5445, 0.0
  %v5454 = vrot.slane %v5453, 4
  %v5455 = vadd.f32 %v5453, %v5454
  %v5456 = vrot.slane %v5455, 2
  %v5457 = vadd.f32 %v5455, %v5456
  %v5458 = vrot.slane %v5457, 1
  %v5459 = vadd.f32 %v5457, %v5458
  %v5460 = vsel %vm110, %v5450, 0.0
  %v5461 = vrot.slane %v5460, 4
  %v5462 = vadd.f32 %v5460, %v5461
  %v5463 = vrot.slane %v5462, 2
  %v5464 = vadd.f32 %v5462, %v5463
  %v5465 = vrot.slane %v5464, 1
  %v5466 = vadd.f32 %v5464, %v5465
  %v5467 = vmul.f32 %v5459, %v2658
  %v5468 = vmul.f32 %v5466, %v2658
  %s5469 = scalar_lea.vmem %s8, 32
  %v5470 = vld [vmem:[%s5469] sm:$0xff]
  %v5471 = vld [vmem:[%s5469 + $0x8] sm:$0xff]
  %v5472 = vld [vmem:[%s5469 + $0x10] sm:$0xff]
  %v5473 = vld [vmem:[%s5469 + $0x18] sm:$0xff]
  %v5474 = vlaneseq
  %v5475 = vshrl.u32 %v5474, 7
  %v5476 = vsub.s32 5, %v5475
  %v5477 = vrot.slane %v2868, %v5476
  %v5480 = vsel %vm2671, %v5468, %v5467
  %v5481 = vsel %vm110, %v5480, 0
  %5483 = vmatprep.subr.mxu0 0.0
  %5484 = vmatpush1.msra.mxu0 0.0
  %5485 = vmatprep.subr.mxu0 0.0
  %5486 = vmatpush1.msra.mxu0 0.0
  %5487 = vmatprep.subr.mxu0 0.0
  %5488 = vmatpush1.msra.mxu0 0.0
  %5489 = vmatprep.subr.mxu0 0.0
  %5490 = vmatpush1.msra.mxu0 0.0
  %5491 = vmatprep.subr.mxu0 0.0
  %5492 = vmatpush1.msra.mxu0 0.0
  %5493 = vmatprep.subr.mxu0 0.0
  %5494 = vmatpush1.msra.mxu0 0.0
  %5495 = vmatprep.subr.mxu0 0.0
  %5496 = vmatpush1.msra.mxu0 0.0
  %5497 = vmatprep.subr.mxu0 0.0
  %5498 = vmatpush1.msra.mxu0 0.0
  %5499 = vmatprep.subr.mxu0 0.0
  %5500 = vmatpush1.msra.mxu0 0.0
  %5501 = vmatprep.subr.mxu0 0.0
  %5502 = vmatpush1.msra.mxu0 0.0
  %5503 = vmatprep.subr.mxu0 0.0
  %5504 = vmatpush1.msra.mxu0 0.0
  %5505 = vmatprep.subr.mxu0 0.0
  %5506 = vmatpush1.msra.mxu0 0.0
  %5507 = vmatprep.subr.mxu0 0.0
  %5508 = vmatpush1.msra.mxu0 %v5473
  %5509 = vmatprep.subr.mxu0 0.0
  %5510 = vmatpush1.msra.mxu0 %v5472
  %5511 = vmatprep.subr.mxu0 0.0
  %5512 = vmatpush1.msra.mxu0 %v5471
  %5513 = vmatprep.subr.mxu0 0.0
  %5514 = vmatpush1.msra.mxu0 %v5470
  %5515 = vmatprep.subr.mxu0 0.0
  %5516 = vmatpush2.msra.mxu0 0.0
  %5517 = vmatprep.subr.mxu0 0.0
  %5518 = vmatpush2.msra.mxu0 0.0
  %5519 = vmatprep.subr.mxu0 0.0
  %5520 = vmatpush2.msra.mxu0 0.0
  %5521 = vmatprep.subr.mxu0 0.0
  %5522 = vmatpush2.msra.mxu0 0.0
  %5523 = vmatprep.subr.mxu0 0.0
  %5524 = vmatpush2.msra.mxu0 0.0
  %5525 = vmatprep.subr.mxu0 0.0
  %5526 = vmatpush2.msra.mxu0 0.0
  %5527 = vmatprep.subr.mxu0 0.0
  %5528 = vmatpush2.msra.mxu0 0.0
  %5529 = vmatprep.subr.mxu0 0.0
  %5530 = vmatpush2.msra.mxu0 0.0
  %5531 = vmatprep.subr.mxu0 0.0
  %5532 = vmatpush2.msra.mxu0 0.0
  %5533 = vmatprep.subr.mxu0 0.0
  %5534 = vmatpush2.msra.mxu0 0.0
  %5535 = vmatprep.subr.mxu0 0.0
  %5536 = vmatpush2.msra.mxu0 0.0
  %5537 = vmatprep.subr.mxu0 0.0
  %5538 = vmatpush2.msra.mxu0 0.0
  %5539 = vmatprep.subr.mxu0 0.0
  %5540 = vmatpush2.msra.mxu0 0.0
  %5541 = vmatprep.subr.mxu0 0.0
  %5542 = vmatpush2.msra.mxu0 0.0
  %5543 = vmatprep.subr.mxu0 0.0
  %5544 = vmatpush2.msra.mxu0 0.0
  %5545 = vmatprep.subr.mxu0 0.0
  %5546 = vmatpush2.msra.mxu0 0.0
  %5547 = vmatprep.mubr.f32.mxu0 0.0
  %5548 = vmatmul.mubr.f32.gmra.mxu0 %v5481
  %v5549 = vpop.f32.mrf.mxu0
  %v5550 = vadd.f32 %v5477, %v5549
  %v5551 = vpop.f32.mrf.mxu0
  %5552 = vdwg.mxu0
  %v5553 = vmax.f32 %v5550, 0.0
  %s5554 = scalar_lea.vmem %s9, 16
  %v5555 = vld [vmem:[%s5554] sm:$0xff]
  %v5556 = vld [vmem:[%s5554 + $0x8] sm:$0xff]
  %v5557 = vlaneseq
  %v5558 = vshrl.u32 %v5557, 7
  %v5559 = vsub.s32 6, %v5558
  %v5560 = vrot.slane %v2868, %v5559
  %v5562 = vsel %vm2752, %v5553, 0
  %5564 = vmatprep.subr.mxu0 0.0
  %5565 = vmatpush1.msra.mxu0 0.0
  %5566 = vmatprep.subr.mxu0 0.0
  %5567 = vmatpush1.msra.mxu0 0.0
  %5568 = vmatprep.subr.mxu0 0.0
  %5569 = vmatpush1.msra.mxu0 0.0
  %5570 = vmatprep.subr.mxu0 0.0
  %5571 = vmatpush1.msra.mxu0 0.0
  %5572 = vmatprep.subr.mxu0 0.0
  %5573 = vmatpush1.msra.mxu0 0.0
  %5574 = vmatprep.subr.mxu0 0.0
  %5575 = vmatpush1.msra.mxu0 0.0
  %5576 = vmatprep.subr.mxu0 0.0
  %5577 = vmatpush1.msra.mxu0 0.0
  %5578 = vmatprep.subr.mxu0 0.0
  %5579 = vmatpush1.msra.mxu0 0.0
  %5580 = vmatprep.subr.mxu0 0.0
  %5581 = vmatpush1.msra.mxu0 0.0
  %5582 = vmatprep.subr.mxu0 0.0
  %5583 = vmatpush1.msra.mxu0 0.0
  %5584 = vmatprep.subr.mxu0 0.0
  %5585 = vmatpush1.msra.mxu0 0.0
  %5586 = vmatprep.subr.mxu0 0.0
  %5587 = vmatpush1.msra.mxu0 0.0
  %5588 = vmatprep.subr.mxu0 0.0
  %5589 = vmatpush1.msra.mxu0 0.0
  %5590 = vmatprep.subr.mxu0 0.0
  %5591 = vmatpush1.msra.mxu0 0.0
  %5592 = vmatprep.subr.mxu0 0.0
  %5593 = vmatpush1.msra.mxu0 %v5556
  %5594 = vmatprep.subr.mxu0 0.0
  %5595 = vmatpush1.msra.mxu0 %v5555
  %5596 = vmatprep.subr.mxu0 0.0
  %5597 = vmatpush2.msra.mxu0 0.0
  %5598 = vmatprep.subr.mxu0 0.0
  %5599 = vmatpush2.msra.mxu0 0.0
  %5600 = vmatprep.subr.mxu0 0.0
  %5601 = vmatpush2.msra.mxu0 0.0
  %5602 = vmatprep.subr.mxu0 0.0
  %5603 = vmatpush2.msra.mxu0 0.0
  %5604 = vmatprep.subr.mxu0 0.0
  %5605 = vmatpush2.msra.mxu0 0.0
  %5606 = vmatprep.subr.mxu0 0.0
  %5607 = vmatpush2.msra.mxu0 0.0
  %5608 = vmatprep.subr.mxu0 0.0
  %5609 = vmatpush2.msra.mxu0 0.0
  %5610 = vmatprep.subr.mxu0 0.0
  %5611 = vmatpush2.msra.mxu0 0.0
  %5612 = vmatprep.subr.mxu0 0.0
  %5613 = vmatpush2.msra.mxu0 0.0
  %5614 = vmatprep.subr.mxu0 0.0
  %5615 = vmatpush2.msra.mxu0 0.0
  %5616 = vmatprep.subr.mxu0 0.0
  %5617 = vmatpush2.msra.mxu0 0.0
  %5618 = vmatprep.subr.mxu0 0.0
  %5619 = vmatpush2.msra.mxu0 0.0
  %5620 = vmatprep.subr.mxu0 0.0
  %5621 = vmatpush2.msra.mxu0 0.0
  %5622 = vmatprep.subr.mxu0 0.0
  %5623 = vmatpush2.msra.mxu0 0.0
  %5624 = vmatprep.subr.mxu0 0.0
  %5625 = vmatpush2.msra.mxu0 0.0
  %5626 = vmatprep.subr.mxu0 0.0
  %5627 = vmatpush2.msra.mxu0 0.0
  %5628 = vmatprep.mubr.f32.mxu0 0.0
  %5629 = vmatmul.mubr.f32.gmra.mxu0 %v5562
  %v5630 = vpop.f32.mrf.mxu0
  %v5631 = vadd.f32 %v5560, %v5630
  %v5632 = vpop.f32.mrf.mxu0
  %5633 = vdwg.mxu0
  %v5634 = vxor.u32 %v5631, 2147483648
  %v5635 = vmul.f32 %v5634, 1.442695
  %v5636 = vpow.pop %v5635
  %v5637 = vadd.f32 %v5636, 1.0
  %v5638 = vrcp.pop %v5637
  %v5639 = vmul.f32 1.0, %v5638
  %v5642 = vunpack.c.l.s4 1966171168
  %v5643 = vunpack.c.0.s8 %v5642
  %v5644 = vlaneseq
  %v5645 = vshrl.u32 %v5644, 7
  %v5646 = vsub.s32 %v5643, %v5645
  %v5647 = vrot.slane %v5639, %v5646
  %v5648 = vcombine.high %v5647, %v5647
  %v5650 = vunpack.c.l.s4 1966171168
  %v5651 = vunpack.c.0.s8 %v5650
  %v5652 = vlaneseq
  %v5653 = vshrl.u32 %v5652, 7
  %v5654 = vsub.s32 %v5651, %v5653
  %v5655 = vrot.slane %v5647, %v5654
  %v5657 = vunpack.c.l.s4 1966171168
  %v5658 = vunpack.c.0.s8 %v5657
  %v5659 = vlaneseq
  %v5660 = vshrl.u32 %v5659, 7
  %v5661 = vsub.s32 %v5658, %v5660
  %v5662 = vrot.slane %v5648, %v5661
  %v5663 = vlaneseq
  %v5664 = vshrl.u32 %v5663, 7
  %v5665 = vsub.s32 0, %v5664
  %v5666 = vrot.slane %v5655, %v5665
  %v5667 = vlaneseq
  %v5668 = vshrl.u32 %v5667, 7
  %v5669 = vsub.s32 0, %v5668
  %v5670 = vrot.slane %v5662, %v5669
  %v5673 = vmul.f32 %v5445, %v5666
  %v5674 = vmul.f32 %v5450, %v5670
  %v5675 = vld [vmem:[%s1 + $0x2] sm:$0x1]
  %s5676 = scalar_lea.vmem %s2, 256
  %v5677 = vld [vmem:[%s5676] sm:$0xff]
  %v5678 = vld [vmem:[%s5676 + $0x8] sm:$0xff]
  %v5679 = vld [vmem:[%s5676 + $0x10] sm:$0xff]
  %v5680 = vld [vmem:[%s5676 + $0x18] sm:$0xff]
  %v5681 = vld [vmem:[%s5676 + $0x20] sm:$0xff]
  %v5682 = vld [vmem:[%s5676 + $0x28] sm:$0xff]
  %v5683 = vld [vmem:[%s5676 + $0x30] sm:$0xff]
  %v5684 = vld [vmem:[%s5676 + $0x38] sm:$0xff]
  %v5685 = vld [vmem:[%s5676 + $0x40] sm:$0xff]
  %v5686 = vld [vmem:[%s5676 + $0x48] sm:$0xff]
  %v5687 = vld [vmem:[%s5676 + $0x50] sm:$0xff]
  %v5688 = vld [vmem:[%s5676 + $0x58] sm:$0xff]
  %v5689 = vld [vmem:[%s5676 + $0x60] sm:$0xff]
  %v5690 = vld [vmem:[%s5676 + $0x68] sm:$0xff]
  %v5691 = vld [vmem:[%s5676 + $0x70] sm:$0xff]
  %v5692 = vld [vmem:[%s5676 + $0x78] sm:$0xff]
  %s5693 = scalar_lea.vmem %s3, 8
  %v5694 = vld [vmem:[%s5693] sm:$0x1]
  %v5695 = vld [vmem:[%s5693 + $0x1] sm:$0x1]
  %v5696 = vld [vmem:[%s5693 + $0x2] sm:$0x1]
  %v5697 = vld [vmem:[%s5693 + $0x3] sm:$0x1]
  %s5698 = scalar_lea.vmem %s4, 64
  %v5699 = vld [vmem:[%s5698] sm:$0xff]
  %v5700 = vld [vmem:[%s5698 + $0x8] sm:$0xff]
  %v5701 = vld [vmem:[%s5698 + $0x10] sm:$0xff]
  %v5702 = vld [vmem:[%s5698 + $0x18] sm:$0xff]
  %v5707 = vlaneseq
  %v5708 = vshrl.u32 %v5707, 7
  %v5709 = vsub.s32 0, %v5708
  %v5710 = vrot.slane %v5694, %v5709
  %v5711 = vlaneseq
  %v5712 = vshrl.u32 %v5711, 7
  %v5713 = vsub.s32 0, %v5712
  %v5714 = vrot.slane %v5695, %v5713
  %v5715 = vlaneseq
  %v5716 = vshrl.u32 %v5715, 7
  %v5717 = vsub.s32 0, %v5716
  %v5718 = vrot.slane %v5696, %v5717
  %v5719 = vlaneseq
  %v5720 = vshrl.u32 %v5719, 7
  %v5721 = vsub.s32 0, %v5720
  %v5722 = vrot.slane %v5697, %v5721
  %v5728 = vsel %vm110, %v5673, 0
  %5730 = vmatprep.subr.mxu0 0.0
  %5731 = vmatpush1.msra.mxu0 0.0
  %5732 = vmatprep.subr.mxu0 0.0
  %5733 = vmatpush1.msra.mxu0 0.0
  %5734 = vmatprep.subr.mxu0 0.0
  %5735 = vmatpush1.msra.mxu0 0.0
  %5736 = vmatprep.subr.mxu0 0.0
  %5737 = vmatpush1.msra.mxu0 0.0
  %5738 = vmatprep.subr.mxu0 0.0
  %5739 = vmatpush1.msra.mxu0 0.0
  %5740 = vmatprep.subr.mxu0 0.0
  %5741 = vmatpush1.msra.mxu0 0.0
  %5742 = vmatprep.subr.mxu0 0.0
  %5743 = vmatpush1.msra.mxu0 0.0
  %5744 = vmatprep.subr.mxu0 0.0
  %5745 = vmatpush1.msra.mxu0 0.0
  %5746 = vmatprep.subr.mxu0 0.0
  %5747 = vmatpush1.msra.mxu0 0.0
  %5748 = vmatprep.subr.mxu0 0.0
  %5749 = vmatpush1.msra.mxu0 0.0
  %5750 = vmatprep.subr.mxu0 0.0
  %5751 = vmatpush1.msra.mxu0 0.0
  %5752 = vmatprep.subr.mxu0 0.0
  %5753 = vmatpush1.msra.mxu0 0.0
  %5754 = vmatprep.subr.mxu0 0.0
  %5755 = vmatpush1.msra.mxu0 %v5680
  %5756 = vmatprep.subr.mxu0 0.0
  %5757 = vmatpush1.msra.mxu0 %v5679
  %5758 = vmatprep.subr.mxu0 0.0
  %5759 = vmatpush1.msra.mxu0 %v5678
  %5760 = vmatprep.subr.mxu0 0.0
  %5761 = vmatpush1.msra.mxu0 %v5677
  %5762 = vmatprep.subr.mxu0 0.0
  %5763 = vmatpush2.msra.mxu0 0.0
  %5764 = vmatprep.subr.mxu0 0.0
  %5765 = vmatpush2.msra.mxu0 0.0
  %5766 = vmatprep.subr.mxu0 0.0
  %5767 = vmatpush2.msra.mxu0 0.0
  %5768 = vmatprep.subr.mxu0 0.0
  %5769 = vmatpush2.msra.mxu0 0.0
  %5770 = vmatprep.subr.mxu0 0.0
  %5771 = vmatpush2.msra.mxu0 0.0
  %5772 = vmatprep.subr.mxu0 0.0
  %5773 = vmatpush2.msra.mxu0 0.0
  %5774 = vmatprep.subr.mxu0 0.0
  %5775 = vmatpush2.msra.mxu0 0.0
  %5776 = vmatprep.subr.mxu0 0.0
  %5777 = vmatpush2.msra.mxu0 0.0
  %5778 = vmatprep.subr.mxu0 0.0
  %5779 = vmatpush2.msra.mxu0 0.0
  %5780 = vmatprep.subr.mxu0 0.0
  %5781 = vmatpush2.msra.mxu0 0.0
  %5782 = vmatprep.subr.mxu0 0.0
  %5783 = vmatpush2.msra.mxu0 0.0
  %5784 = vmatprep.subr.mxu0 0.0
  %5785 = vmatpush2.msra.mxu0 0.0
  %5786 = vmatprep.subr.mxu0 0.0
  %5787 = vmatpush2.msra.mxu0 0.0
  %5788 = vmatprep.subr.mxu0 0.0
  %5789 = vmatpush2.msra.mxu0 0.0
  %5790 = vmatprep.subr.mxu0 0.0
  %5791 = vmatpush2.msra.mxu0 0.0
  %5792 = vmatprep.subr.mxu0 0.0
  %5793 = vmatpush2.msra.mxu0 0.0
  %5794 = vmatprep.mubr.f32.mxu0 0.0
  %5795 = vmatmul.mubr.f32.gmra.mxu0 %v5728
  %v5796 = vpop.f32.mrf.mxu0
  %v5797 = vadd.f32 %v5710, %v5796
  %v5798 = vpop.f32.mrf.mxu0
  %5799 = vdwg.mxu0
  %5800 = vmatprep.subr.mxu0 0.0
  %5801 = vmatpush1.msra.mxu0 0.0
  %5802 = vmatprep.subr.mxu0 0.0
  %5803 = vmatpush1.msra.mxu0 0.0
  %5804 = vmatprep.subr.mxu0 0.0
  %5805 = vmatpush1.msra.mxu0 0.0
  %5806 = vmatprep.subr.mxu0 0.0
  %5807 = vmatpush1.msra.mxu0 0.0
  %5808 = vmatprep.subr.mxu0 0.0
  %5809 = vmatpush1.msra.mxu0 0.0
  %5810 = vmatprep.subr.mxu0 0.0
  %5811 = vmatpush1.msra.mxu0 0.0
  %5812 = vmatprep.subr.mxu0 0.0
  %5813 = vmatpush1.msra.mxu0 0.0
  %5814 = vmatprep.subr.mxu0 0.0
  %5815 = vmatpush1.msra.mxu0 0.0
  %5816 = vmatprep.subr.mxu0 0.0
  %5817 = vmatpush1.msra.mxu0 0.0
  %5818 = vmatprep.subr.mxu0 0.0
  %5819 = vmatpush1.msra.mxu0 0.0
  %5820 = vmatprep.subr.mxu0 0.0
  %5821 = vmatpush1.msra.mxu0 0.0
  %5822 = vmatprep.subr.mxu0 0.0
  %5823 = vmatpush1.msra.mxu0 0.0
  %5824 = vmatprep.subr.mxu0 0.0
  %5825 = vmatpush1.msra.mxu0 %v5684
  %5826 = vmatprep.subr.mxu0 0.0
  %5827 = vmatpush1.msra.mxu0 %v5683
  %5828 = vmatprep.subr.mxu0 0.0
  %5829 = vmatpush1.msra.mxu0 %v5682
  %5830 = vmatprep.subr.mxu0 0.0
  %5831 = vmatpush1.msra.mxu0 %v5681
  %5832 = vmatprep.subr.mxu0 0.0
  %5833 = vmatpush2.msra.mxu0 0.0
  %5834 = vmatprep.subr.mxu0 0.0
  %5835 = vmatpush2.msra.mxu0 0.0
  %5836 = vmatprep.subr.mxu0 0.0
  %5837 = vmatpush2.msra.mxu0 0.0
  %5838 = vmatprep.subr.mxu0 0.0
  %5839 = vmatpush2.msra.mxu0 0.0
  %5840 = vmatprep.subr.mxu0 0.0
  %5841 = vmatpush2.msra.mxu0 0.0
  %5842 = vmatprep.subr.mxu0 0.0
  %5843 = vmatpush2.msra.mxu0 0.0
  %5844 = vmatprep.subr.mxu0 0.0
  %5845 = vmatpush2.msra.mxu0 0.0
  %5846 = vmatprep.subr.mxu0 0.0
  %5847 = vmatpush2.msra.mxu0 0.0
  %5848 = vmatprep.subr.mxu0 0.0
  %5849 = vmatpush2.msra.mxu0 0.0
  %5850 = vmatprep.subr.mxu0 0.0
  %5851 = vmatpush2.msra.mxu0 0.0
  %5852 = vmatprep.subr.mxu0 0.0
  %5853 = vmatpush2.msra.mxu0 0.0
  %5854 = vmatprep.subr.mxu0 0.0
  %5855 = vmatpush2.msra.mxu0 0.0
  %5856 = vmatprep.subr.mxu0 0.0
  %5857 = vmatpush2.msra.mxu0 0.0
  %5858 = vmatprep.subr.mxu0 0.0
  %5859 = vmatpush2.msra.mxu0 0.0
  %5860 = vmatprep.subr.mxu0 0.0
  %5861 = vmatpush2.msra.mxu0 0.0
  %5862 = vmatprep.subr.mxu0 0.0
  %5863 = vmatpush2.msra.mxu0 0.0
  %5864 = vmatprep.mubr.f32.mxu0 0.0
  %5865 = vmatmul.mubr.f32.gmra.mxu0 %v5728
  %v5866 = vpop.f32.mrf.mxu0
  %v5867 = vadd.f32 %v5714, %v5866
  %v5868 = vpop.f32.mrf.mxu0
  %5869 = vdwg.mxu0
  %5870 = vmatprep.subr.mxu0 0.0
  %5871 = vmatpush1.msra.mxu0 0.0
  %5872 = vmatprep.subr.mxu0 0.0
  %5873 = vmatpush1.msra.mxu0 0.0
  %5874 = vmatprep.subr.mxu0 0.0
  %5875 = vmatpush1.msra.mxu0 0.0
  %5876 = vmatprep.subr.mxu0 0.0
  %5877 = vmatpush1.msra.mxu0 0.0
  %5878 = vmatprep.subr.mxu0 0.0
  %5879 = vmatpush1.msra.mxu0 0.0
  %5880 = vmatprep.subr.mxu0 0.0
  %5881 = vmatpush1.msra.mxu0 0.0
  %5882 = vmatprep.subr.mxu0 0.0
  %5883 = vmatpush1.msra.mxu0 0.0
  %5884 = vmatprep.subr.mxu0 0.0
  %5885 = vmatpush1.msra.mxu0 0.0
  %5886 = vmatprep.subr.mxu0 0.0
  %5887 = vmatpush1.msra.mxu0 0.0
  %5888 = vmatprep.subr.mxu0 0.0
  %5889 = vmatpush1.msra.mxu0 0.0
  %5890 = vmatprep.subr.mxu0 0.0
  %5891 = vmatpush1.msra.mxu0 0.0
  %5892 = vmatprep.subr.mxu0 0.0
  %5893 = vmatpush1.msra.mxu0 0.0
  %5894 = vmatprep.subr.mxu0 0.0
  %5895 = vmatpush1.msra.mxu0 %v5688
  %5896 = vmatprep.subr.mxu0 0.0
  %5897 = vmatpush1.msra.mxu0 %v5687
  %5898 = vmatprep.subr.mxu0 0.0
  %5899 = vmatpush1.msra.mxu0 %v5686
  %5900 = vmatprep.subr.mxu0 0.0
  %5901 = vmatpush1.msra.mxu0 %v5685
  %5902 = vmatprep.subr.mxu0 0.0
  %5903 = vmatpush2.msra.mxu0 0.0
  %5904 = vmatprep.subr.mxu0 0.0
  %5905 = vmatpush2.msra.mxu0 0.0
  %5906 = vmatprep.subr.mxu0 0.0
  %5907 = vmatpush2.msra.mxu0 0.0
  %5908 = vmatprep.subr.mxu0 0.0
  %5909 = vmatpush2.msra.mxu0 0.0
  %5910 = vmatprep.subr.mxu0 0.0
  %5911 = vmatpush2.msra.mxu0 0.0
  %5912 = vmatprep.subr.mxu0 0.0
  %5913 = vmatpush2.msra.mxu0 0.0
  %5914 = vmatprep.subr.mxu0 0.0
  %5915 = vmatpush2.msra.mxu0 0.0
  %5916 = vmatprep.subr.mxu0 0.0
  %5917 = vmatpush2.msra.mxu0 0.0
  %5918 = vmatprep.subr.mxu0 0.0
  %5919 = vmatpush2.msra.mxu0 0.0
  %5920 = vmatprep.subr.mxu0 0.0
  %5921 = vmatpush2.msra.mxu0 0.0
  %5922 = vmatprep.subr.mxu0 0.0
  %5923 = vmatpush2.msra.mxu0 0.0
  %5924 = vmatprep.subr.mxu0 0.0
  %5925 = vmatpush2.msra.mxu0 0.0
  %5926 = vmatprep.subr.mxu0 0.0
  %5927 = vmatpush2.msra.mxu0 0.0
  %5928 = vmatprep.subr.mxu0 0.0
  %5929 = vmatpush2.msra.mxu0 0.0
  %5930 = vmatprep.subr.mxu0 0.0
  %5931 = vmatpush2.msra.mxu0 0.0
  %5932 = vmatprep.subr.mxu0 0.0
  %5933 = vmatpush2.msra.mxu0 0.0
  %5934 = vmatprep.mubr.f32.mxu0 0.0
  %5935 = vmatmul.mubr.f32.gmra.mxu0 %v5728
  %v5936 = vpop.f32.mrf.mxu0
  %v5937 = vadd.f32 %v5718, %v5936
  %v5938 = vpop.f32.mrf.mxu0
  %5939 = vdwg.mxu0
  %5940 = vmatprep.subr.mxu0 0.0
  %5941 = vmatpush1.msra.mxu0 0.0
  %5942 = vmatprep.subr.mxu0 0.0
  %5943 = vmatpush1.msra.mxu0 0.0
  %5944 = vmatprep.subr.mxu0 0.0
  %5945 = vmatpush1.msra.mxu0 0.0
  %5946 = vmatprep.subr.mxu0 0.0
  %5947 = vmatpush1.msra.mxu0 0.0
  %5948 = vmatprep.subr.mxu0 0.0
  %5949 = vmatpush1.msra.mxu0 0.0
  %5950 = vmatprep.subr.mxu0 0.0
  %5951 = vmatpush1.msra.mxu0 0.0
  %5952 = vmatprep.subr.mxu0 0.0
  %5953 = vmatpush1.msra.mxu0 0.0
  %5954 = vmatprep.subr.mxu0 0.0
  %5955 = vmatpush1.msra.mxu0 0.0
  %5956 = vmatprep.subr.mxu0 0.0
  %5957 = vmatpush1.msra.mxu0 0.0
  %5958 = vmatprep.subr.mxu0 0.0
  %5959 = vmatpush1.msra.mxu0 0.0
  %5960 = vmatprep.subr.mxu0 0.0
  %5961 = vmatpush1.msra.mxu0 0.0
  %5962 = vmatprep.subr.mxu0 0.0
  %5963 = vmatpush1.msra.mxu0 0.0
  %5964 = vmatprep.subr.mxu0 0.0
  %5965 = vmatpush1.msra.mxu0 %v5692
  %5966 = vmatprep.subr.mxu0 0.0
  %5967 = vmatpush1.msra.mxu0 %v5691
  %5968 = vmatprep.subr.mxu0 0.0
  %5969 = vmatpush1.msra.mxu0 %v5690
  %5970 = vmatprep.subr.mxu0 0.0
  %5971 = vmatpush1.msra.mxu0 %v5689
  %5972 = vmatprep.subr.mxu0 0.0
  %5973 = vmatpush2.msra.mxu0 0.0
  %5974 = vmatprep.subr.mxu0 0.0
  %5975 = vmatpush2.msra.mxu0 0.0
  %5976 = vmatprep.subr.mxu0 0.0
  %5977 = vmatpush2.msra.mxu0 0.0
  %5978 = vmatprep.subr.mxu0 0.0
  %5979 = vmatpush2.msra.mxu0 0.0
  %5980 = vmatprep.subr.mxu0 0.0
  %5981 = vmatpush2.msra.mxu0 0.0
  %5982 = vmatprep.subr.mxu0 0.0
  %5983 = vmatpush2.msra.mxu0 0.0
  %5984 = vmatprep.subr.mxu0 0.0
  %5985 = vmatpush2.msra.mxu0 0.0
  %5986 = vmatprep.subr.mxu0 0.0
  %5987 = vmatpush2.msra.mxu0 0.0
  %5988 = vmatprep.subr.mxu0 0.0
  %5989 = vmatpush2.msra.mxu0 0.0
  %5990 = vmatprep.subr.mxu0 0.0
  %5991 = vmatpush2.msra.mxu0 0.0
  %5992 = vmatprep.subr.mxu0 0.0
  %5993 = vmatpush2.msra.mxu0 0.0
  %5994 = vmatprep.subr.mxu0 0.0
  %5995 = vmatpush2.msra.mxu0 0.0
  %5996 = vmatprep.subr.mxu0 0.0
  %5997 = vmatpush2.msra.mxu0 0.0
  %5998 = vmatprep.subr.mxu0 0.0
  %5999 = vmatpush2.msra.mxu0 0.0
  %6000 = vmatprep.subr.mxu0 0.0
  %6001 = vmatpush2.msra.mxu0 0.0
  %6002 = vmatprep.subr.mxu0 0.0
  %6003 = vmatpush2.msra.mxu0 0.0
  %6004 = vmatprep.mubr.f32.mxu0 0.0
  %6005 = vmatmul.mubr.f32.gmra.mxu0 %v5728
  %v6006 = vpop.f32.mrf.mxu0
  %v6007 = vadd.f32 %v5722, %v6006
  %v6008 = vpop.f32.mrf.mxu0
  %6009 = vdwg.mxu0
  %v6011 = vsel %vm110, %v5674, 0
  %6013 = vmatprep.subr.mxu0 0.0
  %6014 = vmatpush1.msra.mxu0 0.0
  %6015 = vmatprep.subr.mxu0 0.0
  %6016 = vmatpush1.msra.mxu0 0.0
  %6017 = vmatprep.subr.mxu0 0.0
  %6018 = vmatpush1.msra.mxu0 0.0
  %6019 = vmatprep.subr.mxu0 0.0
  %6020 = vmatpush1.msra.mxu0 0.0
  %6021 = vmatprep.subr.mxu0 0.0
  %6022 = vmatpush1.msra.mxu0 0.0
  %6023 = vmatprep.subr.mxu0 0.0
  %6024 = vmatpush1.msra.mxu0 0.0
  %6025 = vmatprep.subr.mxu0 0.0
  %6026 = vmatpush1.msra.mxu0 0.0
  %6027 = vmatprep.subr.mxu0 0.0
  %6028 = vmatpush1.msra.mxu0 0.0
  %6029 = vmatprep.subr.mxu0 0.0
  %6030 = vmatpush1.msra.mxu0 0.0
  %6031 = vmatprep.subr.mxu0 0.0
  %6032 = vmatpush1.msra.mxu0 0.0
  %6033 = vmatprep.subr.mxu0 0.0
  %6034 = vmatpush1.msra.mxu0 0.0
  %6035 = vmatprep.subr.mxu0 0.0
  %6036 = vmatpush1.msra.mxu0 0.0
  %6037 = vmatprep.subr.mxu0 0.0
  %6038 = vmatpush1.msra.mxu0 %v5680
  %6039 = vmatprep.subr.mxu0 0.0
  %6040 = vmatpush1.msra.mxu0 %v5679
  %6041 = vmatprep.subr.mxu0 0.0
  %6042 = vmatpush1.msra.mxu0 %v5678
  %6043 = vmatprep.subr.mxu0 0.0
  %6044 = vmatpush1.msra.mxu0 %v5677
  %6045 = vmatprep.subr.mxu0 0.0
  %6046 = vmatpush2.msra.mxu0 0.0
  %6047 = vmatprep.subr.mxu0 0.0
  %6048 = vmatpush2.msra.mxu0 0.0
  %6049 = vmatprep.subr.mxu0 0.0
  %6050 = vmatpush2.msra.mxu0 0.0
  %6051 = vmatprep.subr.mxu0 0.0
  %6052 = vmatpush2.msra.mxu0 0.0
  %6053 = vmatprep.subr.mxu0 0.0
  %6054 = vmatpush2.msra.mxu0 0.0
  %6055 = vmatprep.subr.mxu0 0.0
  %6056 = vmatpush2.msra.mxu0 0.0
  %6057 = vmatprep.subr.mxu0 0.0
  %6058 = vmatpush2.msra.mxu0 0.0
  %6059 = vmatprep.subr.mxu0 0.0
  %6060 = vmatpush2.msra.mxu0 0.0
  %6061 = vmatprep.subr.mxu0 0.0
  %6062 = vmatpush2.msra.mxu0 0.0
  %6063 = vmatprep.subr.mxu0 0.0
  %6064 = vmatpush2.msra.mxu0 0.0
  %6065 = vmatprep.subr.mxu0 0.0
  %6066 = vmatpush2.msra.mxu0 0.0
  %6067 = vmatprep.subr.mxu0 0.0
  %6068 = vmatpush2.msra.mxu0 0.0
  %6069 = vmatprep.subr.mxu0 0.0
  %6070 = vmatpush2.msra.mxu0 0.0
  %6071 = vmatprep.subr.mxu0 0.0
  %6072 = vmatpush2.msra.mxu0 0.0
  %6073 = vmatprep.subr.mxu0 0.0
  %6074 = vmatpush2.msra.mxu0 0.0
  %6075 = vmatprep.subr.mxu0 0.0
  %6076 = vmatpush2.msra.mxu0 0.0
  %6077 = vmatprep.mubr.f32.mxu0 0.0
  %6078 = vmatmul.mubr.f32.gmra.mxu0 %v6011
  %v6079 = vpop.f32.mrf.mxu0
  %v6080 = vadd.f32 %v5710, %v6079
  %v6081 = vpop.f32.mrf.mxu0
  %6082 = vdwg.mxu0
  %6083 = vmatprep.subr.mxu0 0.0
  %6084 = vmatpush1.msra.mxu0 0.0
  %6085 = vmatprep.subr.mxu0 0.0
  %6086 = vmatpush1.msra.mxu0 0.0
  %6087 = vmatprep.subr.mxu0 0.0
  %6088 = vmatpush1.msra.mxu0 0.0
  %6089 = vmatprep.subr.mxu0 0.0
  %6090 = vmatpush1.msra.mxu0 0.0
  %6091 = vmatprep.subr.mxu0 0.0
  %6092 = vmatpush1.msra.mxu0 0.0
  %6093 = vmatprep.subr.mxu0 0.0
  %6094 = vmatpush1.msra.mxu0 0.0
  %6095 = vmatprep.subr.mxu0 0.0
  %6096 = vmatpush1.msra.mxu0 0.0
  %6097 = vmatprep.subr.mxu0 0.0
  %6098 = vmatpush1.msra.mxu0 0.0
  %6099 = vmatprep.subr.mxu0 0.0
  %6100 = vmatpush1.msra.mxu0 0.0
  %6101 = vmatprep.subr.mxu0 0.0
  %6102 = vmatpush1.msra.mxu0 0.0
  %6103 = vmatprep.subr.mxu0 0.0
  %6104 = vmatpush1.msra.mxu0 0.0
  %6105 = vmatprep.subr.mxu0 0.0
  %6106 = vmatpush1.msra.mxu0 0.0
  %6107 = vmatprep.subr.mxu0 0.0
  %6108 = vmatpush1.msra.mxu0 %v5684
  %6109 = vmatprep.subr.mxu0 0.0
  %6110 = vmatpush1.msra.mxu0 %v5683
  %6111 = vmatprep.subr.mxu0 0.0
  %6112 = vmatpush1.msra.mxu0 %v5682
  %6113 = vmatprep.subr.mxu0 0.0
  %6114 = vmatpush1.msra.mxu0 %v5681
  %6115 = vmatprep.subr.mxu0 0.0
  %6116 = vmatpush2.msra.mxu0 0.0
  %6117 = vmatprep.subr.mxu0 0.0
  %6118 = vmatpush2.msra.mxu0 0.0
  %6119 = vmatprep.subr.mxu0 0.0
  %6120 = vmatpush2.msra.mxu0 0.0
  %6121 = vmatprep.subr.mxu0 0.0
  %6122 = vmatpush2.msra.mxu0 0.0
  %6123 = vmatprep.subr.mxu0 0.0
  %6124 = vmatpush2.msra.mxu0 0.0
  %6125 = vmatprep.subr.mxu0 0.0
  %6126 = vmatpush2.msra.mxu0 0.0
  %6127 = vmatprep.subr.mxu0 0.0
  %6128 = vmatpush2.msra.mxu0 0.0
  %6129 = vmatprep.subr.mxu0 0.0
  %6130 = vmatpush2.msra.mxu0 0.0
  %6131 = vmatprep.subr.mxu0 0.0
  %6132 = vmatpush2.msra.mxu0 0.0
  %6133 = vmatprep.subr.mxu0 0.0
  %6134 = vmatpush2.msra.mxu0 0.0
  %6135 = vmatprep.subr.mxu0 0.0
  %6136 = vmatpush2.msra.mxu0 0.0
  %6137 = vmatprep.subr.mxu0 0.0
  %6138 = vmatpush2.msra.mxu0 0.0
  %6139 = vmatprep.subr.mxu0 0.0
  %6140 = vmatpush2.msra.mxu0 0.0
  %6141 = vmatprep.subr.mxu0 0.0
  %6142 = vmatpush2.msra.mxu0 0.0
  %6143 = vmatprep.subr.mxu0 0.0
  %6144 = vmatpush2.msra.mxu0 0.0
  %6145 = vmatprep.subr.mxu0 0.0
  %6146 = vmatpush2.msra.mxu0 0.0
  %6147 = vmatprep.mubr.f32.mxu0 0.0
  %6148 = vmatmul.mubr.f32.gmra.mxu0 %v6011
  %v6149 = vpop.f32.mrf.mxu0
  %v6150 = vadd.f32 %v5714, %v6149
  %v6151 = vpop.f32.mrf.mxu0
  %6152 = vdwg.mxu0
  %6153 = vmatprep.subr.mxu0 0.0
  %6154 = vmatpush1.msra.mxu0 0.0
  %6155 = vmatprep.subr.mxu0 0.0
  %6156 = vmatpush1.msra.mxu0 0.0
  %6157 = vmatprep.subr.mxu0 0.0
  %6158 = vmatpush1.msra.mxu0 0.0
  %6159 = vmatprep.subr.mxu0 0.0
  %6160 = vmatpush1.msra.mxu0 0.0
  %6161 = vmatprep.subr.mxu0 0.0
  %6162 = vmatpush1.msra.mxu0 0.0
  %6163 = vmatprep.subr.mxu0 0.0
  %6164 = vmatpush1.msra.mxu0 0.0
  %6165 = vmatprep.subr.mxu0 0.0
  %6166 = vmatpush1.msra.mxu0 0.0
  %6167 = vmatprep.subr.mxu0 0.0
  %6168 = vmatpush1.msra.mxu0 0.0
  %6169 = vmatprep.subr.mxu0 0.0
  %6170 = vmatpush1.msra.mxu0 0.0
  %6171 = vmatprep.subr.mxu0 0.0
  %6172 = vmatpush1.msra.mxu0 0.0
  %6173 = vmatprep.subr.mxu0 0.0
  %6174 = vmatpush1.msra.mxu0 0.0
  %6175 = vmatprep.subr.mxu0 0.0
  %6176 = vmatpush1.msra.mxu0 0.0
  %6177 = vmatprep.subr.mxu0 0.0
  %6178 = vmatpush1.msra.mxu0 %v5688
  %6179 = vmatprep.subr.mxu0 0.0
  %6180 = vmatpush1.msra.mxu0 %v5687
  %6181 = vmatprep.subr.mxu0 0.0
  %6182 = vmatpush1.msra.mxu0 %v5686
  %6183 = vmatprep.subr.mxu0 0.0
  %6184 = vmatpush1.msra.mxu0 %v5685
  %6185 = vmatprep.subr.mxu0 0.0
  %6186 = vmatpush2.msra.mxu0 0.0
  %6187 = vmatprep.subr.mxu0 0.0
  %6188 = vmatpush2.msra.mxu0 0.0
  %6189 = vmatprep.subr.mxu0 0.0
  %6190 = vmatpush2.msra.mxu0 0.0
  %6191 = vmatprep.subr.mxu0 0.0
  %6192 = vmatpush2.msra.mxu0 0.0
  %6193 = vmatprep.subr.mxu0 0.0
  %6194 = vmatpush2.msra.mxu0 0.0
  %6195 = vmatprep.subr.mxu0 0.0
  %6196 = vmatpush2.msra.mxu0 0.0
  %6197 = vmatprep.subr.mxu0 0.0
  %6198 = vmatpush2.msra.mxu0 0.0
  %6199 = vmatprep.subr.mxu0 0.0
  %6200 = vmatpush2.msra.mxu0 0.0
  %6201 = vmatprep.subr.mxu0 0.0
  %6202 = vmatpush2.msra.mxu0 0.0
  %6203 = vmatprep.subr.mxu0 0.0
  %6204 = vmatpush2.msra.mxu0 0.0
  %6205 = vmatprep.subr.mxu0 0.0
  %6206 = vmatpush2.msra.mxu0 0.0
  %6207 = vmatprep.subr.mxu0 0.0
  %6208 = vmatpush2.msra.mxu0 0.0
  %6209 = vmatprep.subr.mxu0 0.0
  %6210 = vmatpush2.msra.mxu0 0.0
  %6211 = vmatprep.subr.mxu0 0.0
  %6212 = vmatpush2.msra.mxu0 0.0
  %6213 = vmatprep.subr.mxu0 0.0
  %6214 = vmatpush2.msra.mxu0 0.0
  %6215 = vmatprep.subr.mxu0 0.0
  %6216 = vmatpush2.msra.mxu0 0.0
  %6217 = vmatprep.mubr.f32.mxu0 0.0
  %6218 = vmatmul.mubr.f32.gmra.mxu0 %v6011
  %v6219 = vpop.f32.mrf.mxu0
  %v6220 = vadd.f32 %v5718, %v6219
  %v6221 = vpop.f32.mrf.mxu0
  %6222 = vdwg.mxu0
  %6223 = vmatprep.subr.mxu0 0.0
  %6224 = vmatpush1.msra.mxu0 0.0
  %6225 = vmatprep.subr.mxu0 0.0
  %6226 = vmatpush1.msra.mxu0 0.0
  %6227 = vmatprep.subr.mxu0 0.0
  %6228 = vmatpush1.msra.mxu0 0.0
  %6229 = vmatprep.subr.mxu0 0.0
  %6230 = vmatpush1.msra.mxu0 0.0
  %6231 = vmatprep.subr.mxu0 0.0
  %6232 = vmatpush1.msra.mxu0 0.0
  %6233 = vmatprep.subr.mxu0 0.0
  %6234 = vmatpush1.msra.mxu0 0.0
  %6235 = vmatprep.subr.mxu0 0.0
  %6236 = vmatpush1.msra.mxu0 0.0
  %6237 = vmatprep.subr.mxu0 0.0
  %6238 = vmatpush1.msra.mxu0 0.0
  %6239 = vmatprep.subr.mxu0 0.0
  %6240 = vmatpush1.msra.mxu0 0.0
  %6241 = vmatprep.subr.mxu0 0.0
  %6242 = vmatpush1.msra.mxu0 0.0
  %6243 = vmatprep.subr.mxu0 0.0
  %6244 = vmatpush1.msra.mxu0 0.0
  %6245 = vmatprep.subr.mxu0 0.0
  %6246 = vmatpush1.msra.mxu0 0.0
  %6247 = vmatprep.subr.mxu0 0.0
  %6248 = vmatpush1.msra.mxu0 %v5692
  %6249 = vmatprep.subr.mxu0 0.0
  %6250 = vmatpush1.msra.mxu0 %v5691
  %6251 = vmatprep.subr.mxu0 0.0
  %6252 = vmatpush1.msra.mxu0 %v5690
  %6253 = vmatprep.subr.mxu0 0.0
  %6254 = vmatpush1.msra.mxu0 %v5689
  %6255 = vmatprep.subr.mxu0 0.0
  %6256 = vmatpush2.msra.mxu0 0.0
  %6257 = vmatprep.subr.mxu0 0.0
  %6258 = vmatpush2.msra.mxu0 0.0
  %6259 = vmatprep.subr.mxu0 0.0
  %6260 = vmatpush2.msra.mxu0 0.0
  %6261 = vmatprep.subr.mxu0 0.0
  %6262 = vmatpush2.msra.mxu0 0.0
  %6263 = vmatprep.subr.mxu0 0.0
  %6264 = vmatpush2.msra.mxu0 0.0
  %6265 = vmatprep.subr.mxu0 0.0
  %6266 = vmatpush2.msra.mxu0 0.0
  %6267 = vmatprep.subr.mxu0 0.0
  %6268 = vmatpush2.msra.mxu0 0.0
  %6269 = vmatprep.subr.mxu0 0.0
  %6270 = vmatpush2.msra.mxu0 0.0
  %6271 = vmatprep.subr.mxu0 0.0
  %6272 = vmatpush2.msra.mxu0 0.0
  %6273 = vmatprep.subr.mxu0 0.0
  %6274 = vmatpush2.msra.mxu0 0.0
  %6275 = vmatprep.subr.mxu0 0.0
  %6276 = vmatpush2.msra.mxu0 0.0
  %6277 = vmatprep.subr.mxu0 0.0
  %6278 = vmatpush2.msra.mxu0 0.0
  %6279 = vmatprep.subr.mxu0 0.0
  %6280 = vmatpush2.msra.mxu0 0.0
  %6281 = vmatprep.subr.mxu0 0.0
  %6282 = vmatpush2.msra.mxu0 0.0
  %6283 = vmatprep.subr.mxu0 0.0
  %6284 = vmatpush2.msra.mxu0 0.0
  %6285 = vmatprep.subr.mxu0 0.0
  %6286 = vmatpush2.msra.mxu0 0.0
  %6287 = vmatprep.mubr.f32.mxu0 0.0
  %6288 = vmatmul.mubr.f32.gmra.mxu0 %v6011
  %v6289 = vpop.f32.mrf.mxu0
  %v6290 = vadd.f32 %v5722, %v6289
  %v6291 = vpop.f32.mrf.mxu0
  %6292 = vdwg.mxu0
  %6294 = vrot.lane.b32.xlu0 %v5797, 120
  %v6295 = vpop.permute.xlu0 %6294
  %v6296 = vsel %vm680, %v5797, 0
  %v6298 = vsel %vm680, %v6295, 0
  %6300 = vmatprep.subr.mxu0 0.0
  %6301 = vmatpush1.xpose.msra.mxu0 0.0
  %6302 = vmatprep.subr.mxu0 0.0
  %6303 = vmatpush1.xpose.msra.mxu0 0.0
  %6304 = vmatprep.subr.mxu0 0.0
  %6305 = vmatpush1.xpose.msra.mxu0 0.0
  %6306 = vmatprep.subr.mxu0 0.0
  %6307 = vmatpush1.xpose.msra.mxu0 0.0
  %6308 = vmatprep.subr.mxu0 0.0
  %6309 = vmatpush1.xpose.msra.mxu0 0.0
  %6310 = vmatprep.subr.mxu0 0.0
  %6311 = vmatpush1.xpose.msra.mxu0 0.0
  %6312 = vmatprep.subr.mxu0 0.0
  %6313 = vmatpush1.xpose.msra.mxu0 0.0
  %6314 = vmatprep.subr.mxu0 0.0
  %6315 = vmatpush1.xpose.msra.mxu0 0.0
  %6316 = vmatprep.subr.mxu0 0.0
  %6317 = vmatpush1.xpose.msra.mxu0 0.0
  %6318 = vmatprep.subr.mxu0 0.0
  %6319 = vmatpush1.xpose.msra.mxu0 0.0
  %6320 = vmatprep.subr.mxu0 0.0
  %6321 = vmatpush1.xpose.msra.mxu0 0.0
  %6322 = vmatprep.subr.mxu0 0.0
  %6323 = vmatpush1.xpose.msra.mxu0 0.0
  %6324 = vmatprep.subr.mxu0 0.0
  %6325 = vmatpush1.xpose.msra.mxu0 0.0
  %6326 = vmatprep.subr.mxu0 0.0
  %6327 = vmatpush1.xpose.msra.mxu0 0.0
  %6328 = vmatprep.subr.mxu0 0.0
  %6329 = vmatpush1.xpose.msra.mxu0 0.0
  %6330 = vmatprep.subr.mxu0 0.0
  %6331 = vmatpush1.xpose.msra.mxu0 %v6298
  %6332 = vmatprep.subr.mxu0 0.0
  %6333 = vmatpush2.xpose.msra.mxu0 0.0
  %6334 = vmatprep.subr.mxu0 0.0
  %6335 = vmatpush2.xpose.msra.mxu0 0.0
  %6336 = vmatprep.subr.mxu0 0.0
  %6337 = vmatpush2.xpose.msra.mxu0 0.0
  %6338 = vmatprep.subr.mxu0 0.0
  %6339 = vmatpush2.xpose.msra.mxu0 0.0
  %6340 = vmatprep.subr.mxu0 0.0
  %6341 = vmatpush2.xpose.msra.mxu0 0.0
  %6342 = vmatprep.subr.mxu0 0.0
  %6343 = vmatpush2.xpose.msra.mxu0 0.0
  %6344 = vmatprep.subr.mxu0 0.0
  %6345 = vmatpush2.xpose.msra.mxu0 0.0
  %6346 = vmatprep.subr.mxu0 0.0
  %6347 = vmatpush2.xpose.msra.mxu0 0.0
  %6348 = vmatprep.subr.mxu0 0.0
  %6349 = vmatpush2.xpose.msra.mxu0 0.0
  %6350 = vmatprep.subr.mxu0 0.0
  %6351 = vmatpush2.xpose.msra.mxu0 0.0
  %6352 = vmatprep.subr.mxu0 0.0
  %6353 = vmatpush2.xpose.msra.mxu0 0.0
  %6354 = vmatprep.subr.mxu0 0.0
  %6355 = vmatpush2.xpose.msra.mxu0 0.0
  %6356 = vmatprep.subr.mxu0 0.0
  %6357 = vmatpush2.xpose.msra.mxu0 0.0
  %6358 = vmatprep.subr.mxu0 0.0
  %6359 = vmatpush2.xpose.msra.mxu0 0.0
  %6360 = vmatprep.subr.mxu0 0.0
  %6361 = vmatpush2.xpose.msra.mxu0 0.0
  %6362 = vmatprep.subr.mxu0 0.0
  %6363 = vmatpush2.xpose.msra.mxu0 0.0
  %6364 = vmatprep.mubr.f32.mxu0 0.0
  %6365 = vmatmul.mubr.f32.gmra.mxu0 %v6296
  %v6366 = vpop.f32.mrf.mxu0
  %v6367 = vadd.f32 0.0, %v6366
  %v6368 = vpop.f32.mrf.mxu0
  %6369 = vdwg.mxu0
  %6371 = vrot.lane.b32.xlu0 %v5867, 120
  %v6372 = vpop.permute.xlu0 %6371
  %v6373 = vsel %vm680, %v5867, 0
  %v6375 = vsel %vm680, %v6372, 0
  %6377 = vmatprep.subr.mxu0 0.0
  %6378 = vmatpush1.xpose.msra.mxu0 0.0
  %6379 = vmatprep.subr.mxu0 0.0
  %6380 = vmatpush1.xpose.msra.mxu0 0.0
  %6381 = vmatprep.subr.mxu0 0.0
  %6382 = vmatpush1.xpose.msra.mxu0 0.0
  %6383 = vmatprep.subr.mxu0 0.0
  %6384 = vmatpush1.xpose.msra.mxu0 0.0
  %6385 = vmatprep.subr.mxu0 0.0
  %6386 = vmatpush1.xpose.msra.mxu0 0.0
  %6387 = vmatprep.subr.mxu0 0.0
  %6388 = vmatpush1.xpose.msra.mxu0 0.0
  %6389 = vmatprep.subr.mxu0 0.0
  %6390 = vmatpush1.xpose.msra.mxu0 0.0
  %6391 = vmatprep.subr.mxu0 0.0
  %6392 = vmatpush1.xpose.msra.mxu0 0.0
  %6393 = vmatprep.subr.mxu0 0.0
  %6394 = vmatpush1.xpose.msra.mxu0 0.0
  %6395 = vmatprep.subr.mxu0 0.0
  %6396 = vmatpush1.xpose.msra.mxu0 0.0
  %6397 = vmatprep.subr.mxu0 0.0
  %6398 = vmatpush1.xpose.msra.mxu0 0.0
  %6399 = vmatprep.subr.mxu0 0.0
  %6400 = vmatpush1.xpose.msra.mxu0 0.0
  %6401 = vmatprep.subr.mxu0 0.0
  %6402 = vmatpush1.xpose.msra.mxu0 0.0
  %6403 = vmatprep.subr.mxu0 0.0
  %6404 = vmatpush1.xpose.msra.mxu0 0.0
  %6405 = vmatprep.subr.mxu0 0.0
  %6406 = vmatpush1.xpose.msra.mxu0 0.0
  %6407 = vmatprep.subr.mxu0 0.0
  %6408 = vmatpush1.xpose.msra.mxu0 %v6375
  %6409 = vmatprep.subr.mxu0 0.0
  %6410 = vmatpush2.xpose.msra.mxu0 0.0
  %6411 = vmatprep.subr.mxu0 0.0
  %6412 = vmatpush2.xpose.msra.mxu0 0.0
  %6413 = vmatprep.subr.mxu0 0.0
  %6414 = vmatpush2.xpose.msra.mxu0 0.0
  %6415 = vmatprep.subr.mxu0 0.0
  %6416 = vmatpush2.xpose.msra.mxu0 0.0
  %6417 = vmatprep.subr.mxu0 0.0
  %6418 = vmatpush2.xpose.msra.mxu0 0.0
  %6419 = vmatprep.subr.mxu0 0.0
  %6420 = vmatpush2.xpose.msra.mxu0 0.0
  %6421 = vmatprep.subr.mxu0 0.0
  %6422 = vmatpush2.xpose.msra.mxu0 0.0
  %6423 = vmatprep.subr.mxu0 0.0
  %6424 = vmatpush2.xpose.msra.mxu0 0.0
  %6425 = vmatprep.subr.mxu0 0.0
  %6426 = vmatpush2.xpose.msra.mxu0 0.0
  %6427 = vmatprep.subr.mxu0 0.0
  %6428 = vmatpush2.xpose.msra.mxu0 0.0
  %6429 = vmatprep.subr.mxu0 0.0
  %6430 = vmatpush2.xpose.msra.mxu0 0.0
  %6431 = vmatprep.subr.mxu0 0.0
  %6432 = vmatpush2.xpose.msra.mxu0 0.0
  %6433 = vmatprep.subr.mxu0 0.0
  %6434 = vmatpush2.xpose.msra.mxu0 0.0
  %6435 = vmatprep.subr.mxu0 0.0
  %6436 = vmatpush2.xpose.msra.mxu0 0.0
  %6437 = vmatprep.subr.mxu0 0.0
  %6438 = vmatpush2.xpose.msra.mxu0 0.0
  %6439 = vmatprep.subr.mxu0 0.0
  %6440 = vmatpush2.xpose.msra.mxu0 0.0
  %6441 = vmatprep.mubr.f32.mxu0 0.0
  %6442 = vmatmul.mubr.f32.gmra.mxu0 %v6373
  %v6443 = vpop.f32.mrf.mxu0
  %v6444 = vadd.f32 0.0, %v6443
  %v6445 = vpop.f32.mrf.mxu0
  %6446 = vdwg.mxu0
  %6448 = vrot.lane.b32.xlu0 %v5937, 120
  %v6449 = vpop.permute.xlu0 %6448
  %v6450 = vsel %vm680, %v5937, 0
  %v6452 = vsel %vm680, %v6449, 0
  %6454 = vmatprep.subr.mxu0 0.0
  %6455 = vmatpush1.xpose.msra.mxu0 0.0
  %6456 = vmatprep.subr.mxu0 0.0
  %6457 = vmatpush1.xpose.msra.mxu0 0.0
  %6458 = vmatprep.subr.mxu0 0.0
  %6459 = vmatpush1.xpose.msra.mxu0 0.0
  %6460 = vmatprep.subr.mxu0 0.0
  %6461 = vmatpush1.xpose.msra.mxu0 0.0
  %6462 = vmatprep.subr.mxu0 0.0
  %6463 = vmatpush1.xpose.msra.mxu0 0.0
  %6464 = vmatprep.subr.mxu0 0.0
  %6465 = vmatpush1.xpose.msra.mxu0 0.0
  %6466 = vmatprep.subr.mxu0 0.0
  %6467 = vmatpush1.xpose.msra.mxu0 0.0
  %6468 = vmatprep.subr.mxu0 0.0
  %6469 = vmatpush1.xpose.msra.mxu0 0.0
  %6470 = vmatprep.subr.mxu0 0.0
  %6471 = vmatpush1.xpose.msra.mxu0 0.0
  %6472 = vmatprep.subr.mxu0 0.0
  %6473 = vmatpush1.xpose.msra.mxu0 0.0
  %6474 = vmatprep.subr.mxu0 0.0
  %6475 = vmatpush1.xpose.msra.mxu0 0.0
  %6476 = vmatprep.subr.mxu0 0.0
  %6477 = vmatpush1.xpose.msra.mxu0 0.0
  %6478 = vmatprep.subr.mxu0 0.0
  %6479 = vmatpush1.xpose.msra.mxu0 0.0
  %6480 = vmatprep.subr.mxu0 0.0
  %6481 = vmatpush1.xpose.msra.mxu0 0.0
  %6482 = vmatprep.subr.mxu0 0.0
  %6483 = vmatpush1.xpose.msra.mxu0 0.0
  %6484 = vmatprep.subr.mxu0 0.0
  %6485 = vmatpush1.xpose.msra.mxu0 %v6452
  %6486 = vmatprep.subr.mxu0 0.0
  %6487 = vmatpush2.xpose.msra.mxu0 0.0
  %6488 = vmatprep.subr.mxu0 0.0
  %6489 = vmatpush2.xpose.msra.mxu0 0.0
  %6490 = vmatprep.subr.mxu0 0.0
  %6491 = vmatpush2.xpose.msra.mxu0 0.0
  %6492 = vmatprep.subr.mxu0 0.0
  %6493 = vmatpush2.xpose.msra.mxu0 0.0
  %6494 = vmatprep.subr.mxu0 0.0
  %6495 = vmatpush2.xpose.msra.mxu0 0.0
  %6496 = vmatprep.subr.mxu0 0.0
  %6497 = vmatpush2.xpose.msra.mxu0 0.0
  %6498 = vmatprep.subr.mxu0 0.0
  %6499 = vmatpush2.xpose.msra.mxu0 0.0
  %6500 = vmatprep.subr.mxu0 0.0
  %6501 = vmatpush2.xpose.msra.mxu0 0.0
  %6502 = vmatprep.subr.mxu0 0.0
  %6503 = vmatpush2.xpose.msra.mxu0 0.0
  %6504 = vmatprep.subr.mxu0 0.0
  %6505 = vmatpush2.xpose.msra.mxu0 0.0
  %6506 = vmatprep.subr.mxu0 0.0
  %6507 = vmatpush2.xpose.msra.mxu0 0.0
  %6508 = vmatprep.subr.mxu0 0.0
  %6509 = vmatpush2.xpose.msra.mxu0 0.0
  %6510 = vmatprep.subr.mxu0 0.0
  %6511 = vmatpush2.xpose.msra.mxu0 0.0
  %6512 = vmatprep.subr.mxu0 0.0
  %6513 = vmatpush2.xpose.msra.mxu0 0.0
  %6514 = vmatprep.subr.mxu0 0.0
  %6515 = vmatpush2.xpose.msra.mxu0 0.0
  %6516 = vmatprep.subr.mxu0 0.0
  %6517 = vmatpush2.xpose.msra.mxu0 0.0
  %6518 = vmatprep.mubr.f32.mxu0 0.0
  %6519 = vmatmul.mubr.f32.gmra.mxu0 %v6450
  %v6520 = vpop.f32.mrf.mxu0
  %v6521 = vadd.f32 0.0, %v6520
  %v6522 = vpop.f32.mrf.mxu0
  %6523 = vdwg.mxu0
  %6525 = vrot.lane.b32.xlu0 %v6007, 120
  %v6526 = vpop.permute.xlu0 %6525
  %v6527 = vsel %vm680, %v6007, 0
  %v6529 = vsel %vm680, %v6526, 0
  %6531 = vmatprep.subr.mxu0 0.0
  %6532 = vmatpush1.xpose.msra.mxu0 0.0
  %6533 = vmatprep.subr.mxu0 0.0
  %6534 = vmatpush1.xpose.msra.mxu0 0.0
  %6535 = vmatprep.subr.mxu0 0.0
  %6536 = vmatpush1.xpose.msra.mxu0 0.0
  %6537 = vmatprep.subr.mxu0 0.0
  %6538 = vmatpush1.xpose.msra.mxu0 0.0
  %6539 = vmatprep.subr.mxu0 0.0
  %6540 = vmatpush1.xpose.msra.mxu0 0.0
  %6541 = vmatprep.subr.mxu0 0.0
  %6542 = vmatpush1.xpose.msra.mxu0 0.0
  %6543 = vmatprep.subr.mxu0 0.0
  %6544 = vmatpush1.xpose.msra.mxu0 0.0
  %6545 = vmatprep.subr.mxu0 0.0
  %6546 = vmatpush1.xpose.msra.mxu0 0.0
  %6547 = vmatprep.subr.mxu0 0.0
  %6548 = vmatpush1.xpose.msra.mxu0 0.0
  %6549 = vmatprep.subr.mxu0 0.0
  %6550 = vmatpush1.xpose.msra.mxu0 0.0
  %6551 = vmatprep.subr.mxu0 0.0
  %6552 = vmatpush1.xpose.msra.mxu0 0.0
  %6553 = vmatprep.subr.mxu0 0.0
  %6554 = vmatpush1.xpose.msra.mxu0 0.0
  %6555 = vmatprep.subr.mxu0 0.0
  %6556 = vmatpush1.xpose.msra.mxu0 0.0
  %6557 = vmatprep.subr.mxu0 0.0
  %6558 = vmatpush1.xpose.msra.mxu0 0.0
  %6559 = vmatprep.subr.mxu0 0.0
  %6560 = vmatpush1.xpose.msra.mxu0 0.0
  %6561 = vmatprep.subr.mxu0 0.0
  %6562 = vmatpush1.xpose.msra.mxu0 %v6529
  %6563 = vmatprep.subr.mxu0 0.0
  %6564 = vmatpush2.xpose.msra.mxu0 0.0
  %6565 = vmatprep.subr.mxu0 0.0
  %6566 = vmatpush2.xpose.msra.mxu0 0.0
  %6567 = vmatprep.subr.mxu0 0.0
  %6568 = vmatpush2.xpose.msra.mxu0 0.0
  %6569 = vmatprep.subr.mxu0 0.0
  %6570 = vmatpush2.xpose.msra.mxu0 0.0
  %6571 = vmatprep.subr.mxu0 0.0
  %6572 = vmatpush2.xpose.msra.mxu0 0.0
  %6573 = vmatprep.subr.mxu0 0.0
  %6574 = vmatpush2.xpose.msra.mxu0 0.0
  %6575 = vmatprep.subr.mxu0 0.0
  %6576 = vmatpush2.xpose.msra.mxu0 0.0
  %6577 = vmatprep.subr.mxu0 0.0
  %6578 = vmatpush2.xpose.msra.mxu0 0.0
  %6579 = vmatprep.subr.mxu0 0.0
  %6580 = vmatpush2.xpose.msra.mxu0 0.0
  %6581 = vmatprep.subr.mxu0 0.0
  %6582 = vmatpush2.xpose.msra.mxu0 0.0
  %6583 = vmatprep.subr.mxu0 0.0
  %6584 = vmatpush2.xpose.msra.mxu0 0.0
  %6585 = vmatprep.subr.mxu0 0.0
  %6586 = vmatpush2.xpose.msra.mxu0 0.0
  %6587 = vmatprep.subr.mxu0 0.0
  %6588 = vmatpush2.xpose.msra.mxu0 0.0
  %6589 = vmatprep.subr.mxu0 0.0
  %6590 = vmatpush2.xpose.msra.mxu0 0.0
  %6591 = vmatprep.subr.mxu0 0.0
  %6592 = vmatpush2.xpose.msra.mxu0 0.0
  %6593 = vmatprep.subr.mxu0 0.0
  %6594 = vmatpush2.xpose.msra.mxu0 0.0
  %6595 = vmatprep.mubr.f32.mxu0 0.0
  %6596 = vmatmul.mubr.f32.gmra.mxu0 %v6527
  %v6597 = vpop.f32.mrf.mxu0
  %v6598 = vadd.f32 0.0, %v6597
  %v6599 = vpop.f32.mrf.mxu0
  %6600 = vdwg.mxu0
  %6602 = vrot.lane.b32.xlu0 %v6080, 120
  %v6603 = vpop.permute.xlu0 %6602
  %v6604 = vsel %vm680, %v6080, 0
  %v6606 = vsel %vm680, %v6603, 0
  %6608 = vmatprep.subr.mxu0 0.0
  %6609 = vmatpush1.xpose.msra.mxu0 0.0
  %6610 = vmatprep.subr.mxu0 0.0
  %6611 = vmatpush1.xpose.msra.mxu0 0.0
  %6612 = vmatprep.subr.mxu0 0.0
  %6613 = vmatpush1.xpose.msra.mxu0 0.0
  %6614 = vmatprep.subr.mxu0 0.0
  %6615 = vmatpush1.xpose.msra.mxu0 0.0
  %6616 = vmatprep.subr.mxu0 0.0
  %6617 = vmatpush1.xpose.msra.mxu0 0.0
  %6618 = vmatprep.subr.mxu0 0.0
  %6619 = vmatpush1.xpose.msra.mxu0 0.0
  %6620 = vmatprep.subr.mxu0 0.0
  %6621 = vmatpush1.xpose.msra.mxu0 0.0
  %6622 = vmatprep.subr.mxu0 0.0
  %6623 = vmatpush1.xpose.msra.mxu0 0.0
  %6624 = vmatprep.subr.mxu0 0.0
  %6625 = vmatpush1.xpose.msra.mxu0 0.0
  %6626 = vmatprep.subr.mxu0 0.0
  %6627 = vmatpush1.xpose.msra.mxu0 0.0
  %6628 = vmatprep.subr.mxu0 0.0
  %6629 = vmatpush1.xpose.msra.mxu0 0.0
  %6630 = vmatprep.subr.mxu0 0.0
  %6631 = vmatpush1.xpose.msra.mxu0 0.0
  %6632 = vmatprep.subr.mxu0 0.0
  %6633 = vmatpush1.xpose.msra.mxu0 0.0
  %6634 = vmatprep.subr.mxu0 0.0
  %6635 = vmatpush1.xpose.msra.mxu0 0.0
  %6636 = vmatprep.subr.mxu0 0.0
  %6637 = vmatpush1.xpose.msra.mxu0 0.0
  %6638 = vmatprep.subr.mxu0 0.0
  %6639 = vmatpush1.xpose.msra.mxu0 %v6606
  %6640 = vmatprep.subr.mxu0 0.0
  %6641 = vmatpush2.xpose.msra.mxu0 0.0
  %6642 = vmatprep.subr.mxu0 0.0
  %6643 = vmatpush2.xpose.msra.mxu0 0.0
  %6644 = vmatprep.subr.mxu0 0.0
  %6645 = vmatpush2.xpose.msra.mxu0 0.0
  %6646 = vmatprep.subr.mxu0 0.0
  %6647 = vmatpush2.xpose.msra.mxu0 0.0
  %6648 = vmatprep.subr.mxu0 0.0
  %6649 = vmatpush2.xpose.msra.mxu0 0.0
  %6650 = vmatprep.subr.mxu0 0.0
  %6651 = vmatpush2.xpose.msra.mxu0 0.0
  %6652 = vmatprep.subr.mxu0 0.0
  %6653 = vmatpush2.xpose.msra.mxu0 0.0
  %6654 = vmatprep.subr.mxu0 0.0
  %6655 = vmatpush2.xpose.msra.mxu0 0.0
  %6656 = vmatprep.subr.mxu0 0.0
  %6657 = vmatpush2.xpose.msra.mxu0 0.0
  %6658 = vmatprep.subr.mxu0 0.0
  %6659 = vmatpush2.xpose.msra.mxu0 0.0
  %6660 = vmatprep.subr.mxu0 0.0
  %6661 = vmatpush2.xpose.msra.mxu0 0.0
  %6662 = vmatprep.subr.mxu0 0.0
  %6663 = vmatpush2.xpose.msra.mxu0 0.0
  %6664 = vmatprep.subr.mxu0 0.0
  %6665 = vmatpush2.xpose.msra.mxu0 0.0
  %6666 = vmatprep.subr.mxu0 0.0
  %6667 = vmatpush2.xpose.msra.mxu0 0.0
  %6668 = vmatprep.subr.mxu0 0.0
  %6669 = vmatpush2.xpose.msra.mxu0 0.0
  %6670 = vmatprep.subr.mxu0 0.0
  %6671 = vmatpush2.xpose.msra.mxu0 0.0
  %6672 = vmatprep.mubr.f32.mxu0 0.0
  %6673 = vmatmul.mubr.f32.gmra.mxu0 %v6604
  %v6674 = vpop.f32.mrf.mxu0
  %v6675 = vadd.f32 0.0, %v6674
  %v6676 = vpop.f32.mrf.mxu0
  %6677 = vdwg.mxu0
  %6679 = vrot.lane.b32.xlu0 %v6150, 120
  %v6680 = vpop.permute.xlu0 %6679
  %v6681 = vsel %vm680, %v6150, 0
  %v6683 = vsel %vm680, %v6680, 0
  %6685 = vmatprep.subr.mxu0 0.0
  %6686 = vmatpush1.xpose.msra.mxu0 0.0
  %6687 = vmatprep.subr.mxu0 0.0
  %6688 = vmatpush1.xpose.msra.mxu0 0.0
  %6689 = vmatprep.subr.mxu0 0.0
  %6690 = vmatpush1.xpose.msra.mxu0 0.0
  %6691 = vmatprep.subr.mxu0 0.0
  %6692 = vmatpush1.xpose.msra.mxu0 0.0
  %6693 = vmatprep.subr.mxu0 0.0
  %6694 = vmatpush1.xpose.msra.mxu0 0.0
  %6695 = vmatprep.subr.mxu0 0.0
  %6696 = vmatpush1.xpose.msra.mxu0 0.0
  %6697 = vmatprep.subr.mxu0 0.0
  %6698 = vmatpush1.xpose.msra.mxu0 0.0
  %6699 = vmatprep.subr.mxu0 0.0
  %6700 = vmatpush1.xpose.msra.mxu0 0.0
  %6701 = vmatprep.subr.mxu0 0.0
  %6702 = vmatpush1.xpose.msra.mxu0 0.0
  %6703 = vmatprep.subr.mxu0 0.0
  %6704 = vmatpush1.xpose.msra.mxu0 0.0
  %6705 = vmatprep.subr.mxu0 0.0
  %6706 = vmatpush1.xpose.msra.mxu0 0.0
  %6707 = vmatprep.subr.mxu0 0.0
  %6708 = vmatpush1.xpose.msra.mxu0 0.0
  %6709 = vmatprep.subr.mxu0 0.0
  %6710 = vmatpush1.xpose.msra.mxu0 0.0
  %6711 = vmatprep.subr.mxu0 0.0
  %6712 = vmatpush1.xpose.msra.mxu0 0.0
  %6713 = vmatprep.subr.mxu0 0.0
  %6714 = vmatpush1.xpose.msra.mxu0 0.0
  %6715 = vmatprep.subr.mxu0 0.0
  %6716 = vmatpush1.xpose.msra.mxu0 %v6683
  %6717 = vmatprep.subr.mxu0 0.0
  %6718 = vmatpush2.xpose.msra.mxu0 0.0
  %6719 = vmatprep.subr.mxu0 0.0
  %6720 = vmatpush2.xpose.msra.mxu0 0.0
  %6721 = vmatprep.subr.mxu0 0.0
  %6722 = vmatpush2.xpose.msra.mxu0 0.0
  %6723 = vmatprep.subr.mxu0 0.0
  %6724 = vmatpush2.xpose.msra.mxu0 0.0
  %6725 = vmatprep.subr.mxu0 0.0
  %6726 = vmatpush2.xpose.msra.mxu0 0.0
  %6727 = vmatprep.subr.mxu0 0.0
  %6728 = vmatpush2.xpose.msra.mxu0 0.0
  %6729 = vmatprep.subr.mxu0 0.0
  %6730 = vmatpush2.xpose.msra.mxu0 0.0
  %6731 = vmatprep.subr.mxu0 0.0
  %6732 = vmatpush2.xpose.msra.mxu0 0.0
  %6733 = vmatprep.subr.mxu0 0.0
  %6734 = vmatpush2.xpose.msra.mxu0 0.0
  %6735 = vmatprep.subr.mxu0 0.0
  %6736 = vmatpush2.xpose.msra.mxu0 0.0
  %6737 = vmatprep.subr.mxu0 0.0
  %6738 = vmatpush2.xpose.msra.mxu0 0.0
  %6739 = vmatprep.subr.mxu0 0.0
  %6740 = vmatpush2.xpose.msra.mxu0 0.0
  %6741 = vmatprep.subr.mxu0 0.0
  %6742 = vmatpush2.xpose.msra.mxu0 0.0
  %6743 = vmatprep.subr.mxu0 0.0
  %6744 = vmatpush2.xpose.msra.mxu0 0.0
  %6745 = vmatprep.subr.mxu0 0.0
  %6746 = vmatpush2.xpose.msra.mxu0 0.0
  %6747 = vmatprep.subr.mxu0 0.0
  %6748 = vmatpush2.xpose.msra.mxu0 0.0
  %6749 = vmatprep.mubr.f32.mxu0 0.0
  %6750 = vmatmul.mubr.f32.gmra.mxu0 %v6681
  %v6751 = vpop.f32.mrf.mxu0
  %v6752 = vadd.f32 0.0, %v6751
  %v6753 = vpop.f32.mrf.mxu0
  %6754 = vdwg.mxu0
  %6756 = vrot.lane.b32.xlu0 %v6220, 120
  %v6757 = vpop.permute.xlu0 %6756
  %v6758 = vsel %vm680, %v6220, 0
  %v6760 = vsel %vm680, %v6757, 0
  %6762 = vmatprep.subr.mxu0 0.0
  %6763 = vmatpush1.xpose.msra.mxu0 0.0
  %6764 = vmatprep.subr.mxu0 0.0
  %6765 = vmatpush1.xpose.msra.mxu0 0.0
  %6766 = vmatprep.subr.mxu0 0.0
  %6767 = vmatpush1.xpose.msra.mxu0 0.0
  %6768 = vmatprep.subr.mxu0 0.0
  %6769 = vmatpush1.xpose.msra.mxu0 0.0
  %6770 = vmatprep.subr.mxu0 0.0
  %6771 = vmatpush1.xpose.msra.mxu0 0.0
  %6772 = vmatprep.subr.mxu0 0.0
  %6773 = vmatpush1.xpose.msra.mxu0 0.0
  %6774 = vmatprep.subr.mxu0 0.0
  %6775 = vmatpush1.xpose.msra.mxu0 0.0
  %6776 = vmatprep.subr.mxu0 0.0
  %6777 = vmatpush1.xpose.msra.mxu0 0.0
  %6778 = vmatprep.subr.mxu0 0.0
  %6779 = vmatpush1.xpose.msra.mxu0 0.0
  %6780 = vmatprep.subr.mxu0 0.0
  %6781 = vmatpush1.xpose.msra.mxu0 0.0
  %6782 = vmatprep.subr.mxu0 0.0
  %6783 = vmatpush1.xpose.msra.mxu0 0.0
  %6784 = vmatprep.subr.mxu0 0.0
  %6785 = vmatpush1.xpose.msra.mxu0 0.0
  %6786 = vmatprep.subr.mxu0 0.0
  %6787 = vmatpush1.xpose.msra.mxu0 0.0
  %6788 = vmatprep.subr.mxu0 0.0
  %6789 = vmatpush1.xpose.msra.mxu0 0.0
  %6790 = vmatprep.subr.mxu0 0.0
  %6791 = vmatpush1.xpose.msra.mxu0 0.0
  %6792 = vmatprep.subr.mxu0 0.0
  %6793 = vmatpush1.xpose.msra.mxu0 %v6760
  %6794 = vmatprep.subr.mxu0 0.0
  %6795 = vmatpush2.xpose.msra.mxu0 0.0
  %6796 = vmatprep.subr.mxu0 0.0
  %6797 = vmatpush2.xpose.msra.mxu0 0.0
  %6798 = vmatprep.subr.mxu0 0.0
  %6799 = vmatpush2.xpose.msra.mxu0 0.0
  %6800 = vmatprep.subr.mxu0 0.0
  %6801 = vmatpush2.xpose.msra.mxu0 0.0
  %6802 = vmatprep.subr.mxu0 0.0
  %6803 = vmatpush2.xpose.msra.mxu0 0.0
  %6804 = vmatprep.subr.mxu0 0.0
  %6805 = vmatpush2.xpose.msra.mxu0 0.0
  %6806 = vmatprep.subr.mxu0 0.0
  %6807 = vmatpush2.xpose.msra.mxu0 0.0
  %6808 = vmatprep.subr.mxu0 0.0
  %6809 = vmatpush2.xpose.msra.mxu0 0.0
  %6810 = vmatprep.subr.mxu0 0.0
  %6811 = vmatpush2.xpose.msra.mxu0 0.0
  %6812 = vmatprep.subr.mxu0 0.0
  %6813 = vmatpush2.xpose.msra.mxu0 0.0
  %6814 = vmatprep.subr.mxu0 0.0
  %6815 = vmatpush2.xpose.msra.mxu0 0.0
  %6816 = vmatprep.subr.mxu0 0.0
  %6817 = vmatpush2.xpose.msra.mxu0 0.0
  %6818 = vmatprep.subr.mxu0 0.0
  %6819 = vmatpush2.xpose.msra.mxu0 0.0
  %6820 = vmatprep.subr.mxu0 0.0
  %6821 = vmatpush2.xpose.msra.mxu0 0.0
  %6822 = vmatprep.subr.mxu0 0.0
  %6823 = vmatpush2.xpose.msra.mxu0 0.0
  %6824 = vmatprep.subr.mxu0 0.0
  %6825 = vmatpush2.xpose.msra.mxu0 0.0
  %6826 = vmatprep.mubr.f32.mxu0 0.0
  %6827 = vmatmul.mubr.f32.gmra.mxu0 %v6758
  %v6828 = vpop.f32.mrf.mxu0
  %v6829 = vadd.f32 0.0, %v6828
  %v6830 = vpop.f32.mrf.mxu0
  %6831 = vdwg.mxu0
  %6833 = vrot.lane.b32.xlu0 %v6290, 120
  %v6834 = vpop.permute.xlu0 %6833
  %v6835 = vsel %vm680, %v6290, 0
  %v6837 = vsel %vm680, %v6834, 0
  %6839 = vmatprep.subr.mxu0 0.0
  %6840 = vmatpush1.xpose.msra.mxu0 0.0
  %6841 = vmatprep.subr.mxu0 0.0
  %6842 = vmatpush1.xpose.msra.mxu0 0.0
  %6843 = vmatprep.subr.mxu0 0.0
  %6844 = vmatpush1.xpose.msra.mxu0 0.0
  %6845 = vmatprep.subr.mxu0 0.0
  %6846 = vmatpush1.xpose.msra.mxu0 0.0
  %6847 = vmatprep.subr.mxu0 0.0
  %6848 = vmatpush1.xpose.msra.mxu0 0.0
  %6849 = vmatprep.subr.mxu0 0.0
  %6850 = vmatpush1.xpose.msra.mxu0 0.0
  %6851 = vmatprep.subr.mxu0 0.0
  %6852 = vmatpush1.xpose.msra.mxu0 0.0
  %6853 = vmatprep.subr.mxu0 0.0
  %6854 = vmatpush1.xpose.msra.mxu0 0.0
  %6855 = vmatprep.subr.mxu0 0.0
  %6856 = vmatpush1.xpose.msra.mxu0 0.0
  %6857 = vmatprep.subr.mxu0 0.0
  %6858 = vmatpush1.xpose.msra.mxu0 0.0
  %6859 = vmatprep.subr.mxu0 0.0
  %6860 = vmatpush1.xpose.msra.mxu0 0.0
  %6861 = vmatprep.subr.mxu0 0.0
  %6862 = vmatpush1.xpose.msra.mxu0 0.0
  %6863 = vmatprep.subr.mxu0 0.0
  %6864 = vmatpush1.xpose.msra.mxu0 0.0
  %6865 = vmatprep.subr.mxu0 0.0
  %6866 = vmatpush1.xpose.msra.mxu0 0.0
  %6867 = vmatprep.subr.mxu0 0.0
  %6868 = vmatpush1.xpose.msra.mxu0 0.0
  %6869 = vmatprep.subr.mxu0 0.0
  %6870 = vmatpush1.xpose.msra.mxu0 %v6837
  %6871 = vmatprep.subr.mxu0 0.0
  %6872 = vmatpush2.xpose.msra.mxu0 0.0
  %6873 = vmatprep.subr.mxu0 0.0
  %6874 = vmatpush2.xpose.msra.mxu0 0.0
  %6875 = vmatprep.subr.mxu0 0.0
  %6876 = vmatpush2.xpose.msra.mxu0 0.0
  %6877 = vmatprep.subr.mxu0 0.0
  %6878 = vmatpush2.xpose.msra.mxu0 0.0
  %6879 = vmatprep.subr.mxu0 0.0
  %6880 = vmatpush2.xpose.msra.mxu0 0.0
  %6881 = vmatprep.subr.mxu0 0.0
  %6882 = vmatpush2.xpose.msra.mxu0 0.0
  %6883 = vmatprep.subr.mxu0 0.0
  %6884 = vmatpush2.xpose.msra.mxu0 0.0
  %6885 = vmatprep.subr.mxu0 0.0
  %6886 = vmatpush2.xpose.msra.mxu0 0.0
  %6887 = vmatprep.subr.mxu0 0.0
  %6888 = vmatpush2.xpose.msra.mxu0 0.0
  %6889 = vmatprep.subr.mxu0 0.0
  %6890 = vmatpush2.xpose.msra.mxu0 0.0
  %6891 = vmatprep.subr.mxu0 0.0
  %6892 = vmatpush2.xpose.msra.mxu0 0.0
  %6893 = vmatprep.subr.mxu0 0.0
  %6894 = vmatpush2.xpose.msra.mxu0 0.0
  %6895 = vmatprep.subr.mxu0 0.0
  %6896 = vmatpush2.xpose.msra.mxu0 0.0
  %6897 = vmatprep.subr.mxu0 0.0
  %6898 = vmatpush2.xpose.msra.mxu0 0.0
  %6899 = vmatprep.subr.mxu0 0.0
  %6900 = vmatpush2.xpose.msra.mxu0 0.0
  %6901 = vmatprep.subr.mxu0 0.0
  %6902 = vmatpush2.xpose.msra.mxu0 0.0
  %6903 = vmatprep.mubr.f32.mxu0 0.0
  %6904 = vmatmul.mubr.f32.gmra.mxu0 %v6835
  %v6905 = vpop.f32.mrf.mxu0
  %v6906 = vadd.f32 0.0, %v6905
  %v6907 = vpop.f32.mrf.mxu0
  %6908 = vdwg.mxu0
  %v6909 = vmul.f32 %v6367, 0.35355338
  %v6910 = vmul.f32 %v6444, 0.35355338
  %v6911 = vmul.f32 %v6521, 0.35355338
  %v6912 = vmul.f32 %v6598, 0.35355338
  %v6913 = vmul.f32 %v6675, 0.35355338
  %v6914 = vmul.f32 %v6752, 0.35355338
  %v6915 = vmul.f32 %v6829, 0.35355338
  %v6916 = vmul.f32 %v6906, 0.35355338
  %v6917 = vsel %vm680, %v6909, -inf
  %6918 = vmax.xlane.f32.xlu0 %v6917
  %v6919 = vpop.xlane.xlu0 %6918
  %v6920 = vsel %vm680, %v6910, -inf
  %6921 = vmax.xlane.f32.xlu0 %v6920
  %v6922 = vpop.xlane.xlu0 %6921
  %v6923 = vsel %vm680, %v6911, -inf
  %6924 = vmax.xlane.f32.xlu0 %v6923
  %v6925 = vpop.xlane.xlu0 %6924
  %v6926 = vsel %vm680, %v6912, -inf
  %6927 = vmax.xlane.f32.xlu0 %v6926
  %v6928 = vpop.xlane.xlu0 %6927
  %v6929 = vsel %vm680, %v6913, -inf
  %6930 = vmax.xlane.f32.xlu0 %v6929
  %v6931 = vpop.xlane.xlu0 %6930
  %v6932 = vsel %vm680, %v6914, -inf
  %6933 = vmax.xlane.f32.xlu0 %v6932
  %v6934 = vpop.xlane.xlu0 %6933
  %v6935 = vsel %vm680, %v6915, -inf
  %6936 = vmax.xlane.f32.xlu0 %v6935
  %v6937 = vpop.xlane.xlu0 %6936
  %v6938 = vsel %vm680, %v6916, -inf
  %6939 = vmax.xlane.f32.xlu0 %v6938
  %v6940 = vpop.xlane.xlu0 %6939
  %v6941 = vsub.f32 %v6909, %v6919
  %v6942 = vsub.f32 %v6910, %v6922
  %v6943 = vsub.f32 %v6911, %v6925
  %v6944 = vsub.f32 %v6912, %v6928
  %v6945 = vsub.f32 %v6913, %v6931
  %v6946 = vsub.f32 %v6914, %v6934
  %v6947 = vsub.f32 %v6915, %v6937
  %v6948 = vsub.f32 %v6916, %v6940
  %v6949 = vmul.f32 %v6941, 1.442695
  %v6950 = vpow.pop %v6949
  %v6951 = vmul.f32 %v6942, 1.442695
  %v6952 = vpow.pop %v6951
  %v6953 = vmul.f32 %v6943, 1.442695
  %v6954 = vpow.pop %v6953
  %v6955 = vmul.f32 %v6944, 1.442695
  %v6956 = vpow.pop %v6955
  %v6957 = vmul.f32 %v6945, 1.442695
  %v6958 = vpow.pop %v6957
  %v6959 = vmul.f32 %v6946, 1.442695
  %v6960 = vpow.pop %v6959
  %v6961 = vmul.f32 %v6947, 1.442695
  %v6962 = vpow.pop %v6961
  %v6963 = vmul.f32 %v6948, 1.442695
  %v6964 = vpow.pop %v6963
  %v6965 = vsel %vm680, %v6950, 0.0
  %6966 = vadd.xlane.f32.xlu0 %v6965
  %v6967 = vpop.xlane.xlu0 %6966
  %v6968 = vsel %vm680, %v6952, 0.0
  %6969 = vadd.xlane.f32.xlu0 %v6968
  %v6970 = vpop.xlane.xlu0 %6969
  %v6971 = vsel %vm680, %v6954, 0.0
  %6972 = vadd.xlane.f32.xlu0 %v6971
  %v6973 = vpop.xlane.xlu0 %6972
  %v6974 = vsel %vm680, %v6956, 0.0
  %6975 = vadd.xlane.f32.xlu0 %v6974
  %v6976 = vpop.xlane.xlu0 %6975
  %v6977 = vsel %vm680, %v6958, 0.0
  %6978 = vadd.xlane.f32.xlu0 %v6977
  %v6979 = vpop.xlane.xlu0 %6978
  %v6980 = vsel %vm680, %v6960, 0.0
  %6981 = vadd.xlane.f32.xlu0 %v6980
  %v6982 = vpop.xlane.xlu0 %6981
  %v6983 = vsel %vm680, %v6962, 0.0
  %6984 = vadd.xlane.f32.xlu0 %v6983
  %v6985 = vpop.xlane.xlu0 %6984
  %v6986 = vsel %vm680, %v6964, 0.0
  %6987 = vadd.xlane.f32.xlu0 %v6986
  %v6988 = vpop.xlane.xlu0 %6987
  %v6989 = vrcp.pop %v6967
  %v6990 = vrcp.pop %v6970
  %v6991 = vrcp.pop %v6973
  %v6992 = vrcp.pop %v6976
  %v6993 = vrcp.pop %v6979
  %v6994 = vrcp.pop %v6982
  %v6995 = vrcp.pop %v6985
  %v6996 = vrcp.pop %v6988
  %v6997 = vmul.f32 %v6950, %v6989
  %v6998 = vmul.f32 %v6952, %v6990
  %v6999 = vmul.f32 %v6954, %v6991
  %v7000 = vmul.f32 %v6956, %v6992
  %v7001 = vmul.f32 %v6958, %v6993
  %v7002 = vmul.f32 %v6960, %v6994
  %v7003 = vmul.f32 %v6962, %v6995
  %v7004 = vmul.f32 %v6964, %v6996
  %7005 = vrot.lane.b32.xlu0 %v5797, 112
  %v7006 = vpop.permute.xlu0 %7005
  %7008 = vxpose.xlu0.b32.start [1/16] %v7006, 128
  %7009 = vxpose.xlu0.b32.cont [2/16] 0.0, 128
  %7010 = vxpose.xlu0.b32.cont [3/16] 0.0, 128
  %7011 = vxpose.xlu0.b32.cont [4/16] 0.0, 128
  %7012 = vxpose.xlu0.b32.cont [5/16] 0.0, 128
  %7013 = vxpose.xlu0.b32.cont [6/16] 0.0, 128
  %7014 = vxpose.xlu0.b32.cont [7/16] 0.0, 128
  %7015 = vxpose.xlu0.b32.cont [8/16] 0.0, 128
  %7016 = vxpose.xlu0.b32.cont [9/16] 0.0, 128
  %7017 = vxpose.xlu0.b32.cont [10/16] 0.0, 128
  %7018 = vxpose.xlu0.b32.cont [11/16] 0.0, 128
  %7019 = vxpose.xlu0.b32.cont [12/16] 0.0, 128
  %7020 = vxpose.xlu0.b32.cont [13/16] 0.0, 128
  %7021 = vxpose.xlu0.b32.cont [14/16] 0.0, 128
  %7022 = vxpose.xlu0.b32.cont [15/16] 0.0, 128
  %7023 = vxpose.xlu0.b32.end [16/16] 0.0, 128
  %v7024 = vpop.trf.xlu0
  %v7025 = vpop.trf.xlu0
  %v7026 = vpop.trf.xlu0
  %v7027 = vpop.trf.xlu0
  %v7028 = vpop.trf.xlu0
  %v7029 = vpop.trf.xlu0
  %v7030 = vpop.trf.xlu0
  %v7031 = vpop.trf.xlu0
  %v7032 = vpop.trf.xlu0
  %v7033 = vpop.trf.xlu0
  %v7034 = vpop.trf.xlu0
  %v7035 = vpop.trf.xlu0
  %v7036 = vpop.trf.xlu0
  %v7037 = vpop.trf.xlu0
  %v7038 = vpop.trf.xlu0
  %v7039 = vpop.trf.xlu0
  %v7041 = vsel %vm680, %v7024, 0
  %v7044 = vsel %vm680, %v6997, 0
  %7046 = vmatprep.subr.mxu0 0.0
  %7047 = vmatpush1.xpose.msra.mxu0 0.0
  %7048 = vmatprep.subr.mxu0 0.0
  %7049 = vmatpush1.xpose.msra.mxu0 0.0
  %7050 = vmatprep.subr.mxu0 0.0
  %7051 = vmatpush1.xpose.msra.mxu0 0.0
  %7052 = vmatprep.subr.mxu0 0.0
  %7053 = vmatpush1.xpose.msra.mxu0 0.0
  %7054 = vmatprep.subr.mxu0 0.0
  %7055 = vmatpush1.xpose.msra.mxu0 0.0
  %7056 = vmatprep.subr.mxu0 0.0
  %7057 = vmatpush1.xpose.msra.mxu0 0.0
  %7058 = vmatprep.subr.mxu0 0.0
  %7059 = vmatpush1.xpose.msra.mxu0 0.0
  %7060 = vmatprep.subr.mxu0 0.0
  %7061 = vmatpush1.xpose.msra.mxu0 0.0
  %7062 = vmatprep.subr.mxu0 0.0
  %7063 = vmatpush1.xpose.msra.mxu0 0.0
  %7064 = vmatprep.subr.mxu0 0.0
  %7065 = vmatpush1.xpose.msra.mxu0 0.0
  %7066 = vmatprep.subr.mxu0 0.0
  %7067 = vmatpush1.xpose.msra.mxu0 0.0
  %7068 = vmatprep.subr.mxu0 0.0
  %7069 = vmatpush1.xpose.msra.mxu0 0.0
  %7070 = vmatprep.subr.mxu0 0.0
  %7071 = vmatpush1.xpose.msra.mxu0 0.0
  %7072 = vmatprep.subr.mxu0 0.0
  %7073 = vmatpush1.xpose.msra.mxu0 0.0
  %7074 = vmatprep.subr.mxu0 0.0
  %7075 = vmatpush1.xpose.msra.mxu0 0.0
  %7076 = vmatprep.subr.mxu0 0.0
  %7077 = vmatpush1.xpose.msra.mxu0 %v7044
  %7078 = vmatprep.subr.mxu0 0.0
  %7079 = vmatpush2.xpose.msra.mxu0 0.0
  %7080 = vmatprep.subr.mxu0 0.0
  %7081 = vmatpush2.xpose.msra.mxu0 0.0
  %7082 = vmatprep.subr.mxu0 0.0
  %7083 = vmatpush2.xpose.msra.mxu0 0.0
  %7084 = vmatprep.subr.mxu0 0.0
  %7085 = vmatpush2.xpose.msra.mxu0 0.0
  %7086 = vmatprep.subr.mxu0 0.0
  %7087 = vmatpush2.xpose.msra.mxu0 0.0
  %7088 = vmatprep.subr.mxu0 0.0
  %7089 = vmatpush2.xpose.msra.mxu0 0.0
  %7090 = vmatprep.subr.mxu0 0.0
  %7091 = vmatpush2.xpose.msra.mxu0 0.0
  %7092 = vmatprep.subr.mxu0 0.0
  %7093 = vmatpush2.xpose.msra.mxu0 0.0
  %7094 = vmatprep.subr.mxu0 0.0
  %7095 = vmatpush2.xpose.msra.mxu0 0.0
  %7096 = vmatprep.subr.mxu0 0.0
  %7097 = vmatpush2.xpose.msra.mxu0 0.0
  %7098 = vmatprep.subr.mxu0 0.0
  %7099 = vmatpush2.xpose.msra.mxu0 0.0
  %7100 = vmatprep.subr.mxu0 0.0
  %7101 = vmatpush2.xpose.msra.mxu0 0.0
  %7102 = vmatprep.subr.mxu0 0.0
  %7103 = vmatpush2.xpose.msra.mxu0 0.0
  %7104 = vmatprep.subr.mxu0 0.0
  %7105 = vmatpush2.xpose.msra.mxu0 0.0
  %7106 = vmatprep.subr.mxu0 0.0
  %7107 = vmatpush2.xpose.msra.mxu0 0.0
  %7108 = vmatprep.subr.mxu0 0.0
  %7109 = vmatpush2.xpose.msra.mxu0 0.0
  %7110 = vmatprep.mubr.f32.mxu0 0.0
  %7111 = vmatmul.mubr.f32.gmra.mxu0 %v7041
  %v7112 = vpop.f32.mrf.mxu0
  %v7113 = vadd.f32 0.0, %v7112
  %v7114 = vpop.f32.mrf.mxu0
  %7115 = vdwg.mxu0
  %7116 = vrot.lane.b32.xlu0 %v5867, 112
  %v7117 = vpop.permute.xlu0 %7116
  %7119 = vxpose.xlu0.b32.start [1/16] %v7117, 128
  %7120 = vxpose.xlu0.b32.cont [2/16] 0.0, 128
  %7121 = vxpose.xlu0.b32.cont [3/16] 0.0, 128
  %7122 = vxpose.xlu0.b32.cont [4/16] 0.0, 128
  %7123 = vxpose.xlu0.b32.cont [5/16] 0.0, 128
  %7124 = vxpose.xlu0.b32.cont [6/16] 0.0, 128
  %7125 = vxpose.xlu0.b32.cont [7/16] 0.0, 128
  %7126 = vxpose.xlu0.b32.cont [8/16] 0.0, 128
  %7127 = vxpose.xlu0.b32.cont [9/16] 0.0, 128
  %7128 = vxpose.xlu0.b32.cont [10/16] 0.0, 128
  %7129 = vxpose.xlu0.b32.cont [11/16] 0.0, 128
  %7130 = vxpose.xlu0.b32.cont [12/16] 0.0, 128
  %7131 = vxpose.xlu0.b32.cont [13/16] 0.0, 128
  %7132 = vxpose.xlu0.b32.cont [14/16] 0.0, 128
  %7133 = vxpose.xlu0.b32.cont [15/16] 0.0, 128
  %7134 = vxpose.xlu0.b32.end [16/16] 0.0, 128
  %v7135 = vpop.trf.xlu0
  %v7136 = vpop.trf.xlu0
  %v7137 = vpop.trf.xlu0
  %v7138 = vpop.trf.xlu0
  %v7139 = vpop.trf.xlu0
  %v7140 = vpop.trf.xlu0
  %v7141 = vpop.trf.xlu0
  %v7142 = vpop.trf.xlu0
  %v7143 = vpop.trf.xlu0
  %v7144 = vpop.trf.xlu0
  %v7145 = vpop.trf.xlu0
  %v7146 = vpop.trf.xlu0
  %v7147 = vpop.trf.xlu0
  %v7148 = vpop.trf.xlu0
  %v7149 = vpop.trf.xlu0
  %v7150 = vpop.trf.xlu0
  %v7152 = vsel %vm680, %v7135, 0
  %v7155 = vsel %vm680, %v6998, 0
  %7157 = vmatprep.subr.mxu0 0.0
  %7158 = vmatpush1.xpose.msra.mxu0 0.0
  %7159 = vmatprep.subr.mxu0 0.0
  %7160 = vmatpush1.xpose.msra.mxu0 0.0
  %7161 = vmatprep.subr.mxu0 0.0
  %7162 = vmatpush1.xpose.msra.mxu0 0.0
  %7163 = vmatprep.subr.mxu0 0.0
  %7164 = vmatpush1.xpose.msra.mxu0 0.0
  %7165 = vmatprep.subr.mxu0 0.0
  %7166 = vmatpush1.xpose.msra.mxu0 0.0
  %7167 = vmatprep.subr.mxu0 0.0
  %7168 = vmatpush1.xpose.msra.mxu0 0.0
  %7169 = vmatprep.subr.mxu0 0.0
  %7170 = vmatpush1.xpose.msra.mxu0 0.0
  %7171 = vmatprep.subr.mxu0 0.0
  %7172 = vmatpush1.xpose.msra.mxu0 0.0
  %7173 = vmatprep.subr.mxu0 0.0
  %7174 = vmatpush1.xpose.msra.mxu0 0.0
  %7175 = vmatprep.subr.mxu0 0.0
  %7176 = vmatpush1.xpose.msra.mxu0 0.0
  %7177 = vmatprep.subr.mxu0 0.0
  %7178 = vmatpush1.xpose.msra.mxu0 0.0
  %7179 = vmatprep.subr.mxu0 0.0
  %7180 = vmatpush1.xpose.msra.mxu0 0.0
  %7181 = vmatprep.subr.mxu0 0.0
  %7182 = vmatpush1.xpose.msra.mxu0 0.0
  %7183 = vmatprep.subr.mxu0 0.0
  %7184 = vmatpush1.xpose.msra.mxu0 0.0
  %7185 = vmatprep.subr.mxu0 0.0
  %7186 = vmatpush1.xpose.msra.mxu0 0.0
  %7187 = vmatprep.subr.mxu0 0.0
  %7188 = vmatpush1.xpose.msra.mxu0 %v7155
  %7189 = vmatprep.subr.mxu0 0.0
  %7190 = vmatpush2.xpose.msra.mxu0 0.0
  %7191 = vmatprep.subr.mxu0 0.0
  %7192 = vmatpush2.xpose.msra.mxu0 0.0
  %7193 = vmatprep.subr.mxu0 0.0
  %7194 = vmatpush2.xpose.msra.mxu0 0.0
  %7195 = vmatprep.subr.mxu0 0.0
  %7196 = vmatpush2.xpose.msra.mxu0 0.0
  %7197 = vmatprep.subr.mxu0 0.0
  %7198 = vmatpush2.xpose.msra.mxu0 0.0
  %7199 = vmatprep.subr.mxu0 0.0
  %7200 = vmatpush2.xpose.msra.mxu0 0.0
  %7201 = vmatprep.subr.mxu0 0.0
  %7202 = vmatpush2.xpose.msra.mxu0 0.0
  %7203 = vmatprep.subr.mxu0 0.0
  %7204 = vmatpush2.xpose.msra.mxu0 0.0
  %7205 = vmatprep.subr.mxu0 0.0
  %7206 = vmatpush2.xpose.msra.mxu0 0.0
  %7207 = vmatprep.subr.mxu0 0.0
  %7208 = vmatpush2.xpose.msra.mxu0 0.0
  %7209 = vmatprep.subr.mxu0 0.0
  %7210 = vmatpush2.xpose.msra.mxu0 0.0
  %7211 = vmatprep.subr.mxu0 0.0
  %7212 = vmatpush2.xpose.msra.mxu0 0.0
  %7213 = vmatprep.subr.mxu0 0.0
  %7214 = vmatpush2.xpose.msra.mxu0 0.0
  %7215 = vmatprep.subr.mxu0 0.0
  %7216 = vmatpush2.xpose.msra.mxu0 0.0
  %7217 = vmatprep.subr.mxu0 0.0
  %7218 = vmatpush2.xpose.msra.mxu0 0.0
  %7219 = vmatprep.subr.mxu0 0.0
  %7220 = vmatpush2.xpose.msra.mxu0 0.0
  %7221 = vmatprep.mubr.f32.mxu0 0.0
  %7222 = vmatmul.mubr.f32.gmra.mxu0 %v7152
  %v7223 = vpop.f32.mrf.mxu0
  %v7224 = vadd.f32 0.0, %v7223
  %v7225 = vpop.f32.mrf.mxu0
  %7226 = vdwg.mxu0
  %7227 = vrot.lane.b32.xlu0 %v5937, 112
  %v7228 = vpop.permute.xlu0 %7227
  %7230 = vxpose.xlu0.b32.start [1/16] %v7228, 128
  %7231 = vxpose.xlu0.b32.cont [2/16] 0.0, 128
  %7232 = vxpose.xlu0.b32.cont [3/16] 0.0, 128
  %7233 = vxpose.xlu0.b32.cont [4/16] 0.0, 128
  %7234 = vxpose.xlu0.b32.cont [5/16] 0.0, 128
  %7235 = vxpose.xlu0.b32.cont [6/16] 0.0, 128
  %7236 = vxpose.xlu0.b32.cont [7/16] 0.0, 128
  %7237 = vxpose.xlu0.b32.cont [8/16] 0.0, 128
  %7238 = vxpose.xlu0.b32.cont [9/16] 0.0, 128
  %7239 = vxpose.xlu0.b32.cont [10/16] 0.0, 128
  %7240 = vxpose.xlu0.b32.cont [11/16] 0.0, 128
  %7241 = vxpose.xlu0.b32.cont [12/16] 0.0, 128
  %7242 = vxpose.xlu0.b32.cont [13/16] 0.0, 128
  %7243 = vxpose.xlu0.b32.cont [14/16] 0.0, 128
  %7244 = vxpose.xlu0.b32.cont [15/16] 0.0, 128
  %7245 = vxpose.xlu0.b32.end [16/16] 0.0, 128
  %v7246 = vpop.trf.xlu0
  %v7247 = vpop.trf.xlu0
  %v7248 = vpop.trf.xlu0
  %v7249 = vpop.trf.xlu0
  %v7250 = vpop.trf.xlu0
  %v7251 = vpop.trf.xlu0
  %v7252 = vpop.trf.xlu0
  %v7253 = vpop.trf.xlu0
  %v7254 = vpop.trf.xlu0
  %v7255 = vpop.trf.xlu0
  %v7256 = vpop.trf.xlu0
  %v7257 = vpop.trf.xlu0
  %v7258 = vpop.trf.xlu0
  %v7259 = vpop.trf.xlu0
  %v7260 = vpop.trf.xlu0
  %v7261 = vpop.trf.xlu0
  %v7263 = vsel %vm680, %v7246, 0
  %v7266 = vsel %vm680, %v6999, 0
  %7268 = vmatprep.subr.mxu0 0.0
  %7269 = vmatpush1.xpose.msra.mxu0 0.0
  %7270 = vmatprep.subr.mxu0 0.0
  %7271 = vmatpush1.xpose.msra.mxu0 0.0
  %7272 = vmatprep.subr.mxu0 0.0
  %7273 = vmatpush1.xpose.msra.mxu0 0.0
  %7274 = vmatprep.subr.mxu0 0.0
  %7275 = vmatpush1.xpose.msra.mxu0 0.0
  %7276 = vmatprep.subr.mxu0 0.0
  %7277 = vmatpush1.xpose.msra.mxu0 0.0
  %7278 = vmatprep.subr.mxu0 0.0
  %7279 = vmatpush1.xpose.msra.mxu0 0.0
  %7280 = vmatprep.subr.mxu0 0.0
  %7281 = vmatpush1.xpose.msra.mxu0 0.0
  %7282 = vmatprep.subr.mxu0 0.0
  %7283 = vmatpush1.xpose.msra.mxu0 0.0
  %7284 = vmatprep.subr.mxu0 0.0
  %7285 = vmatpush1.xpose.msra.mxu0 0.0
  %7286 = vmatprep.subr.mxu0 0.0
  %7287 = vmatpush1.xpose.msra.mxu0 0.0
  %7288 = vmatprep.subr.mxu0 0.0
  %7289 = vmatpush1.xpose.msra.mxu0 0.0
  %7290 = vmatprep.subr.mxu0 0.0
  %7291 = vmatpush1.xpose.msra.mxu0 0.0
  %7292 = vmatprep.subr.mxu0 0.0
  %7293 = vmatpush1.xpose.msra.mxu0 0.0
  %7294 = vmatprep.subr.mxu0 0.0
  %7295 = vmatpush1.xpose.msra.mxu0 0.0
  %7296 = vmatprep.subr.mxu0 0.0
  %7297 = vmatpush1.xpose.msra.mxu0 0.0
  %7298 = vmatprep.subr.mxu0 0.0
  %7299 = vmatpush1.xpose.msra.mxu0 %v7266
  %7300 = vmatprep.subr.mxu0 0.0
  %7301 = vmatpush2.xpose.msra.mxu0 0.0
  %7302 = vmatprep.subr.mxu0 0.0
  %7303 = vmatpush2.xpose.msra.mxu0 0.0
  %7304 = vmatprep.subr.mxu0 0.0
  %7305 = vmatpush2.xpose.msra.mxu0 0.0
  %7306 = vmatprep.subr.mxu0 0.0
  %7307 = vmatpush2.xpose.msra.mxu0 0.0
  %7308 = vmatprep.subr.mxu0 0.0
  %7309 = vmatpush2.xpose.msra.mxu0 0.0
  %7310 = vmatprep.subr.mxu0 0.0
  %7311 = vmatpush2.xpose.msra.mxu0 0.0
  %7312 = vmatprep.subr.mxu0 0.0
  %7313 = vmatpush2.xpose.msra.mxu0 0.0
  %7314 = vmatprep.subr.mxu0 0.0
  %7315 = vmatpush2.xpose.msra.mxu0 0.0
  %7316 = vmatprep.subr.mxu0 0.0
  %7317 = vmatpush2.xpose.msra.mxu0 0.0
  %7318 = vmatprep.subr.mxu0 0.0
  %7319 = vmatpush2.xpose.msra.mxu0 0.0
  %7320 = vmatprep.subr.mxu0 0.0
  %7321 = vmatpush2.xpose.msra.mxu0 0.0
  %7322 = vmatprep.subr.mxu0 0.0
  %7323 = vmatpush2.xpose.msra.mxu0 0.0
  %7324 = vmatprep.subr.mxu0 0.0
  %7325 = vmatpush2.xpose.msra.mxu0 0.0
  %7326 = vmatprep.subr.mxu0 0.0
  %7327 = vmatpush2.xpose.msra.mxu0 0.0
  %7328 = vmatprep.subr.mxu0 0.0
  %7329 = vmatpush2.xpose.msra.mxu0 0.0
  %7330 = vmatprep.subr.mxu0 0.0
  %7331 = vmatpush2.xpose.msra.mxu0 0.0
  %7332 = vmatprep.mubr.f32.mxu0 0.0
  %7333 = vmatmul.mubr.f32.gmra.mxu0 %v7263
  %v7334 = vpop.f32.mrf.mxu0
  %v7335 = vadd.f32 0.0, %v7334
  %v7336 = vpop.f32.mrf.mxu0
  %7337 = vdwg.mxu0
  %7338 = vrot.lane.b32.xlu0 %v6007, 112
  %v7339 = vpop.permute.xlu0 %7338
  %7341 = vxpose.xlu0.b32.start [1/16] %v7339, 128
  %7342 = vxpose.xlu0.b32.cont [2/16] 0.0, 128
  %7343 = vxpose.xlu0.b32.cont [3/16] 0.0, 128
  %7344 = vxpose.xlu0.b32.cont [4/16] 0.0, 128
  %7345 = vxpose.xlu0.b32.cont [5/16] 0.0, 128
  %7346 = vxpose.xlu0.b32.cont [6/16] 0.0, 128
  %7347 = vxpose.xlu0.b32.cont [7/16] 0.0, 128
  %7348 = vxpose.xlu0.b32.cont [8/16] 0.0, 128
  %7349 = vxpose.xlu0.b32.cont [9/16] 0.0, 128
  %7350 = vxpose.xlu0.b32.cont [10/16] 0.0, 128
  %7351 = vxpose.xlu0.b32.cont [11/16] 0.0, 128
  %7352 = vxpose.xlu0.b32.cont [12/16] 0.0, 128
  %7353 = vxpose.xlu0.b32.cont [13/16] 0.0, 128
  %7354 = vxpose.xlu0.b32.cont [14/16] 0.0, 128
  %7355 = vxpose.xlu0.b32.cont [15/16] 0.0, 128
  %7356 = vxpose.xlu0.b32.end [16/16] 0.0, 128
  %v7357 = vpop.trf.xlu0
  %v7358 = vpop.trf.xlu0
  %v7359 = vpop.trf.xlu0
  %v7360 = vpop.trf.xlu0
  %v7361 = vpop.trf.xlu0
  %v7362 = vpop.trf.xlu0
  %v7363 = vpop.trf.xlu0
  %v7364 = vpop.trf.xlu0
  %v7365 = vpop.trf.xlu0
  %v7366 = vpop.trf.xlu0
  %v7367 = vpop.trf.xlu0
  %v7368 = vpop.trf.xlu0
  %v7369 = vpop.trf.xlu0
  %v7370 = vpop.trf.xlu0
  %v7371 = vpop.trf.xlu0
  %v7372 = vpop.trf.xlu0
  %v7374 = vsel %vm680, %v7357, 0
  %v7377 = vsel %vm680, %v7000, 0
  %7379 = vmatprep.subr.mxu0 0.0
  %7380 = vmatpush1.xpose.msra.mxu0 0.0
  %7381 = vmatprep.subr.mxu0 0.0
  %7382 = vmatpush1.xpose.msra.mxu0 0.0
  %7383 = vmatprep.subr.mxu0 0.0
  %7384 = vmatpush1.xpose.msra.mxu0 0.0
  %7385 = vmatprep.subr.mxu0 0.0
  %7386 = vmatpush1.xpose.msra.mxu0 0.0
  %7387 = vmatprep.subr.mxu0 0.0
  %7388 = vmatpush1.xpose.msra.mxu0 0.0
  %7389 = vmatprep.subr.mxu0 0.0
  %7390 = vmatpush1.xpose.msra.mxu0 0.0
  %7391 = vmatprep.subr.mxu0 0.0
  %7392 = vmatpush1.xpose.msra.mxu0 0.0
  %7393 = vmatprep.subr.mxu0 0.0
  %7394 = vmatpush1.xpose.msra.mxu0 0.0
  %7395 = vmatprep.subr.mxu0 0.0
  %7396 = vmatpush1.xpose.msra.mxu0 0.0
  %7397 = vmatprep.subr.mxu0 0.0
  %7398 = vmatpush1.xpose.msra.mxu0 0.0
  %7399 = vmatprep.subr.mxu0 0.0
  %7400 = vmatpush1.xpose.msra.mxu0 0.0
  %7401 = vmatprep.subr.mxu0 0.0
  %7402 = vmatpush1.xpose.msra.mxu0 0.0
  %7403 = vmatprep.subr.mxu0 0.0
  %7404 = vmatpush1.xpose.msra.mxu0 0.0
  %7405 = vmatprep.subr.mxu0 0.0
  %7406 = vmatpush1.xpose.msra.mxu0 0.0
  %7407 = vmatprep.subr.mxu0 0.0
  %7408 = vmatpush1.xpose.msra.mxu0 0.0
  %7409 = vmatprep.subr.mxu0 0.0
  %7410 = vmatpush1.xpose.msra.mxu0 %v7377
  %7411 = vmatprep.subr.mxu0 0.0
  %7412 = vmatpush2.xpose.msra.mxu0 0.0
  %7413 = vmatprep.subr.mxu0 0.0
  %7414 = vmatpush2.xpose.msra.mxu0 0.0
  %7415 = vmatprep.subr.mxu0 0.0
  %7416 = vmatpush2.xpose.msra.mxu0 0.0
  %7417 = vmatprep.subr.mxu0 0.0
  %7418 = vmatpush2.xpose.msra.mxu0 0.0
  %7419 = vmatprep.subr.mxu0 0.0
  %7420 = vmatpush2.xpose.msra.mxu0 0.0
  %7421 = vmatprep.subr.mxu0 0.0
  %7422 = vmatpush2.xpose.msra.mxu0 0.0
  %7423 = vmatprep.subr.mxu0 0.0
  %7424 = vmatpush2.xpose.msra.mxu0 0.0
  %7425 = vmatprep.subr.mxu0 0.0
  %7426 = vmatpush2.xpose.msra.mxu0 0.0
  %7427 = vmatprep.subr.mxu0 0.0
  %7428 = vmatpush2.xpose.msra.mxu0 0.0
  %7429 = vmatprep.subr.mxu0 0.0
  %7430 = vmatpush2.xpose.msra.mxu0 0.0
  %7431 = vmatprep.subr.mxu0 0.0
  %7432 = vmatpush2.xpose.msra.mxu0 0.0
  %7433 = vmatprep.subr.mxu0 0.0
  %7434 = vmatpush2.xpose.msra.mxu0 0.0
  %7435 = vmatprep.subr.mxu0 0.0
  %7436 = vmatpush2.xpose.msra.mxu0 0.0
  %7437 = vmatprep.subr.mxu0 0.0
  %7438 = vmatpush2.xpose.msra.mxu0 0.0
  %7439 = vmatprep.subr.mxu0 0.0
  %7440 = vmatpush2.xpose.msra.mxu0 0.0
  %7441 = vmatprep.subr.mxu0 0.0
  %7442 = vmatpush2.xpose.msra.mxu0 0.0
  %7443 = vmatprep.mubr.f32.mxu0 0.0
  %7444 = vmatmul.mubr.f32.gmra.mxu0 %v7374
  %v7445 = vpop.f32.mrf.mxu0
  %v7446 = vadd.f32 0.0, %v7445
  %v7447 = vpop.f32.mrf.mxu0
  %7448 = vdwg.mxu0
  %7449 = vrot.lane.b32.xlu0 %v6080, 112
  %v7450 = vpop.permute.xlu0 %7449
  %7452 = vxpose.xlu0.b32.start [1/16] %v7450, 128
  %7453 = vxpose.xlu0.b32.cont [2/16] 0.0, 128
  %7454 = vxpose.xlu0.b32.cont [3/16] 0.0, 128
  %7455 = vxpose.xlu0.b32.cont [4/16] 0.0, 128
  %7456 = vxpose.xlu0.b32.cont [5/16] 0.0, 128
  %7457 = vxpose.xlu0.b32.cont [6/16] 0.0, 128
  %7458 = vxpose.xlu0.b32.cont [7/16] 0.0, 128
  %7459 = vxpose.xlu0.b32.cont [8/16] 0.0, 128
  %7460 = vxpose.xlu0.b32.cont [9/16] 0.0, 128
  %7461 = vxpose.xlu0.b32.cont [10/16] 0.0, 128
  %7462 = vxpose.xlu0.b32.cont [11/16] 0.0, 128
  %7463 = vxpose.xlu0.b32.cont [12/16] 0.0, 128
  %7464 = vxpose.xlu0.b32.cont [13/16] 0.0, 128
  %7465 = vxpose.xlu0.b32.cont [14/16] 0.0, 128
  %7466 = vxpose.xlu0.b32.cont [15/16] 0.0, 128
  %7467 = vxpose.xlu0.b32.end [16/16] 0.0, 128
  %v7468 = vpop.trf.xlu0
  %v7469 = vpop.trf.xlu0
  %v7470 = vpop.trf.xlu0
  %v7471 = vpop.trf.xlu0
  %v7472 = vpop.trf.xlu0
  %v7473 = vpop.trf.xlu0
  %v7474 = vpop.trf.xlu0
  %v7475 = vpop.trf.xlu0
  %v7476 = vpop.trf.xlu0
  %v7477 = vpop.trf.xlu0
  %v7478 = vpop.trf.xlu0
  %v7479 = vpop.trf.xlu0
  %v7480 = vpop.trf.xlu0
  %v7481 = vpop.trf.xlu0
  %v7482 = vpop.trf.xlu0
  %v7483 = vpop.trf.xlu0
  %v7485 = vsel %vm680, %v7468, 0
  %v7488 = vsel %vm680, %v7001, 0
  %7490 = vmatprep.subr.mxu0 0.0
  %7491 = vmatpush1.xpose.msra.mxu0 0.0
  %7492 = vmatprep.subr.mxu0 0.0
  %7493 = vmatpush1.xpose.msra.mxu0 0.0
  %7494 = vmatprep.subr.mxu0 0.0
  %7495 = vmatpush1.xpose.msra.mxu0 0.0
  %7496 = vmatprep.subr.mxu0 0.0
  %7497 = vmatpush1.xpose.msra.mxu0 0.0
  %7498 = vmatprep.subr.mxu0 0.0
  %7499 = vmatpush1.xpose.msra.mxu0 0.0
  %7500 = vmatprep.subr.mxu0 0.0
  %7501 = vmatpush1.xpose.msra.mxu0 0.0
  %7502 = vmatprep.subr.mxu0 0.0
  %7503 = vmatpush1.xpose.msra.mxu0 0.0
  %7504 = vmatprep.subr.mxu0 0.0
  %7505 = vmatpush1.xpose.msra.mxu0 0.0
  %7506 = vmatprep.subr.mxu0 0.0
  %7507 = vmatpush1.xpose.msra.mxu0 0.0
  %7508 = vmatprep.subr.mxu0 0.0
  %7509 = vmatpush1.xpose.msra.mxu0 0.0
  %7510 = vmatprep.subr.mxu0 0.0
  %7511 = vmatpush1.xpose.msra.mxu0 0.0
  %7512 = vmatprep.subr.mxu0 0.0
  %7513 = vmatpush1.xpose.msra.mxu0 0.0
  %7514 = vmatprep.subr.mxu0 0.0
  %7515 = vmatpush1.xpose.msra.mxu0 0.0
  %7516 = vmatprep.subr.mxu0 0.0
  %7517 = vmatpush1.xpose.msra.mxu0 0.0
  %7518 = vmatprep.subr.mxu0 0.0
  %7519 = vmatpush1.xpose.msra.mxu0 0.0
  %7520 = vmatprep.subr.mxu0 0.0
  %7521 = vmatpush1.xpose.msra.mxu0 %v7488
  %7522 = vmatprep.subr.mxu0 0.0
  %7523 = vmatpush2.xpose.msra.mxu0 0.0
  %7524 = vmatprep.subr.mxu0 0.0
  %7525 = vmatpush2.xpose.msra.mxu0 0.0
  %7526 = vmatprep.subr.mxu0 0.0
  %7527 = vmatpush2.xpose.msra.mxu0 0.0
  %7528 = vmatprep.subr.mxu0 0.0
  %7529 = vmatpush2.xpose.msra.mxu0 0.0
  %7530 = vmatprep.subr.mxu0 0.0
  %7531 = vmatpush2.xpose.msra.mxu0 0.0
  %7532 = vmatprep.subr.mxu0 0.0
  %7533 = vmatpush2.xpose.msra.mxu0 0.0
  %7534 = vmatprep.subr.mxu0 0.0
  %7535 = vmatpush2.xpose.msra.mxu0 0.0
  %7536 = vmatprep.subr.mxu0 0.0
  %7537 = vmatpush2.xpose.msra.mxu0 0.0
  %7538 = vmatprep.subr.mxu0 0.0
  %7539 = vmatpush2.xpose.msra.mxu0 0.0
  %7540 = vmatprep.subr.mxu0 0.0
  %7541 = vmatpush2.xpose.msra.mxu0 0.0
  %7542 = vmatprep.subr.mxu0 0.0
  %7543 = vmatpush2.xpose.msra.mxu0 0.0
  %7544 = vmatprep.subr.mxu0 0.0
  %7545 = vmatpush2.xpose.msra.mxu0 0.0
  %7546 = vmatprep.subr.mxu0 0.0
  %7547 = vmatpush2.xpose.msra.mxu0 0.0
  %7548 = vmatprep.subr.mxu0 0.0
  %7549 = vmatpush2.xpose.msra.mxu0 0.0
  %7550 = vmatprep.subr.mxu0 0.0
  %7551 = vmatpush2.xpose.msra.mxu0 0.0
  %7552 = vmatprep.subr.mxu0 0.0
  %7553 = vmatpush2.xpose.msra.mxu0 0.0
  %7554 = vmatprep.mubr.f32.mxu0 0.0
  %7555 = vmatmul.mubr.f32.gmra.mxu0 %v7485
  %v7556 = vpop.f32.mrf.mxu0
  %v7557 = vadd.f32 0.0, %v7556
  %v7558 = vpop.f32.mrf.mxu0
  %7559 = vdwg.mxu0
  %7560 = vrot.lane.b32.xlu0 %v6150, 112
  %v7561 = vpop.permute.xlu0 %7560
  %7563 = vxpose.xlu0.b32.start [1/16] %v7561, 128
  %7564 = vxpose.xlu0.b32.cont [2/16] 0.0, 128
  %7565 = vxpose.xlu0.b32.cont [3/16] 0.0, 128
  %7566 = vxpose.xlu0.b32.cont [4/16] 0.0, 128
  %7567 = vxpose.xlu0.b32.cont [5/16] 0.0, 128
  %7568 = vxpose.xlu0.b32.cont [6/16] 0.0, 128
  %7569 = vxpose.xlu0.b32.cont [7/16] 0.0, 128
  %7570 = vxpose.xlu0.b32.cont [8/16] 0.0, 128
  %7571 = vxpose.xlu0.b32.cont [9/16] 0.0, 128
  %7572 = vxpose.xlu0.b32.cont [10/16] 0.0, 128
  %7573 = vxpose.xlu0.b32.cont [11/16] 0.0, 128
  %7574 = vxpose.xlu0.b32.cont [12/16] 0.0, 128
  %7575 = vxpose.xlu0.b32.cont [13/16] 0.0, 128
  %7576 = vxpose.xlu0.b32.cont [14/16] 0.0, 128
  %7577 = vxpose.xlu0.b32.cont [15/16] 0.0, 128
  %7578 = vxpose.xlu0.b32.end [16/16] 0.0, 128
  %v7579 = vpop.trf.xlu0
  %v7580 = vpop.trf.xlu0
  %v7581 = vpop.trf.xlu0
  %v7582 = vpop.trf.xlu0
  %v7583 = vpop.trf.xlu0
  %v7584 = vpop.trf.xlu0
  %v7585 = vpop.trf.xlu0
  %v7586 = vpop.trf.xlu0
  %v7587 = vpop.trf.xlu0
  %v7588 = vpop.trf.xlu0
  %v7589 = vpop.trf.xlu0
  %v7590 = vpop.trf.xlu0
  %v7591 = vpop.trf.xlu0
  %v7592 = vpop.trf.xlu0
  %v7593 = vpop.trf.xlu0
  %v7594 = vpop.trf.xlu0
  %v7596 = vsel %vm680, %v7579, 0
  %v7599 = vsel %vm680, %v7002, 0
  %7601 = vmatprep.subr.mxu0 0.0
  %7602 = vmatpush1.xpose.msra.mxu0 0.0
  %7603 = vmatprep.subr.mxu0 0.0
  %7604 = vmatpush1.xpose.msra.mxu0 0.0
  %7605 = vmatprep.subr.mxu0 0.0
  %7606 = vmatpush1.xpose.msra.mxu0 0.0
  %7607 = vmatprep.subr.mxu0 0.0
  %7608 = vmatpush1.xpose.msra.mxu0 0.0
  %7609 = vmatprep.subr.mxu0 0.0
  %7610 = vmatpush1.xpose.msra.mxu0 0.0
  %7611 = vmatprep.subr.mxu0 0.0
  %7612 = vmatpush1.xpose.msra.mxu0 0.0
  %7613 = vmatprep.subr.mxu0 0.0
  %7614 = vmatpush1.xpose.msra.mxu0 0.0
  %7615 = vmatprep.subr.mxu0 0.0
  %7616 = vmatpush1.xpose.msra.mxu0 0.0
  %7617 = vmatprep.subr.mxu0 0.0
  %7618 = vmatpush1.xpose.msra.mxu0 0.0
  %7619 = vmatprep.subr.mxu0 0.0
  %7620 = vmatpush1.xpose.msra.mxu0 0.0
  %7621 = vmatprep.subr.mxu0 0.0
  %7622 = vmatpush1.xpose.msra.mxu0 0.0
  %7623 = vmatprep.subr.mxu0 0.0
  %7624 = vmatpush1.xpose.msra.mxu0 0.0
  %7625 = vmatprep.subr.mxu0 0.0
  %7626 = vmatpush1.xpose.msra.mxu0 0.0
  %7627 = vmatprep.subr.mxu0 0.0
  %7628 = vmatpush1.xpose.msra.mxu0 0.0
  %7629 = vmatprep.subr.mxu0 0.0
  %7630 = vmatpush1.xpose.msra.mxu0 0.0
  %7631 = vmatprep.subr.mxu0 0.0
  %7632 = vmatpush1.xpose.msra.mxu0 %v7599
  %7633 = vmatprep.subr.mxu0 0.0
  %7634 = vmatpush2.xpose.msra.mxu0 0.0
  %7635 = vmatprep.subr.mxu0 0.0
  %7636 = vmatpush2.xpose.msra.mxu0 0.0
  %7637 = vmatprep.subr.mxu0 0.0
  %7638 = vmatpush2.xpose.msra.mxu0 0.0
  %7639 = vmatprep.subr.mxu0 0.0
  %7640 = vmatpush2.xpose.msra.mxu0 0.0
  %7641 = vmatprep.subr.mxu0 0.0
  %7642 = vmatpush2.xpose.msra.mxu0 0.0
  %7643 = vmatprep.subr.mxu0 0.0
  %7644 = vmatpush2.xpose.msra.mxu0 0.0
  %7645 = vmatprep.subr.mxu0 0.0
  %7646 = vmatpush2.xpose.msra.mxu0 0.0
  %7647 = vmatprep.subr.mxu0 0.0
  %7648 = vmatpush2.xpose.msra.mxu0 0.0
  %7649 = vmatprep.subr.mxu0 0.0
  %7650 = vmatpush2.xpose.msra.mxu0 0.0
  %7651 = vmatprep.subr.mxu0 0.0
  %7652 = vmatpush2.xpose.msra.mxu0 0.0
  %7653 = vmatprep.subr.mxu0 0.0
  %7654 = vmatpush2.xpose.msra.mxu0 0.0
  %7655 = vmatprep.subr.mxu0 0.0
  %7656 = vmatpush2.xpose.msra.mxu0 0.0
  %7657 = vmatprep.subr.mxu0 0.0
  %7658 = vmatpush2.xpose.msra.mxu0 0.0
  %7659 = vmatprep.subr.mxu0 0.0
  %7660 = vmatpush2.xpose.msra.mxu0 0.0
  %7661 = vmatprep.subr.mxu0 0.0
  %7662 = vmatpush2.xpose.msra.mxu0 0.0
  %7663 = vmatprep.subr.mxu0 0.0
  %7664 = vmatpush2.xpose.msra.mxu0 0.0
  %7665 = vmatprep.mubr.f32.mxu0 0.0
  %7666 = vmatmul.mubr.f32.gmra.mxu0 %v7596
  %v7667 = vpop.f32.mrf.mxu0
  %v7668 = vadd.f32 0.0, %v7667
  %v7669 = vpop.f32.mrf.mxu0
  %7670 = vdwg.mxu0
  %7671 = vrot.lane.b32.xlu0 %v6220, 112
  %v7672 = vpop.permute.xlu0 %7671
  %7674 = vxpose.xlu0.b32.start [1/16] %v7672, 128
  %7675 = vxpose.xlu0.b32.cont [2/16] 0.0, 128
  %7676 = vxpose.xlu0.b32.cont [3/16] 0.0, 128
  %7677 = vxpose.xlu0.b32.cont [4/16] 0.0, 128
  %7678 = vxpose.xlu0.b32.cont [5/16] 0.0, 128
  %7679 = vxpose.xlu0.b32.cont [6/16] 0.0, 128
  %7680 = vxpose.xlu0.b32.cont [7/16] 0.0, 128
  %7681 = vxpose.xlu0.b32.cont [8/16] 0.0, 128
  %7682 = vxpose.xlu0.b32.cont [9/16] 0.0, 128
  %7683 = vxpose.xlu0.b32.cont [10/16] 0.0, 128
  %7684 = vxpose.xlu0.b32.cont [11/16] 0.0, 128
  %7685 = vxpose.xlu0.b32.cont [12/16] 0.0, 128
  %7686 = vxpose.xlu0.b32.cont [13/16] 0.0, 128
  %7687 = vxpose.xlu0.b32.cont [14/16] 0.0, 128
  %7688 = vxpose.xlu0.b32.cont [15/16] 0.0, 128
  %7689 = vxpose.xlu0.b32.end [16/16] 0.0, 128
  %v7690 = vpop.trf.xlu0
  %v7691 = vpop.trf.xlu0
  %v7692 = vpop.trf.xlu0
  %v7693 = vpop.trf.xlu0
  %v7694 = vpop.trf.xlu0
  %v7695 = vpop.trf.xlu0
  %v7696 = vpop.trf.xlu0
  %v7697 = vpop.trf.xlu0
  %v7698 = vpop.trf.xlu0
  %v7699 = vpop.trf.xlu0
  %v7700 = vpop.trf.xlu0
  %v7701 = vpop.trf.xlu0
  %v7702 = vpop.trf.xlu0
  %v7703 = vpop.trf.xlu0
  %v7704 = vpop.trf.xlu0
  %v7705 = vpop.trf.xlu0
  %v7707 = vsel %vm680, %v7690, 0
  %v7710 = vsel %vm680, %v7003, 0
  %7712 = vmatprep.subr.mxu0 0.0
  %7713 = vmatpush1.xpose.msra.mxu0 0.0
  %7714 = vmatprep.subr.mxu0 0.0
  %7715 = vmatpush1.xpose.msra.mxu0 0.0
  %7716 = vmatprep.subr.mxu0 0.0
  %7717 = vmatpush1.xpose.msra.mxu0 0.0
  %7718 = vmatprep.subr.mxu0 0.0
  %7719 = vmatpush1.xpose.msra.mxu0 0.0
  %7720 = vmatprep.subr.mxu0 0.0
  %7721 = vmatpush1.xpose.msra.mxu0 0.0
  %7722 = vmatprep.subr.mxu0 0.0
  %7723 = vmatpush1.xpose.msra.mxu0 0.0
  %7724 = vmatprep.subr.mxu0 0.0
  %7725 = vmatpush1.xpose.msra.mxu0 0.0
  %7726 = vmatprep.subr.mxu0 0.0
  %7727 = vmatpush1.xpose.msra.mxu0 0.0
  %7728 = vmatprep.subr.mxu0 0.0
  %7729 = vmatpush1.xpose.msra.mxu0 0.0
  %7730 = vmatprep.subr.mxu0 0.0
  %7731 = vmatpush1.xpose.msra.mxu0 0.0
  %7732 = vmatprep.subr.mxu0 0.0
  %7733 = vmatpush1.xpose.msra.mxu0 0.0
  %7734 = vmatprep.subr.mxu0 0.0
  %7735 = vmatpush1.xpose.msra.mxu0 0.0
  %7736 = vmatprep.subr.mxu0 0.0
  %7737 = vmatpush1.xpose.msra.mxu0 0.0
  %7738 = vmatprep.subr.mxu0 0.0
  %7739 = vmatpush1.xpose.msra.mxu0 0.0
  %7740 = vmatprep.subr.mxu0 0.0
  %7741 = vmatpush1.xpose.msra.mxu0 0.0
  %7742 = vmatprep.subr.mxu0 0.0
  %7743 = vmatpush1.xpose.msra.mxu0 %v7710
  %7744 = vmatprep.subr.mxu0 0.0
  %7745 = vmatpush2.xpose.msra.mxu0 0.0
  %7746 = vmatprep.subr.mxu0 0.0
  %7747 = vmatpush2.xpose.msra.mxu0 0.0
  %7748 = vmatprep.subr.mxu0 0.0
  %7749 = vmatpush2.xpose.msra.mxu0 0.0
  %7750 = vmatprep.subr.mxu0 0.0
  %7751 = vmatpush2.xpose.msra.mxu0 0.0
  %7752 = vmatprep.subr.mxu0 0.0
  %7753 = vmatpush2.xpose.msra.mxu0 0.0
  %7754 = vmatprep.subr.mxu0 0.0
  %7755 = vmatpush2.xpose.msra.mxu0 0.0
  %7756 = vmatprep.subr.mxu0 0.0
  %7757 = vmatpush2.xpose.msra.mxu0 0.0
  %7758 = vmatprep.subr.mxu0 0.0
  %7759 = vmatpush2.xpose.msra.mxu0 0.0
  %7760 = vmatprep.subr.mxu0 0.0
  %7761 = vmatpush2.xpose.msra.mxu0 0.0
  %7762 = vmatprep.subr.mxu0 0.0
  %7763 = vmatpush2.xpose.msra.mxu0 0.0
  %7764 = vmatprep.subr.mxu0 0.0
  %7765 = vmatpush2.xpose.msra.mxu0 0.0
  %7766 = vmatprep.subr.mxu0 0.0
  %7767 = vmatpush2.xpose.msra.mxu0 0.0
  %7768 = vmatprep.subr.mxu0 0.0
  %7769 = vmatpush2.xpose.msra.mxu0 0.0
  %7770 = vmatprep.subr.mxu0 0.0
  %7771 = vmatpush2.xpose.msra.mxu0 0.0
  %7772 = vmatprep.subr.mxu0 0.0
  %7773 = vmatpush2.xpose.msra.mxu0 0.0
  %7774 = vmatprep.subr.mxu0 0.0
  %7775 = vmatpush2.xpose.msra.mxu0 0.0
  %7776 = vmatprep.mubr.f32.mxu0 0.0
  %7777 = vmatmul.mubr.f32.gmra.mxu0 %v7707
  %v7778 = vpop.f32.mrf.mxu0
  %v7779 = vadd.f32 0.0, %v7778
  %v7780 = vpop.f32.mrf.mxu0
  %7781 = vdwg.mxu0
  %7782 = vrot.lane.b32.xlu0 %v6290, 112
  %v7783 = vpop.permute.xlu0 %7782
  %7785 = vxpose.xlu0.b32.start [1/16] %v7783, 128
  %7786 = vxpose.xlu0.b32.cont [2/16] 0.0, 128
  %7787 = vxpose.xlu0.b32.cont [3/16] 0.0, 128
  %7788 = vxpose.xlu0.b32.cont [4/16] 0.0, 128
  %7789 = vxpose.xlu0.b32.cont [5/16] 0.0, 128
  %7790 = vxpose.xlu0.b32.cont [6/16] 0.0, 128
  %7791 = vxpose.xlu0.b32.cont [7/16] 0.0, 128
  %7792 = vxpose.xlu0.b32.cont [8/16] 0.0, 128
  %7793 = vxpose.xlu0.b32.cont [9/16] 0.0, 128
  %7794 = vxpose.xlu0.b32.cont [10/16] 0.0, 128
  %7795 = vxpose.xlu0.b32.cont [11/16] 0.0, 128
  %7796 = vxpose.xlu0.b32.cont [12/16] 0.0, 128
  %7797 = vxpose.xlu0.b32.cont [13/16] 0.0, 128
  %7798 = vxpose.xlu0.b32.cont [14/16] 0.0, 128
  %7799 = vxpose.xlu0.b32.cont [15/16] 0.0, 128
  %7800 = vxpose.xlu0.b32.end [16/16] 0.0, 128
  %v7801 = vpop.trf.xlu0
  %v7802 = vpop.trf.xlu0
  %v7803 = vpop.trf.xlu0
  %v7804 = vpop.trf.xlu0
  %v7805 = vpop.trf.xlu0
  %v7806 = vpop.trf.xlu0
  %v7807 = vpop.trf.xlu0
  %v7808 = vpop.trf.xlu0
  %v7809 = vpop.trf.xlu0
  %v7810 = vpop.trf.xlu0
  %v7811 = vpop.trf.xlu0
  %v7812 = vpop.trf.xlu0
  %v7813 = vpop.trf.xlu0
  %v7814 = vpop.trf.xlu0
  %v7815 = vpop.trf.xlu0
  %v7816 = vpop.trf.xlu0
  %v7818 = vsel %vm680, %v7801, 0
  %v7821 = vsel %vm680, %v7004, 0
  %7823 = vmatprep.subr.mxu0 0.0
  %7824 = vmatpush1.xpose.msra.mxu0 0.0
  %7825 = vmatprep.subr.mxu0 0.0
  %7826 = vmatpush1.xpose.msra.mxu0 0.0
  %7827 = vmatprep.subr.mxu0 0.0
  %7828 = vmatpush1.xpose.msra.mxu0 0.0
  %7829 = vmatprep.subr.mxu0 0.0
  %7830 = vmatpush1.xpose.msra.mxu0 0.0
  %7831 = vmatprep.subr.mxu0 0.0
  %7832 = vmatpush1.xpose.msra.mxu0 0.0
  %7833 = vmatprep.subr.mxu0 0.0
  %7834 = vmatpush1.xpose.msra.mxu0 0.0
  %7835 = vmatprep.subr.mxu0 0.0
  %7836 = vmatpush1.xpose.msra.mxu0 0.0
  %7837 = vmatprep.subr.mxu0 0.0
  %7838 = vmatpush1.xpose.msra.mxu0 0.0
  %7839 = vmatprep.subr.mxu0 0.0
  %7840 = vmatpush1.xpose.msra.mxu0 0.0
  %7841 = vmatprep.subr.mxu0 0.0
  %7842 = vmatpush1.xpose.msra.mxu0 0.0
  %7843 = vmatprep.subr.mxu0 0.0
  %7844 = vmatpush1.xpose.msra.mxu0 0.0
  %7845 = vmatprep.subr.mxu0 0.0
  %7846 = vmatpush1.xpose.msra.mxu0 0.0
  %7847 = vmatprep.subr.mxu0 0.0
  %7848 = vmatpush1.xpose.msra.mxu0 0.0
  %7849 = vmatprep.subr.mxu0 0.0
  %7850 = vmatpush1.xpose.msra.mxu0 0.0
  %7851 = vmatprep.subr.mxu0 0.0
  %7852 = vmatpush1.xpose.msra.mxu0 0.0
  %7853 = vmatprep.subr.mxu0 0.0
  %7854 = vmatpush1.xpose.msra.mxu0 %v7821
  %7855 = vmatprep.subr.mxu0 0.0
  %7856 = vmatpush2.xpose.msra.mxu0 0.0
  %7857 = vmatprep.subr.mxu0 0.0
  %7858 = vmatpush2.xpose.msra.mxu0 0.0
  %7859 = vmatprep.subr.mxu0 0.0
  %7860 = vmatpush2.xpose.msra.mxu0 0.0
  %7861 = vmatprep.subr.mxu0 0.0
  %7862 = vmatpush2.xpose.msra.mxu0 0.0
  %7863 = vmatprep.subr.mxu0 0.0
  %7864 = vmatpush2.xpose.msra.mxu0 0.0
  %7865 = vmatprep.subr.mxu0 0.0
  %7866 = vmatpush2.xpose.msra.mxu0 0.0
  %7867 = vmatprep.subr.mxu0 0.0
  %7868 = vmatpush2.xpose.msra.mxu0 0.0
  %7869 = vmatprep.subr.mxu0 0.0
  %7870 = vmatpush2.xpose.msra.mxu0 0.0
  %7871 = vmatprep.subr.mxu0 0.0
  %7872 = vmatpush2.xpose.msra.mxu0 0.0
  %7873 = vmatprep.subr.mxu0 0.0
  %7874 = vmatpush2.xpose.msra.mxu0 0.0
  %7875 = vmatprep.subr.mxu0 0.0
  %7876 = vmatpush2.xpose.msra.mxu0 0.0
  %7877 = vmatprep.subr.mxu0 0.0
  %7878 = vmatpush2.xpose.msra.mxu0 0.0
  %7879 = vmatprep.subr.mxu0 0.0
  %7880 = vmatpush2.xpose.msra.mxu0 0.0
  %7881 = vmatprep.subr.mxu0 0.0
  %7882 = vmatpush2.xpose.msra.mxu0 0.0
  %7883 = vmatprep.subr.mxu0 0.0
  %7884 = vmatpush2.xpose.msra.mxu0 0.0
  %7885 = vmatprep.subr.mxu0 0.0
  %7886 = vmatpush2.xpose.msra.mxu0 0.0
  %7887 = vmatprep.mubr.f32.mxu0 0.0
  %7888 = vmatmul.mubr.f32.gmra.mxu0 %v7818
  %v7889 = vpop.f32.mrf.mxu0
  %v7890 = vadd.f32 0.0, %v7889
  %v7891 = vpop.f32.mrf.mxu0
  %7892 = vdwg.mxu0
  %7893 = vxpose.xlu0.b32.start [1/16] %v7113, 128
  %7894 = vxpose.xlu0.b32.cont [2/16] %v7224, 128
  %7895 = vxpose.xlu0.b32.cont [3/16] %v7335, 128
  %7896 = vxpose.xlu0.b32.cont [4/16] %v7446, 128
  %7897 = vxpose.xlu0.b32.cont [5/16] 0.0, 128
  %7898 = vxpose.xlu0.b32.cont [6/16] 0.0, 128
  %7899 = vxpose.xlu0.b32.cont [7/16] 0.0, 128
  %7900 = vxpose.xlu0.b32.cont [8/16] 0.0, 128
  %7901 = vxpose.xlu0.b32.cont [9/16] 0.0, 128
  %7902 = vxpose.xlu0.b32.cont [10/16] 0.0, 128
  %7903 = vxpose.xlu0.b32.cont [11/16] 0.0, 128
  %7904 = vxpose.xlu0.b32.cont [12/16] 0.0, 128
  %7905 = vxpose.xlu0.b32.cont [13/16] 0.0, 128
  %7906 = vxpose.xlu0.b32.cont [14/16] 0.0, 128
  %7907 = vxpose.xlu0.b32.cont [15/16] 0.0, 128
  %7908 = vxpose.xlu0.b32.end [16/16] 0.0, 128
  %v7909 = vpop.trf.xlu0
  %v7910 = vpop.trf.xlu0
  %v7911 = vpop.trf.xlu0
  %v7912 = vpop.trf.xlu0
  %v7913 = vpop.trf.xlu0
  %v7914 = vpop.trf.xlu0
  %v7915 = vpop.trf.xlu0
  %v7916 = vpop.trf.xlu0
  %v7917 = vpop.trf.xlu0
  %v7918 = vpop.trf.xlu0
  %v7919 = vpop.trf.xlu0
  %v7920 = vpop.trf.xlu0
  %v7921 = vpop.trf.xlu0
  %v7922 = vpop.trf.xlu0
  %v7923 = vpop.trf.xlu0
  %v7924 = vpop.trf.xlu0
  %7925 = vxpose.xlu0.b32.start [1/16] %v7557, 128
  %7926 = vxpose.xlu0.b32.cont [2/16] %v7668, 128
  %7927 = vxpose.xlu0.b32.cont [3/16] %v7779, 128
  %7928 = vxpose.xlu0.b32.cont [4/16] %v7890, 128
  %7929 = vxpose.xlu0.b32.cont [5/16] 0.0, 128
  %7930 = vxpose.xlu0.b32.cont [6/16] 0.0, 128
  %7931 = vxpose.xlu0.b32.cont [7/16] 0.0, 128
  %7932 = vxpose.xlu0.b32.cont [8/16] 0.0, 128
  %7933 = vxpose.xlu0.b32.cont [9/16] 0.0, 128
  %7934 = vxpose.xlu0.b32.cont [10/16] 0.0, 128
  %7935 = vxpose.xlu0.b32.cont [11/16] 0.0, 128
  %7936 = vxpose.xlu0.b32.cont [12/16] 0.0, 128
  %7937 = vxpose.xlu0.b32.cont [13/16] 0.0, 128
  %7938 = vxpose.xlu0.b32.cont [14/16] 0.0, 128
  %7939 = vxpose.xlu0.b32.cont [15/16] 0.0, 128
  %7940 = vxpose.xlu0.b32.end [16/16] 0.0, 128
  %v7941 = vpop.trf.xlu0
  %v7942 = vpop.trf.xlu0
  %v7943 = vpop.trf.xlu0
  %v7944 = vpop.trf.xlu0
  %v7945 = vpop.trf.xlu0
  %v7946 = vpop.trf.xlu0
  %v7947 = vpop.trf.xlu0
  %v7948 = vpop.trf.xlu0
  %v7949 = vpop.trf.xlu0
  %v7950 = vpop.trf.xlu0
  %v7951 = vpop.trf.xlu0
  %v7952 = vpop.trf.xlu0
  %v7953 = vpop.trf.xlu0
  %v7954 = vpop.trf.xlu0
  %v7955 = vpop.trf.xlu0
  %v7956 = vpop.trf.xlu0
  %v7957 = vlaneseq
  %v7958 = vshrl.u32 %v7957, 7
  %v7959 = vsub.s32 0, %v7958
  %v7960 = vrot.slane %v5675, %v7959
  %v7962 = vsel %vm110, %v7909, 0
  %v7965 = vsel %vm110, %v7941, 0
  %7967 = vmatprep.subr.mxu0 0.0
  %7968 = vmatpush1.msra.mxu0 0.0
  %7969 = vmatprep.subr.mxu0 0.0
  %7970 = vmatpush1.msra.mxu0 0.0
  %7971 = vmatprep.subr.mxu0 0.0
  %7972 = vmatpush1.msra.mxu0 0.0
  %7973 = vmatprep.subr.mxu0 0.0
  %7974 = vmatpush1.msra.mxu0 0.0
  %7975 = vmatprep.subr.mxu0 0.0
  %7976 = vmatpush1.msra.mxu0 0.0
  %7977 = vmatprep.subr.mxu0 0.0
  %7978 = vmatpush1.msra.mxu0 0.0
  %7979 = vmatprep.subr.mxu0 0.0
  %7980 = vmatpush1.msra.mxu0 0.0
  %7981 = vmatprep.subr.mxu0 0.0
  %7982 = vmatpush1.msra.mxu0 0.0
  %7983 = vmatprep.subr.mxu0 0.0
  %7984 = vmatpush1.msra.mxu0 0.0
  %7985 = vmatprep.subr.mxu0 0.0
  %7986 = vmatpush1.msra.mxu0 0.0
  %7987 = vmatprep.subr.mxu0 0.0
  %7988 = vmatpush1.msra.mxu0 0.0
  %7989 = vmatprep.subr.mxu0 0.0
  %7990 = vmatpush1.msra.mxu0 0.0
  %7991 = vmatprep.subr.mxu0 0.0
  %7992 = vmatpush1.msra.mxu0 %v5702
  %7993 = vmatprep.subr.mxu0 0.0
  %7994 = vmatpush1.msra.mxu0 %v5701
  %7995 = vmatprep.subr.mxu0 0.0
  %7996 = vmatpush1.msra.mxu0 %v5700
  %7997 = vmatprep.subr.mxu0 0.0
  %7998 = vmatpush1.msra.mxu0 %v5699
  %7999 = vmatprep.subr.mxu0 0.0
  %8000 = vmatpush2.msra.mxu0 0.0
  %8001 = vmatprep.subr.mxu0 0.0
  %8002 = vmatpush2.msra.mxu0 0.0
  %8003 = vmatprep.subr.mxu0 0.0
  %8004 = vmatpush2.msra.mxu0 0.0
  %8005 = vmatprep.subr.mxu0 0.0
  %8006 = vmatpush2.msra.mxu0 0.0
  %8007 = vmatprep.subr.mxu0 0.0
  %8008 = vmatpush2.msra.mxu0 0.0
  %8009 = vmatprep.subr.mxu0 0.0
  %8010 = vmatpush2.msra.mxu0 0.0
  %8011 = vmatprep.subr.mxu0 0.0
  %8012 = vmatpush2.msra.mxu0 0.0
  %8013 = vmatprep.subr.mxu0 0.0
  %8014 = vmatpush2.msra.mxu0 0.0
  %8015 = vmatprep.subr.mxu0 0.0
  %8016 = vmatpush2.msra.mxu0 0.0
  %8017 = vmatprep.subr.mxu0 0.0
  %8018 = vmatpush2.msra.mxu0 0.0
  %8019 = vmatprep.subr.mxu0 0.0
  %8020 = vmatpush2.msra.mxu0 0.0
  %8021 = vmatprep.subr.mxu0 0.0
  %8022 = vmatpush2.msra.mxu0 0.0
  %8023 = vmatprep.subr.mxu0 0.0
  %8024 = vmatpush2.msra.mxu0 0.0
  %8025 = vmatprep.subr.mxu0 0.0
  %8026 = vmatpush2.msra.mxu0 0.0
  %8027 = vmatprep.subr.mxu0 0.0
  %8028 = vmatpush2.msra.mxu0 0.0
  %8029 = vmatprep.subr.mxu0 0.0
  %8030 = vmatpush2.msra.mxu0 0.0
  %8031 = vmatprep.mubr.f32.mxu0 0.0
  %8032 = vmatmul.mubr.f32.gmra.mxu0 %v7962
  %v8033 = vpop.f32.mrf.mxu0
  %v8034 = vadd.f32 %v7960, %v8033
  %v8035 = vpop.f32.mrf.mxu0
  %8036 = vmatprep.mubr.f32.mxu0 0.0
  %8037 = vmatmul.mubr.f32.gmra.mxu0 %v7965
  %v8038 = vpop.f32.mrf.mxu0
  %v8039 = vadd.f32 %v7960, %v8038
  %v8040 = vpop.f32.mrf.mxu0
  %8041 = vdwg.mxu0
  %v8042 = vld [vmem:[%s1 + $0x3] sm:$0x1]
  %v8043 = vld [vmem:[%s1 + $0x4] sm:$0x1]
  %8045 = vset.pattern.permute.xlu0 0
  %8046 = vperm.xlu0 %8045, %v8043
  %v8047 = vpop.permute.xlu0 %8046
  %v8050 = vsel %vm110, %v8042, 0
  %v8053 = vsel %vm110, %v8034, 0
  %v8056 = vsel %vm110, %v8039, 0
  %8058 = vmatprep.subr.mxu0 0.0
  %8059 = vmatpush1.xpose.msra.mxu0 0.0
  %8060 = vmatprep.subr.mxu0 0.0
  %8061 = vmatpush1.xpose.msra.mxu0 0.0
  %8062 = vmatprep.subr.mxu0 0.0
  %8063 = vmatpush1.xpose.msra.mxu0 0.0
  %8064 = vmatprep.subr.mxu0 0.0
  %8065 = vmatpush1.xpose.msra.mxu0 0.0
  %8066 = vmatprep.subr.mxu0 0.0
  %8067 = vmatpush1.xpose.msra.mxu0 0.0
  %8068 = vmatprep.subr.mxu0 0.0
  %8069 = vmatpush1.xpose.msra.mxu0 0.0
  %8070 = vmatprep.subr.mxu0 0.0
  %8071 = vmatpush1.xpose.msra.mxu0 0.0
  %8072 = vmatprep.subr.mxu0 0.0
  %8073 = vmatpush1.xpose.msra.mxu0 0.0
  %8074 = vmatprep.subr.mxu0 0.0
  %8075 = vmatpush1.xpose.msra.mxu0 0.0
  %8076 = vmatprep.subr.mxu0 0.0
  %8077 = vmatpush1.xpose.msra.mxu0 0.0
  %8078 = vmatprep.subr.mxu0 0.0
  %8079 = vmatpush1.xpose.msra.mxu0 0.0
  %8080 = vmatprep.subr.mxu0 0.0
  %8081 = vmatpush1.xpose.msra.mxu0 0.0
  %8082 = vmatprep.subr.mxu0 0.0
  %8083 = vmatpush1.xpose.msra.mxu0 0.0
  %8084 = vmatprep.subr.mxu0 0.0
  %8085 = vmatpush1.xpose.msra.mxu0 0.0
  %8086 = vmatprep.subr.mxu0 0.0
  %8087 = vmatpush1.xpose.msra.mxu0 %v8056
  %8088 = vmatprep.subr.mxu0 0.0
  %8089 = vmatpush1.xpose.msra.mxu0 %v8053
  %8090 = vmatprep.subr.mxu0 0.0
  %8091 = vmatpush2.xpose.msra.mxu0 0.0
  %8092 = vmatprep.subr.mxu0 0.0
  %8093 = vmatpush2.xpose.msra.mxu0 0.0
  %8094 = vmatprep.subr.mxu0 0.0
  %8095 = vmatpush2.xpose.msra.mxu0 0.0
  %8096 = vmatprep.subr.mxu0 0.0
  %8097 = vmatpush2.xpose.msra.mxu0 0.0
  %8098 = vmatprep.subr.mxu0 0.0
  %8099 = vmatpush2.xpose.msra.mxu0 0.0
  %8100 = vmatprep.subr.mxu0 0.0
  %8101 = vmatpush2.xpose.msra.mxu0 0.0
  %8102 = vmatprep.subr.mxu0 0.0
  %8103 = vmatpush2.xpose.msra.mxu0 0.0
  %8104 = vmatprep.subr.mxu0 0.0
  %8105 = vmatpush2.xpose.msra.mxu0 0.0
  %8106 = vmatprep.subr.mxu0 0.0
  %8107 = vmatpush2.xpose.msra.mxu0 0.0
  %8108 = vmatprep.subr.mxu0 0.0
  %8109 = vmatpush2.xpose.msra.mxu0 0.0
  %8110 = vmatprep.subr.mxu0 0.0
  %8111 = vmatpush2.xpose.msra.mxu0 0.0
  %8112 = vmatprep.subr.mxu0 0.0
  %8113 = vmatpush2.xpose.msra.mxu0 0.0
  %8114 = vmatprep.subr.mxu0 0.0
  %8115 = vmatpush2.xpose.msra.mxu0 0.0
  %8116 = vmatprep.subr.mxu0 0.0
  %8117 = vmatpush2.xpose.msra.mxu0 0.0
  %8118 = vmatprep.subr.mxu0 0.0
  %8119 = vmatpush2.xpose.msra.mxu0 0.0
  %8120 = vmatprep.subr.mxu0 0.0
  %8121 = vmatpush2.xpose.msra.mxu0 0.0
  %8122 = vmatprep.mubr.f32.mxu0 0.0
  %8123 = vmatmul.mubr.f32.gmra.mxu0 %v8050
  %v8124 = vpop.f32.mrf.mxu0
  %v8125 = vadd.f32 %v8047, %v8124
  %v8126 = vpop.f32.mrf.mxu0
  %8127 = vdwg.mxu0
  %vm8128 = vcmask 122880
  %8129 = vst.msk [vmem:[%s10] sm:$0x1] %vm8128, %v8125
  // Predicated region
  $region42: #{informer_forward.1} parent=0 // pred_check
    _
  $region43: #{informer_forward.1} parent=0 // pred_check_branch
    %8131 = sbr.rel (0) target = $region45
  $region44: #{informer_forward.1} parent=0 // pred_region
    _
  $region45: #{informer_forward.1} parent=0 // pred_fallthru
    _
  // Predicated region
  $region46: #{informer_forward.1} parent=0 // pred_check
    _
  $region47: #{informer_forward.1} parent=0 // pred_check_branch
    %8133 = sbr.rel (0) target = $region49
  $region48: #{informer_forward.1} parent=0 // pred_region
    _
  $region49: #{informer_forward.1} parent=0 // pred_fallthru
    _

</llo_original>
